<compile_context>
chip_gen: v7x
topology: tpu7x:2x2x1
jax: 0.10.0
libtpu: 0.0.40
codegen_flags: <defaults>
</compile_context>

<pallas_src>
import jax
import jax.numpy as jnp
import numpy as np
from jax.experimental import pallas as pl
from jax.experimental.pallas import tpu as pltpu


# ------------------------------ Pallas kernel ------------------------------ #

def _sppelan_kernel(x_ref, w1_ref, b1_ref, w5_ref, b5_ref, o_ref):
    # x_ref : (B, H, W, Cin)        NHWC activations (whole batch)
    # w1_ref: (Cin, Cn)             conv1 1x1 weight, BN scale pre-folded
    # b1_ref: (1, Cn)               conv1 folded BN bias
    # w5_ref: (2, 2*Cn, Cout)       conv5 1x1 weight, BN scale pre-folded,
    #                               split into two K=2*Cn blocks:
    #                               block0 multiplies (f1|f2), block1 (f3|f4)
    # b5_ref: (1, Cout)             conv5 folded BN bias
    # o_ref : (B, H, W, Cout)
    B, H, W, Cin = x_ref.shape
    Cn = w1_ref.shape[1]
    Cout = o_ref.shape[3]
    N = B * H * W
    # Stands in for the -inf padding of nn.MaxPool2d.  Safe here because every
    # pooled value is a SiLU output (> -0.28) or a max of such values.
    NEG = jnp.float32(-1e30)

    # ---------- hoisted constants (built once, reused by all 3 pools) --------
    # W-direction taps (+-1, +-2) are circular flat-row rolls; wrapped rows and
    # rows that cross an image-row boundary must be masked to NEG.  Deriving
    # the mask by rolling the w-index with the SAME primitive makes it
    # independent of the roll direction convention: a tap is valid iff the
    # delivered source column is within distance 2 (any wrap gives >= W-2).
    row = jax.lax.broadcasted_iota(jnp.int32, (N, Cn), 0)
    w_idx = row & (W - 1)                       # W is a power of two (asserted)
    w_shifts = (1, 2, N - 1, N - 2)             # == {+-1, +-2} mod N
    w_masks = []
    for s in w_shifts:
        d = pltpu.roll(w_idx, shift=s, axis=0) - w_idx
        w_masks.append((d >= -2) & (d <= 2))
    # H-direction -inf padding: 2 rows above / below every image (hoisted).
    neg_rows = jnp.full((B, 2, W, Cn), NEG, jnp.float32)

    def maxpool5(f):
        """MaxPool2d(kernel=5, stride=1, padding=2) on a flat (N, Cn) feature."""
        # ---- W pass: masked sublane rolls (XLU) + VPU max; no relayout copies.
        r = f
        for s, m in zip(w_shifts, w_masks):
            r = jnp.maximum(r, jnp.where(m, pltpu.roll(f, shift=s, axis=0), NEG))
        # ---- H pass: one NEG-padded buffer, aligned major-axis slices,
        #      log-step max tree (3 maxima instead of 4).
        ph = jnp.concatenate([neg_rows, r.reshape(B, H, W, Cn), neg_rows], axis=1)
        a = jnp.maximum(ph[:, 0:H + 3], ph[:, 1:H + 4])     # pairs  [i, i+1]
        b = jnp.maximum(a[:, 0:H + 1], a[:, 2:H + 3])       # quads  [i .. i+3]
        o = jnp.maximum(b[:, 0:H], ph[:, 4:H + 4])          # 5 taps [i .. i+4]
        return o.reshape(N, Cn)

    # ---------- conv1: 1x1 conv (BN scale folded) + bias + SiLU --------------
    x = x_ref[...].reshape(N, Cin)
    y = jnp.dot(x, w1_ref[...], preferred_element_type=jnp.float32) + b1_ref[...]
    f1 = y * jax.nn.sigmoid(y)                               # (N, Cn)

    # ---------- pooling chain interleaved with conv5 accumulation ------------
    # conv5 on concat(f1..f4) == sum_k f_k @ w5_block_k.  Blocks are paired so
    # each MXU matmul has K = 2*Cn and at most two features are live at once.
    f2 = maxpool5(f1)
    acc = jnp.dot(jnp.concatenate([f1, f2], axis=-1), w5_ref[0],
                  preferred_element_type=jnp.float32)        # (N, Cout)
    f3 = maxpool5(f2)
    f4 = maxpool5(f3)
    acc = acc + jnp.dot(jnp.concatenate([f3, f4], axis=-1), w5_ref[1],
                        preferred_element_type=jnp.float32)

    # ---------- conv5 epilogue: bias + SiLU -----------------------------------
    y5 = acc + b5_ref[...]
    y5 = y5 * jax.nn.sigmoid(y5)
    o_ref[...] = y5.reshape(B, H, W, Cout).astype(o_ref.dtype)


# ----------------------------- Pallas wrapper ------------------------------- #

def sppelan_forward_nhwc(x, p):
    """Fused SPPELAN forward.  NHWC in -> NHWC out (preferred entry point)."""
    B, H, W, Cin = x.shape
    Cn = p['w1'].shape[1]
    Cout = p['w5'].shape[2]
    # Fast-path layout requirements (free in-kernel reshapes + bitmask trick).
    assert W % 8 == 0 and (W & (W - 1)) == 0, "W must be a power of two >= 8"
    return pl.pallas_call(
        _sppelan_kernel,
        out_shape=jax.ShapeDtypeStruct((B, H, W, Cout), jnp.float32),
        grid=(),                                    # whole batch in one step
        in_specs=[
            pl.BlockSpec((B, H, W, Cin), lambda: (0, 0, 0, 0)),
            pl.BlockSpec((Cin, Cn), lambda: (0, 0)),
            pl.BlockSpec((1, Cn), lambda: (0, 0)),
            pl.BlockSpec((2, 2 * Cn, Cout), lambda: (0, 0, 0)),
            pl.BlockSpec((1, Cout), lambda: (0, 0)),
        ],
        out_specs=pl.BlockSpec((B, H, W, Cout), lambda: (0, 0, 0, 0)),
    )(x, p['w1'], p['b1'], p['w5'], p['b5'])


def sppelan_forward(x_nchw, p):
    """PyTorch-parity API (NCHW in -> NCHW out).  In a real pipeline keep the
    activations NHWC end-to-end and call sppelan_forward_nhwc directly: the
    two transposes below are XLA-side layout ops used only for parity tests."""
    x = jnp.transpose(x_nchw, (0, 2, 3, 1)).astype(jnp.float32)   # -> NHWC
    y = sppelan_forward_nhwc(x, p)
    return jnp.transpose(y, (0, 3, 1, 2))                          # -> NCHW


# ----------------------------- parameter setup ------------------------------ #

def _fold_bn(key, c, eps=1e-3):
    k1, k2, k3, k4 = jax.random.split(key, 4)
    gamma = 1.0 + 0.1 * jax.random.normal(k1, (c,), jnp.float32)
    beta = 0.05 * jax.random.normal(k2, (c,), jnp.float32)
    mean = 0.05 * jax.random.normal(k3, (c,), jnp.float32)
    var = 1.0 + 0.1 * jnp.abs(jax.random.normal(k4, (c,), jnp.float32))
    scale = gamma / jnp.sqrt(var + eps)
    bias = beta - mean * scale
    return scale, bias


def init_sppelan_params(key, in_channels, out_channels, neck_channels=None):
    """Random Conv+BN(eval) params with the BN scale folded into the weights."""
    neck = neck_channels or out_channels // 2
    k1, k2, k3, k4 = jax.random.split(key, 4)
    w1 = 0.1 * jax.random.normal(k1, (in_channels, neck), jnp.float32)
    w5 = 0.1 * jax.random.normal(k2, (4 * neck, out_channels), jnp.float32)
    s1, b1 = _fold_bn(k3, neck)
    s5, b5 = _fold_bn(k4, out_channels)
    w1_folded = w1 * s1[None, :]                              # per-out-channel
    w5_folded = (w5 * s5[None, :]).reshape(2, 2 * neck, out_channels)
    return dict(w1=w1_folded, b1=b1.reshape(1, neck),
                w5=w5_folded, b5=b5.reshape(1, out_channels))


# --------------------------- pure-JAX reference ----------------------------- #

def sppelan_forward_ref(x_nchw, p):
    x = jnp.transpose(x_nchw, (0, 2, 3, 1)).astype(jnp.float32)   # NHWC
    Cout = p['w5'].shape[2]

    y = jnp.einsum('bhwc,cd->bhwd', x, p['w1']) + p['b1'][0]
    f1 = y * jax.nn.sigmoid(y)

    def mp5(f):  # MaxPool2d(kernel=5, stride=1, padding=2), pad value = -inf
        return jax.lax.reduce_window(f, -jnp.inf, jax.lax.max,
                                     (1, 5, 5, 1), (1, 1, 1, 1), 'SAME')

    f2 = mp5(f1)
    f3 = mp5(f2)
    f4 = mp5(f3)

    cat = jnp.concatenate([f1, f2, f3, f4], axis=-1)
    w5_full = p['w5'].reshape(-1, Cout)
    y5 = jnp.einsum('bhwc,cd->bhwd', cat, w5_full) + p['b5'][0]
    y5 = y5 * jax.nn.sigmoid(y5)
    return jnp.transpose(y5, (0, 3, 1, 2))


# ---------------------------------- main ------------------------------------ #

if __name__ == "__main__":
    key = jax.random.PRNGKey(0)
    k_x, k_p = jax.random.split(key)

    B, Cin, H, W = 2, 64, 16, 16
    Cout = 128                               # neck = Cout // 2 = 64

    x = jax.random.normal(k_x, (B, Cin, H, W), jnp.float32)   # NCHW like PyTorch
    params = init_sppelan_params(k_p, Cin, Cout)

    fwd = jax.jit(sppelan_forward)
    out = fwd(x, params)
    jax.block_until_ready(out)
    assert out.shape == (B, Cout, H, W)

    out_ref = sppelan_forward_ref(x, params)
    np.testing.assert_allclose(np.asarray(out), np.asarray(out_ref),
                               rtol=2e-3, atol=2e-3)

    print("KERNEL_OK")
</pallas_src>

<mosaic_0001>
module attributes {stable_mosaic.version = 11 : i64} {
  func.func @_sppelan_kernel(%arg0: memref<2x16x16x64xf32, #tpu.memory_space<vmem>>, %arg1: memref<64x64xf32, #tpu.memory_space<vmem>>, %arg2: memref<1x64xf32, #tpu.memory_space<vmem>>, %arg3: memref<2x128x128xf32, #tpu.memory_space<vmem>>, %arg4: memref<1x128xf32, #tpu.memory_space<vmem>>, %arg5: memref<2x16x16x128xf32, #tpu.memory_space<vmem>>) attributes {dimension_semantics = [], scalar_prefetch = 0 : i64, scratch_operands = 0 : i64, tpu.core_type = #tpu.core_type<tc>} {
    %0 = tpu.iota {dimensions = array<i32: 0>} : vector<512x64xi32>
    %c15_i32 = arith.constant 15 : i32
    %1 = vector.broadcast %c15_i32 : i32 to vector<512x64xi32>
    %2 = arith.andi %0, %1 : vector<512x64xi32>
    %c1_i32 = arith.constant 1 : i32
    %3 = tpu.dynamic_rotate %2 by %c1_i32 dim 0 : vector<512x64xi32>, i32 -> vector<512x64xi32>
    %4 = arith.subi %3, %2 : vector<512x64xi32>
    %c-2_i32 = arith.constant -2 : i32
    %5 = vector.broadcast %c-2_i32 : i32 to vector<512x64xi32>
    %6 = arith.cmpi sge, %4, %5 : vector<512x64xi32>
    %c2_i32 = arith.constant 2 : i32
    %7 = vector.broadcast %c2_i32 : i32 to vector<512x64xi32>
    %8 = arith.cmpi sle, %4, %7 : vector<512x64xi32>
    %9 = arith.andi %6, %8 : vector<512x64xi1>
    %c2_i32_0 = arith.constant 2 : i32
    %10 = tpu.dynamic_rotate %2 by %c2_i32_0 dim 0 : vector<512x64xi32>, i32 -> vector<512x64xi32>
    %11 = arith.subi %10, %2 : vector<512x64xi32>
    %c-2_i32_1 = arith.constant -2 : i32
    %12 = vector.broadcast %c-2_i32_1 : i32 to vector<512x64xi32>
    %13 = arith.cmpi sge, %11, %12 : vector<512x64xi32>
    %c2_i32_2 = arith.constant 2 : i32
    %14 = vector.broadcast %c2_i32_2 : i32 to vector<512x64xi32>
    %15 = arith.cmpi sle, %11, %14 : vector<512x64xi32>
    %16 = arith.andi %13, %15 : vector<512x64xi1>
    %c511_i32 = arith.constant 511 : i32
    %17 = tpu.dynamic_rotate %2 by %c511_i32 dim 0 : vector<512x64xi32>, i32 -> vector<512x64xi32>
    %18 = arith.subi %17, %2 : vector<512x64xi32>
    %c-2_i32_3 = arith.constant -2 : i32
    %19 = vector.broadcast %c-2_i32_3 : i32 to vector<512x64xi32>
    %20 = arith.cmpi sge, %18, %19 : vector<512x64xi32>
    %c2_i32_4 = arith.constant 2 : i32
    %21 = vector.broadcast %c2_i32_4 : i32 to vector<512x64xi32>
    %22 = arith.cmpi sle, %18, %21 : vector<512x64xi32>
    %23 = arith.andi %20, %22 : vector<512x64xi1>
    %c510_i32 = arith.constant 510 : i32
    %24 = tpu.dynamic_rotate %2 by %c510_i32 dim 0 : vector<512x64xi32>, i32 -> vector<512x64xi32>
    %25 = arith.subi %24, %2 : vector<512x64xi32>
    %c-2_i32_5 = arith.constant -2 : i32
    %26 = vector.broadcast %c-2_i32_5 : i32 to vector<512x64xi32>
    %27 = arith.cmpi sge, %25, %26 : vector<512x64xi32>
    %c2_i32_6 = arith.constant 2 : i32
    %28 = vector.broadcast %c2_i32_6 : i32 to vector<512x64xi32>
    %29 = arith.cmpi sle, %25, %28 : vector<512x64xi32>
    %30 = arith.andi %27, %29 : vector<512x64xi1>
    %cst = arith.constant -1.000000e+30 : f32
    %31 = vector.broadcast %cst : f32 to vector<2x2x16x64xf32>
    %c0 = arith.constant 0 : index
    %c0_7 = arith.constant 0 : index
    %c0_8 = arith.constant 0 : index
    %c0_9 = arith.constant 0 : index
    %32 = vector.load %arg0[%c0, %c0_7, %c0_8, %c0_9] : memref<2x16x16x64xf32, #tpu.memory_space<vmem>>, vector<2x16x16x64xf32>
    %33 = vector.shape_cast %32 : vector<2x16x16x64xf32> to vector<512x64xf32>
    %c0_10 = arith.constant 0 : index
    %c0_11 = arith.constant 0 : index
    %34 = vector.load %arg1[%c0_10, %c0_11] : memref<64x64xf32, #tpu.memory_space<vmem>>, vector<64x64xf32>
    %cst_12 = arith.constant dense<0.000000e+00> : vector<512x64xf32>
    %35 = tpu.matmul %33, %34, %cst_12 {dimension_numbers = #tpu.dot_dimension_numbers<[1], [0], [0], [1], [0, 0, 1, 1], [], []>} : vector<512x64xf32>, vector<64x64xf32>, vector<512x64xf32> -> vector<512x64xf32>
    %c0_13 = arith.constant 0 : index
    %c0_14 = arith.constant 0 : index
    %36 = vector.load %arg2[%c0_13, %c0_14] : memref<1x64xf32, #tpu.memory_space<vmem>>, vector<1x64xf32>
    %37 = vector.broadcast %36 : vector<1x64xf32> to vector<512x64xf32>
    %38 = arith.addf %35, %37 : vector<512x64xf32>
    %39 = arith.negf %38 : vector<512x64xf32>
    %40 = math.exp %39 : vector<512x64xf32>
    %cst_15 = arith.constant 1.000000e+00 : f32
    %41 = vector.broadcast %cst_15 : f32 to vector<512x64xf32>
    %42 = arith.addf %41, %40 : vector<512x64xf32>
    %43 = arith.divf %41, %42 : vector<512x64xf32>
    %44 = arith.mulf %38, %43 : vector<512x64xf32>
    %c1_i32_16 = arith.constant 1 : i32
    %45 = tpu.dynamic_rotate %44 by %c1_i32_16 dim 0 : vector<512x64xf32>, i32 -> vector<512x64xf32>
    %cst_17 = arith.constant -1.000000e+30 : f32
    %46 = vector.broadcast %cst_17 : f32 to vector<512x64xf32>
    %47 = arith.select %9, %45, %46 : vector<512x64xi1>, vector<512x64xf32>
    %48 = arith.maximumf %44, %47 : vector<512x64xf32>
    %c2_i32_18 = arith.constant 2 : i32
    %49 = tpu.dynamic_rotate %44 by %c2_i32_18 dim 0 : vector<512x64xf32>, i32 -> vector<512x64xf32>
    %cst_19 = arith.constant -1.000000e+30 : f32
    %50 = vector.broadcast %cst_19 : f32 to vector<512x64xf32>
    %51 = arith.select %16, %49, %50 : vector<512x64xi1>, vector<512x64xf32>
    %52 = arith.maximumf %48, %51 : vector<512x64xf32>
    %c511_i32_20 = arith.constant 511 : i32
    %53 = tpu.dynamic_rotate %44 by %c511_i32_20 dim 0 : vector<512x64xf32>, i32 -> vector<512x64xf32>
    %cst_21 = arith.constant -1.000000e+30 : f32
    %54 = vector.broadcast %cst_21 : f32 to vector<512x64xf32>
    %55 = arith.select %23, %53, %54 : vector<512x64xi1>, vector<512x64xf32>
    %56 = arith.maximumf %52, %55 : vector<512x64xf32>
    %c510_i32_22 = arith.constant 510 : i32
    %57 = tpu.dynamic_rotate %44 by %c510_i32_22 dim 0 : vector<512x64xf32>, i32 -> vector<512x64xf32>
    %cst_23 = arith.constant -1.000000e+30 : f32
    %58 = vector.broadcast %cst_23 : f32 to vector<512x64xf32>
    %59 = arith.select %30, %57, %58 : vector<512x64xi1>, vector<512x64xf32>
    %60 = arith.maximumf %56, %59 : vector<512x64xf32>
    %61 = vector.shape_cast %60 : vector<512x64xf32> to vector<2x16x16x64xf32>
    %62 = tpu.concatenate %31, %61, %31 in 1 : vector<2x2x16x64xf32>, vector<2x16x16x64xf32>, vector<2x2x16x64xf32> -> vector<2x20x16x64xf32>
    %63 = vector.extract_strided_slice %62 {offsets = [0, 0, 0, 0], sizes = [2, 19, 16, 64], strides = [1, 1, 1, 1]} : vector<2x20x16x64xf32> to vector<2x19x16x64xf32>
    %64 = vector.extract_strided_slice %62 {offsets = [0, 1, 0, 0], sizes = [2, 19, 16, 64], strides = [1, 1, 1, 1]} : vector<2x20x16x64xf32> to vector<2x19x16x64xf32>
    %65 = arith.maximumf %63, %64 : vector<2x19x16x64xf32>
    %66 = vector.extract_strided_slice %65 {offsets = [0, 0, 0, 0], sizes = [2, 17, 16, 64], strides = [1, 1, 1, 1]} : vector<2x19x16x64xf32> to vector<2x17x16x64xf32>
    %67 = vector.extract_strided_slice %65 {offsets = [0, 2, 0, 0], sizes = [2, 17, 16, 64], strides = [1, 1, 1, 1]} : vector<2x19x16x64xf32> to vector<2x17x16x64xf32>
    %68 = arith.maximumf %66, %67 : vector<2x17x16x64xf32>
    %69 = vector.extract_strided_slice %68 {offsets = [0, 0, 0, 0], sizes = [2, 16, 16, 64], strides = [1, 1, 1, 1]} : vector<2x17x16x64xf32> to vector<2x16x16x64xf32>
    %70 = vector.extract_strided_slice %62 {offsets = [0, 4, 0, 0], sizes = [2, 16, 16, 64], strides = [1, 1, 1, 1]} : vector<2x20x16x64xf32> to vector<2x16x16x64xf32>
    %71 = arith.maximumf %69, %70 : vector<2x16x16x64xf32>
    %72 = vector.shape_cast %71 : vector<2x16x16x64xf32> to vector<512x64xf32>
    %73 = tpu.concatenate %44, %72 in 1 : vector<512x64xf32>, vector<512x64xf32> -> vector<512x128xf32>
    %c0_24 = arith.constant 0 : index
    %c0_25 = arith.constant 0 : index
    %c0_26 = arith.constant 0 : index
    %74 = vector.load %arg3[%c0_24, %c0_25, %c0_26] : memref<2x128x128xf32, #tpu.memory_space<vmem>>, vector<1x128x128xf32>
    %75 = vector.shape_cast %74 : vector<1x128x128xf32> to vector<128x128xf32>
    %cst_27 = arith.constant dense<0.000000e+00> : vector<512x128xf32>
    %76 = tpu.matmul %73, %75, %cst_27 {dimension_numbers = #tpu.dot_dimension_numbers<[1], [0], [0], [1], [0, 0, 1, 1], [], []>} : vector<512x128xf32>, vector<128x128xf32>, vector<512x128xf32> -> vector<512x128xf32>
    %c1_i32_28 = arith.constant 1 : i32
    %77 = tpu.dynamic_rotate %72 by %c1_i32_28 dim 0 : vector<512x64xf32>, i32 -> vector<512x64xf32>
    %cst_29 = arith.constant -1.000000e+30 : f32
    %78 = vector.broadcast %cst_29 : f32 to vector<512x64xf32>
    %79 = arith.select %9, %77, %78 : vector<512x64xi1>, vector<512x64xf32>
    %80 = arith.maximumf %72, %79 : vector<512x64xf32>
    %c2_i32_30 = arith.constant 2 : i32
    %81 = tpu.dynamic_rotate %72 by %c2_i32_30 dim 0 : vector<512x64xf32>, i32 -> vector<512x64xf32>
    %cst_31 = arith.constant -1.000000e+30 : f32
    %82 = vector.broadcast %cst_31 : f32 to vector<512x64xf32>
    %83 = arith.select %16, %81, %82 : vector<512x64xi1>, vector<512x64xf32>
    %84 = arith.maximumf %80, %83 : vector<512x64xf32>
    %c511_i32_32 = arith.constant 511 : i32
    %85 = tpu.dynamic_rotate %72 by %c511_i32_32 dim 0 : vector<512x64xf32>, i32 -> vector<512x64xf32>
    %cst_33 = arith.constant -1.000000e+30 : f32
    %86 = vector.broadcast %cst_33 : f32 to vector<512x64xf32>
    %87 = arith.select %23, %85, %86 : vector<512x64xi1>, vector<512x64xf32>
    %88 = arith.maximumf %84, %87 : vector<512x64xf32>
    %c510_i32_34 = arith.constant 510 : i32
    %89 = tpu.dynamic_rotate %72 by %c510_i32_34 dim 0 : vector<512x64xf32>, i32 -> vector<512x64xf32>
    %cst_35 = arith.constant -1.000000e+30 : f32
    %90 = vector.broadcast %cst_35 : f32 to vector<512x64xf32>
    %91 = arith.select %30, %89, %90 : vector<512x64xi1>, vector<512x64xf32>
    %92 = arith.maximumf %88, %91 : vector<512x64xf32>
    %93 = vector.shape_cast %92 : vector<512x64xf32> to vector<2x16x16x64xf32>
    %94 = tpu.concatenate %31, %93, %31 in 1 : vector<2x2x16x64xf32>, vector<2x16x16x64xf32>, vector<2x2x16x64xf32> -> vector<2x20x16x64xf32>
    %95 = vector.extract_strided_slice %94 {offsets = [0, 0, 0, 0], sizes = [2, 19, 16, 64], strides = [1, 1, 1, 1]} : vector<2x20x16x64xf32> to vector<2x19x16x64xf32>
    %96 = vector.extract_strided_slice %94 {offsets = [0, 1, 0, 0], sizes = [2, 19, 16, 64], strides = [1, 1, 1, 1]} : vector<2x20x16x64xf32> to vector<2x19x16x64xf32>
    %97 = arith.maximumf %95, %96 : vector<2x19x16x64xf32>
    %98 = vector.extract_strided_slice %97 {offsets = [0, 0, 0, 0], sizes = [2, 17, 16, 64], strides = [1, 1, 1, 1]} : vector<2x19x16x64xf32> to vector<2x17x16x64xf32>
    %99 = vector.extract_strided_slice %97 {offsets = [0, 2, 0, 0], sizes = [2, 17, 16, 64], strides = [1, 1, 1, 1]} : vector<2x19x16x64xf32> to vector<2x17x16x64xf32>
    %100 = arith.maximumf %98, %99 : vector<2x17x16x64xf32>
    %101 = vector.extract_strided_slice %100 {offsets = [0, 0, 0, 0], sizes = [2, 16, 16, 64], strides = [1, 1, 1, 1]} : vector<2x17x16x64xf32> to vector<2x16x16x64xf32>
    %102 = vector.extract_strided_slice %94 {offsets = [0, 4, 0, 0], sizes = [2, 16, 16, 64], strides = [1, 1, 1, 1]} : vector<2x20x16x64xf32> to vector<2x16x16x64xf32>
    %103 = arith.maximumf %101, %102 : vector<2x16x16x64xf32>
    %104 = vector.shape_cast %103 : vector<2x16x16x64xf32> to vector<512x64xf32>
    %c1_i32_36 = arith.constant 1 : i32
    %105 = tpu.dynamic_rotate %104 by %c1_i32_36 dim 0 : vector<512x64xf32>, i32 -> vector<512x64xf32>
    %cst_37 = arith.constant -1.000000e+30 : f32
    %106 = vector.broadcast %cst_37 : f32 to vector<512x64xf32>
    %107 = arith.select %9, %105, %106 : vector<512x64xi1>, vector<512x64xf32>
    %108 = arith.maximumf %104, %107 : vector<512x64xf32>
    %c2_i32_38 = arith.constant 2 : i32
    %109 = tpu.dynamic_rotate %104 by %c2_i32_38 dim 0 : vector<512x64xf32>, i32 -> vector<512x64xf32>
    %cst_39 = arith.constant -1.000000e+30 : f32
    %110 = vector.broadcast %cst_39 : f32 to vector<512x64xf32>
    %111 = arith.select %16, %109, %110 : vector<512x64xi1>, vector<512x64xf32>
    %112 = arith.maximumf %108, %111 : vector<512x64xf32>
    %c511_i32_40 = arith.constant 511 : i32
    %113 = tpu.dynamic_rotate %104 by %c511_i32_40 dim 0 : vector<512x64xf32>, i32 -> vector<512x64xf32>
    %cst_41 = arith.constant -1.000000e+30 : f32
    %114 = vector.broadcast %cst_41 : f32 to vector<512x64xf32>
    %115 = arith.select %23, %113, %114 : vector<512x64xi1>, vector<512x64xf32>
    %116 = arith.maximumf %112, %115 : vector<512x64xf32>
    %c510_i32_42 = arith.constant 510 : i32
    %117 = tpu.dynamic_rotate %104 by %c510_i32_42 dim 0 : vector<512x64xf32>, i32 -> vector<512x64xf32>
    %cst_43 = arith.constant -1.000000e+30 : f32
    %118 = vector.broadcast %cst_43 : f32 to vector<512x64xf32>
    %119 = arith.select %30, %117, %118 : vector<512x64xi1>, vector<512x64xf32>
    %120 = arith.maximumf %116, %119 : vector<512x64xf32>
    %121 = vector.shape_cast %120 : vector<512x64xf32> to vector<2x16x16x64xf32>
    %122 = tpu.concatenate %31, %121, %31 in 1 : vector<2x2x16x64xf32>, vector<2x16x16x64xf32>, vector<2x2x16x64xf32> -> vector<2x20x16x64xf32>
    %123 = vector.extract_strided_slice %122 {offsets = [0, 0, 0, 0], sizes = [2, 19, 16, 64], strides = [1, 1, 1, 1]} : vector<2x20x16x64xf32> to vector<2x19x16x64xf32>
    %124 = vector.extract_strided_slice %122 {offsets = [0, 1, 0, 0], sizes = [2, 19, 16, 64], strides = [1, 1, 1, 1]} : vector<2x20x16x64xf32> to vector<2x19x16x64xf32>
    %125 = arith.maximumf %123, %124 : vector<2x19x16x64xf32>
    %126 = vector.extract_strided_slice %125 {offsets = [0, 0, 0, 0], sizes = [2, 17, 16, 64], strides = [1, 1, 1, 1]} : vector<2x19x16x64xf32> to vector<2x17x16x64xf32>
    %127 = vector.extract_strided_slice %125 {offsets = [0, 2, 0, 0], sizes = [2, 17, 16, 64], strides = [1, 1, 1, 1]} : vector<2x19x16x64xf32> to vector<2x17x16x64xf32>
    %128 = arith.maximumf %126, %127 : vector<2x17x16x64xf32>
    %129 = vector.extract_strided_slice %128 {offsets = [0, 0, 0, 0], sizes = [2, 16, 16, 64], strides = [1, 1, 1, 1]} : vector<2x17x16x64xf32> to vector<2x16x16x64xf32>
    %130 = vector.extract_strided_slice %122 {offsets = [0, 4, 0, 0], sizes = [2, 16, 16, 64], strides = [1, 1, 1, 1]} : vector<2x20x16x64xf32> to vector<2x16x16x64xf32>
    %131 = arith.maximumf %129, %130 : vector<2x16x16x64xf32>
    %132 = vector.shape_cast %131 : vector<2x16x16x64xf32> to vector<512x64xf32>
    %133 = tpu.concatenate %104, %132 in 1 : vector<512x64xf32>, vector<512x64xf32> -> vector<512x128xf32>
    %c1 = arith.constant 1 : index
    %c0_44 = arith.constant 0 : index
    %c0_45 = arith.constant 0 : index
    %134 = vector.load %arg3[%c1, %c0_44, %c0_45] : memref<2x128x128xf32, #tpu.memory_space<vmem>>, vector<1x128x128xf32>
    %135 = vector.shape_cast %134 : vector<1x128x128xf32> to vector<128x128xf32>
    %cst_46 = arith.constant dense<0.000000e+00> : vector<512x128xf32>
    %136 = tpu.matmul %133, %135, %cst_46 {dimension_numbers = #tpu.dot_dimension_numbers<[1], [0], [0], [1], [0, 0, 1, 1], [], []>} : vector<512x128xf32>, vector<128x128xf32>, vector<512x128xf32> -> vector<512x128xf32>
    %137 = arith.addf %76, %136 : vector<512x128xf32>
    %c0_47 = arith.constant 0 : index
    %c0_48 = arith.constant 0 : index
    %138 = vector.load %arg4[%c0_47, %c0_48] : memref<1x128xf32, #tpu.memory_space<vmem>>, vector<1x128xf32>
    %139 = vector.broadcast %138 : vector<1x128xf32> to vector<512x128xf32>
    %140 = arith.addf %137, %139 : vector<512x128xf32>
    %141 = arith.negf %140 : vector<512x128xf32>
    %142 = math.exp %141 : vector<512x128xf32>
    %cst_49 = arith.constant 1.000000e+00 : f32
    %143 = vector.broadcast %cst_49 : f32 to vector<512x128xf32>
    %144 = arith.addf %143, %142 : vector<512x128xf32>
    %145 = arith.divf %143, %144 : vector<512x128xf32>
    %146 = arith.mulf %140, %145 : vector<512x128xf32>
    %147 = vector.shape_cast %146 : vector<512x128xf32> to vector<2x16x16x128xf32>
    %c0_50 = arith.constant 0 : index
    %c0_51 = arith.constant 0 : index
    %c0_52 = arith.constant 0 : index
    %c0_53 = arith.constant 0 : index
    %148 = vector.load %arg5[%c0_50, %c0_51, %c0_52, %c0_53] : memref<2x16x16x128xf32, #tpu.memory_space<vmem>>, vector<2x16x16x128xf32>
    tpu.vector_store %arg5[%c0_50, %c0_51, %c0_52, %c0_53], %147 {strides = array<i32>} : memref<2x16x16x128xf32, #tpu.memory_space<vmem>>, vector<2x16x16x128xf32>,
    return
  }
}

</mosaic_0001>

<llo_original>
// kernel: sppelan_forward.1
$region0: #{sppelan_forward.1}
  #allocation0 [shape = 'u32[]', space=smem, size = 0x4, offset = 0x4, fixed_abs, tag = 'smem constant byte address 0x4 - core index']
  #allocation1 [shape = 'u32[144,128]{1,0:T(1,128)}', space=vmem, size = 0x12000, scoped, tag = 'internal scratch']
  %s0 = inlined_call_operand.hbm [shape: f32[2,16,16,64], index: 0, kind: input, shape index: {}]
  %s1 = inlined_call_operand.hbm [shape: f32[64,64], index: 1, kind: input, shape index: {}]
  %s2 = inlined_call_operand.vmem [shape: f32[1,64], index: 2, kind: input, shape index: {}]
  %s3 = inlined_call_operand.hbm [shape: f32[2,128,128], index: 3, kind: input, shape index: {}]
  %s4 = inlined_call_operand.vmem [shape: f32[1,128], index: 4, kind: input, shape index: {}]
  %s5 = inlined_call_operand.hbm [shape: f32[2,16,16,128], index: 5, kind: output, shape index: {}]
  %s6 = sld [smem:[#allocation0]]
  $region42: #{sppelan_forward.1} parent=0
    _
  %s8 = ssub.s32 1, %s6
  %s9 = scalar_select 0, %s8, %s6
  $region1: #{sppelan_forward.1} parent=0
    #allocation2 [shape = 'u8[262144]{0}', space=vmem, size = 0x40000, scoped, tag = 'input window, operand 0, single buffered']
    #allocation3 [shape = 's32[1]{0}', space=sflag, size = 0x4, scoped, tag = 'scoped memory for sppelan_forward.1']
    #allocation4 [shape = 's32[1]{0}', space=sflag, size = 0x4, scoped, tag = 'scoped memory for sppelan_forward.1']
    #allocation5 [shape = 'u8[32768]{0}', space=vmem, size = 0x8000, scoped, tag = 'input window, operand 1, single buffered']
    #allocation6 [shape = 's32[1]{0}', space=sflag, size = 0x4, scoped, tag = 'scoped memory for sppelan_forward.1']
    #allocation7 [shape = 'u8[131072]{0}', space=vmem, size = 0x20000, scoped, tag = 'input window, operand 3, single buffered']
    #allocation8 [shape = 'u8[262144]{0}', space=vmem, size = 0x40000, scoped, tag = 'output window, operand 0, single buffered']
    %10 = vsyncpa [#allocation3], 0
    %11 = vsyncpa [#allocation6], 0
    %12 = vsyncpa [#allocation4], 0
    // Predicated region
    $region2: #{sppelan_forward.1} parent=1 // pred_check
      _
    $region3: #{sppelan_forward.1} parent=1 // pred_check_branch
      %14 = sbr.rel (0) target = $region5
    $region4: #{sppelan_forward.1} parent=1 // pred_region
      %s16 = ssub.s32 8192, 8192
      %17 = vsyncadd [#allocation3], %s16
      %s18 = sshll.u32 [#allocation2], 4
      %s19 = int_to_ptr.vmem [resolvable:$true] %s18
      %24 = dma.hbm_to_vmem [thread:$0]  %s0, 8192, %s19, [#allocation3], 128, 128, 8
    $region5: #{sppelan_forward.1} parent=1 // pred_fallthru
      _
    // Predicated region
    $region6: #{sppelan_forward.1} parent=1 // pred_check
      _
    $region7: #{sppelan_forward.1} parent=1 // pred_check_branch
      %26 = sbr.rel (0) target = $region9
    $region8: #{sppelan_forward.1} parent=1 // pred_region
      %s28 = ssub.s32 1024, 1024
      %29 = vsyncadd [#allocation6], %s28
      %s30 = sshll.u32 [#allocation5], 4
      %s31 = int_to_ptr.vmem [resolvable:$true] %s30
      %36 = dma.hbm_to_vmem [thread:$0]  %s1, 1024, %s31, [#allocation6], 128, 128, 8
    $region9: #{sppelan_forward.1} parent=1 // pred_fallthru
      _
    // Predicated region
    $region10: #{sppelan_forward.1} parent=1 // pred_check
      _
    $region11: #{sppelan_forward.1} parent=1 // pred_check_branch
      %38 = sbr.rel (0) target = $region13
    $region12: #{sppelan_forward.1} parent=1 // pred_region
      _
    $region13: #{sppelan_forward.1} parent=1 // pred_fallthru
      _
    // Predicated region
    $region14: #{sppelan_forward.1} parent=1 // pred_check
      _
    $region15: #{sppelan_forward.1} parent=1 // pred_check_branch
      %40 = sbr.rel (0) target = $region17
    $region16: #{sppelan_forward.1} parent=1 // pred_region
      %s42 = ssub.s32 4096, 4096
      %43 = vsyncadd [#allocation6], %s42
      %s44 = sshll.u32 [#allocation7], 4
      %s45 = int_to_ptr.vmem [resolvable:$true] %s44
      %50 = dma.hbm_to_vmem [thread:$0]  %s3, 4096, %s45, [#allocation6], 128, 128, 8
    $region17: #{sppelan_forward.1} parent=1 // pred_fallthru
      _
    // Predicated region
    $region18: #{sppelan_forward.1} parent=1 // pred_check
      _
    $region19: #{sppelan_forward.1} parent=1 // pred_check_branch
      %52 = sbr.rel (0) target = $region21
    $region20: #{sppelan_forward.1} parent=1 // pred_region
      _
    $region21: #{sppelan_forward.1} parent=1 // pred_fallthru
      _
    // Predicated region
    $region22: #{sppelan_forward.1} parent=1 // pred_check
      _
    $region23: #{sppelan_forward.1} parent=1 // pred_check_branch
      %54 = sbr.rel (0) target = $region25
    $region24: #{sppelan_forward.1} parent=1 // pred_region
      %55 = dma.done [#allocation3], 8192
    $region25: #{sppelan_forward.1} parent=1 // pred_fallthru
      _
    // Predicated region
    $region26: #{sppelan_forward.1} parent=1 // pred_check
      _
    $region27: #{sppelan_forward.1} parent=1 // pred_check_branch
      %57 = sbr.rel (0) target = $region29
    $region28: #{sppelan_forward.1} parent=1 // pred_region
      %58 = dma.done [#allocation6], 1024
    $region29: #{sppelan_forward.1} parent=1 // pred_fallthru
      _
    // Predicated region
    $region30: #{sppelan_forward.1} parent=1 // pred_check
      _
    $region31: #{sppelan_forward.1} parent=1 // pred_check_branch
      %60 = sbr.rel (0) target = $region33
    $region32: #{sppelan_forward.1} parent=1 // pred_region
      %61 = dma.done [#allocation6], 4096
    $region33: #{sppelan_forward.1} parent=1 // pred_fallthru
      _
    %v62 = vlaneseq
    %v63 = vshrl.u32 %v62, 7
    %v64 = vadd.s32 %v63, 8
    %v65 = vadd.s32 %v63, 16
    %v66 = vadd.s32 %v63, 24
    %v67 = vadd.s32 %v63, 32
    %v68 = vadd.s32 %v63, 40
    %v69 = vadd.s32 %v63, 48
    %v70 = vadd.s32 %v63, 56
    %v71 = vadd.s32 %v63, 64
    %v72 = vadd.s32 %v63, 72
    %v73 = vadd.s32 %v63, 80
    %v74 = vadd.s32 %v63, 88
    %v75 = vadd.s32 %v63, 96
    %v76 = vadd.s32 %v63, 104
    %v77 = vadd.s32 %v63, 112
    %v78 = vadd.s32 %v63, 120
    %v79 = vadd.s32 %v63, 128
    %v80 = vadd.s32 %v63, 136
    %v81 = vadd.s32 %v63, 144
    %v82 = vadd.s32 %v63, 152
    %v83 = vadd.s32 %v63, 160
    %v84 = vadd.s32 %v63, 168
    %v85 = vadd.s32 %v63, 176
    %v86 = vadd.s32 %v63, 184
    %v87 = vadd.s32 %v63, 192
    %v88 = vadd.s32 %v63, 200
    %v89 = vadd.s32 %v63, 208
    %v90 = vadd.s32 %v63, 216
    %v91 = vadd.s32 %v63, 224
    %v92 = vadd.s32 %v63, 232
    %v93 = vadd.s32 %v63, 240
    %v94 = vadd.s32 %v63, 248
    %v95 = vadd.s32 %v63, 256
    %v96 = vadd.s32 %v63, 264
    %v97 = vadd.s32 %v63, 272
    %v98 = vadd.s32 %v63, 280
    %v99 = vadd.s32 %v63, 288
    %v100 = vadd.s32 %v63, 296
    %v101 = vadd.s32 %v63, 304
    %v102 = vadd.s32 %v63, 312
    %v103 = vadd.s32 %v63, 320
    %v104 = vadd.s32 %v63, 328
    %v105 = vadd.s32 %v63, 336
    %v106 = vadd.s32 %v63, 344
    %v107 = vadd.s32 %v63, 352
    %v108 = vadd.s32 %v63, 360
    %v109 = vadd.s32 %v63, 368
    %v110 = vadd.s32 %v63, 376
    %v111 = vadd.s32 %v63, 384
    %v112 = vadd.s32 %v63, 392
    %v113 = vadd.s32 %v63, 400
    %v114 = vadd.s32 %v63, 408
    %v115 = vadd.s32 %v63, 416
    %v116 = vadd.s32 %v63, 424
    %v117 = vadd.s32 %v63, 432
    %v118 = vadd.s32 %v63, 440
    %v119 = vadd.s32 %v63, 448
    %v120 = vadd.s32 %v63, 456
    %v121 = vadd.s32 %v63, 464
    %v122 = vadd.s32 %v63, 472
    %v123 = vadd.s32 %v63, 480
    %v124 = vadd.s32 %v63, 488
    %v125 = vadd.s32 %v63, 496
    %v126 = vadd.s32 %v63, 504
    %v127 = vand.u32 %v63, 15
    %v128 = vand.u32 %v64, 15
    %v129 = vand.u32 %v65, 15
    %v130 = vand.u32 %v66, 15
    %v131 = vand.u32 %v67, 15
    %v132 = vand.u32 %v68, 15
    %v133 = vand.u32 %v69, 15
    %v134 = vand.u32 %v70, 15
    %v135 = vand.u32 %v71, 15
    %v136 = vand.u32 %v72, 15
    %v137 = vand.u32 %v73, 15
    %v138 = vand.u32 %v74, 15
    %v139 = vand.u32 %v75, 15
    %v140 = vand.u32 %v76, 15
    %v141 = vand.u32 %v77, 15
    %v142 = vand.u32 %v78, 15
    %v143 = vand.u32 %v79, 15
    %v144 = vand.u32 %v80, 15
    %v145 = vand.u32 %v81, 15
    %v146 = vand.u32 %v82, 15
    %v147 = vand.u32 %v83, 15
    %v148 = vand.u32 %v84, 15
    %v149 = vand.u32 %v85, 15
    %v150 = vand.u32 %v86, 15
    %v151 = vand.u32 %v87, 15
    %v152 = vand.u32 %v88, 15
    %v153 = vand.u32 %v89, 15
    %v154 = vand.u32 %v90, 15
    %v155 = vand.u32 %v91, 15
    %v156 = vand.u32 %v92, 15
    %v157 = vand.u32 %v93, 15
    %v158 = vand.u32 %v94, 15
    %v159 = vand.u32 %v95, 15
    %v160 = vand.u32 %v96, 15
    %v161 = vand.u32 %v97, 15
    %v162 = vand.u32 %v98, 15
    %v163 = vand.u32 %v99, 15
    %v164 = vand.u32 %v100, 15
    %v165 = vand.u32 %v101, 15
    %v166 = vand.u32 %v102, 15
    %v167 = vand.u32 %v103, 15
    %v168 = vand.u32 %v104, 15
    %v169 = vand.u32 %v105, 15
    %v170 = vand.u32 %v106, 15
    %v171 = vand.u32 %v107, 15
    %v172 = vand.u32 %v108, 15
    %v173 = vand.u32 %v109, 15
    %v174 = vand.u32 %v110, 15
    %v175 = vand.u32 %v111, 15
    %v176 = vand.u32 %v112, 15
    %v177 = vand.u32 %v113, 15
    %v178 = vand.u32 %v114, 15
    %v179 = vand.u32 %v115, 15
    %v180 = vand.u32 %v116, 15
    %v181 = vand.u32 %v117, 15
    %v182 = vand.u32 %v118, 15
    %v183 = vand.u32 %v119, 15
    %v184 = vand.u32 %v120, 15
    %v185 = vand.u32 %v121, 15
    %v186 = vand.u32 %v122, 15
    %v187 = vand.u32 %v123, 15
    %v188 = vand.u32 %v124, 15
    %v189 = vand.u32 %v125, 15
    %v190 = vand.u32 %v126, 15
    %v191 = vrot.slane %v127, 7
    %v192 = vrot.slane %v128, 7
    %v193 = vrot.slane %v129, 7
    %v194 = vrot.slane %v130, 7
    %v195 = vrot.slane %v131, 7
    %v196 = vrot.slane %v132, 7
    %v197 = vrot.slane %v133, 7
    %v198 = vrot.slane %v134, 7
    %v199 = vrot.slane %v135, 7
    %v200 = vrot.slane %v136, 7
    %v201 = vrot.slane %v137, 7
    %v202 = vrot.slane %v138, 7
    %v203 = vrot.slane %v139, 7
    %v204 = vrot.slane %v140, 7
    %v205 = vrot.slane %v141, 7
    %v206 = vrot.slane %v142, 7
    %v207 = vrot.slane %v143, 7
    %v208 = vrot.slane %v144, 7
    %v209 = vrot.slane %v145, 7
    %v210 = vrot.slane %v146, 7
    %v211 = vrot.slane %v147, 7
    %v212 = vrot.slane %v148, 7
    %v213 = vrot.slane %v149, 7
    %v214 = vrot.slane %v150, 7
    %v215 = vrot.slane %v151, 7
    %v216 = vrot.slane %v152, 7
    %v217 = vrot.slane %v153, 7
    %v218 = vrot.slane %v154, 7
    %v219 = vrot.slane %v155, 7
    %v220 = vrot.slane %v156, 7
    %v221 = vrot.slane %v157, 7
    %v222 = vrot.slane %v158, 7
    %v223 = vrot.slane %v159, 7
    %v224 = vrot.slane %v160, 7
    %v225 = vrot.slane %v161, 7
    %v226 = vrot.slane %v162, 7
    %v227 = vrot.slane %v163, 7
    %v228 = vrot.slane %v164, 7
    %v229 = vrot.slane %v165, 7
    %v230 = vrot.slane %v166, 7
    %v231 = vrot.slane %v167, 7
    %v232 = vrot.slane %v168, 7
    %v233 = vrot.slane %v169, 7
    %v234 = vrot.slane %v170, 7
    %v235 = vrot.slane %v171, 7
    %v236 = vrot.slane %v172, 7
    %v237 = vrot.slane %v173, 7
    %v238 = vrot.slane %v174, 7
    %v239 = vrot.slane %v175, 7
    %v240 = vrot.slane %v176, 7
    %v241 = vrot.slane %v177, 7
    %v242 = vrot.slane %v178, 7
    %v243 = vrot.slane %v179, 7
    %v244 = vrot.slane %v180, 7
    %v245 = vrot.slane %v181, 7
    %v246 = vrot.slane %v182, 7
    %v247 = vrot.slane %v183, 7
    %v248 = vrot.slane %v184, 7
    %v249 = vrot.slane %v185, 7
    %v250 = vrot.slane %v186, 7
    %v251 = vrot.slane %v187, 7
    %v252 = vrot.slane %v188, 7
    %v253 = vrot.slane %v189, 7
    %v254 = vrot.slane %v190, 7
    %vm255 = vcmp.lt.s32.totalorder %v63, 1
    %v256 = vsel %vm255, %v253, %v254
    %v257 = vsel %vm255, %v252, %v253
    %v258 = vsel %vm255, %v251, %v252
    %v259 = vsel %vm255, %v250, %v251
    %v260 = vsel %vm255, %v249, %v250
    %v261 = vsel %vm255, %v248, %v249
    %v262 = vsel %vm255, %v247, %v248
    %v263 = vsel %vm255, %v246, %v247
    %v264 = vsel %vm255, %v245, %v246
    %v265 = vsel %vm255, %v244, %v245
    %v266 = vsel %vm255, %v243, %v244
    %v267 = vsel %vm255, %v242, %v243
    %v268 = vsel %vm255, %v241, %v242
    %v269 = vsel %vm255, %v240, %v241
    %v270 = vsel %vm255, %v239, %v240
    %v271 = vsel %vm255, %v238, %v239
    %v272 = vsel %vm255, %v237, %v238
    %v273 = vsel %vm255, %v236, %v237
    %v274 = vsel %vm255, %v235, %v236
    %v275 = vsel %vm255, %v234, %v235
    %v276 = vsel %vm255, %v233, %v234
    %v277 = vsel %vm255, %v232, %v233
    %v278 = vsel %vm255, %v231, %v232
    %v279 = vsel %vm255, %v230, %v231
    %v280 = vsel %vm255, %v229, %v230
    %v281 = vsel %vm255, %v228, %v229
    %v282 = vsel %vm255, %v227, %v228
    %v283 = vsel %vm255, %v226, %v227
    %v284 = vsel %vm255, %v225, %v226
    %v285 = vsel %vm255, %v224, %v225
    %v286 = vsel %vm255, %v223, %v224
    %v287 = vsel %vm255, %v222, %v223
    %v288 = vsel %vm255, %v221, %v222
    %v289 = vsel %vm255, %v220, %v221
    %v290 = vsel %vm255, %v219, %v220
    %v291 = vsel %vm255, %v218, %v219
    %v292 = vsel %vm255, %v217, %v218
    %v293 = vsel %vm255, %v216, %v217
    %v294 = vsel %vm255, %v215, %v216
    %v295 = vsel %vm255, %v214, %v215
    %v296 = vsel %vm255, %v213, %v214
    %v297 = vsel %vm255, %v212, %v213
    %v298 = vsel %vm255, %v211, %v212
    %v299 = vsel %vm255, %v210, %v211
    %v300 = vsel %vm255, %v209, %v210
    %v301 = vsel %vm255, %v208, %v209
    %v302 = vsel %vm255, %v207, %v208
    %v303 = vsel %vm255, %v206, %v207
    %v304 = vsel %vm255, %v205, %v206
    %v305 = vsel %vm255, %v204, %v205
    %v306 = vsel %vm255, %v203, %v204
    %v307 = vsel %vm255, %v202, %v203
    %v308 = vsel %vm255, %v201, %v202
    %v309 = vsel %vm255, %v200, %v201
    %v310 = vsel %vm255, %v199, %v200
    %v311 = vsel %vm255, %v198, %v199
    %v312 = vsel %vm255, %v197, %v198
    %v313 = vsel %vm255, %v196, %v197
    %v314 = vsel %vm255, %v195, %v196
    %v315 = vsel %vm255, %v194, %v195
    %v316 = vsel %vm255, %v193, %v194
    %v317 = vsel %vm255, %v192, %v193
    %v318 = vsel %vm255, %v191, %v192
    %v319 = vsel %vm255, %v254, %v191
    %v320 = vsub.s32 %v319, %v127
    %v321 = vsub.s32 %v318, %v128
    %v322 = vsub.s32 %v317, %v129
    %v323 = vsub.s32 %v316, %v130
    %v324 = vsub.s32 %v315, %v131
    %v325 = vsub.s32 %v314, %v132
    %v326 = vsub.s32 %v313, %v133
    %v327 = vsub.s32 %v312, %v134
    %v328 = vsub.s32 %v311, %v135
    %v329 = vsub.s32 %v310, %v136
    %v330 = vsub.s32 %v309, %v137
    %v331 = vsub.s32 %v308, %v138
    %v332 = vsub.s32 %v307, %v139
    %v333 = vsub.s32 %v306, %v140
    %v334 = vsub.s32 %v305, %v141
    %v335 = vsub.s32 %v304, %v142
    %v336 = vsub.s32 %v303, %v143
    %v337 = vsub.s32 %v302, %v144
    %v338 = vsub.s32 %v301, %v145
    %v339 = vsub.s32 %v300, %v146
    %v340 = vsub.s32 %v299, %v147
    %v341 = vsub.s32 %v298, %v148
    %v342 = vsub.s32 %v297, %v149
    %v343 = vsub.s32 %v296, %v150
    %v344 = vsub.s32 %v295, %v151
    %v345 = vsub.s32 %v294, %v152
    %v346 = vsub.s32 %v293, %v153
    %v347 = vsub.s32 %v292, %v154
    %v348 = vsub.s32 %v291, %v155
    %v349 = vsub.s32 %v290, %v156
    %v350 = vsub.s32 %v289, %v157
    %v351 = vsub.s32 %v288, %v158
    %v352 = vsub.s32 %v287, %v159
    %v353 = vsub.s32 %v286, %v160
    %v354 = vsub.s32 %v285, %v161
    %v355 = vsub.s32 %v284, %v162
    %v356 = vsub.s32 %v283, %v163
    %v357 = vsub.s32 %v282, %v164
    %v358 = vsub.s32 %v281, %v165
    %v359 = vsub.s32 %v280, %v166
    %v360 = vsub.s32 %v279, %v167
    %v361 = vsub.s32 %v278, %v168
    %v362 = vsub.s32 %v277, %v169
    %v363 = vsub.s32 %v276, %v170
    %v364 = vsub.s32 %v275, %v171
    %v365 = vsub.s32 %v274, %v172
    %v366 = vsub.s32 %v273, %v173
    %v367 = vsub.s32 %v272, %v174
    %v368 = vsub.s32 %v271, %v175
    %v369 = vsub.s32 %v270, %v176
    %v370 = vsub.s32 %v269, %v177
    %v371 = vsub.s32 %v268, %v178
    %v372 = vsub.s32 %v267, %v179
    %v373 = vsub.s32 %v266, %v180
    %v374 = vsub.s32 %v265, %v181
    %v375 = vsub.s32 %v264, %v182
    %v376 = vsub.s32 %v263, %v183
    %v377 = vsub.s32 %v262, %v184
    %v378 = vsub.s32 %v261, %v185
    %v379 = vsub.s32 %v260, %v186
    %v380 = vsub.s32 %v259, %v187
    %v381 = vsub.s32 %v258, %v188
    %v382 = vsub.s32 %v257, %v189
    %v383 = vsub.s32 %v256, %v190
    %vm384 = vcmp.ge.s32.totalorder %v320, 4294967294
    %vm385 = vcmp.ge.s32.totalorder %v321, 4294967294
    %vm386 = vcmp.ge.s32.totalorder %v322, 4294967294
    %vm387 = vcmp.ge.s32.totalorder %v323, 4294967294
    %vm388 = vcmp.ge.s32.totalorder %v324, 4294967294
    %vm389 = vcmp.ge.s32.totalorder %v325, 4294967294
    %vm390 = vcmp.ge.s32.totalorder %v326, 4294967294
    %vm391 = vcmp.ge.s32.totalorder %v327, 4294967294
    %vm392 = vcmp.ge.s32.totalorder %v328, 4294967294
    %vm393 = vcmp.ge.s32.totalorder %v329, 4294967294
    %vm394 = vcmp.ge.s32.totalorder %v330, 4294967294
    %vm395 = vcmp.ge.s32.totalorder %v331, 4294967294
    %vm396 = vcmp.ge.s32.totalorder %v332, 4294967294
    %vm397 = vcmp.ge.s32.totalorder %v333, 4294967294
    %vm398 = vcmp.ge.s32.totalorder %v334, 4294967294
    %vm399 = vcmp.ge.s32.totalorder %v335, 4294967294
    %vm400 = vcmp.ge.s32.totalorder %v336, 4294967294
    %vm401 = vcmp.ge.s32.totalorder %v337, 4294967294
    %vm402 = vcmp.ge.s32.totalorder %v338, 4294967294
    %vm403 = vcmp.ge.s32.totalorder %v339, 4294967294
    %vm404 = vcmp.ge.s32.totalorder %v340, 4294967294
    %vm405 = vcmp.ge.s32.totalorder %v341, 4294967294
    %vm406 = vcmp.ge.s32.totalorder %v342, 4294967294
    %vm407 = vcmp.ge.s32.totalorder %v343, 4294967294
    %vm408 = vcmp.ge.s32.totalorder %v344, 4294967294
    %vm409 = vcmp.ge.s32.totalorder %v345, 4294967294
    %vm410 = vcmp.ge.s32.totalorder %v346, 4294967294
    %vm411 = vcmp.ge.s32.totalorder %v347, 4294967294
    %vm412 = vcmp.ge.s32.totalorder %v348, 4294967294
    %vm413 = vcmp.ge.s32.totalorder %v349, 4294967294
    %vm414 = vcmp.ge.s32.totalorder %v350, 4294967294
    %vm415 = vcmp.ge.s32.totalorder %v351, 4294967294
    %vm416 = vcmp.ge.s32.totalorder %v352, 4294967294
    %vm417 = vcmp.ge.s32.totalorder %v353, 4294967294
    %vm418 = vcmp.ge.s32.totalorder %v354, 4294967294
    %vm419 = vcmp.ge.s32.totalorder %v355, 4294967294
    %vm420 = vcmp.ge.s32.totalorder %v356, 4294967294
    %vm421 = vcmp.ge.s32.totalorder %v357, 4294967294
    %vm422 = vcmp.ge.s32.totalorder %v358, 4294967294
    %vm423 = vcmp.ge.s32.totalorder %v359, 4294967294
    %vm424 = vcmp.ge.s32.totalorder %v360, 4294967294
    %vm425 = vcmp.ge.s32.totalorder %v361, 4294967294
    %vm426 = vcmp.ge.s32.totalorder %v362, 4294967294
    %vm427 = vcmp.ge.s32.totalorder %v363, 4294967294
    %vm428 = vcmp.ge.s32.totalorder %v364, 4294967294
    %vm429 = vcmp.ge.s32.totalorder %v365, 4294967294
    %vm430 = vcmp.ge.s32.totalorder %v366, 4294967294
    %vm431 = vcmp.ge.s32.totalorder %v367, 4294967294
    %vm432 = vcmp.ge.s32.totalorder %v368, 4294967294
    %vm433 = vcmp.ge.s32.totalorder %v369, 4294967294
    %vm434 = vcmp.ge.s32.totalorder %v370, 4294967294
    %vm435 = vcmp.ge.s32.totalorder %v371, 4294967294
    %vm436 = vcmp.ge.s32.totalorder %v372, 4294967294
    %vm437 = vcmp.ge.s32.totalorder %v373, 4294967294
    %vm438 = vcmp.ge.s32.totalorder %v374, 4294967294
    %vm439 = vcmp.ge.s32.totalorder %v375, 4294967294
    %vm440 = vcmp.ge.s32.totalorder %v376, 4294967294
    %vm441 = vcmp.ge.s32.totalorder %v377, 4294967294
    %vm442 = vcmp.ge.s32.totalorder %v378, 4294967294
    %vm443 = vcmp.ge.s32.totalorder %v379, 4294967294
    %vm444 = vcmp.ge.s32.totalorder %v380, 4294967294
    %vm445 = vcmp.ge.s32.totalorder %v381, 4294967294
    %vm446 = vcmp.ge.s32.totalorder %v382, 4294967294
    %vm447 = vcmp.ge.s32.totalorder %v383, 4294967294
    %vm448 = vcmp.le.s32.totalorder %v320, 2
    %vm449 = vcmp.le.s32.totalorder %v321, 2
    %vm450 = vcmp.le.s32.totalorder %v322, 2
    %vm451 = vcmp.le.s32.totalorder %v323, 2
    %vm452 = vcmp.le.s32.totalorder %v324, 2
    %vm453 = vcmp.le.s32.totalorder %v325, 2
    %vm454 = vcmp.le.s32.totalorder %v326, 2
    %vm455 = vcmp.le.s32.totalorder %v327, 2
    %vm456 = vcmp.le.s32.totalorder %v328, 2
    %vm457 = vcmp.le.s32.totalorder %v329, 2
    %vm458 = vcmp.le.s32.totalorder %v330, 2
    %vm459 = vcmp.le.s32.totalorder %v331, 2
    %vm460 = vcmp.le.s32.totalorder %v332, 2
    %vm461 = vcmp.le.s32.totalorder %v333, 2
    %vm462 = vcmp.le.s32.totalorder %v334, 2
    %vm463 = vcmp.le.s32.totalorder %v335, 2
    %vm464 = vcmp.le.s32.totalorder %v336, 2
    %vm465 = vcmp.le.s32.totalorder %v337, 2
    %vm466 = vcmp.le.s32.totalorder %v338, 2
    %vm467 = vcmp.le.s32.totalorder %v339, 2
    %vm468 = vcmp.le.s32.totalorder %v340, 2
    %vm469 = vcmp.le.s32.totalorder %v341, 2
    %vm470 = vcmp.le.s32.totalorder %v342, 2
    %vm471 = vcmp.le.s32.totalorder %v343, 2
    %vm472 = vcmp.le.s32.totalorder %v344, 2
    %vm473 = vcmp.le.s32.totalorder %v345, 2
    %vm474 = vcmp.le.s32.totalorder %v346, 2
    %vm475 = vcmp.le.s32.totalorder %v347, 2
    %vm476 = vcmp.le.s32.totalorder %v348, 2
    %vm477 = vcmp.le.s32.totalorder %v349, 2
    %vm478 = vcmp.le.s32.totalorder %v350, 2
    %vm479 = vcmp.le.s32.totalorder %v351, 2
    %vm480 = vcmp.le.s32.totalorder %v352, 2
    %vm481 = vcmp.le.s32.totalorder %v353, 2
    %vm482 = vcmp.le.s32.totalorder %v354, 2
    %vm483 = vcmp.le.s32.totalorder %v355, 2
    %vm484 = vcmp.le.s32.totalorder %v356, 2
    %vm485 = vcmp.le.s32.totalorder %v357, 2
    %vm486 = vcmp.le.s32.totalorder %v358, 2
    %vm487 = vcmp.le.s32.totalorder %v359, 2
    %vm488 = vcmp.le.s32.totalorder %v360, 2
    %vm489 = vcmp.le.s32.totalorder %v361, 2
    %vm490 = vcmp.le.s32.totalorder %v362, 2
    %vm491 = vcmp.le.s32.totalorder %v363, 2
    %vm492 = vcmp.le.s32.totalorder %v364, 2
    %vm493 = vcmp.le.s32.totalorder %v365, 2
    %vm494 = vcmp.le.s32.totalorder %v366, 2
    %vm495 = vcmp.le.s32.totalorder %v367, 2
    %vm496 = vcmp.le.s32.totalorder %v368, 2
    %vm497 = vcmp.le.s32.totalorder %v369, 2
    %vm498 = vcmp.le.s32.totalorder %v370, 2
    %vm499 = vcmp.le.s32.totalorder %v371, 2
    %vm500 = vcmp.le.s32.totalorder %v372, 2
    %vm501 = vcmp.le.s32.totalorder %v373, 2
    %vm502 = vcmp.le.s32.totalorder %v374, 2
    %vm503 = vcmp.le.s32.totalorder %v375, 2
    %vm504 = vcmp.le.s32.totalorder %v376, 2
    %vm505 = vcmp.le.s32.totalorder %v377, 2
    %vm506 = vcmp.le.s32.totalorder %v378, 2
    %vm507 = vcmp.le.s32.totalorder %v379, 2
    %vm508 = vcmp.le.s32.totalorder %v380, 2
    %vm509 = vcmp.le.s32.totalorder %v381, 2
    %vm510 = vcmp.le.s32.totalorder %v382, 2
    %vm511 = vcmp.le.s32.totalorder %v383, 2
    %vm512 = vmand %vm384, %vm448
    %vm513 = vmand %vm385, %vm449
    %vm514 = vmand %vm386, %vm450
    %vm515 = vmand %vm387, %vm451
    %vm516 = vmand %vm388, %vm452
    %vm517 = vmand %vm389, %vm453
    %vm518 = vmand %vm390, %vm454
    %vm519 = vmand %vm391, %vm455
    %vm520 = vmand %vm392, %vm456
    %vm521 = vmand %vm393, %vm457
    %vm522 = vmand %vm394, %vm458
    %vm523 = vmand %vm395, %vm459
    %vm524 = vmand %vm396, %vm460
    %vm525 = vmand %vm397, %vm461
    %vm526 = vmand %vm398, %vm462
    %vm527 = vmand %vm399, %vm463
    %vm528 = vmand %vm400, %vm464
    %vm529 = vmand %vm401, %vm465
    %vm530 = vmand %vm402, %vm466
    %vm531 = vmand %vm403, %vm467
    %vm532 = vmand %vm404, %vm468
    %vm533 = vmand %vm405, %vm469
    %vm534 = vmand %vm406, %vm470
    %vm535 = vmand %vm407, %vm471
    %vm536 = vmand %vm408, %vm472
    %vm537 = vmand %vm409, %vm473
    %vm538 = vmand %vm410, %vm474
    %vm539 = vmand %vm411, %vm475
    %vm540 = vmand %vm412, %vm476
    %vm541 = vmand %vm413, %vm477
    %vm542 = vmand %vm414, %vm478
    %vm543 = vmand %vm415, %vm479
    %vm544 = vmand %vm416, %vm480
    %vm545 = vmand %vm417, %vm481
    %vm546 = vmand %vm418, %vm482
    %vm547 = vmand %vm419, %vm483
    %vm548 = vmand %vm420, %vm484
    %vm549 = vmand %vm421, %vm485
    %vm550 = vmand %vm422, %vm486
    %vm551 = vmand %vm423, %vm487
    %vm552 = vmand %vm424, %vm488
    %vm553 = vmand %vm425, %vm489
    %vm554 = vmand %vm426, %vm490
    %vm555 = vmand %vm427, %vm491
    %vm556 = vmand %vm428, %vm492
    %vm557 = vmand %vm429, %vm493
    %vm558 = vmand %vm430, %vm494
    %vm559 = vmand %vm431, %vm495
    %vm560 = vmand %vm432, %vm496
    %vm561 = vmand %vm433, %vm497
    %vm562 = vmand %vm434, %vm498
    %vm563 = vmand %vm435, %vm499
    %vm564 = vmand %vm436, %vm500
    %vm565 = vmand %vm437, %vm501
    %vm566 = vmand %vm438, %vm502
    %vm567 = vmand %vm439, %vm503
    %vm568 = vmand %vm440, %vm504
    %vm569 = vmand %vm441, %vm505
    %vm570 = vmand %vm442, %vm506
    %vm571 = vmand %vm443, %vm507
    %vm572 = vmand %vm444, %vm508
    %vm573 = vmand %vm445, %vm509
    %vm574 = vmand %vm446, %vm510
    %vm575 = vmand %vm447, %vm511
    %v576 = vrot.slane %v127, 6
    %v577 = vrot.slane %v128, 6
    %v578 = vrot.slane %v129, 6
    %v579 = vrot.slane %v130, 6
    %v580 = vrot.slane %v131, 6
    %v581 = vrot.slane %v132, 6
    %v582 = vrot.slane %v133, 6
    %v583 = vrot.slane %v134, 6
    %v584 = vrot.slane %v135, 6
    %v585 = vrot.slane %v136, 6
    %v586 = vrot.slane %v137, 6
    %v587 = vrot.slane %v138, 6
    %v588 = vrot.slane %v139, 6
    %v589 = vrot.slane %v140, 6
    %v590 = vrot.slane %v141, 6
    %v591 = vrot.slane %v142, 6
    %v592 = vrot.slane %v143, 6
    %v593 = vrot.slane %v144, 6
    %v594 = vrot.slane %v145, 6
    %v595 = vrot.slane %v146, 6
    %v596 = vrot.slane %v147, 6
    %v597 = vrot.slane %v148, 6
    %v598 = vrot.slane %v149, 6
    %v599 = vrot.slane %v150, 6
    %v600 = vrot.slane %v151, 6
    %v601 = vrot.slane %v152, 6
    %v602 = vrot.slane %v153, 6
    %v603 = vrot.slane %v154, 6
    %v604 = vrot.slane %v155, 6
    %v605 = vrot.slane %v156, 6
    %v606 = vrot.slane %v157, 6
    %v607 = vrot.slane %v158, 6
    %v608 = vrot.slane %v159, 6
    %v609 = vrot.slane %v160, 6
    %v610 = vrot.slane %v161, 6
    %v611 = vrot.slane %v162, 6
    %v612 = vrot.slane %v163, 6
    %v613 = vrot.slane %v164, 6
    %v614 = vrot.slane %v165, 6
    %v615 = vrot.slane %v166, 6
    %v616 = vrot.slane %v167, 6
    %v617 = vrot.slane %v168, 6
    %v618 = vrot.slane %v169, 6
    %v619 = vrot.slane %v170, 6
    %v620 = vrot.slane %v171, 6
    %v621 = vrot.slane %v172, 6
    %v622 = vrot.slane %v173, 6
    %v623 = vrot.slane %v174, 6
    %v624 = vrot.slane %v175, 6
    %v625 = vrot.slane %v176, 6
    %v626 = vrot.slane %v177, 6
    %v627 = vrot.slane %v178, 6
    %v628 = vrot.slane %v179, 6
    %v629 = vrot.slane %v180, 6
    %v630 = vrot.slane %v181, 6
    %v631 = vrot.slane %v182, 6
    %v632 = vrot.slane %v183, 6
    %v633 = vrot.slane %v184, 6
    %v634 = vrot.slane %v185, 6
    %v635 = vrot.slane %v186, 6
    %v636 = vrot.slane %v187, 6
    %v637 = vrot.slane %v188, 6
    %v638 = vrot.slane %v189, 6
    %v639 = vrot.slane %v190, 6
    %vm640 = vcmp.lt.s32.totalorder %v63, 2
    %v641 = vsel %vm640, %v638, %v639
    %v642 = vsel %vm640, %v637, %v638
    %v643 = vsel %vm640, %v636, %v637
    %v644 = vsel %vm640, %v635, %v636
    %v645 = vsel %vm640, %v634, %v635
    %v646 = vsel %vm640, %v633, %v634
    %v647 = vsel %vm640, %v632, %v633
    %v648 = vsel %vm640, %v631, %v632
    %v649 = vsel %vm640, %v630, %v631
    %v650 = vsel %vm640, %v629, %v630
    %v651 = vsel %vm640, %v628, %v629
    %v652 = vsel %vm640, %v627, %v628
    %v653 = vsel %vm640, %v626, %v627
    %v654 = vsel %vm640, %v625, %v626
    %v655 = vsel %vm640, %v624, %v625
    %v656 = vsel %vm640, %v623, %v624
    %v657 = vsel %vm640, %v622, %v623
    %v658 = vsel %vm640, %v621, %v622
    %v659 = vsel %vm640, %v620, %v621
    %v660 = vsel %vm640, %v619, %v620
    %v661 = vsel %vm640, %v618, %v619
    %v662 = vsel %vm640, %v617, %v618
    %v663 = vsel %vm640, %v616, %v617
    %v664 = vsel %vm640, %v615, %v616
    %v665 = vsel %vm640, %v614, %v615
    %v666 = vsel %vm640, %v613, %v614
    %v667 = vsel %vm640, %v612, %v613
    %v668 = vsel %vm640, %v611, %v612
    %v669 = vsel %vm640, %v610, %v611
    %v670 = vsel %vm640, %v609, %v610
    %v671 = vsel %vm640, %v608, %v609
    %v672 = vsel %vm640, %v607, %v608
    %v673 = vsel %vm640, %v606, %v607
    %v674 = vsel %vm640, %v605, %v606
    %v675 = vsel %vm640, %v604, %v605
    %v676 = vsel %vm640, %v603, %v604
    %v677 = vsel %vm640, %v602, %v603
    %v678 = vsel %vm640, %v601, %v602
    %v679 = vsel %vm640, %v600, %v601
    %v680 = vsel %vm640, %v599, %v600
    %v681 = vsel %vm640, %v598, %v599
    %v682 = vsel %vm640, %v597, %v598
    %v683 = vsel %vm640, %v596, %v597
    %v684 = vsel %vm640, %v595, %v596
    %v685 = vsel %vm640, %v594, %v595
    %v686 = vsel %vm640, %v593, %v594
    %v687 = vsel %vm640, %v592, %v593
    %v688 = vsel %vm640, %v591, %v592
    %v689 = vsel %vm640, %v590, %v591
    %v690 = vsel %vm640, %v589, %v590
    %v691 = vsel %vm640, %v588, %v589
    %v692 = vsel %vm640, %v587, %v588
    %v693 = vsel %vm640, %v586, %v587
    %v694 = vsel %vm640, %v585, %v586
    %v695 = vsel %vm640, %v584, %v585
    %v696 = vsel %vm640, %v583, %v584
    %v697 = vsel %vm640, %v582, %v583
    %v698 = vsel %vm640, %v581, %v582
    %v699 = vsel %vm640, %v580, %v581
    %v700 = vsel %vm640, %v579, %v580
    %v701 = vsel %vm640, %v578, %v579
    %v702 = vsel %vm640, %v577, %v578
    %v703 = vsel %vm640, %v576, %v577
    %v704 = vsel %vm640, %v639, %v576
    %v705 = vsub.s32 %v704, %v127
    %v706 = vsub.s32 %v703, %v128
    %v707 = vsub.s32 %v702, %v129
    %v708 = vsub.s32 %v701, %v130
    %v709 = vsub.s32 %v700, %v131
    %v710 = vsub.s32 %v699, %v132
    %v711 = vsub.s32 %v698, %v133
    %v712 = vsub.s32 %v697, %v134
    %v713 = vsub.s32 %v696, %v135
    %v714 = vsub.s32 %v695, %v136
    %v715 = vsub.s32 %v694, %v137
    %v716 = vsub.s32 %v693, %v138
    %v717 = vsub.s32 %v692, %v139
    %v718 = vsub.s32 %v691, %v140
    %v719 = vsub.s32 %v690, %v141
    %v720 = vsub.s32 %v689, %v142
    %v721 = vsub.s32 %v688, %v143
    %v722 = vsub.s32 %v687, %v144
    %v723 = vsub.s32 %v686, %v145
    %v724 = vsub.s32 %v685, %v146
    %v725 = vsub.s32 %v684, %v147
    %v726 = vsub.s32 %v683, %v148
    %v727 = vsub.s32 %v682, %v149
    %v728 = vsub.s32 %v681, %v150
    %v729 = vsub.s32 %v680, %v151
    %v730 = vsub.s32 %v679, %v152
    %v731 = vsub.s32 %v678, %v153
    %v732 = vsub.s32 %v677, %v154
    %v733 = vsub.s32 %v676, %v155
    %v734 = vsub.s32 %v675, %v156
    %v735 = vsub.s32 %v674, %v157
    %v736 = vsub.s32 %v673, %v158
    %v737 = vsub.s32 %v672, %v159
    %v738 = vsub.s32 %v671, %v160
    %v739 = vsub.s32 %v670, %v161
    %v740 = vsub.s32 %v669, %v162
    %v741 = vsub.s32 %v668, %v163
    %v742 = vsub.s32 %v667, %v164
    %v743 = vsub.s32 %v666, %v165
    %v744 = vsub.s32 %v665, %v166
    %v745 = vsub.s32 %v664, %v167
    %v746 = vsub.s32 %v663, %v168
    %v747 = vsub.s32 %v662, %v169
    %v748 = vsub.s32 %v661, %v170
    %v749 = vsub.s32 %v660, %v171
    %v750 = vsub.s32 %v659, %v172
    %v751 = vsub.s32 %v658, %v173
    %v752 = vsub.s32 %v657, %v174
    %v753 = vsub.s32 %v656, %v175
    %v754 = vsub.s32 %v655, %v176
    %v755 = vsub.s32 %v654, %v177
    %v756 = vsub.s32 %v653, %v178
    %v757 = vsub.s32 %v652, %v179
    %v758 = vsub.s32 %v651, %v180
    %v759 = vsub.s32 %v650, %v181
    %v760 = vsub.s32 %v649, %v182
    %v761 = vsub.s32 %v648, %v183
    %v762 = vsub.s32 %v647, %v184
    %v763 = vsub.s32 %v646, %v185
    %v764 = vsub.s32 %v645, %v186
    %v765 = vsub.s32 %v644, %v187
    %v766 = vsub.s32 %v643, %v188
    %v767 = vsub.s32 %v642, %v189
    %v768 = vsub.s32 %v641, %v190
    %vm769 = vcmp.ge.s32.totalorder %v705, 4294967294
    %vm770 = vcmp.ge.s32.totalorder %v706, 4294967294
    %vm771 = vcmp.ge.s32.totalorder %v707, 4294967294
    %vm772 = vcmp.ge.s32.totalorder %v708, 4294967294
    %vm773 = vcmp.ge.s32.totalorder %v709, 4294967294
    %vm774 = vcmp.ge.s32.totalorder %v710, 4294967294
    %vm775 = vcmp.ge.s32.totalorder %v711, 4294967294
    %vm776 = vcmp.ge.s32.totalorder %v712, 4294967294
    %vm777 = vcmp.ge.s32.totalorder %v713, 4294967294
    %vm778 = vcmp.ge.s32.totalorder %v714, 4294967294
    %vm779 = vcmp.ge.s32.totalorder %v715, 4294967294
    %vm780 = vcmp.ge.s32.totalorder %v716, 4294967294
    %vm781 = vcmp.ge.s32.totalorder %v717, 4294967294
    %vm782 = vcmp.ge.s32.totalorder %v718, 4294967294
    %vm783 = vcmp.ge.s32.totalorder %v719, 4294967294
    %vm784 = vcmp.ge.s32.totalorder %v720, 4294967294
    %vm785 = vcmp.ge.s32.totalorder %v721, 4294967294
    %vm786 = vcmp.ge.s32.totalorder %v722, 4294967294
    %vm787 = vcmp.ge.s32.totalorder %v723, 4294967294
    %vm788 = vcmp.ge.s32.totalorder %v724, 4294967294
    %vm789 = vcmp.ge.s32.totalorder %v725, 4294967294
    %vm790 = vcmp.ge.s32.totalorder %v726, 4294967294
    %vm791 = vcmp.ge.s32.totalorder %v727, 4294967294
    %vm792 = vcmp.ge.s32.totalorder %v728, 4294967294
    %vm793 = vcmp.ge.s32.totalorder %v729, 4294967294
    %vm794 = vcmp.ge.s32.totalorder %v730, 4294967294
    %vm795 = vcmp.ge.s32.totalorder %v731, 4294967294
    %vm796 = vcmp.ge.s32.totalorder %v732, 4294967294
    %vm797 = vcmp.ge.s32.totalorder %v733, 4294967294
    %vm798 = vcmp.ge.s32.totalorder %v734, 4294967294
    %vm799 = vcmp.ge.s32.totalorder %v735, 4294967294
    %vm800 = vcmp.ge.s32.totalorder %v736, 4294967294
    %vm801 = vcmp.ge.s32.totalorder %v737, 4294967294
    %vm802 = vcmp.ge.s32.totalorder %v738, 4294967294
    %vm803 = vcmp.ge.s32.totalorder %v739, 4294967294
    %vm804 = vcmp.ge.s32.totalorder %v740, 4294967294
    %vm805 = vcmp.ge.s32.totalorder %v741, 4294967294
    %vm806 = vcmp.ge.s32.totalorder %v742, 4294967294
    %vm807 = vcmp.ge.s32.totalorder %v743, 4294967294
    %vm808 = vcmp.ge.s32.totalorder %v744, 4294967294
    %vm809 = vcmp.ge.s32.totalorder %v745, 4294967294
    %vm810 = vcmp.ge.s32.totalorder %v746, 4294967294
    %vm811 = vcmp.ge.s32.totalorder %v747, 4294967294
    %vm812 = vcmp.ge.s32.totalorder %v748, 4294967294
    %vm813 = vcmp.ge.s32.totalorder %v749, 4294967294
    %vm814 = vcmp.ge.s32.totalorder %v750, 4294967294
    %vm815 = vcmp.ge.s32.totalorder %v751, 4294967294
    %vm816 = vcmp.ge.s32.totalorder %v752, 4294967294
    %vm817 = vcmp.ge.s32.totalorder %v753, 4294967294
    %vm818 = vcmp.ge.s32.totalorder %v754, 4294967294
    %vm819 = vcmp.ge.s32.totalorder %v755, 4294967294
    %vm820 = vcmp.ge.s32.totalorder %v756, 4294967294
    %vm821 = vcmp.ge.s32.totalorder %v757, 4294967294
    %vm822 = vcmp.ge.s32.totalorder %v758, 4294967294
    %vm823 = vcmp.ge.s32.totalorder %v759, 4294967294
    %vm824 = vcmp.ge.s32.totalorder %v760, 4294967294
    %vm825 = vcmp.ge.s32.totalorder %v761, 4294967294
    %vm826 = vcmp.ge.s32.totalorder %v762, 4294967294
    %vm827 = vcmp.ge.s32.totalorder %v763, 4294967294
    %vm828 = vcmp.ge.s32.totalorder %v764, 4294967294
    %vm829 = vcmp.ge.s32.totalorder %v765, 4294967294
    %vm830 = vcmp.ge.s32.totalorder %v766, 4294967294
    %vm831 = vcmp.ge.s32.totalorder %v767, 4294967294
    %vm832 = vcmp.ge.s32.totalorder %v768, 4294967294
    %vm833 = vcmp.le.s32.totalorder %v705, 2
    %vm834 = vcmp.le.s32.totalorder %v706, 2
    %vm835 = vcmp.le.s32.totalorder %v707, 2
    %vm836 = vcmp.le.s32.totalorder %v708, 2
    %vm837 = vcmp.le.s32.totalorder %v709, 2
    %vm838 = vcmp.le.s32.totalorder %v710, 2
    %vm839 = vcmp.le.s32.totalorder %v711, 2
    %vm840 = vcmp.le.s32.totalorder %v712, 2
    %vm841 = vcmp.le.s32.totalorder %v713, 2
    %vm842 = vcmp.le.s32.totalorder %v714, 2
    %vm843 = vcmp.le.s32.totalorder %v715, 2
    %vm844 = vcmp.le.s32.totalorder %v716, 2
    %vm845 = vcmp.le.s32.totalorder %v717, 2
    %vm846 = vcmp.le.s32.totalorder %v718, 2
    %vm847 = vcmp.le.s32.totalorder %v719, 2
    %vm848 = vcmp.le.s32.totalorder %v720, 2
    %vm849 = vcmp.le.s32.totalorder %v721, 2
    %vm850 = vcmp.le.s32.totalorder %v722, 2
    %vm851 = vcmp.le.s32.totalorder %v723, 2
    %vm852 = vcmp.le.s32.totalorder %v724, 2
    %vm853 = vcmp.le.s32.totalorder %v725, 2
    %vm854 = vcmp.le.s32.totalorder %v726, 2
    %vm855 = vcmp.le.s32.totalorder %v727, 2
    %vm856 = vcmp.le.s32.totalorder %v728, 2
    %vm857 = vcmp.le.s32.totalorder %v729, 2
    %vm858 = vcmp.le.s32.totalorder %v730, 2
    %vm859 = vcmp.le.s32.totalorder %v731, 2
    %vm860 = vcmp.le.s32.totalorder %v732, 2
    %vm861 = vcmp.le.s32.totalorder %v733, 2
    %vm862 = vcmp.le.s32.totalorder %v734, 2
    %vm863 = vcmp.le.s32.totalorder %v735, 2
    %vm864 = vcmp.le.s32.totalorder %v736, 2
    %vm865 = vcmp.le.s32.totalorder %v737, 2
    %vm866 = vcmp.le.s32.totalorder %v738, 2
    %vm867 = vcmp.le.s32.totalorder %v739, 2
    %vm868 = vcmp.le.s32.totalorder %v740, 2
    %vm869 = vcmp.le.s32.totalorder %v741, 2
    %vm870 = vcmp.le.s32.totalorder %v742, 2
    %vm871 = vcmp.le.s32.totalorder %v743, 2
    %vm872 = vcmp.le.s32.totalorder %v744, 2
    %vm873 = vcmp.le.s32.totalorder %v745, 2
    %vm874 = vcmp.le.s32.totalorder %v746, 2
    %vm875 = vcmp.le.s32.totalorder %v747, 2
    %vm876 = vcmp.le.s32.totalorder %v748, 2
    %vm877 = vcmp.le.s32.totalorder %v749, 2
    %vm878 = vcmp.le.s32.totalorder %v750, 2
    %vm879 = vcmp.le.s32.totalorder %v751, 2
    %vm880 = vcmp.le.s32.totalorder %v752, 2
    %vm881 = vcmp.le.s32.totalorder %v753, 2
    %vm882 = vcmp.le.s32.totalorder %v754, 2
    %vm883 = vcmp.le.s32.totalorder %v755, 2
    %vm884 = vcmp.le.s32.totalorder %v756, 2
    %vm885 = vcmp.le.s32.totalorder %v757, 2
    %vm886 = vcmp.le.s32.totalorder %v758, 2
    %vm887 = vcmp.le.s32.totalorder %v759, 2
    %vm888 = vcmp.le.s32.totalorder %v760, 2
    %vm889 = vcmp.le.s32.totalorder %v761, 2
    %vm890 = vcmp.le.s32.totalorder %v762, 2
    %vm891 = vcmp.le.s32.totalorder %v763, 2
    %vm892 = vcmp.le.s32.totalorder %v764, 2
    %vm893 = vcmp.le.s32.totalorder %v765, 2
    %vm894 = vcmp.le.s32.totalorder %v766, 2
    %vm895 = vcmp.le.s32.totalorder %v767, 2
    %vm896 = vcmp.le.s32.totalorder %v768, 2
    %vm897 = vmand %vm769, %vm833
    %vm898 = vmand %vm770, %vm834
    %vm899 = vmand %vm771, %vm835
    %vm900 = vmand %vm772, %vm836
    %vm901 = vmand %vm773, %vm837
    %vm902 = vmand %vm774, %vm838
    %vm903 = vmand %vm775, %vm839
    %vm904 = vmand %vm776, %vm840
    %vm905 = vmand %vm777, %vm841
    %vm906 = vmand %vm778, %vm842
    %vm907 = vmand %vm779, %vm843
    %vm908 = vmand %vm780, %vm844
    %vm909 = vmand %vm781, %vm845
    %vm910 = vmand %vm782, %vm846
    %vm911 = vmand %vm783, %vm847
    %vm912 = vmand %vm784, %vm848
    %vm913 = vmand %vm785, %vm849
    %vm914 = vmand %vm786, %vm850
    %vm915 = vmand %vm787, %vm851
    %vm916 = vmand %vm788, %vm852
    %vm917 = vmand %vm789, %vm853
    %vm918 = vmand %vm790, %vm854
    %vm919 = vmand %vm791, %vm855
    %vm920 = vmand %vm792, %vm856
    %vm921 = vmand %vm793, %vm857
    %vm922 = vmand %vm794, %vm858
    %vm923 = vmand %vm795, %vm859
    %vm924 = vmand %vm796, %vm860
    %vm925 = vmand %vm797, %vm861
    %vm926 = vmand %vm798, %vm862
    %vm927 = vmand %vm799, %vm863
    %vm928 = vmand %vm800, %vm864
    %vm929 = vmand %vm801, %vm865
    %vm930 = vmand %vm802, %vm866
    %vm931 = vmand %vm803, %vm867
    %vm932 = vmand %vm804, %vm868
    %vm933 = vmand %vm805, %vm869
    %vm934 = vmand %vm806, %vm870
    %vm935 = vmand %vm807, %vm871
    %vm936 = vmand %vm808, %vm872
    %vm937 = vmand %vm809, %vm873
    %vm938 = vmand %vm810, %vm874
    %vm939 = vmand %vm811, %vm875
    %vm940 = vmand %vm812, %vm876
    %vm941 = vmand %vm813, %vm877
    %vm942 = vmand %vm814, %vm878
    %vm943 = vmand %vm815, %vm879
    %vm944 = vmand %vm816, %vm880
    %vm945 = vmand %vm817, %vm881
    %vm946 = vmand %vm818, %vm882
    %vm947 = vmand %vm819, %vm883
    %vm948 = vmand %vm820, %vm884
    %vm949 = vmand %vm821, %vm885
    %vm950 = vmand %vm822, %vm886
    %vm951 = vmand %vm823, %vm887
    %vm952 = vmand %vm824, %vm888
    %vm953 = vmand %vm825, %vm889
    %vm954 = vmand %vm826, %vm890
    %vm955 = vmand %vm827, %vm891
    %vm956 = vmand %vm828, %vm892
    %vm957 = vmand %vm829, %vm893
    %vm958 = vmand %vm830, %vm894
    %vm959 = vmand %vm831, %vm895
    %vm960 = vmand %vm832, %vm896
    %v961 = vrot.slane %v127, 1
    %v962 = vrot.slane %v128, 1
    %v963 = vrot.slane %v129, 1
    %v964 = vrot.slane %v130, 1
    %v965 = vrot.slane %v131, 1
    %v966 = vrot.slane %v132, 1
    %v967 = vrot.slane %v133, 1
    %v968 = vrot.slane %v134, 1
    %v969 = vrot.slane %v135, 1
    %v970 = vrot.slane %v136, 1
    %v971 = vrot.slane %v137, 1
    %v972 = vrot.slane %v138, 1
    %v973 = vrot.slane %v139, 1
    %v974 = vrot.slane %v140, 1
    %v975 = vrot.slane %v141, 1
    %v976 = vrot.slane %v142, 1
    %v977 = vrot.slane %v143, 1
    %v978 = vrot.slane %v144, 1
    %v979 = vrot.slane %v145, 1
    %v980 = vrot.slane %v146, 1
    %v981 = vrot.slane %v147, 1
    %v982 = vrot.slane %v148, 1
    %v983 = vrot.slane %v149, 1
    %v984 = vrot.slane %v150, 1
    %v985 = vrot.slane %v151, 1
    %v986 = vrot.slane %v152, 1
    %v987 = vrot.slane %v153, 1
    %v988 = vrot.slane %v154, 1
    %v989 = vrot.slane %v155, 1
    %v990 = vrot.slane %v156, 1
    %v991 = vrot.slane %v157, 1
    %v992 = vrot.slane %v158, 1
    %v993 = vrot.slane %v159, 1
    %v994 = vrot.slane %v160, 1
    %v995 = vrot.slane %v161, 1
    %v996 = vrot.slane %v162, 1
    %v997 = vrot.slane %v163, 1
    %v998 = vrot.slane %v164, 1
    %v999 = vrot.slane %v165, 1
    %v1000 = vrot.slane %v166, 1
    %v1001 = vrot.slane %v167, 1
    %v1002 = vrot.slane %v168, 1
    %v1003 = vrot.slane %v169, 1
    %v1004 = vrot.slane %v170, 1
    %v1005 = vrot.slane %v171, 1
    %v1006 = vrot.slane %v172, 1
    %v1007 = vrot.slane %v173, 1
    %v1008 = vrot.slane %v174, 1
    %v1009 = vrot.slane %v175, 1
    %v1010 = vrot.slane %v176, 1
    %v1011 = vrot.slane %v177, 1
    %v1012 = vrot.slane %v178, 1
    %v1013 = vrot.slane %v179, 1
    %v1014 = vrot.slane %v180, 1
    %v1015 = vrot.slane %v181, 1
    %v1016 = vrot.slane %v182, 1
    %v1017 = vrot.slane %v183, 1
    %v1018 = vrot.slane %v184, 1
    %v1019 = vrot.slane %v185, 1
    %v1020 = vrot.slane %v186, 1
    %v1021 = vrot.slane %v187, 1
    %v1022 = vrot.slane %v188, 1
    %v1023 = vrot.slane %v189, 1
    %v1024 = vrot.slane %v190, 1
    %vm1025 = vcmp.lt.s32.totalorder %v63, 7
    %v1026 = vsel %vm1025, %v1023, %v1024
    %v1027 = vsel %vm1025, %v1022, %v1023
    %v1028 = vsel %vm1025, %v1021, %v1022
    %v1029 = vsel %vm1025, %v1020, %v1021
    %v1030 = vsel %vm1025, %v1019, %v1020
    %v1031 = vsel %vm1025, %v1018, %v1019
    %v1032 = vsel %vm1025, %v1017, %v1018
    %v1033 = vsel %vm1025, %v1016, %v1017
    %v1034 = vsel %vm1025, %v1015, %v1016
    %v1035 = vsel %vm1025, %v1014, %v1015
    %v1036 = vsel %vm1025, %v1013, %v1014
    %v1037 = vsel %vm1025, %v1012, %v1013
    %v1038 = vsel %vm1025, %v1011, %v1012
    %v1039 = vsel %vm1025, %v1010, %v1011
    %v1040 = vsel %vm1025, %v1009, %v1010
    %v1041 = vsel %vm1025, %v1008, %v1009
    %v1042 = vsel %vm1025, %v1007, %v1008
    %v1043 = vsel %vm1025, %v1006, %v1007
    %v1044 = vsel %vm1025, %v1005, %v1006
    %v1045 = vsel %vm1025, %v1004, %v1005
    %v1046 = vsel %vm1025, %v1003, %v1004
    %v1047 = vsel %vm1025, %v1002, %v1003
    %v1048 = vsel %vm1025, %v1001, %v1002
    %v1049 = vsel %vm1025, %v1000, %v1001
    %v1050 = vsel %vm1025, %v999, %v1000
    %v1051 = vsel %vm1025, %v998, %v999
    %v1052 = vsel %vm1025, %v997, %v998
    %v1053 = vsel %vm1025, %v996, %v997
    %v1054 = vsel %vm1025, %v995, %v996
    %v1055 = vsel %vm1025, %v994, %v995
    %v1056 = vsel %vm1025, %v993, %v994
    %v1057 = vsel %vm1025, %v992, %v993
    %v1058 = vsel %vm1025, %v991, %v992
    %v1059 = vsel %vm1025, %v990, %v991
    %v1060 = vsel %vm1025, %v989, %v990
    %v1061 = vsel %vm1025, %v988, %v989
    %v1062 = vsel %vm1025, %v987, %v988
    %v1063 = vsel %vm1025, %v986, %v987
    %v1064 = vsel %vm1025, %v985, %v986
    %v1065 = vsel %vm1025, %v984, %v985
    %v1066 = vsel %vm1025, %v983, %v984
    %v1067 = vsel %vm1025, %v982, %v983
    %v1068 = vsel %vm1025, %v981, %v982
    %v1069 = vsel %vm1025, %v980, %v981
    %v1070 = vsel %vm1025, %v979, %v980
    %v1071 = vsel %vm1025, %v978, %v979
    %v1072 = vsel %vm1025, %v977, %v978
    %v1073 = vsel %vm1025, %v976, %v977
    %v1074 = vsel %vm1025, %v975, %v976
    %v1075 = vsel %vm1025, %v974, %v975
    %v1076 = vsel %vm1025, %v973, %v974
    %v1077 = vsel %vm1025, %v972, %v973
    %v1078 = vsel %vm1025, %v971, %v972
    %v1079 = vsel %vm1025, %v970, %v971
    %v1080 = vsel %vm1025, %v969, %v970
    %v1081 = vsel %vm1025, %v968, %v969
    %v1082 = vsel %vm1025, %v967, %v968
    %v1083 = vsel %vm1025, %v966, %v967
    %v1084 = vsel %vm1025, %v965, %v966
    %v1085 = vsel %vm1025, %v964, %v965
    %v1086 = vsel %vm1025, %v963, %v964
    %v1087 = vsel %vm1025, %v962, %v963
    %v1088 = vsel %vm1025, %v961, %v962
    %v1089 = vsel %vm1025, %v1024, %v961
    %v1090 = vsub.s32 %v1088, %v127
    %v1091 = vsub.s32 %v1087, %v128
    %v1092 = vsub.s32 %v1086, %v129
    %v1093 = vsub.s32 %v1085, %v130
    %v1094 = vsub.s32 %v1084, %v131
    %v1095 = vsub.s32 %v1083, %v132
    %v1096 = vsub.s32 %v1082, %v133
    %v1097 = vsub.s32 %v1081, %v134
    %v1098 = vsub.s32 %v1080, %v135
    %v1099 = vsub.s32 %v1079, %v136
    %v1100 = vsub.s32 %v1078, %v137
    %v1101 = vsub.s32 %v1077, %v138
    %v1102 = vsub.s32 %v1076, %v139
    %v1103 = vsub.s32 %v1075, %v140
    %v1104 = vsub.s32 %v1074, %v141
    %v1105 = vsub.s32 %v1073, %v142
    %v1106 = vsub.s32 %v1072, %v143
    %v1107 = vsub.s32 %v1071, %v144
    %v1108 = vsub.s32 %v1070, %v145
    %v1109 = vsub.s32 %v1069, %v146
    %v1110 = vsub.s32 %v1068, %v147
    %v1111 = vsub.s32 %v1067, %v148
    %v1112 = vsub.s32 %v1066, %v149
    %v1113 = vsub.s32 %v1065, %v150
    %v1114 = vsub.s32 %v1064, %v151
    %v1115 = vsub.s32 %v1063, %v152
    %v1116 = vsub.s32 %v1062, %v153
    %v1117 = vsub.s32 %v1061, %v154
    %v1118 = vsub.s32 %v1060, %v155
    %v1119 = vsub.s32 %v1059, %v156
    %v1120 = vsub.s32 %v1058, %v157
    %v1121 = vsub.s32 %v1057, %v158
    %v1122 = vsub.s32 %v1056, %v159
    %v1123 = vsub.s32 %v1055, %v160
    %v1124 = vsub.s32 %v1054, %v161
    %v1125 = vsub.s32 %v1053, %v162
    %v1126 = vsub.s32 %v1052, %v163
    %v1127 = vsub.s32 %v1051, %v164
    %v1128 = vsub.s32 %v1050, %v165
    %v1129 = vsub.s32 %v1049, %v166
    %v1130 = vsub.s32 %v1048, %v167
    %v1131 = vsub.s32 %v1047, %v168
    %v1132 = vsub.s32 %v1046, %v169
    %v1133 = vsub.s32 %v1045, %v170
    %v1134 = vsub.s32 %v1044, %v171
    %v1135 = vsub.s32 %v1043, %v172
    %v1136 = vsub.s32 %v1042, %v173
    %v1137 = vsub.s32 %v1041, %v174
    %v1138 = vsub.s32 %v1040, %v175
    %v1139 = vsub.s32 %v1039, %v176
    %v1140 = vsub.s32 %v1038, %v177
    %v1141 = vsub.s32 %v1037, %v178
    %v1142 = vsub.s32 %v1036, %v179
    %v1143 = vsub.s32 %v1035, %v180
    %v1144 = vsub.s32 %v1034, %v181
    %v1145 = vsub.s32 %v1033, %v182
    %v1146 = vsub.s32 %v1032, %v183
    %v1147 = vsub.s32 %v1031, %v184
    %v1148 = vsub.s32 %v1030, %v185
    %v1149 = vsub.s32 %v1029, %v186
    %v1150 = vsub.s32 %v1028, %v187
    %v1151 = vsub.s32 %v1027, %v188
    %v1152 = vsub.s32 %v1026, %v189
    %v1153 = vsub.s32 %v1089, %v190
    %vm1154 = vcmp.ge.s32.totalorder %v1090, 4294967294
    %vm1155 = vcmp.ge.s32.totalorder %v1091, 4294967294
    %vm1156 = vcmp.ge.s32.totalorder %v1092, 4294967294
    %vm1157 = vcmp.ge.s32.totalorder %v1093, 4294967294
    %vm1158 = vcmp.ge.s32.totalorder %v1094, 4294967294
    %vm1159 = vcmp.ge.s32.totalorder %v1095, 4294967294
    %vm1160 = vcmp.ge.s32.totalorder %v1096, 4294967294
    %vm1161 = vcmp.ge.s32.totalorder %v1097, 4294967294
    %vm1162 = vcmp.ge.s32.totalorder %v1098, 4294967294
    %vm1163 = vcmp.ge.s32.totalorder %v1099, 4294967294
    %vm1164 = vcmp.ge.s32.totalorder %v1100, 4294967294
    %vm1165 = vcmp.ge.s32.totalorder %v1101, 4294967294
    %vm1166 = vcmp.ge.s32.totalorder %v1102, 4294967294
    %vm1167 = vcmp.ge.s32.totalorder %v1103, 4294967294
    %vm1168 = vcmp.ge.s32.totalorder %v1104, 4294967294
    %vm1169 = vcmp.ge.s32.totalorder %v1105, 4294967294
    %vm1170 = vcmp.ge.s32.totalorder %v1106, 4294967294
    %vm1171 = vcmp.ge.s32.totalorder %v1107, 4294967294
    %vm1172 = vcmp.ge.s32.totalorder %v1108, 4294967294
    %vm1173 = vcmp.ge.s32.totalorder %v1109, 4294967294
    %vm1174 = vcmp.ge.s32.totalorder %v1110, 4294967294
    %vm1175 = vcmp.ge.s32.totalorder %v1111, 4294967294
    %vm1176 = vcmp.ge.s32.totalorder %v1112, 4294967294
    %vm1177 = vcmp.ge.s32.totalorder %v1113, 4294967294
    %vm1178 = vcmp.ge.s32.totalorder %v1114, 4294967294
    %vm1179 = vcmp.ge.s32.totalorder %v1115, 4294967294
    %vm1180 = vcmp.ge.s32.totalorder %v1116, 4294967294
    %vm1181 = vcmp.ge.s32.totalorder %v1117, 4294967294
    %vm1182 = vcmp.ge.s32.totalorder %v1118, 4294967294
    %vm1183 = vcmp.ge.s32.totalorder %v1119, 4294967294
    %vm1184 = vcmp.ge.s32.totalorder %v1120, 4294967294
    %vm1185 = vcmp.ge.s32.totalorder %v1121, 4294967294
    %vm1186 = vcmp.ge.s32.totalorder %v1122, 4294967294
    %vm1187 = vcmp.ge.s32.totalorder %v1123, 4294967294
    %vm1188 = vcmp.ge.s32.totalorder %v1124, 4294967294
    %vm1189 = vcmp.ge.s32.totalorder %v1125, 4294967294
    %vm1190 = vcmp.ge.s32.totalorder %v1126, 4294967294
    %vm1191 = vcmp.ge.s32.totalorder %v1127, 4294967294
    %vm1192 = vcmp.ge.s32.totalorder %v1128, 4294967294
    %vm1193 = vcmp.ge.s32.totalorder %v1129, 4294967294
    %vm1194 = vcmp.ge.s32.totalorder %v1130, 4294967294
    %vm1195 = vcmp.ge.s32.totalorder %v1131, 4294967294
    %vm1196 = vcmp.ge.s32.totalorder %v1132, 4294967294
    %vm1197 = vcmp.ge.s32.totalorder %v1133, 4294967294
    %vm1198 = vcmp.ge.s32.totalorder %v1134, 4294967294
    %vm1199 = vcmp.ge.s32.totalorder %v1135, 4294967294
    %vm1200 = vcmp.ge.s32.totalorder %v1136, 4294967294
    %vm1201 = vcmp.ge.s32.totalorder %v1137, 4294967294
    %vm1202 = vcmp.ge.s32.totalorder %v1138, 4294967294
    %vm1203 = vcmp.ge.s32.totalorder %v1139, 4294967294
    %vm1204 = vcmp.ge.s32.totalorder %v1140, 4294967294
    %vm1205 = vcmp.ge.s32.totalorder %v1141, 4294967294
    %vm1206 = vcmp.ge.s32.totalorder %v1142, 4294967294
    %vm1207 = vcmp.ge.s32.totalorder %v1143, 4294967294
    %vm1208 = vcmp.ge.s32.totalorder %v1144, 4294967294
    %vm1209 = vcmp.ge.s32.totalorder %v1145, 4294967294
    %vm1210 = vcmp.ge.s32.totalorder %v1146, 4294967294
    %vm1211 = vcmp.ge.s32.totalorder %v1147, 4294967294
    %vm1212 = vcmp.ge.s32.totalorder %v1148, 4294967294
    %vm1213 = vcmp.ge.s32.totalorder %v1149, 4294967294
    %vm1214 = vcmp.ge.s32.totalorder %v1150, 4294967294
    %vm1215 = vcmp.ge.s32.totalorder %v1151, 4294967294
    %vm1216 = vcmp.ge.s32.totalorder %v1152, 4294967294
    %vm1217 = vcmp.ge.s32.totalorder %v1153, 4294967294
    %vm1218 = vcmp.le.s32.totalorder %v1090, 2
    %vm1219 = vcmp.le.s32.totalorder %v1091, 2
    %vm1220 = vcmp.le.s32.totalorder %v1092, 2
    %vm1221 = vcmp.le.s32.totalorder %v1093, 2
    %vm1222 = vcmp.le.s32.totalorder %v1094, 2
    %vm1223 = vcmp.le.s32.totalorder %v1095, 2
    %vm1224 = vcmp.le.s32.totalorder %v1096, 2
    %vm1225 = vcmp.le.s32.totalorder %v1097, 2
    %vm1226 = vcmp.le.s32.totalorder %v1098, 2
    %vm1227 = vcmp.le.s32.totalorder %v1099, 2
    %vm1228 = vcmp.le.s32.totalorder %v1100, 2
    %vm1229 = vcmp.le.s32.totalorder %v1101, 2
    %vm1230 = vcmp.le.s32.totalorder %v1102, 2
    %vm1231 = vcmp.le.s32.totalorder %v1103, 2
    %vm1232 = vcmp.le.s32.totalorder %v1104, 2
    %vm1233 = vcmp.le.s32.totalorder %v1105, 2
    %vm1234 = vcmp.le.s32.totalorder %v1106, 2
    %vm1235 = vcmp.le.s32.totalorder %v1107, 2
    %vm1236 = vcmp.le.s32.totalorder %v1108, 2
    %vm1237 = vcmp.le.s32.totalorder %v1109, 2
    %vm1238 = vcmp.le.s32.totalorder %v1110, 2
    %vm1239 = vcmp.le.s32.totalorder %v1111, 2
    %vm1240 = vcmp.le.s32.totalorder %v1112, 2
    %vm1241 = vcmp.le.s32.totalorder %v1113, 2
    %vm1242 = vcmp.le.s32.totalorder %v1114, 2
    %vm1243 = vcmp.le.s32.totalorder %v1115, 2
    %vm1244 = vcmp.le.s32.totalorder %v1116, 2
    %vm1245 = vcmp.le.s32.totalorder %v1117, 2
    %vm1246 = vcmp.le.s32.totalorder %v1118, 2
    %vm1247 = vcmp.le.s32.totalorder %v1119, 2
    %vm1248 = vcmp.le.s32.totalorder %v1120, 2
    %vm1249 = vcmp.le.s32.totalorder %v1121, 2
    %vm1250 = vcmp.le.s32.totalorder %v1122, 2
    %vm1251 = vcmp.le.s32.totalorder %v1123, 2
    %vm1252 = vcmp.le.s32.totalorder %v1124, 2
    %vm1253 = vcmp.le.s32.totalorder %v1125, 2
    %vm1254 = vcmp.le.s32.totalorder %v1126, 2
    %vm1255 = vcmp.le.s32.totalorder %v1127, 2
    %vm1256 = vcmp.le.s32.totalorder %v1128, 2
    %vm1257 = vcmp.le.s32.totalorder %v1129, 2
    %vm1258 = vcmp.le.s32.totalorder %v1130, 2
    %vm1259 = vcmp.le.s32.totalorder %v1131, 2
    %vm1260 = vcmp.le.s32.totalorder %v1132, 2
    %vm1261 = vcmp.le.s32.totalorder %v1133, 2
    %vm1262 = vcmp.le.s32.totalorder %v1134, 2
    %vm1263 = vcmp.le.s32.totalorder %v1135, 2
    %vm1264 = vcmp.le.s32.totalorder %v1136, 2
    %vm1265 = vcmp.le.s32.totalorder %v1137, 2
    %vm1266 = vcmp.le.s32.totalorder %v1138, 2
    %vm1267 = vcmp.le.s32.totalorder %v1139, 2
    %vm1268 = vcmp.le.s32.totalorder %v1140, 2
    %vm1269 = vcmp.le.s32.totalorder %v1141, 2
    %vm1270 = vcmp.le.s32.totalorder %v1142, 2
    %vm1271 = vcmp.le.s32.totalorder %v1143, 2
    %vm1272 = vcmp.le.s32.totalorder %v1144, 2
    %vm1273 = vcmp.le.s32.totalorder %v1145, 2
    %vm1274 = vcmp.le.s32.totalorder %v1146, 2
    %vm1275 = vcmp.le.s32.totalorder %v1147, 2
    %vm1276 = vcmp.le.s32.totalorder %v1148, 2
    %vm1277 = vcmp.le.s32.totalorder %v1149, 2
    %vm1278 = vcmp.le.s32.totalorder %v1150, 2
    %vm1279 = vcmp.le.s32.totalorder %v1151, 2
    %vm1280 = vcmp.le.s32.totalorder %v1152, 2
    %vm1281 = vcmp.le.s32.totalorder %v1153, 2
    %vm1282 = vmand %vm1154, %vm1218
    %vm1283 = vmand %vm1155, %vm1219
    %vm1284 = vmand %vm1156, %vm1220
    %vm1285 = vmand %vm1157, %vm1221
    %vm1286 = vmand %vm1158, %vm1222
    %vm1287 = vmand %vm1159, %vm1223
    %vm1288 = vmand %vm1160, %vm1224
    %vm1289 = vmand %vm1161, %vm1225
    %vm1290 = vmand %vm1162, %vm1226
    %vm1291 = vmand %vm1163, %vm1227
    %vm1292 = vmand %vm1164, %vm1228
    %vm1293 = vmand %vm1165, %vm1229
    %vm1294 = vmand %vm1166, %vm1230
    %vm1295 = vmand %vm1167, %vm1231
    %vm1296 = vmand %vm1168, %vm1232
    %vm1297 = vmand %vm1169, %vm1233
    %vm1298 = vmand %vm1170, %vm1234
    %vm1299 = vmand %vm1171, %vm1235
    %vm1300 = vmand %vm1172, %vm1236
    %vm1301 = vmand %vm1173, %vm1237
    %vm1302 = vmand %vm1174, %vm1238
    %vm1303 = vmand %vm1175, %vm1239
    %vm1304 = vmand %vm1176, %vm1240
    %vm1305 = vmand %vm1177, %vm1241
    %vm1306 = vmand %vm1178, %vm1242
    %vm1307 = vmand %vm1179, %vm1243
    %vm1308 = vmand %vm1180, %vm1244
    %vm1309 = vmand %vm1181, %vm1245
    %vm1310 = vmand %vm1182, %vm1246
    %vm1311 = vmand %vm1183, %vm1247
    %vm1312 = vmand %vm1184, %vm1248
    %vm1313 = vmand %vm1185, %vm1249
    %vm1314 = vmand %vm1186, %vm1250
    %vm1315 = vmand %vm1187, %vm1251
    %vm1316 = vmand %vm1188, %vm1252
    %vm1317 = vmand %vm1189, %vm1253
    %vm1318 = vmand %vm1190, %vm1254
    %vm1319 = vmand %vm1191, %vm1255
    %vm1320 = vmand %vm1192, %vm1256
    %vm1321 = vmand %vm1193, %vm1257
    %vm1322 = vmand %vm1194, %vm1258
    %vm1323 = vmand %vm1195, %vm1259
    %vm1324 = vmand %vm1196, %vm1260
    %vm1325 = vmand %vm1197, %vm1261
    %vm1326 = vmand %vm1198, %vm1262
    %vm1327 = vmand %vm1199, %vm1263
    %vm1328 = vmand %vm1200, %vm1264
    %vm1329 = vmand %vm1201, %vm1265
    %vm1330 = vmand %vm1202, %vm1266
    %vm1331 = vmand %vm1203, %vm1267
    %vm1332 = vmand %vm1204, %vm1268
    %vm1333 = vmand %vm1205, %vm1269
    %vm1334 = vmand %vm1206, %vm1270
    %vm1335 = vmand %vm1207, %vm1271
    %vm1336 = vmand %vm1208, %vm1272
    %vm1337 = vmand %vm1209, %vm1273
    %vm1338 = vmand %vm1210, %vm1274
    %vm1339 = vmand %vm1211, %vm1275
    %vm1340 = vmand %vm1212, %vm1276
    %vm1341 = vmand %vm1213, %vm1277
    %vm1342 = vmand %vm1214, %vm1278
    %vm1343 = vmand %vm1215, %vm1279
    %vm1344 = vmand %vm1216, %vm1280
    %vm1345 = vmand %vm1217, %vm1281
    %v1346 = vrot.slane %v127, 2
    %v1347 = vrot.slane %v128, 2
    %v1348 = vrot.slane %v129, 2
    %v1349 = vrot.slane %v130, 2
    %v1350 = vrot.slane %v131, 2
    %v1351 = vrot.slane %v132, 2
    %v1352 = vrot.slane %v133, 2
    %v1353 = vrot.slane %v134, 2
    %v1354 = vrot.slane %v135, 2
    %v1355 = vrot.slane %v136, 2
    %v1356 = vrot.slane %v137, 2
    %v1357 = vrot.slane %v138, 2
    %v1358 = vrot.slane %v139, 2
    %v1359 = vrot.slane %v140, 2
    %v1360 = vrot.slane %v141, 2
    %v1361 = vrot.slane %v142, 2
    %v1362 = vrot.slane %v143, 2
    %v1363 = vrot.slane %v144, 2
    %v1364 = vrot.slane %v145, 2
    %v1365 = vrot.slane %v146, 2
    %v1366 = vrot.slane %v147, 2
    %v1367 = vrot.slane %v148, 2
    %v1368 = vrot.slane %v149, 2
    %v1369 = vrot.slane %v150, 2
    %v1370 = vrot.slane %v151, 2
    %v1371 = vrot.slane %v152, 2
    %v1372 = vrot.slane %v153, 2
    %v1373 = vrot.slane %v154, 2
    %v1374 = vrot.slane %v155, 2
    %v1375 = vrot.slane %v156, 2
    %v1376 = vrot.slane %v157, 2
    %v1377 = vrot.slane %v158, 2
    %v1378 = vrot.slane %v159, 2
    %v1379 = vrot.slane %v160, 2
    %v1380 = vrot.slane %v161, 2
    %v1381 = vrot.slane %v162, 2
    %v1382 = vrot.slane %v163, 2
    %v1383 = vrot.slane %v164, 2
    %v1384 = vrot.slane %v165, 2
    %v1385 = vrot.slane %v166, 2
    %v1386 = vrot.slane %v167, 2
    %v1387 = vrot.slane %v168, 2
    %v1388 = vrot.slane %v169, 2
    %v1389 = vrot.slane %v170, 2
    %v1390 = vrot.slane %v171, 2
    %v1391 = vrot.slane %v172, 2
    %v1392 = vrot.slane %v173, 2
    %v1393 = vrot.slane %v174, 2
    %v1394 = vrot.slane %v175, 2
    %v1395 = vrot.slane %v176, 2
    %v1396 = vrot.slane %v177, 2
    %v1397 = vrot.slane %v178, 2
    %v1398 = vrot.slane %v179, 2
    %v1399 = vrot.slane %v180, 2
    %v1400 = vrot.slane %v181, 2
    %v1401 = vrot.slane %v182, 2
    %v1402 = vrot.slane %v183, 2
    %v1403 = vrot.slane %v184, 2
    %v1404 = vrot.slane %v185, 2
    %v1405 = vrot.slane %v186, 2
    %v1406 = vrot.slane %v187, 2
    %v1407 = vrot.slane %v188, 2
    %v1408 = vrot.slane %v189, 2
    %v1409 = vrot.slane %v190, 2
    %vm1410 = vcmp.lt.s32.totalorder %v63, 6
    %v1411 = vsel %vm1410, %v1408, %v1409
    %v1412 = vsel %vm1410, %v1407, %v1408
    %v1413 = vsel %vm1410, %v1406, %v1407
    %v1414 = vsel %vm1410, %v1405, %v1406
    %v1415 = vsel %vm1410, %v1404, %v1405
    %v1416 = vsel %vm1410, %v1403, %v1404
    %v1417 = vsel %vm1410, %v1402, %v1403
    %v1418 = vsel %vm1410, %v1401, %v1402
    %v1419 = vsel %vm1410, %v1400, %v1401
    %v1420 = vsel %vm1410, %v1399, %v1400
    %v1421 = vsel %vm1410, %v1398, %v1399
    %v1422 = vsel %vm1410, %v1397, %v1398
    %v1423 = vsel %vm1410, %v1396, %v1397
    %v1424 = vsel %vm1410, %v1395, %v1396
    %v1425 = vsel %vm1410, %v1394, %v1395
    %v1426 = vsel %vm1410, %v1393, %v1394
    %v1427 = vsel %vm1410, %v1392, %v1393
    %v1428 = vsel %vm1410, %v1391, %v1392
    %v1429 = vsel %vm1410, %v1390, %v1391
    %v1430 = vsel %vm1410, %v1389, %v1390
    %v1431 = vsel %vm1410, %v1388, %v1389
    %v1432 = vsel %vm1410, %v1387, %v1388
    %v1433 = vsel %vm1410, %v1386, %v1387
    %v1434 = vsel %vm1410, %v1385, %v1386
    %v1435 = vsel %vm1410, %v1384, %v1385
    %v1436 = vsel %vm1410, %v1383, %v1384
    %v1437 = vsel %vm1410, %v1382, %v1383
    %v1438 = vsel %vm1410, %v1381, %v1382
    %v1439 = vsel %vm1410, %v1380, %v1381
    %v1440 = vsel %vm1410, %v1379, %v1380
    %v1441 = vsel %vm1410, %v1378, %v1379
    %v1442 = vsel %vm1410, %v1377, %v1378
    %v1443 = vsel %vm1410, %v1376, %v1377
    %v1444 = vsel %vm1410, %v1375, %v1376
    %v1445 = vsel %vm1410, %v1374, %v1375
    %v1446 = vsel %vm1410, %v1373, %v1374
    %v1447 = vsel %vm1410, %v1372, %v1373
    %v1448 = vsel %vm1410, %v1371, %v1372
    %v1449 = vsel %vm1410, %v1370, %v1371
    %v1450 = vsel %vm1410, %v1369, %v1370
    %v1451 = vsel %vm1410, %v1368, %v1369
    %v1452 = vsel %vm1410, %v1367, %v1368
    %v1453 = vsel %vm1410, %v1366, %v1367
    %v1454 = vsel %vm1410, %v1365, %v1366
    %v1455 = vsel %vm1410, %v1364, %v1365
    %v1456 = vsel %vm1410, %v1363, %v1364
    %v1457 = vsel %vm1410, %v1362, %v1363
    %v1458 = vsel %vm1410, %v1361, %v1362
    %v1459 = vsel %vm1410, %v1360, %v1361
    %v1460 = vsel %vm1410, %v1359, %v1360
    %v1461 = vsel %vm1410, %v1358, %v1359
    %v1462 = vsel %vm1410, %v1357, %v1358
    %v1463 = vsel %vm1410, %v1356, %v1357
    %v1464 = vsel %vm1410, %v1355, %v1356
    %v1465 = vsel %vm1410, %v1354, %v1355
    %v1466 = vsel %vm1410, %v1353, %v1354
    %v1467 = vsel %vm1410, %v1352, %v1353
    %v1468 = vsel %vm1410, %v1351, %v1352
    %v1469 = vsel %vm1410, %v1350, %v1351
    %v1470 = vsel %vm1410, %v1349, %v1350
    %v1471 = vsel %vm1410, %v1348, %v1349
    %v1472 = vsel %vm1410, %v1347, %v1348
    %v1473 = vsel %vm1410, %v1346, %v1347
    %v1474 = vsel %vm1410, %v1409, %v1346
    %v1475 = vsub.s32 %v1473, %v127
    %v1476 = vsub.s32 %v1472, %v128
    %v1477 = vsub.s32 %v1471, %v129
    %v1478 = vsub.s32 %v1470, %v130
    %v1479 = vsub.s32 %v1469, %v131
    %v1480 = vsub.s32 %v1468, %v132
    %v1481 = vsub.s32 %v1467, %v133
    %v1482 = vsub.s32 %v1466, %v134
    %v1483 = vsub.s32 %v1465, %v135
    %v1484 = vsub.s32 %v1464, %v136
    %v1485 = vsub.s32 %v1463, %v137
    %v1486 = vsub.s32 %v1462, %v138
    %v1487 = vsub.s32 %v1461, %v139
    %v1488 = vsub.s32 %v1460, %v140
    %v1489 = vsub.s32 %v1459, %v141
    %v1490 = vsub.s32 %v1458, %v142
    %v1491 = vsub.s32 %v1457, %v143
    %v1492 = vsub.s32 %v1456, %v144
    %v1493 = vsub.s32 %v1455, %v145
    %v1494 = vsub.s32 %v1454, %v146
    %v1495 = vsub.s32 %v1453, %v147
    %v1496 = vsub.s32 %v1452, %v148
    %v1497 = vsub.s32 %v1451, %v149
    %v1498 = vsub.s32 %v1450, %v150
    %v1499 = vsub.s32 %v1449, %v151
    %v1500 = vsub.s32 %v1448, %v152
    %v1501 = vsub.s32 %v1447, %v153
    %v1502 = vsub.s32 %v1446, %v154
    %v1503 = vsub.s32 %v1445, %v155
    %v1504 = vsub.s32 %v1444, %v156
    %v1505 = vsub.s32 %v1443, %v157
    %v1506 = vsub.s32 %v1442, %v158
    %v1507 = vsub.s32 %v1441, %v159
    %v1508 = vsub.s32 %v1440, %v160
    %v1509 = vsub.s32 %v1439, %v161
    %v1510 = vsub.s32 %v1438, %v162
    %v1511 = vsub.s32 %v1437, %v163
    %v1512 = vsub.s32 %v1436, %v164
    %v1513 = vsub.s32 %v1435, %v165
    %v1514 = vsub.s32 %v1434, %v166
    %v1515 = vsub.s32 %v1433, %v167
    %v1516 = vsub.s32 %v1432, %v168
    %v1517 = vsub.s32 %v1431, %v169
    %v1518 = vsub.s32 %v1430, %v170
    %v1519 = vsub.s32 %v1429, %v171
    %v1520 = vsub.s32 %v1428, %v172
    %v1521 = vsub.s32 %v1427, %v173
    %v1522 = vsub.s32 %v1426, %v174
    %v1523 = vsub.s32 %v1425, %v175
    %v1524 = vsub.s32 %v1424, %v176
    %v1525 = vsub.s32 %v1423, %v177
    %v1526 = vsub.s32 %v1422, %v178
    %v1527 = vsub.s32 %v1421, %v179
    %v1528 = vsub.s32 %v1420, %v180
    %v1529 = vsub.s32 %v1419, %v181
    %v1530 = vsub.s32 %v1418, %v182
    %v1531 = vsub.s32 %v1417, %v183
    %v1532 = vsub.s32 %v1416, %v184
    %v1533 = vsub.s32 %v1415, %v185
    %v1534 = vsub.s32 %v1414, %v186
    %v1535 = vsub.s32 %v1413, %v187
    %v1536 = vsub.s32 %v1412, %v188
    %v1537 = vsub.s32 %v1411, %v189
    %v1538 = vsub.s32 %v1474, %v190
    %vm1539 = vcmp.ge.s32.totalorder %v1475, 4294967294
    %vm1540 = vcmp.ge.s32.totalorder %v1476, 4294967294
    %vm1541 = vcmp.ge.s32.totalorder %v1477, 4294967294
    %vm1542 = vcmp.ge.s32.totalorder %v1478, 4294967294
    %vm1543 = vcmp.ge.s32.totalorder %v1479, 4294967294
    %vm1544 = vcmp.ge.s32.totalorder %v1480, 4294967294
    %vm1545 = vcmp.ge.s32.totalorder %v1481, 4294967294
    %vm1546 = vcmp.ge.s32.totalorder %v1482, 4294967294
    %vm1547 = vcmp.ge.s32.totalorder %v1483, 4294967294
    %vm1548 = vcmp.ge.s32.totalorder %v1484, 4294967294
    %vm1549 = vcmp.ge.s32.totalorder %v1485, 4294967294
    %vm1550 = vcmp.ge.s32.totalorder %v1486, 4294967294
    %vm1551 = vcmp.ge.s32.totalorder %v1487, 4294967294
    %vm1552 = vcmp.ge.s32.totalorder %v1488, 4294967294
    %vm1553 = vcmp.ge.s32.totalorder %v1489, 4294967294
    %vm1554 = vcmp.ge.s32.totalorder %v1490, 4294967294
    %vm1555 = vcmp.ge.s32.totalorder %v1491, 4294967294
    %vm1556 = vcmp.ge.s32.totalorder %v1492, 4294967294
    %vm1557 = vcmp.ge.s32.totalorder %v1493, 4294967294
    %vm1558 = vcmp.ge.s32.totalorder %v1494, 4294967294
    %vm1559 = vcmp.ge.s32.totalorder %v1495, 4294967294
    %vm1560 = vcmp.ge.s32.totalorder %v1496, 4294967294
    %vm1561 = vcmp.ge.s32.totalorder %v1497, 4294967294
    %vm1562 = vcmp.ge.s32.totalorder %v1498, 4294967294
    %vm1563 = vcmp.ge.s32.totalorder %v1499, 4294967294
    %vm1564 = vcmp.ge.s32.totalorder %v1500, 4294967294
    %vm1565 = vcmp.ge.s32.totalorder %v1501, 4294967294
    %vm1566 = vcmp.ge.s32.totalorder %v1502, 4294967294
    %vm1567 = vcmp.ge.s32.totalorder %v1503, 4294967294
    %vm1568 = vcmp.ge.s32.totalorder %v1504, 4294967294
    %vm1569 = vcmp.ge.s32.totalorder %v1505, 4294967294
    %vm1570 = vcmp.ge.s32.totalorder %v1506, 4294967294
    %vm1571 = vcmp.ge.s32.totalorder %v1507, 4294967294
    %vm1572 = vcmp.ge.s32.totalorder %v1508, 4294967294
    %vm1573 = vcmp.ge.s32.totalorder %v1509, 4294967294
    %vm1574 = vcmp.ge.s32.totalorder %v1510, 4294967294
    %vm1575 = vcmp.ge.s32.totalorder %v1511, 4294967294
    %vm1576 = vcmp.ge.s32.totalorder %v1512, 4294967294
    %vm1577 = vcmp.ge.s32.totalorder %v1513, 4294967294
    %vm1578 = vcmp.ge.s32.totalorder %v1514, 4294967294
    %vm1579 = vcmp.ge.s32.totalorder %v1515, 4294967294
    %vm1580 = vcmp.ge.s32.totalorder %v1516, 4294967294
    %vm1581 = vcmp.ge.s32.totalorder %v1517, 4294967294
    %vm1582 = vcmp.ge.s32.totalorder %v1518, 4294967294
    %vm1583 = vcmp.ge.s32.totalorder %v1519, 4294967294
    %vm1584 = vcmp.ge.s32.totalorder %v1520, 4294967294
    %vm1585 = vcmp.ge.s32.totalorder %v1521, 4294967294
    %vm1586 = vcmp.ge.s32.totalorder %v1522, 4294967294
    %vm1587 = vcmp.ge.s32.totalorder %v1523, 4294967294
    %vm1588 = vcmp.ge.s32.totalorder %v1524, 4294967294
    %vm1589 = vcmp.ge.s32.totalorder %v1525, 4294967294
    %vm1590 = vcmp.ge.s32.totalorder %v1526, 4294967294
    %vm1591 = vcmp.ge.s32.totalorder %v1527, 4294967294
    %vm1592 = vcmp.ge.s32.totalorder %v1528, 4294967294
    %vm1593 = vcmp.ge.s32.totalorder %v1529, 4294967294
    %vm1594 = vcmp.ge.s32.totalorder %v1530, 4294967294
    %vm1595 = vcmp.ge.s32.totalorder %v1531, 4294967294
    %vm1596 = vcmp.ge.s32.totalorder %v1532, 4294967294
    %vm1597 = vcmp.ge.s32.totalorder %v1533, 4294967294
    %vm1598 = vcmp.ge.s32.totalorder %v1534, 4294967294
    %vm1599 = vcmp.ge.s32.totalorder %v1535, 4294967294
    %vm1600 = vcmp.ge.s32.totalorder %v1536, 4294967294
    %vm1601 = vcmp.ge.s32.totalorder %v1537, 4294967294
    %vm1602 = vcmp.ge.s32.totalorder %v1538, 4294967294
    %vm1603 = vcmp.le.s32.totalorder %v1475, 2
    %vm1604 = vcmp.le.s32.totalorder %v1476, 2
    %vm1605 = vcmp.le.s32.totalorder %v1477, 2
    %vm1606 = vcmp.le.s32.totalorder %v1478, 2
    %vm1607 = vcmp.le.s32.totalorder %v1479, 2
    %vm1608 = vcmp.le.s32.totalorder %v1480, 2
    %vm1609 = vcmp.le.s32.totalorder %v1481, 2
    %vm1610 = vcmp.le.s32.totalorder %v1482, 2
    %vm1611 = vcmp.le.s32.totalorder %v1483, 2
    %vm1612 = vcmp.le.s32.totalorder %v1484, 2
    %vm1613 = vcmp.le.s32.totalorder %v1485, 2
    %vm1614 = vcmp.le.s32.totalorder %v1486, 2
    %vm1615 = vcmp.le.s32.totalorder %v1487, 2
    %vm1616 = vcmp.le.s32.totalorder %v1488, 2
    %vm1617 = vcmp.le.s32.totalorder %v1489, 2
    %vm1618 = vcmp.le.s32.totalorder %v1490, 2
    %vm1619 = vcmp.le.s32.totalorder %v1491, 2
    %vm1620 = vcmp.le.s32.totalorder %v1492, 2
    %vm1621 = vcmp.le.s32.totalorder %v1493, 2
    %vm1622 = vcmp.le.s32.totalorder %v1494, 2
    %vm1623 = vcmp.le.s32.totalorder %v1495, 2
    %vm1624 = vcmp.le.s32.totalorder %v1496, 2
    %vm1625 = vcmp.le.s32.totalorder %v1497, 2
    %vm1626 = vcmp.le.s32.totalorder %v1498, 2
    %vm1627 = vcmp.le.s32.totalorder %v1499, 2
    %vm1628 = vcmp.le.s32.totalorder %v1500, 2
    %vm1629 = vcmp.le.s32.totalorder %v1501, 2
    %vm1630 = vcmp.le.s32.totalorder %v1502, 2
    %vm1631 = vcmp.le.s32.totalorder %v1503, 2
    %vm1632 = vcmp.le.s32.totalorder %v1504, 2
    %vm1633 = vcmp.le.s32.totalorder %v1505, 2
    %vm1634 = vcmp.le.s32.totalorder %v1506, 2
    %vm1635 = vcmp.le.s32.totalorder %v1507, 2
    %vm1636 = vcmp.le.s32.totalorder %v1508, 2
    %vm1637 = vcmp.le.s32.totalorder %v1509, 2
    %vm1638 = vcmp.le.s32.totalorder %v1510, 2
    %vm1639 = vcmp.le.s32.totalorder %v1511, 2
    %vm1640 = vcmp.le.s32.totalorder %v1512, 2
    %vm1641 = vcmp.le.s32.totalorder %v1513, 2
    %vm1642 = vcmp.le.s32.totalorder %v1514, 2
    %vm1643 = vcmp.le.s32.totalorder %v1515, 2
    %vm1644 = vcmp.le.s32.totalorder %v1516, 2
    %vm1645 = vcmp.le.s32.totalorder %v1517, 2
    %vm1646 = vcmp.le.s32.totalorder %v1518, 2
    %vm1647 = vcmp.le.s32.totalorder %v1519, 2
    %vm1648 = vcmp.le.s32.totalorder %v1520, 2
    %vm1649 = vcmp.le.s32.totalorder %v1521, 2
    %vm1650 = vcmp.le.s32.totalorder %v1522, 2
    %vm1651 = vcmp.le.s32.totalorder %v1523, 2
    %vm1652 = vcmp.le.s32.totalorder %v1524, 2
    %vm1653 = vcmp.le.s32.totalorder %v1525, 2
    %vm1654 = vcmp.le.s32.totalorder %v1526, 2
    %vm1655 = vcmp.le.s32.totalorder %v1527, 2
    %vm1656 = vcmp.le.s32.totalorder %v1528, 2
    %vm1657 = vcmp.le.s32.totalorder %v1529, 2
    %vm1658 = vcmp.le.s32.totalorder %v1530, 2
    %vm1659 = vcmp.le.s32.totalorder %v1531, 2
    %vm1660 = vcmp.le.s32.totalorder %v1532, 2
    %vm1661 = vcmp.le.s32.totalorder %v1533, 2
    %vm1662 = vcmp.le.s32.totalorder %v1534, 2
    %vm1663 = vcmp.le.s32.totalorder %v1535, 2
    %vm1664 = vcmp.le.s32.totalorder %v1536, 2
    %vm1665 = vcmp.le.s32.totalorder %v1537, 2
    %vm1666 = vcmp.le.s32.totalorder %v1538, 2
    %vm1667 = vmand %vm1539, %vm1603
    %vm1668 = vmand %vm1540, %vm1604
    %vm1669 = vmand %vm1541, %vm1605
    %vm1670 = vmand %vm1542, %vm1606
    %vm1671 = vmand %vm1543, %vm1607
    %vm1672 = vmand %vm1544, %vm1608
    %vm1673 = vmand %vm1545, %vm1609
    %vm1674 = vmand %vm1546, %vm1610
    %vm1675 = vmand %vm1547, %vm1611
    %vm1676 = vmand %vm1548, %vm1612
    %vm1677 = vmand %vm1549, %vm1613
    %vm1678 = vmand %vm1550, %vm1614
    %vm1679 = vmand %vm1551, %vm1615
    %vm1680 = vmand %vm1552, %vm1616
    %vm1681 = vmand %vm1553, %vm1617
    %vm1682 = vmand %vm1554, %vm1618
    %vm1683 = vmand %vm1555, %vm1619
    %vm1684 = vmand %vm1556, %vm1620
    %vm1685 = vmand %vm1557, %vm1621
    %vm1686 = vmand %vm1558, %vm1622
    %vm1687 = vmand %vm1559, %vm1623
    %vm1688 = vmand %vm1560, %vm1624
    %vm1689 = vmand %vm1561, %vm1625
    %vm1690 = vmand %vm1562, %vm1626
    %vm1691 = vmand %vm1563, %vm1627
    %vm1692 = vmand %vm1564, %vm1628
    %vm1693 = vmand %vm1565, %vm1629
    %vm1694 = vmand %vm1566, %vm1630
    %vm1695 = vmand %vm1567, %vm1631
    %vm1696 = vmand %vm1568, %vm1632
    %vm1697 = vmand %vm1569, %vm1633
    %vm1698 = vmand %vm1570, %vm1634
    %vm1699 = vmand %vm1571, %vm1635
    %vm1700 = vmand %vm1572, %vm1636
    %vm1701 = vmand %vm1573, %vm1637
    %vm1702 = vmand %vm1574, %vm1638
    %vm1703 = vmand %vm1575, %vm1639
    %vm1704 = vmand %vm1576, %vm1640
    %vm1705 = vmand %vm1577, %vm1641
    %vm1706 = vmand %vm1578, %vm1642
    %vm1707 = vmand %vm1579, %vm1643
    %vm1708 = vmand %vm1580, %vm1644
    %vm1709 = vmand %vm1581, %vm1645
    %vm1710 = vmand %vm1582, %vm1646
    %vm1711 = vmand %vm1583, %vm1647
    %vm1712 = vmand %vm1584, %vm1648
    %vm1713 = vmand %vm1585, %vm1649
    %vm1714 = vmand %vm1586, %vm1650
    %vm1715 = vmand %vm1587, %vm1651
    %vm1716 = vmand %vm1588, %vm1652
    %vm1717 = vmand %vm1589, %vm1653
    %vm1718 = vmand %vm1590, %vm1654
    %vm1719 = vmand %vm1591, %vm1655
    %vm1720 = vmand %vm1592, %vm1656
    %vm1721 = vmand %vm1593, %vm1657
    %vm1722 = vmand %vm1594, %vm1658
    %vm1723 = vmand %vm1595, %vm1659
    %vm1724 = vmand %vm1596, %vm1660
    %vm1725 = vmand %vm1597, %vm1661
    %vm1726 = vmand %vm1598, %vm1662
    %vm1727 = vmand %vm1599, %vm1663
    %vm1728 = vmand %vm1600, %vm1664
    %vm1729 = vmand %vm1601, %vm1665
    %vm1730 = vmand %vm1602, %vm1666
    %v1731 = vld [vmem:[#allocation2] sm:$0xff]
    %v1732 = vld [vmem:[#allocation2 + $0x8] sm:$0xff]
    %v1733 = vld [vmem:[#allocation2 + $0x10] sm:$0xff]
    %v1734 = vld [vmem:[#allocation2 + $0x18] sm:$0xff]
    %v1735 = vld [vmem:[#allocation2 + $0x20] sm:$0xff]
    %v1736 = vld [vmem:[#allocation2 + $0x28] sm:$0xff]
    %v1737 = vld [vmem:[#allocation2 + $0x30] sm:$0xff]
    %v1738 = vld [vmem:[#allocation2 + $0x38] sm:$0xff]
    %v1739 = vld [vmem:[#allocation2 + $0x40] sm:$0xff]
    %v1740 = vld [vmem:[#allocation2 + $0x48] sm:$0xff]
    %v1741 = vld [vmem:[#allocation2 + $0x50] sm:$0xff]
    %v1742 = vld [vmem:[#allocation2 + $0x58] sm:$0xff]
    %v1743 = vld [vmem:[#allocation2 + $0x60] sm:$0xff]
    %v1744 = vld [vmem:[#allocation2 + $0x68] sm:$0xff]
    %v1745 = vld [vmem:[#allocation2 + $0x70] sm:$0xff]
    %v1746 = vld [vmem:[#allocation2 + $0x78] sm:$0xff]
    %v1747 = vld [vmem:[#allocation2 + $0x80] sm:$0xff]
    %v1748 = vld [vmem:[#allocation2 + $0x88] sm:$0xff]
    %v1749 = vld [vmem:[#allocation2 + $0x90] sm:$0xff]
    %v1750 = vld [vmem:[#allocation2 + $0x98] sm:$0xff]
    %v1751 = vld [vmem:[#allocation2 + $0xa0] sm:$0xff]
    %v1752 = vld [vmem:[#allocation2 + $0xa8] sm:$0xff]
    %v1753 = vld [vmem:[#allocation2 + $0xb0] sm:$0xff]
    %v1754 = vld [vmem:[#allocation2 + $0xb8] sm:$0xff]
    %v1755 = vld [vmem:[#allocation2 + $0xc0] sm:$0xff]
    %v1756 = vld [vmem:[#allocation2 + $0xc8] sm:$0xff]
    %v1757 = vld [vmem:[#allocation2 + $0xd0] sm:$0xff]
    %v1758 = vld [vmem:[#allocation2 + $0xd8] sm:$0xff]
    %v1759 = vld [vmem:[#allocation2 + $0xe0] sm:$0xff]
    %v1760 = vld [vmem:[#allocation2 + $0xe8] sm:$0xff]
    %v1761 = vld [vmem:[#allocation2 + $0xf0] sm:$0xff]
    %v1762 = vld [vmem:[#allocation2 + $0xf8] sm:$0xff]
    %v1763 = vld [vmem:[#allocation2 + $0x100] sm:$0xff]
    %v1764 = vld [vmem:[#allocation2 + $0x108] sm:$0xff]
    %v1765 = vld [vmem:[#allocation2 + $0x110] sm:$0xff]
    %v1766 = vld [vmem:[#allocation2 + $0x118] sm:$0xff]
    %v1767 = vld [vmem:[#allocation2 + $0x120] sm:$0xff]
    %v1768 = vld [vmem:[#allocation2 + $0x128] sm:$0xff]
    %v1769 = vld [vmem:[#allocation2 + $0x130] sm:$0xff]
    %v1770 = vld [vmem:[#allocation2 + $0x138] sm:$0xff]
    %v1771 = vld [vmem:[#allocation2 + $0x140] sm:$0xff]
    %v1772 = vld [vmem:[#allocation2 + $0x148] sm:$0xff]
    %v1773 = vld [vmem:[#allocation2 + $0x150] sm:$0xff]
    %v1774 = vld [vmem:[#allocation2 + $0x158] sm:$0xff]
    %v1775 = vld [vmem:[#allocation2 + $0x160] sm:$0xff]
    %v1776 = vld [vmem:[#allocation2 + $0x168] sm:$0xff]
    %v1777 = vld [vmem:[#allocation2 + $0x170] sm:$0xff]
    %v1778 = vld [vmem:[#allocation2 + $0x178] sm:$0xff]
    %v1779 = vld [vmem:[#allocation2 + $0x180] sm:$0xff]
    %v1780 = vld [vmem:[#allocation2 + $0x188] sm:$0xff]
    %v1781 = vld [vmem:[#allocation2 + $0x190] sm:$0xff]
    %v1782 = vld [vmem:[#allocation2 + $0x198] sm:$0xff]
    %v1783 = vld [vmem:[#allocation2 + $0x1a0] sm:$0xff]
    %v1784 = vld [vmem:[#allocation2 + $0x1a8] sm:$0xff]
    %v1785 = vld [vmem:[#allocation2 + $0x1b0] sm:$0xff]
    %v1786 = vld [vmem:[#allocation2 + $0x1b8] sm:$0xff]
    %v1787 = vld [vmem:[#allocation2 + $0x1c0] sm:$0xff]
    %v1788 = vld [vmem:[#allocation2 + $0x1c8] sm:$0xff]
    %v1789 = vld [vmem:[#allocation2 + $0x1d0] sm:$0xff]
    %v1790 = vld [vmem:[#allocation2 + $0x1d8] sm:$0xff]
    %v1791 = vld [vmem:[#allocation2 + $0x1e0] sm:$0xff]
    %v1792 = vld [vmem:[#allocation2 + $0x1e8] sm:$0xff]
    %v1793 = vld [vmem:[#allocation2 + $0x1f0] sm:$0xff]
    %v1794 = vld [vmem:[#allocation2 + $0x1f8] sm:$0xff]
    %v1795 = vld [vmem:[#allocation5] sm:$0xff]
    %v1796 = vld [vmem:[#allocation5 + $0x8] sm:$0xff]
    %v1797 = vld [vmem:[#allocation5 + $0x10] sm:$0xff]
    %v1798 = vld [vmem:[#allocation5 + $0x18] sm:$0xff]
    %v1799 = vld [vmem:[#allocation5 + $0x20] sm:$0xff]
    %v1800 = vld [vmem:[#allocation5 + $0x28] sm:$0xff]
    %v1801 = vld [vmem:[#allocation5 + $0x30] sm:$0xff]
    %v1802 = vld [vmem:[#allocation5 + $0x38] sm:$0xff]
    %v1803 = vld [vmem:[%s2] sm:$0x1]
    %v1805 = vlaneseq
    %v1806 = vshrl.u32 %v1805, 7
    %v1807 = vsub.s32 0, %v1806
    %v1808 = vrot.slane %v1803, %v1807
    %vm1810 = vcmask 523264
    %v1812 = vsel %vm1810, %v1731, 0
    %v1815 = vsel %vm1810, %v1732, 0
    %v1818 = vsel %vm1810, %v1733, 0
    %v1821 = vsel %vm1810, %v1734, 0
    %v1824 = vsel %vm1810, %v1735, 0
    %v1827 = vsel %vm1810, %v1736, 0
    %v1830 = vsel %vm1810, %v1737, 0
    %v1833 = vsel %vm1810, %v1738, 0
    %v1836 = vsel %vm1810, %v1739, 0
    %v1839 = vsel %vm1810, %v1740, 0
    %v1842 = vsel %vm1810, %v1741, 0
    %v1845 = vsel %vm1810, %v1742, 0
    %v1848 = vsel %vm1810, %v1743, 0
    %v1851 = vsel %vm1810, %v1744, 0
    %v1854 = vsel %vm1810, %v1745, 0
    %v1857 = vsel %vm1810, %v1746, 0
    %v1860 = vsel %vm1810, %v1747, 0
    %v1863 = vsel %vm1810, %v1748, 0
    %v1866 = vsel %vm1810, %v1749, 0
    %v1869 = vsel %vm1810, %v1750, 0
    %v1872 = vsel %vm1810, %v1751, 0
    %v1875 = vsel %vm1810, %v1752, 0
    %v1878 = vsel %vm1810, %v1753, 0
    %v1881 = vsel %vm1810, %v1754, 0
    %v1884 = vsel %vm1810, %v1755, 0
    %v1887 = vsel %vm1810, %v1756, 0
    %v1890 = vsel %vm1810, %v1757, 0
    %v1893 = vsel %vm1810, %v1758, 0
    %v1896 = vsel %vm1810, %v1759, 0
    %v1899 = vsel %vm1810, %v1760, 0
    %v1902 = vsel %vm1810, %v1761, 0
    %v1905 = vsel %vm1810, %v1762, 0
    %v1908 = vsel %vm1810, %v1763, 0
    %v1911 = vsel %vm1810, %v1764, 0
    %v1914 = vsel %vm1810, %v1765, 0
    %v1917 = vsel %vm1810, %v1766, 0
    %v1920 = vsel %vm1810, %v1767, 0
    %v1923 = vsel %vm1810, %v1768, 0
    %v1926 = vsel %vm1810, %v1769, 0
    %v1929 = vsel %vm1810, %v1770, 0
    %v1932 = vsel %vm1810, %v1771, 0
    %v1935 = vsel %vm1810, %v1772, 0
    %v1938 = vsel %vm1810, %v1773, 0
    %v1941 = vsel %vm1810, %v1774, 0
    %v1944 = vsel %vm1810, %v1775, 0
    %v1947 = vsel %vm1810, %v1776, 0
    %v1950 = vsel %vm1810, %v1777, 0
    %v1953 = vsel %vm1810, %v1778, 0
    %v1956 = vsel %vm1810, %v1779, 0
    %v1959 = vsel %vm1810, %v1780, 0
    %v1962 = vsel %vm1810, %v1781, 0
    %v1965 = vsel %vm1810, %v1782, 0
    %v1968 = vsel %vm1810, %v1783, 0
    %v1971 = vsel %vm1810, %v1784, 0
    %v1974 = vsel %vm1810, %v1785, 0
    %v1977 = vsel %vm1810, %v1786, 0
    %v1980 = vsel %vm1810, %v1787, 0
    %v1983 = vsel %vm1810, %v1788, 0
    %v1986 = vsel %vm1810, %v1789, 0
    %v1989 = vsel %vm1810, %v1790, 0
    %v1992 = vsel %vm1810, %v1791, 0
    %v1995 = vsel %vm1810, %v1792, 0
    %v1998 = vsel %vm1810, %v1793, 0
    %v2001 = vsel %vm1810, %v1794, 0
    %2003 = vmatprep.subr.mxu0 0.0
    %2004 = vmatpush1.msra.mxu0 %v1795
    %2005 = vmatprep.subr.mxu0 0.0
    %2006 = vmatpush1.msra.mxu0 %v1796
    %2007 = vmatprep.subr.mxu0 0.0
    %2008 = vmatpush1.msra.mxu0 %v1797
    %2009 = vmatprep.subr.mxu0 0.0
    %2010 = vmatpush1.msra.mxu0 %v1798
    %2011 = vmatprep.subr.mxu0 0.0
    %2012 = vmatpush1.msra.mxu0 %v1799
    %2013 = vmatprep.subr.mxu0 0.0
    %2014 = vmatpush1.msra.mxu0 %v1800
    %2015 = vmatprep.subr.mxu0 0.0
    %2016 = vmatpush1.msra.mxu0 %v1801
    %2017 = vmatprep.subr.mxu0 0.0
    %2018 = vmatpush1.msra.mxu0 %v1802
    %2019 = vmatprep.subr.mxu0 0.0
    %2020 = vmatpush1.msra.mxu0 0.0
    %2021 = vmatprep.subr.mxu0 0.0
    %2022 = vmatpush1.msra.mxu0 0.0
    %2023 = vmatprep.subr.mxu0 0.0
    %2024 = vmatpush1.msra.mxu0 0.0
    %2025 = vmatprep.subr.mxu0 0.0
    %2026 = vmatpush1.msra.mxu0 0.0
    %2027 = vmatprep.subr.mxu0 0.0
    %2028 = vmatpush1.msra.mxu0 0.0
    %2029 = vmatprep.subr.mxu0 0.0
    %2030 = vmatpush1.msra.mxu0 0.0
    %2031 = vmatprep.subr.mxu0 0.0
    %2032 = vmatpush1.msra.mxu0 0.0
    %2033 = vmatprep.subr.mxu0 0.0
    %2034 = vmatpush1.msra.mxu0 0.0
    %2035 = vmatprep.subr.mxu0 0.0
    %2036 = vmatpush1.msra.mxu0 0.0
    %2037 = vmatprep.subr.mxu0 0.0
    %2038 = vmatpush1.msra.mxu0 0.0
    %2039 = vmatprep.subr.mxu0 0.0
    %2040 = vmatpush1.msra.mxu0 0.0
    %2041 = vmatprep.subr.mxu0 0.0
    %2042 = vmatpush1.msra.mxu0 0.0
    %2043 = vmatprep.subr.mxu0 0.0
    %2044 = vmatpush1.msra.mxu0 0.0
    %2045 = vmatprep.subr.mxu0 0.0
    %2046 = vmatpush1.msra.mxu0 0.0
    %2047 = vmatprep.subr.mxu0 0.0
    %2048 = vmatpush1.msra.mxu0 0.0
    %2049 = vmatprep.subr.mxu0 0.0
    %2050 = vmatpush1.msra.mxu0 0.0
    %2051 = vmatprep.subr.mxu0 0.0
    %2052 = vmatpush1.msra.mxu0 0.0
    %2053 = vmatprep.subr.mxu0 0.0
    %2054 = vmatpush1.msra.mxu0 0.0
    %2055 = vmatprep.subr.mxu0 0.0
    %2056 = vmatpush1.msra.mxu0 0.0
    %2057 = vmatprep.subr.mxu0 0.0
    %2058 = vmatpush1.msra.mxu0 0.0
    %2059 = vmatprep.subr.mxu0 0.0
    %2060 = vmatpush1.msra.mxu0 0.0
    %2061 = vmatprep.subr.mxu0 0.0
    %2062 = vmatpush1.msra.mxu0 0.0
    %2063 = vmatprep.subr.mxu0 0.0
    %2064 = vmatpush1.msra.mxu0 0.0
    %2065 = vmatprep.subr.mxu0 0.0
    %2066 = vmatpush1.msra.mxu0 0.0
    %2067 = vmatprep.mubr.f32.mxu0 0.0
    %2068 = vmatmul.mubr.f32.gmra.mrb[0].mxu0 %v1812
    %v2069 = vpop.f32.mrb[0].mxu0
    %v2070 = vadd.f32 %v1808, %v2069
    %v2071 = vpop.f32.mrb[0].mxu0
    %2072 = vmatprep.mubr.f32.mxu0 0.0
    %2073 = vmatmul.mubr.f32.gmra.mrb[0].mxu0 %v1815
    %v2074 = vpop.f32.mrb[0].mxu0
    %v2075 = vadd.f32 %v1808, %v2074
    %v2076 = vpop.f32.mrb[0].mxu0
    %2077 = vmatprep.mubr.f32.mxu0 0.0
    %2078 = vmatmul.mubr.f32.gmra.mrb[0].mxu0 %v1818
    %v2079 = vpop.f32.mrb[0].mxu0
    %v2080 = vadd.f32 %v1808, %v2079
    %v2081 = vpop.f32.mrb[0].mxu0
    %2082 = vmatprep.mubr.f32.mxu0 0.0
    %2083 = vmatmul.mubr.f32.gmra.mrb[0].mxu0 %v1821
    %v2084 = vpop.f32.mrb[0].mxu0
    %v2085 = vadd.f32 %v1808, %v2084
    %v2086 = vpop.f32.mrb[0].mxu0
    %2087 = vmatprep.mubr.f32.mxu0 0.0
    %2088 = vmatmul.mubr.f32.gmra.mrb[0].mxu0 %v1824
    %v2089 = vpop.f32.mrb[0].mxu0
    %v2090 = vadd.f32 %v1808, %v2089
    %v2091 = vpop.f32.mrb[0].mxu0
    %2092 = vmatprep.mubr.f32.mxu0 0.0
    %2093 = vmatmul.mubr.f32.gmra.mrb[0].mxu0 %v1827
    %v2094 = vpop.f32.mrb[0].mxu0
    %v2095 = vadd.f32 %v1808, %v2094
    %v2096 = vpop.f32.mrb[0].mxu0
    %2097 = vmatprep.mubr.f32.mxu0 0.0
    %2098 = vmatmul.mubr.f32.gmra.mrb[0].mxu0 %v1830
    %v2099 = vpop.f32.mrb[0].mxu0
    %v2100 = vadd.f32 %v1808, %v2099
    %v2101 = vpop.f32.mrb[0].mxu0
    %2102 = vmatprep.mubr.f32.mxu0 0.0
    %2103 = vmatmul.mubr.f32.gmra.mrb[0].mxu0 %v1833
    %v2104 = vpop.f32.mrb[0].mxu0
    %v2105 = vadd.f32 %v1808, %v2104
    %v2106 = vpop.f32.mrb[0].mxu0
    %2107 = vmatprep.mubr.f32.mxu0 0.0
    %2108 = vmatmul.mubr.f32.gmra.mrb[0].mxu0 %v1836
    %v2109 = vpop.f32.mrb[0].mxu0
    %v2110 = vadd.f32 %v1808, %v2109
    %v2111 = vpop.f32.mrb[0].mxu0
    %2112 = vmatprep.mubr.f32.mxu0 0.0
    %2113 = vmatmul.mubr.f32.gmra.mrb[0].mxu0 %v1839
    %v2114 = vpop.f32.mrb[0].mxu0
    %v2115 = vadd.f32 %v1808, %v2114
    %v2116 = vpop.f32.mrb[0].mxu0
    %2117 = vmatprep.mubr.f32.mxu0 0.0
    %2118 = vmatmul.mubr.f32.gmra.mrb[0].mxu0 %v1842
    %v2119 = vpop.f32.mrb[0].mxu0
    %v2120 = vadd.f32 %v1808, %v2119
    %v2121 = vpop.f32.mrb[0].mxu0
    %2122 = vmatprep.mubr.f32.mxu0 0.0
    %2123 = vmatmul.mubr.f32.gmra.mrb[0].mxu0 %v1845
    %v2124 = vpop.f32.mrb[0].mxu0
    %v2125 = vadd.f32 %v1808, %v2124
    %v2126 = vpop.f32.mrb[0].mxu0
    %2127 = vmatprep.mubr.f32.mxu0 0.0
    %2128 = vmatmul.mubr.f32.gmra.mrb[0].mxu0 %v1848
    %v2129 = vpop.f32.mrb[0].mxu0
    %v2130 = vadd.f32 %v1808, %v2129
    %v2131 = vpop.f32.mrb[0].mxu0
    %2132 = vmatprep.mubr.f32.mxu0 0.0
    %2133 = vmatmul.mubr.f32.gmra.mrb[0].mxu0 %v1851
    %v2134 = vpop.f32.mrb[0].mxu0
    %v2135 = vadd.f32 %v1808, %v2134
    %v2136 = vpop.f32.mrb[0].mxu0
    %2137 = vmatprep.mubr.f32.mxu0 0.0
    %2138 = vmatmul.mubr.f32.gmra.mrb[0].mxu0 %v1854
    %v2139 = vpop.f32.mrb[0].mxu0
    %v2140 = vadd.f32 %v1808, %v2139
    %v2141 = vpop.f32.mrb[0].mxu0
    %2142 = vmatprep.mubr.f32.mxu0 0.0
    %2143 = vmatmul.mubr.f32.gmra.mrb[0].mxu0 %v1857
    %v2144 = vpop.f32.mrb[0].mxu0
    %v2145 = vadd.f32 %v1808, %v2144
    %v2146 = vpop.f32.mrb[0].mxu0
    %2147 = vmatprep.mubr.f32.mxu0 0.0
    %2148 = vmatmul.mubr.f32.gmra.mrb[0].mxu0 %v1860
    %v2149 = vpop.f32.mrb[0].mxu0
    %v2150 = vadd.f32 %v1808, %v2149
    %v2151 = vpop.f32.mrb[0].mxu0
    %2152 = vmatprep.mubr.f32.mxu0 0.0
    %2153 = vmatmul.mubr.f32.gmra.mrb[0].mxu0 %v1863
    %v2154 = vpop.f32.mrb[0].mxu0
    %v2155 = vadd.f32 %v1808, %v2154
    %v2156 = vpop.f32.mrb[0].mxu0
    %2157 = vmatprep.mubr.f32.mxu0 0.0
    %2158 = vmatmul.mubr.f32.gmra.mrb[0].mxu0 %v1866
    %v2159 = vpop.f32.mrb[0].mxu0
    %v2160 = vadd.f32 %v1808, %v2159
    %v2161 = vpop.f32.mrb[0].mxu0
    %2162 = vmatprep.mubr.f32.mxu0 0.0
    %2163 = vmatmul.mubr.f32.gmra.mrb[0].mxu0 %v1869
    %v2164 = vpop.f32.mrb[0].mxu0
    %v2165 = vadd.f32 %v1808, %v2164
    %v2166 = vpop.f32.mrb[0].mxu0
    %2167 = vmatprep.mubr.f32.mxu0 0.0
    %2168 = vmatmul.mubr.f32.gmra.mrb[0].mxu0 %v1872
    %v2169 = vpop.f32.mrb[0].mxu0
    %v2170 = vadd.f32 %v1808, %v2169
    %v2171 = vpop.f32.mrb[0].mxu0
    %2172 = vmatprep.mubr.f32.mxu0 0.0
    %2173 = vmatmul.mubr.f32.gmra.mrb[0].mxu0 %v1875
    %v2174 = vpop.f32.mrb[0].mxu0
    %v2175 = vadd.f32 %v1808, %v2174
    %v2176 = vpop.f32.mrb[0].mxu0
    %2177 = vmatprep.mubr.f32.mxu0 0.0
    %2178 = vmatmul.mubr.f32.gmra.mrb[0].mxu0 %v1878
    %v2179 = vpop.f32.mrb[0].mxu0
    %v2180 = vadd.f32 %v1808, %v2179
    %v2181 = vpop.f32.mrb[0].mxu0
    %2182 = vmatprep.mubr.f32.mxu0 0.0
    %2183 = vmatmul.mubr.f32.gmra.mrb[0].mxu0 %v1881
    %v2184 = vpop.f32.mrb[0].mxu0
    %v2185 = vadd.f32 %v1808, %v2184
    %v2186 = vpop.f32.mrb[0].mxu0
    %2187 = vmatprep.mubr.f32.mxu0 0.0
    %2188 = vmatmul.mubr.f32.gmra.mrb[0].mxu0 %v1884
    %v2189 = vpop.f32.mrb[0].mxu0
    %v2190 = vadd.f32 %v1808, %v2189
    %v2191 = vpop.f32.mrb[0].mxu0
    %2192 = vmatprep.mubr.f32.mxu0 0.0
    %2193 = vmatmul.mubr.f32.gmra.mrb[0].mxu0 %v1887
    %v2194 = vpop.f32.mrb[0].mxu0
    %v2195 = vadd.f32 %v1808, %v2194
    %v2196 = vpop.f32.mrb[0].mxu0
    %2197 = vmatprep.mubr.f32.mxu0 0.0
    %2198 = vmatmul.mubr.f32.gmra.mrb[0].mxu0 %v1890
    %v2199 = vpop.f32.mrb[0].mxu0
    %v2200 = vadd.f32 %v1808, %v2199
    %v2201 = vpop.f32.mrb[0].mxu0
    %2202 = vmatprep.mubr.f32.mxu0 0.0
    %2203 = vmatmul.mubr.f32.gmra.mrb[0].mxu0 %v1893
    %v2204 = vpop.f32.mrb[0].mxu0
    %v2205 = vadd.f32 %v1808, %v2204
    %v2206 = vpop.f32.mrb[0].mxu0
    %2207 = vmatprep.mubr.f32.mxu0 0.0
    %2208 = vmatmul.mubr.f32.gmra.mrb[0].mxu0 %v1896
    %v2209 = vpop.f32.mrb[0].mxu0
    %v2210 = vadd.f32 %v1808, %v2209
    %v2211 = vpop.f32.mrb[0].mxu0
    %2212 = vmatprep.mubr.f32.mxu0 0.0
    %2213 = vmatmul.mubr.f32.gmra.mrb[0].mxu0 %v1899
    %v2214 = vpop.f32.mrb[0].mxu0
    %v2215 = vadd.f32 %v1808, %v2214
    %v2216 = vpop.f32.mrb[0].mxu0
    %2217 = vmatprep.mubr.f32.mxu0 0.0
    %2218 = vmatmul.mubr.f32.gmra.mrb[0].mxu0 %v1902
    %v2219 = vpop.f32.mrb[0].mxu0
    %v2220 = vadd.f32 %v1808, %v2219
    %v2221 = vpop.f32.mrb[0].mxu0
    %2222 = vmatprep.mubr.f32.mxu0 0.0
    %2223 = vmatmul.mubr.f32.gmra.mrb[0].mxu0 %v1905
    %v2224 = vpop.f32.mrb[0].mxu0
    %v2225 = vadd.f32 %v1808, %v2224
    %v2226 = vpop.f32.mrb[0].mxu0
    %2227 = vmatprep.mubr.f32.mxu0 0.0
    %2228 = vmatmul.mubr.f32.gmra.mrb[0].mxu0 %v1908
    %v2229 = vpop.f32.mrb[0].mxu0
    %v2230 = vadd.f32 %v1808, %v2229
    %v2231 = vpop.f32.mrb[0].mxu0
    %2232 = vmatprep.mubr.f32.mxu0 0.0
    %2233 = vmatmul.mubr.f32.gmra.mrb[0].mxu0 %v1911
    %v2234 = vpop.f32.mrb[0].mxu0
    %v2235 = vadd.f32 %v1808, %v2234
    %v2236 = vpop.f32.mrb[0].mxu0
    %2237 = vmatprep.mubr.f32.mxu0 0.0
    %2238 = vmatmul.mubr.f32.gmra.mrb[0].mxu0 %v1914
    %v2239 = vpop.f32.mrb[0].mxu0
    %v2240 = vadd.f32 %v1808, %v2239
    %v2241 = vpop.f32.mrb[0].mxu0
    %2242 = vmatprep.mubr.f32.mxu0 0.0
    %2243 = vmatmul.mubr.f32.gmra.mrb[0].mxu0 %v1917
    %v2244 = vpop.f32.mrb[0].mxu0
    %v2245 = vadd.f32 %v1808, %v2244
    %v2246 = vpop.f32.mrb[0].mxu0
    %2247 = vmatprep.mubr.f32.mxu0 0.0
    %2248 = vmatmul.mubr.f32.gmra.mrb[0].mxu0 %v1920
    %v2249 = vpop.f32.mrb[0].mxu0
    %v2250 = vadd.f32 %v1808, %v2249
    %v2251 = vpop.f32.mrb[0].mxu0
    %2252 = vmatprep.mubr.f32.mxu0 0.0
    %2253 = vmatmul.mubr.f32.gmra.mrb[0].mxu0 %v1923
    %v2254 = vpop.f32.mrb[0].mxu0
    %v2255 = vadd.f32 %v1808, %v2254
    %v2256 = vpop.f32.mrb[0].mxu0
    %2257 = vmatprep.mubr.f32.mxu0 0.0
    %2258 = vmatmul.mubr.f32.gmra.mrb[0].mxu0 %v1926
    %v2259 = vpop.f32.mrb[0].mxu0
    %v2260 = vadd.f32 %v1808, %v2259
    %v2261 = vpop.f32.mrb[0].mxu0
    %2262 = vmatprep.mubr.f32.mxu0 0.0
    %2263 = vmatmul.mubr.f32.gmra.mrb[0].mxu0 %v1929
    %v2264 = vpop.f32.mrb[0].mxu0
    %v2265 = vadd.f32 %v1808, %v2264
    %v2266 = vpop.f32.mrb[0].mxu0
    %2267 = vmatprep.mubr.f32.mxu0 0.0
    %2268 = vmatmul.mubr.f32.gmra.mrb[0].mxu0 %v1932
    %v2269 = vpop.f32.mrb[0].mxu0
    %v2270 = vadd.f32 %v1808, %v2269
    %v2271 = vpop.f32.mrb[0].mxu0
    %2272 = vmatprep.mubr.f32.mxu0 0.0
    %2273 = vmatmul.mubr.f32.gmra.mrb[0].mxu0 %v1935
    %v2274 = vpop.f32.mrb[0].mxu0
    %v2275 = vadd.f32 %v1808, %v2274
    %v2276 = vpop.f32.mrb[0].mxu0
    %2277 = vmatprep.mubr.f32.mxu0 0.0
    %2278 = vmatmul.mubr.f32.gmra.mrb[0].mxu0 %v1938
    %v2279 = vpop.f32.mrb[0].mxu0
    %v2280 = vadd.f32 %v1808, %v2279
    %v2281 = vpop.f32.mrb[0].mxu0
    %2282 = vmatprep.mubr.f32.mxu0 0.0
    %2283 = vmatmul.mubr.f32.gmra.mrb[0].mxu0 %v1941
    %v2284 = vpop.f32.mrb[0].mxu0
    %v2285 = vadd.f32 %v1808, %v2284
    %v2286 = vpop.f32.mrb[0].mxu0
    %2287 = vmatprep.mubr.f32.mxu0 0.0
    %2288 = vmatmul.mubr.f32.gmra.mrb[0].mxu0 %v1944
    %v2289 = vpop.f32.mrb[0].mxu0
    %v2290 = vadd.f32 %v1808, %v2289
    %v2291 = vpop.f32.mrb[0].mxu0
    %2292 = vmatprep.mubr.f32.mxu0 0.0
    %2293 = vmatmul.mubr.f32.gmra.mrb[0].mxu0 %v1947
    %v2294 = vpop.f32.mrb[0].mxu0
    %v2295 = vadd.f32 %v1808, %v2294
    %v2296 = vpop.f32.mrb[0].mxu0
    %2297 = vmatprep.mubr.f32.mxu0 0.0
    %2298 = vmatmul.mubr.f32.gmra.mrb[0].mxu0 %v1950
    %v2299 = vpop.f32.mrb[0].mxu0
    %v2300 = vadd.f32 %v1808, %v2299
    %v2301 = vpop.f32.mrb[0].mxu0
    %2302 = vmatprep.mubr.f32.mxu0 0.0
    %2303 = vmatmul.mubr.f32.gmra.mrb[0].mxu0 %v1953
    %v2304 = vpop.f32.mrb[0].mxu0
    %v2305 = vadd.f32 %v1808, %v2304
    %v2306 = vpop.f32.mrb[0].mxu0
    %2307 = vmatprep.mubr.f32.mxu0 0.0
    %2308 = vmatmul.mubr.f32.gmra.mrb[0].mxu0 %v1956
    %v2309 = vpop.f32.mrb[0].mxu0
    %v2310 = vadd.f32 %v1808, %v2309
    %v2311 = vpop.f32.mrb[0].mxu0
    %2312 = vmatprep.mubr.f32.mxu0 0.0
    %2313 = vmatmul.mubr.f32.gmra.mrb[0].mxu0 %v1959
    %v2314 = vpop.f32.mrb[0].mxu0
    %v2315 = vadd.f32 %v1808, %v2314
    %v2316 = vpop.f32.mrb[0].mxu0
    %2317 = vmatprep.mubr.f32.mxu0 0.0
    %2318 = vmatmul.mubr.f32.gmra.mrb[0].mxu0 %v1962
    %v2319 = vpop.f32.mrb[0].mxu0
    %v2320 = vadd.f32 %v1808, %v2319
    %v2321 = vpop.f32.mrb[0].mxu0
    %2322 = vmatprep.mubr.f32.mxu0 0.0
    %2323 = vmatmul.mubr.f32.gmra.mrb[0].mxu0 %v1965
    %v2324 = vpop.f32.mrb[0].mxu0
    %v2325 = vadd.f32 %v1808, %v2324
    %v2326 = vpop.f32.mrb[0].mxu0
    %2327 = vmatprep.mubr.f32.mxu0 0.0
    %2328 = vmatmul.mubr.f32.gmra.mrb[0].mxu0 %v1968
    %v2329 = vpop.f32.mrb[0].mxu0
    %v2330 = vadd.f32 %v1808, %v2329
    %v2331 = vpop.f32.mrb[0].mxu0
    %2332 = vmatprep.mubr.f32.mxu0 0.0
    %2333 = vmatmul.mubr.f32.gmra.mrb[0].mxu0 %v1971
    %v2334 = vpop.f32.mrb[0].mxu0
    %v2335 = vadd.f32 %v1808, %v2334
    %v2336 = vpop.f32.mrb[0].mxu0
    %2337 = vmatprep.mubr.f32.mxu0 0.0
    %2338 = vmatmul.mubr.f32.gmra.mrb[0].mxu0 %v1974
    %v2339 = vpop.f32.mrb[0].mxu0
    %v2340 = vadd.f32 %v1808, %v2339
    %v2341 = vpop.f32.mrb[0].mxu0
    %2342 = vmatprep.mubr.f32.mxu0 0.0
    %2343 = vmatmul.mubr.f32.gmra.mrb[0].mxu0 %v1977
    %v2344 = vpop.f32.mrb[0].mxu0
    %v2345 = vadd.f32 %v1808, %v2344
    %v2346 = vpop.f32.mrb[0].mxu0
    %2347 = vmatprep.mubr.f32.mxu0 0.0
    %2348 = vmatmul.mubr.f32.gmra.mrb[0].mxu0 %v1980
    %v2349 = vpop.f32.mrb[0].mxu0
    %v2350 = vadd.f32 %v1808, %v2349
    %v2351 = vpop.f32.mrb[0].mxu0
    %2352 = vmatprep.mubr.f32.mxu0 0.0
    %2353 = vmatmul.mubr.f32.gmra.mrb[0].mxu0 %v1983
    %v2354 = vpop.f32.mrb[0].mxu0
    %v2355 = vadd.f32 %v1808, %v2354
    %v2356 = vpop.f32.mrb[0].mxu0
    %2357 = vmatprep.mubr.f32.mxu0 0.0
    %2358 = vmatmul.mubr.f32.gmra.mrb[0].mxu0 %v1986
    %v2359 = vpop.f32.mrb[0].mxu0
    %v2360 = vadd.f32 %v1808, %v2359
    %v2361 = vpop.f32.mrb[0].mxu0
    %2362 = vmatprep.mubr.f32.mxu0 0.0
    %2363 = vmatmul.mubr.f32.gmra.mrb[0].mxu0 %v1989
    %v2364 = vpop.f32.mrb[0].mxu0
    %v2365 = vadd.f32 %v1808, %v2364
    %v2366 = vpop.f32.mrb[0].mxu0
    %2367 = vmatprep.mubr.f32.mxu0 0.0
    %2368 = vmatmul.mubr.f32.gmra.mrb[0].mxu0 %v1992
    %v2369 = vpop.f32.mrb[0].mxu0
    %v2370 = vadd.f32 %v1808, %v2369
    %v2371 = vpop.f32.mrb[0].mxu0
    %2372 = vmatprep.mubr.f32.mxu0 0.0
    %2373 = vmatmul.mubr.f32.gmra.mrb[0].mxu0 %v1995
    %v2374 = vpop.f32.mrb[0].mxu0
    %v2375 = vadd.f32 %v1808, %v2374
    %v2376 = vpop.f32.mrb[0].mxu0
    %2377 = vmatprep.mubr.f32.mxu0 0.0
    %2378 = vmatmul.mubr.f32.gmra.mrb[0].mxu0 %v1998
    %v2379 = vpop.f32.mrb[0].mxu0
    %v2380 = vadd.f32 %v1808, %v2379
    %v2381 = vpop.f32.mrb[0].mxu0
    %2382 = vmatprep.mubr.f32.mxu0 0.0
    %2383 = vmatmul.mubr.f32.gmra.mrb[0].mxu0 %v2001
    %v2384 = vpop.f32.mrb[0].mxu0
    %v2385 = vadd.f32 %v1808, %v2384
    %v2386 = vpop.f32.mrb[0].mxu0
    %2387 = vdwg.mxu0
    %v2388 = vxor.u32 %v2070, 2147483648
    %v2389 = vxor.u32 %v2075, 2147483648
    %v2390 = vxor.u32 %v2080, 2147483648
    %v2391 = vxor.u32 %v2085, 2147483648
    %v2392 = vxor.u32 %v2090, 2147483648
    %v2393 = vxor.u32 %v2095, 2147483648
    %v2394 = vxor.u32 %v2100, 2147483648
    %v2395 = vxor.u32 %v2105, 2147483648
    %v2396 = vxor.u32 %v2110, 2147483648
    %v2397 = vxor.u32 %v2115, 2147483648
    %v2398 = vxor.u32 %v2120, 2147483648
    %v2399 = vxor.u32 %v2125, 2147483648
    %v2400 = vxor.u32 %v2130, 2147483648
    %v2401 = vxor.u32 %v2135, 2147483648
    %v2402 = vxor.u32 %v2140, 2147483648
    %v2403 = vxor.u32 %v2145, 2147483648
    %v2404 = vxor.u32 %v2150, 2147483648
    %v2405 = vxor.u32 %v2155, 2147483648
    %v2406 = vxor.u32 %v2160, 2147483648
    %v2407 = vxor.u32 %v2165, 2147483648
    %v2408 = vxor.u32 %v2170, 2147483648
    %v2409 = vxor.u32 %v2175, 2147483648
    %v2410 = vxor.u32 %v2180, 2147483648
    %v2411 = vxor.u32 %v2185, 2147483648
    %v2412 = vxor.u32 %v2190, 2147483648
    %v2413 = vxor.u32 %v2195, 2147483648
    %v2414 = vxor.u32 %v2200, 2147483648
    %v2415 = vxor.u32 %v2205, 2147483648
    %v2416 = vxor.u32 %v2210, 2147483648
    %v2417 = vxor.u32 %v2215, 2147483648
    %v2418 = vxor.u32 %v2220, 2147483648
    %v2419 = vxor.u32 %v2225, 2147483648
    %v2420 = vxor.u32 %v2230, 2147483648
    %v2421 = vxor.u32 %v2235, 2147483648
    %v2422 = vxor.u32 %v2240, 2147483648
    %v2423 = vxor.u32 %v2245, 2147483648
    %v2424 = vxor.u32 %v2250, 2147483648
    %v2425 = vxor.u32 %v2255, 2147483648
    %v2426 = vxor.u32 %v2260, 2147483648
    %v2427 = vxor.u32 %v2265, 2147483648
    %v2428 = vxor.u32 %v2270, 2147483648
    %v2429 = vxor.u32 %v2275, 2147483648
    %v2430 = vxor.u32 %v2280, 2147483648
    %v2431 = vxor.u32 %v2285, 2147483648
    %v2432 = vxor.u32 %v2290, 2147483648
    %v2433 = vxor.u32 %v2295, 2147483648
    %v2434 = vxor.u32 %v2300, 2147483648
    %v2435 = vxor.u32 %v2305, 2147483648
    %v2436 = vxor.u32 %v2310, 2147483648
    %v2437 = vxor.u32 %v2315, 2147483648
    %v2438 = vxor.u32 %v2320, 2147483648
    %v2439 = vxor.u32 %v2325, 2147483648
    %v2440 = vxor.u32 %v2330, 2147483648
    %v2441 = vxor.u32 %v2335, 2147483648
    %v2442 = vxor.u32 %v2340, 2147483648
    %v2443 = vxor.u32 %v2345, 2147483648
    %v2444 = vxor.u32 %v2350, 2147483648
    %v2445 = vxor.u32 %v2355, 2147483648
    %v2446 = vxor.u32 %v2360, 2147483648
    %v2447 = vxor.u32 %v2365, 2147483648
    %v2448 = vxor.u32 %v2370, 2147483648
    %v2449 = vxor.u32 %v2375, 2147483648
    %v2450 = vxor.u32 %v2380, 2147483648
    %v2451 = vxor.u32 %v2385, 2147483648
    %v2452 = vmul.f32 %v2388, 1.442695
    %v2453 = vpow.pop %v2452
    %v2454 = vmul.f32 %v2389, 1.442695
    %v2455 = vpow.pop %v2454
    %v2456 = vmul.f32 %v2390, 1.442695
    %v2457 = vpow.pop %v2456
    %v2458 = vmul.f32 %v2391, 1.442695
    %v2459 = vpow.pop %v2458
    %v2460 = vmul.f32 %v2392, 1.442695
    %v2461 = vpow.pop %v2460
    %v2462 = vmul.f32 %v2393, 1.442695
    %v2463 = vpow.pop %v2462
    %v2464 = vmul.f32 %v2394, 1.442695
    %v2465 = vpow.pop %v2464
    %v2466 = vmul.f32 %v2395, 1.442695
    %v2467 = vpow.pop %v2466
    %v2468 = vmul.f32 %v2396, 1.442695
    %v2469 = vpow.pop %v2468
    %v2470 = vmul.f32 %v2397, 1.442695
    %v2471 = vpow.pop %v2470
    %v2472 = vmul.f32 %v2398, 1.442695
    %v2473 = vpow.pop %v2472
    %v2474 = vmul.f32 %v2399, 1.442695
    %v2475 = vpow.pop %v2474
    %v2476 = vmul.f32 %v2400, 1.442695
    %v2477 = vpow.pop %v2476
    %v2478 = vmul.f32 %v2401, 1.442695
    %v2479 = vpow.pop %v2478
    %v2480 = vmul.f32 %v2402, 1.442695
    %v2481 = vpow.pop %v2480
    %v2482 = vmul.f32 %v2403, 1.442695
    %v2483 = vpow.pop %v2482
    %v2484 = vmul.f32 %v2404, 1.442695
    %v2485 = vpow.pop %v2484
    %v2486 = vmul.f32 %v2405, 1.442695
    %v2487 = vpow.pop %v2486
    %v2488 = vmul.f32 %v2406, 1.442695
    %v2489 = vpow.pop %v2488
    %v2490 = vmul.f32 %v2407, 1.442695
    %v2491 = vpow.pop %v2490
    %v2492 = vmul.f32 %v2408, 1.442695
    %v2493 = vpow.pop %v2492
    %v2494 = vmul.f32 %v2409, 1.442695
    %v2495 = vpow.pop %v2494
    %v2496 = vmul.f32 %v2410, 1.442695
    %v2497 = vpow.pop %v2496
    %v2498 = vmul.f32 %v2411, 1.442695
    %v2499 = vpow.pop %v2498
    %v2500 = vmul.f32 %v2412, 1.442695
    %v2501 = vpow.pop %v2500
    %v2502 = vmul.f32 %v2413, 1.442695
    %v2503 = vpow.pop %v2502
    %v2504 = vmul.f32 %v2414, 1.442695
    %v2505 = vpow.pop %v2504
    %v2506 = vmul.f32 %v2415, 1.442695
    %v2507 = vpow.pop %v2506
    %v2508 = vmul.f32 %v2416, 1.442695
    %v2509 = vpow.pop %v2508
    %v2510 = vmul.f32 %v2417, 1.442695
    %v2511 = vpow.pop %v2510
    %v2512 = vmul.f32 %v2418, 1.442695
    %v2513 = vpow.pop %v2512
    %v2514 = vmul.f32 %v2419, 1.442695
    %v2515 = vpow.pop %v2514
    %v2516 = vmul.f32 %v2420, 1.442695
    %v2517 = vpow.pop %v2516
    %v2518 = vmul.f32 %v2421, 1.442695
    %v2519 = vpow.pop %v2518
    %v2520 = vmul.f32 %v2422, 1.442695
    %v2521 = vpow.pop %v2520
    %v2522 = vmul.f32 %v2423, 1.442695
    %v2523 = vpow.pop %v2522
    %v2524 = vmul.f32 %v2424, 1.442695
    %v2525 = vpow.pop %v2524
    %v2526 = vmul.f32 %v2425, 1.442695
    %v2527 = vpow.pop %v2526
    %v2528 = vmul.f32 %v2426, 1.442695
    %v2529 = vpow.pop %v2528
    %v2530 = vmul.f32 %v2427, 1.442695
    %v2531 = vpow.pop %v2530
    %v2532 = vmul.f32 %v2428, 1.442695
    %v2533 = vpow.pop %v2532
    %v2534 = vmul.f32 %v2429, 1.442695
    %v2535 = vpow.pop %v2534
    %v2536 = vmul.f32 %v2430, 1.442695
    %v2537 = vpow.pop %v2536
    %v2538 = vmul.f32 %v2431, 1.442695
    %v2539 = vpow.pop %v2538
    %v2540 = vmul.f32 %v2432, 1.442695
    %v2541 = vpow.pop %v2540
    %v2542 = vmul.f32 %v2433, 1.442695
    %v2543 = vpow.pop %v2542
    %v2544 = vmul.f32 %v2434, 1.442695
    %v2545 = vpow.pop %v2544
    %v2546 = vmul.f32 %v2435, 1.442695
    %v2547 = vpow.pop %v2546
    %v2548 = vmul.f32 %v2436, 1.442695
    %v2549 = vpow.pop %v2548
    %v2550 = vmul.f32 %v2437, 1.442695
    %v2551 = vpow.pop %v2550
    %v2552 = vmul.f32 %v2438, 1.442695
    %v2553 = vpow.pop %v2552
    %v2554 = vmul.f32 %v2439, 1.442695
    %v2555 = vpow.pop %v2554
    %v2556 = vmul.f32 %v2440, 1.442695
    %v2557 = vpow.pop %v2556
    %v2558 = vmul.f32 %v2441, 1.442695
    %v2559 = vpow.pop %v2558
    %v2560 = vmul.f32 %v2442, 1.442695
    %v2561 = vpow.pop %v2560
    %v2562 = vmul.f32 %v2443, 1.442695
    %v2563 = vpow.pop %v2562
    %v2564 = vmul.f32 %v2444, 1.442695
    %v2565 = vpow.pop %v2564
    %v2566 = vmul.f32 %v2445, 1.442695
    %v2567 = vpow.pop %v2566
    %v2568 = vmul.f32 %v2446, 1.442695
    %v2569 = vpow.pop %v2568
    %v2570 = vmul.f32 %v2447, 1.442695
    %v2571 = vpow.pop %v2570
    %v2572 = vmul.f32 %v2448, 1.442695
    %v2573 = vpow.pop %v2572
    %v2574 = vmul.f32 %v2449, 1.442695
    %v2575 = vpow.pop %v2574
    %v2576 = vmul.f32 %v2450, 1.442695
    %v2577 = vpow.pop %v2576
    %v2578 = vmul.f32 %v2451, 1.442695
    %v2579 = vpow.pop %v2578
    %v2580 = vadd.f32 %v2453, 1.0
    %v2581 = vadd.f32 %v2455, 1.0
    %v2582 = vadd.f32 %v2457, 1.0
    %v2583 = vadd.f32 %v2459, 1.0
    %v2584 = vadd.f32 %v2461, 1.0
    %v2585 = vadd.f32 %v2463, 1.0
    %v2586 = vadd.f32 %v2465, 1.0
    %v2587 = vadd.f32 %v2467, 1.0
    %v2588 = vadd.f32 %v2469, 1.0
    %v2589 = vadd.f32 %v2471, 1.0
    %v2590 = vadd.f32 %v2473, 1.0
    %v2591 = vadd.f32 %v2475, 1.0
    %v2592 = vadd.f32 %v2477, 1.0
    %v2593 = vadd.f32 %v2479, 1.0
    %v2594 = vadd.f32 %v2481, 1.0
    %v2595 = vadd.f32 %v2483, 1.0
    %v2596 = vadd.f32 %v2485, 1.0
    %v2597 = vadd.f32 %v2487, 1.0
    %v2598 = vadd.f32 %v2489, 1.0
    %v2599 = vadd.f32 %v2491, 1.0
    %v2600 = vadd.f32 %v2493, 1.0
    %v2601 = vadd.f32 %v2495, 1.0
    %v2602 = vadd.f32 %v2497, 1.0
    %v2603 = vadd.f32 %v2499, 1.0
    %v2604 = vadd.f32 %v2501, 1.0
    %v2605 = vadd.f32 %v2503, 1.0
    %v2606 = vadd.f32 %v2505, 1.0
    %v2607 = vadd.f32 %v2507, 1.0
    %v2608 = vadd.f32 %v2509, 1.0
    %v2609 = vadd.f32 %v2511, 1.0
    %v2610 = vadd.f32 %v2513, 1.0
    %v2611 = vadd.f32 %v2515, 1.0
    %v2612 = vadd.f32 %v2517, 1.0
    %v2613 = vadd.f32 %v2519, 1.0
    %v2614 = vadd.f32 %v2521, 1.0
    %v2615 = vadd.f32 %v2523, 1.0
    %v2616 = vadd.f32 %v2525, 1.0
    %v2617 = vadd.f32 %v2527, 1.0
    %v2618 = vadd.f32 %v2529, 1.0
    %v2619 = vadd.f32 %v2531, 1.0
    %v2620 = vadd.f32 %v2533, 1.0
    %v2621 = vadd.f32 %v2535, 1.0
    %v2622 = vadd.f32 %v2537, 1.0
    %v2623 = vadd.f32 %v2539, 1.0
    %v2624 = vadd.f32 %v2541, 1.0
    %v2625 = vadd.f32 %v2543, 1.0
    %v2626 = vadd.f32 %v2545, 1.0
    %v2627 = vadd.f32 %v2547, 1.0
    %v2628 = vadd.f32 %v2549, 1.0
    %v2629 = vadd.f32 %v2551, 1.0
    %v2630 = vadd.f32 %v2553, 1.0
    %v2631 = vadd.f32 %v2555, 1.0
    %v2632 = vadd.f32 %v2557, 1.0
    %v2633 = vadd.f32 %v2559, 1.0
    %v2634 = vadd.f32 %v2561, 1.0
    %v2635 = vadd.f32 %v2563, 1.0
    %v2636 = vadd.f32 %v2565, 1.0
    %v2637 = vadd.f32 %v2567, 1.0
    %v2638 = vadd.f32 %v2569, 1.0
    %v2639 = vadd.f32 %v2571, 1.0
    %v2640 = vadd.f32 %v2573, 1.0
    %v2641 = vadd.f32 %v2575, 1.0
    %v2642 = vadd.f32 %v2577, 1.0
    %v2643 = vadd.f32 %v2579, 1.0
    %v2644 = vrcp.pop %v2580
    %v2645 = vmul.f32 1.0, %v2644
    %v2646 = vrcp.pop %v2581
    %v2647 = vmul.f32 1.0, %v2646
    %v2648 = vrcp.pop %v2582
    %v2649 = vmul.f32 1.0, %v2648
    %v2650 = vrcp.pop %v2583
    %v2651 = vmul.f32 1.0, %v2650
    %v2652 = vrcp.pop %v2584
    %v2653 = vmul.f32 1.0, %v2652
    %v2654 = vrcp.pop %v2585
    %v2655 = vmul.f32 1.0, %v2654
    %v2656 = vrcp.pop %v2586
    %v2657 = vmul.f32 1.0, %v2656
    %v2658 = vrcp.pop %v2587
    %v2659 = vmul.f32 1.0, %v2658
    %v2660 = vrcp.pop %v2588
    %v2661 = vmul.f32 1.0, %v2660
    %v2662 = vrcp.pop %v2589
    %v2663 = vmul.f32 1.0, %v2662
    %v2664 = vrcp.pop %v2590
    %v2665 = vmul.f32 1.0, %v2664
    %v2666 = vrcp.pop %v2591
    %v2667 = vmul.f32 1.0, %v2666
    %v2668 = vrcp.pop %v2592
    %v2669 = vmul.f32 1.0, %v2668
    %v2670 = vrcp.pop %v2593
    %v2671 = vmul.f32 1.0, %v2670
    %v2672 = vrcp.pop %v2594
    %v2673 = vmul.f32 1.0, %v2672
    %v2674 = vrcp.pop %v2595
    %v2675 = vmul.f32 1.0, %v2674
    %v2676 = vrcp.pop %v2596
    %v2677 = vmul.f32 1.0, %v2676
    %v2678 = vrcp.pop %v2597
    %v2679 = vmul.f32 1.0, %v2678
    %v2680 = vrcp.pop %v2598
    %v2681 = vmul.f32 1.0, %v2680
    %v2682 = vrcp.pop %v2599
    %v2683 = vmul.f32 1.0, %v2682
    %v2684 = vrcp.pop %v2600
    %v2685 = vmul.f32 1.0, %v2684
    %v2686 = vrcp.pop %v2601
    %v2687 = vmul.f32 1.0, %v2686
    %v2688 = vrcp.pop %v2602
    %v2689 = vmul.f32 1.0, %v2688
    %v2690 = vrcp.pop %v2603
    %v2691 = vmul.f32 1.0, %v2690
    %v2692 = vrcp.pop %v2604
    %v2693 = vmul.f32 1.0, %v2692
    %v2694 = vrcp.pop %v2605
    %v2695 = vmul.f32 1.0, %v2694
    %v2696 = vrcp.pop %v2606
    %v2697 = vmul.f32 1.0, %v2696
    %v2698 = vrcp.pop %v2607
    %v2699 = vmul.f32 1.0, %v2698
    %v2700 = vrcp.pop %v2608
    %v2701 = vmul.f32 1.0, %v2700
    %v2702 = vrcp.pop %v2609
    %v2703 = vmul.f32 1.0, %v2702
    %v2704 = vrcp.pop %v2610
    %v2705 = vmul.f32 1.0, %v2704
    %v2706 = vrcp.pop %v2611
    %v2707 = vmul.f32 1.0, %v2706
    %v2708 = vrcp.pop %v2612
    %v2709 = vmul.f32 1.0, %v2708
    %v2710 = vrcp.pop %v2613
    %v2711 = vmul.f32 1.0, %v2710
    %v2712 = vrcp.pop %v2614
    %v2713 = vmul.f32 1.0, %v2712
    %v2714 = vrcp.pop %v2615
    %v2715 = vmul.f32 1.0, %v2714
    %v2716 = vrcp.pop %v2616
    %v2717 = vmul.f32 1.0, %v2716
    %v2718 = vrcp.pop %v2617
    %v2719 = vmul.f32 1.0, %v2718
    %v2720 = vrcp.pop %v2618
    %v2721 = vmul.f32 1.0, %v2720
    %v2722 = vrcp.pop %v2619
    %v2723 = vmul.f32 1.0, %v2722
    %v2724 = vrcp.pop %v2620
    %v2725 = vmul.f32 1.0, %v2724
    %v2726 = vrcp.pop %v2621
    %v2727 = vmul.f32 1.0, %v2726
    %v2728 = vrcp.pop %v2622
    %v2729 = vmul.f32 1.0, %v2728
    %v2730 = vrcp.pop %v2623
    %v2731 = vmul.f32 1.0, %v2730
    %v2732 = vrcp.pop %v2624
    %v2733 = vmul.f32 1.0, %v2732
    %v2734 = vrcp.pop %v2625
    %v2735 = vmul.f32 1.0, %v2734
    %v2736 = vrcp.pop %v2626
    %v2737 = vmul.f32 1.0, %v2736
    %v2738 = vrcp.pop %v2627
    %v2739 = vmul.f32 1.0, %v2738
    %v2740 = vrcp.pop %v2628
    %v2741 = vmul.f32 1.0, %v2740
    %v2742 = vrcp.pop %v2629
    %v2743 = vmul.f32 1.0, %v2742
    %v2744 = vrcp.pop %v2630
    %v2745 = vmul.f32 1.0, %v2744
    %v2746 = vrcp.pop %v2631
    %v2747 = vmul.f32 1.0, %v2746
    %v2748 = vrcp.pop %v2632
    %v2749 = vmul.f32 1.0, %v2748
    %v2750 = vrcp.pop %v2633
    %v2751 = vmul.f32 1.0, %v2750
    %v2752 = vrcp.pop %v2634
    %v2753 = vmul.f32 1.0, %v2752
    %v2754 = vrcp.pop %v2635
    %v2755 = vmul.f32 1.0, %v2754
    %v2756 = vrcp.pop %v2636
    %v2757 = vmul.f32 1.0, %v2756
    %v2758 = vrcp.pop %v2637
    %v2759 = vmul.f32 1.0, %v2758
    %v2760 = vrcp.pop %v2638
    %v2761 = vmul.f32 1.0, %v2760
    %v2762 = vrcp.pop %v2639
    %v2763 = vmul.f32 1.0, %v2762
    %v2764 = vrcp.pop %v2640
    %v2765 = vmul.f32 1.0, %v2764
    %v2766 = vrcp.pop %v2641
    %v2767 = vmul.f32 1.0, %v2766
    %v2768 = vrcp.pop %v2642
    %v2769 = vmul.f32 1.0, %v2768
    %v2770 = vrcp.pop %v2643
    %v2771 = vmul.f32 1.0, %v2770
    %v2772 = vmul.f32 %v2070, %v2645
    %v2773 = vmul.f32 %v2075, %v2647
    %v2774 = vmul.f32 %v2080, %v2649
    %v2775 = vmul.f32 %v2085, %v2651
    %v2776 = vmul.f32 %v2090, %v2653
    %v2777 = vmul.f32 %v2095, %v2655
    %v2778 = vmul.f32 %v2100, %v2657
    %v2779 = vmul.f32 %v2105, %v2659
    %v2780 = vmul.f32 %v2110, %v2661
    %v2781 = vmul.f32 %v2115, %v2663
    %v2782 = vmul.f32 %v2120, %v2665
    %v2783 = vmul.f32 %v2125, %v2667
    %v2784 = vmul.f32 %v2130, %v2669
    %v2785 = vmul.f32 %v2135, %v2671
    %v2786 = vmul.f32 %v2140, %v2673
    %v2787 = vmul.f32 %v2145, %v2675
    %v2788 = vmul.f32 %v2150, %v2677
    %v2789 = vmul.f32 %v2155, %v2679
    %v2790 = vmul.f32 %v2160, %v2681
    %v2791 = vmul.f32 %v2165, %v2683
    %v2792 = vmul.f32 %v2170, %v2685
    %v2793 = vmul.f32 %v2175, %v2687
    %v2794 = vmul.f32 %v2180, %v2689
    %v2795 = vmul.f32 %v2185, %v2691
    %v2796 = vmul.f32 %v2190, %v2693
    %v2797 = vmul.f32 %v2195, %v2695
    %v2798 = vmul.f32 %v2200, %v2697
    %v2799 = vmul.f32 %v2205, %v2699
    %v2800 = vmul.f32 %v2210, %v2701
    %v2801 = vmul.f32 %v2215, %v2703
    %v2802 = vmul.f32 %v2220, %v2705
    %v2803 = vmul.f32 %v2225, %v2707
    %v2804 = vmul.f32 %v2230, %v2709
    %v2805 = vmul.f32 %v2235, %v2711
    %v2806 = vmul.f32 %v2240, %v2713
    %v2807 = vmul.f32 %v2245, %v2715
    %v2808 = vmul.f32 %v2250, %v2717
    %v2809 = vmul.f32 %v2255, %v2719
    %v2810 = vmul.f32 %v2260, %v2721
    %v2811 = vmul.f32 %v2265, %v2723
    %v2812 = vmul.f32 %v2270, %v2725
    %v2813 = vmul.f32 %v2275, %v2727
    %v2814 = vmul.f32 %v2280, %v2729
    %v2815 = vmul.f32 %v2285, %v2731
    %v2816 = vmul.f32 %v2290, %v2733
    %v2817 = vmul.f32 %v2295, %v2735
    %v2818 = vmul.f32 %v2300, %v2737
    %v2819 = vmul.f32 %v2305, %v2739
    %v2820 = vmul.f32 %v2310, %v2741
    %v2821 = vmul.f32 %v2315, %v2743
    %v2822 = vmul.f32 %v2320, %v2745
    %v2823 = vmul.f32 %v2325, %v2747
    %v2824 = vmul.f32 %v2330, %v2749
    %v2825 = vmul.f32 %v2335, %v2751
    %v2826 = vmul.f32 %v2340, %v2753
    %v2827 = vmul.f32 %v2345, %v2755
    %v2828 = vmul.f32 %v2350, %v2757
    %v2829 = vmul.f32 %v2355, %v2759
    %v2830 = vmul.f32 %v2360, %v2761
    %v2831 = vmul.f32 %v2365, %v2763
    %v2832 = vmul.f32 %v2370, %v2765
    %v2833 = vmul.f32 %v2375, %v2767
    %v2834 = vmul.f32 %v2380, %v2769
    %v2835 = vmul.f32 %v2385, %v2771
    %v2836 = vrot.slane %v2772, 7
    %v2837 = vrot.slane %v2773, 7
    %v2838 = vrot.slane %v2774, 7
    %v2839 = vrot.slane %v2775, 7
    %v2840 = vrot.slane %v2776, 7
    %v2841 = vrot.slane %v2777, 7
    %v2842 = vrot.slane %v2778, 7
    %v2843 = vrot.slane %v2779, 7
    %v2844 = vrot.slane %v2780, 7
    %v2845 = vrot.slane %v2781, 7
    %v2846 = vrot.slane %v2782, 7
    %v2847 = vrot.slane %v2783, 7
    %v2848 = vrot.slane %v2784, 7
    %v2849 = vrot.slane %v2785, 7
    %v2850 = vrot.slane %v2786, 7
    %v2851 = vrot.slane %v2787, 7
    %v2852 = vrot.slane %v2788, 7
    %v2853 = vrot.slane %v2789, 7
    %v2854 = vrot.slane %v2790, 7
    %v2855 = vrot.slane %v2791, 7
    %v2856 = vrot.slane %v2792, 7
    %v2857 = vrot.slane %v2793, 7
    %v2858 = vrot.slane %v2794, 7
    %v2859 = vrot.slane %v2795, 7
    %v2860 = vrot.slane %v2796, 7
    %v2861 = vrot.slane %v2797, 7
    %v2862 = vrot.slane %v2798, 7
    %v2863 = vrot.slane %v2799, 7
    %v2864 = vrot.slane %v2800, 7
    %v2865 = vrot.slane %v2801, 7
    %v2866 = vrot.slane %v2802, 7
    %v2867 = vrot.slane %v2803, 7
    %v2868 = vrot.slane %v2804, 7
    %v2869 = vrot.slane %v2805, 7
    %v2870 = vrot.slane %v2806, 7
    %v2871 = vrot.slane %v2807, 7
    %v2872 = vrot.slane %v2808, 7
    %v2873 = vrot.slane %v2809, 7
    %v2874 = vrot.slane %v2810, 7
    %v2875 = vrot.slane %v2811, 7
    %v2876 = vrot.slane %v2812, 7
    %v2877 = vrot.slane %v2813, 7
    %v2878 = vrot.slane %v2814, 7
    %v2879 = vrot.slane %v2815, 7
    %v2880 = vrot.slane %v2816, 7
    %v2881 = vrot.slane %v2817, 7
    %v2882 = vrot.slane %v2818, 7
    %v2883 = vrot.slane %v2819, 7
    %v2884 = vrot.slane %v2820, 7
    %v2885 = vrot.slane %v2821, 7
    %v2886 = vrot.slane %v2822, 7
    %v2887 = vrot.slane %v2823, 7
    %v2888 = vrot.slane %v2824, 7
    %v2889 = vrot.slane %v2825, 7
    %v2890 = vrot.slane %v2826, 7
    %v2891 = vrot.slane %v2827, 7
    %v2892 = vrot.slane %v2828, 7
    %v2893 = vrot.slane %v2829, 7
    %v2894 = vrot.slane %v2830, 7
    %v2895 = vrot.slane %v2831, 7
    %v2896 = vrot.slane %v2832, 7
    %v2897 = vrot.slane %v2833, 7
    %v2898 = vrot.slane %v2834, 7
    %v2899 = vrot.slane %v2835, 7
    %v2900 = vsel %vm255, %v2898, %v2899
    %v2901 = vsel %vm255, %v2897, %v2898
    %v2902 = vsel %vm255, %v2896, %v2897
    %v2903 = vsel %vm255, %v2895, %v2896
    %v2904 = vsel %vm255, %v2894, %v2895
    %v2905 = vsel %vm255, %v2893, %v2894
    %v2906 = vsel %vm255, %v2892, %v2893
    %v2907 = vsel %vm255, %v2891, %v2892
    %v2908 = vsel %vm255, %v2890, %v2891
    %v2909 = vsel %vm255, %v2889, %v2890
    %v2910 = vsel %vm255, %v2888, %v2889
    %v2911 = vsel %vm255, %v2887, %v2888
    %v2912 = vsel %vm255, %v2886, %v2887
    %v2913 = vsel %vm255, %v2885, %v2886
    %v2914 = vsel %vm255, %v2884, %v2885
    %v2915 = vsel %vm255, %v2883, %v2884
    %v2916 = vsel %vm255, %v2882, %v2883
    %v2917 = vsel %vm255, %v2881, %v2882
    %v2918 = vsel %vm255, %v2880, %v2881
    %v2919 = vsel %vm255, %v2879, %v2880
    %v2920 = vsel %vm255, %v2878, %v2879
    %v2921 = vsel %vm255, %v2877, %v2878
    %v2922 = vsel %vm255, %v2876, %v2877
    %v2923 = vsel %vm255, %v2875, %v2876
    %v2924 = vsel %vm255, %v2874, %v2875
    %v2925 = vsel %vm255, %v2873, %v2874
    %v2926 = vsel %vm255, %v2872, %v2873
    %v2927 = vsel %vm255, %v2871, %v2872
    %v2928 = vsel %vm255, %v2870, %v2871
    %v2929 = vsel %vm255, %v2869, %v2870
    %v2930 = vsel %vm255, %v2868, %v2869
    %v2931 = vsel %vm255, %v2867, %v2868
    %v2932 = vsel %vm255, %v2866, %v2867
    %v2933 = vsel %vm255, %v2865, %v2866
    %v2934 = vsel %vm255, %v2864, %v2865
    %v2935 = vsel %vm255, %v2863, %v2864
    %v2936 = vsel %vm255, %v2862, %v2863
    %v2937 = vsel %vm255, %v2861, %v2862
    %v2938 = vsel %vm255, %v2860, %v2861
    %v2939 = vsel %vm255, %v2859, %v2860
    %v2940 = vsel %vm255, %v2858, %v2859
    %v2941 = vsel %vm255, %v2857, %v2858
    %v2942 = vsel %vm255, %v2856, %v2857
    %v2943 = vsel %vm255, %v2855, %v2856
    %v2944 = vsel %vm255, %v2854, %v2855
    %v2945 = vsel %vm255, %v2853, %v2854
    %v2946 = vsel %vm255, %v2852, %v2853
    %v2947 = vsel %vm255, %v2851, %v2852
    %v2948 = vsel %vm255, %v2850, %v2851
    %v2949 = vsel %vm255, %v2849, %v2850
    %v2950 = vsel %vm255, %v2848, %v2849
    %v2951 = vsel %vm255, %v2847, %v2848
    %v2952 = vsel %vm255, %v2846, %v2847
    %v2953 = vsel %vm255, %v2845, %v2846
    %v2954 = vsel %vm255, %v2844, %v2845
    %v2955 = vsel %vm255, %v2843, %v2844
    %v2956 = vsel %vm255, %v2842, %v2843
    %v2957 = vsel %vm255, %v2841, %v2842
    %v2958 = vsel %vm255, %v2840, %v2841
    %v2959 = vsel %vm255, %v2839, %v2840
    %v2960 = vsel %vm255, %v2838, %v2839
    %v2961 = vsel %vm255, %v2837, %v2838
    %v2962 = vsel %vm255, %v2836, %v2837
    %v2963 = vsel %vm255, %v2899, %v2836
    %v2964 = vsel %vm512, %v2963, -1e+30
    %v2965 = vsel %vm513, %v2962, -1e+30
    %v2966 = vsel %vm514, %v2961, -1e+30
    %v2967 = vsel %vm515, %v2960, -1e+30
    %v2968 = vsel %vm516, %v2959, -1e+30
    %v2969 = vsel %vm517, %v2958, -1e+30
    %v2970 = vsel %vm518, %v2957, -1e+30
    %v2971 = vsel %vm519, %v2956, -1e+30
    %v2972 = vsel %vm520, %v2955, -1e+30
    %v2973 = vsel %vm521, %v2954, -1e+30
    %v2974 = vsel %vm522, %v2953, -1e+30
    %v2975 = vsel %vm523, %v2952, -1e+30
    %v2976 = vsel %vm524, %v2951, -1e+30
    %v2977 = vsel %vm525, %v2950, -1e+30
    %v2978 = vsel %vm526, %v2949, -1e+30
    %v2979 = vsel %vm527, %v2948, -1e+30
    %v2980 = vsel %vm528, %v2947, -1e+30
    %v2981 = vsel %vm529, %v2946, -1e+30
    %v2982 = vsel %vm530, %v2945, -1e+30
    %v2983 = vsel %vm531, %v2944, -1e+30
    %v2984 = vsel %vm532, %v2943, -1e+30
    %v2985 = vsel %vm533, %v2942, -1e+30
    %v2986 = vsel %vm534, %v2941, -1e+30
    %v2987 = vsel %vm535, %v2940, -1e+30
    %v2988 = vsel %vm536, %v2939, -1e+30
    %v2989 = vsel %vm537, %v2938, -1e+30
    %v2990 = vsel %vm538, %v2937, -1e+30
    %v2991 = vsel %vm539, %v2936, -1e+30
    %v2992 = vsel %vm540, %v2935, -1e+30
    %v2993 = vsel %vm541, %v2934, -1e+30
    %v2994 = vsel %vm542, %v2933, -1e+30
    %v2995 = vsel %vm543, %v2932, -1e+30
    %v2996 = vsel %vm544, %v2931, -1e+30
    %v2997 = vsel %vm545, %v2930, -1e+30
    %v2998 = vsel %vm546, %v2929, -1e+30
    %v2999 = vsel %vm547, %v2928, -1e+30
    %v3000 = vsel %vm548, %v2927, -1e+30
    %v3001 = vsel %vm549, %v2926, -1e+30
    %v3002 = vsel %vm550, %v2925, -1e+30
    %v3003 = vsel %vm551, %v2924, -1e+30
    %v3004 = vsel %vm552, %v2923, -1e+30
    %v3005 = vsel %vm553, %v2922, -1e+30
    %v3006 = vsel %vm554, %v2921, -1e+30
    %v3007 = vsel %vm555, %v2920, -1e+30
    %v3008 = vsel %vm556, %v2919, -1e+30
    %v3009 = vsel %vm557, %v2918, -1e+30
    %v3010 = vsel %vm558, %v2917, -1e+30
    %v3011 = vsel %vm559, %v2916, -1e+30
    %v3012 = vsel %vm560, %v2915, -1e+30
    %v3013 = vsel %vm561, %v2914, -1e+30
    %v3014 = vsel %vm562, %v2913, -1e+30
    %v3015 = vsel %vm563, %v2912, -1e+30
    %v3016 = vsel %vm564, %v2911, -1e+30
    %v3017 = vsel %vm565, %v2910, -1e+30
    %v3018 = vsel %vm566, %v2909, -1e+30
    %v3019 = vsel %vm567, %v2908, -1e+30
    %v3020 = vsel %vm568, %v2907, -1e+30
    %v3021 = vsel %vm569, %v2906, -1e+30
    %v3022 = vsel %vm570, %v2905, -1e+30
    %v3023 = vsel %vm571, %v2904, -1e+30
    %v3024 = vsel %vm572, %v2903, -1e+30
    %v3025 = vsel %vm573, %v2902, -1e+30
    %v3026 = vsel %vm574, %v2901, -1e+30
    %v3027 = vsel %vm575, %v2900, -1e+30
    %v3028 = vmax.f32 %v2772, %v2964
    %v3029 = vmax.f32 %v2773, %v2965
    %v3030 = vmax.f32 %v2774, %v2966
    %v3031 = vmax.f32 %v2775, %v2967
    %v3032 = vmax.f32 %v2776, %v2968
    %v3033 = vmax.f32 %v2777, %v2969
    %v3034 = vmax.f32 %v2778, %v2970
    %v3035 = vmax.f32 %v2779, %v2971
    %v3036 = vmax.f32 %v2780, %v2972
    %v3037 = vmax.f32 %v2781, %v2973
    %v3038 = vmax.f32 %v2782, %v2974
    %v3039 = vmax.f32 %v2783, %v2975
    %v3040 = vmax.f32 %v2784, %v2976
    %v3041 = vmax.f32 %v2785, %v2977
    %v3042 = vmax.f32 %v2786, %v2978
    %v3043 = vmax.f32 %v2787, %v2979
    %v3044 = vmax.f32 %v2788, %v2980
    %v3045 = vmax.f32 %v2789, %v2981
    %v3046 = vmax.f32 %v2790, %v2982
    %v3047 = vmax.f32 %v2791, %v2983
    %v3048 = vmax.f32 %v2792, %v2984
    %v3049 = vmax.f32 %v2793, %v2985
    %v3050 = vmax.f32 %v2794, %v2986
    %v3051 = vmax.f32 %v2795, %v2987
    %v3052 = vmax.f32 %v2796, %v2988
    %v3053 = vmax.f32 %v2797, %v2989
    %v3054 = vmax.f32 %v2798, %v2990
    %v3055 = vmax.f32 %v2799, %v2991
    %v3056 = vmax.f32 %v2800, %v2992
    %v3057 = vmax.f32 %v2801, %v2993
    %v3058 = vmax.f32 %v2802, %v2994
    %v3059 = vmax.f32 %v2803, %v2995
    %v3060 = vmax.f32 %v2804, %v2996
    %v3061 = vmax.f32 %v2805, %v2997
    %v3062 = vmax.f32 %v2806, %v2998
    %v3063 = vmax.f32 %v2807, %v2999
    %v3064 = vmax.f32 %v2808, %v3000
    %v3065 = vmax.f32 %v2809, %v3001
    %v3066 = vmax.f32 %v2810, %v3002
    %v3067 = vmax.f32 %v2811, %v3003
    %v3068 = vmax.f32 %v2812, %v3004
    %v3069 = vmax.f32 %v2813, %v3005
    %v3070 = vmax.f32 %v2814, %v3006
    %v3071 = vmax.f32 %v2815, %v3007
    %v3072 = vmax.f32 %v2816, %v3008
    %v3073 = vmax.f32 %v2817, %v3009
    %v3074 = vmax.f32 %v2818, %v3010
    %v3075 = vmax.f32 %v2819, %v3011
    %v3076 = vmax.f32 %v2820, %v3012
    %v3077 = vmax.f32 %v2821, %v3013
    %v3078 = vmax.f32 %v2822, %v3014
    %v3079 = vmax.f32 %v2823, %v3015
    %v3080 = vmax.f32 %v2824, %v3016
    %v3081 = vmax.f32 %v2825, %v3017
    %v3082 = vmax.f32 %v2826, %v3018
    %v3083 = vmax.f32 %v2827, %v3019
    %v3084 = vmax.f32 %v2828, %v3020
    %v3085 = vmax.f32 %v2829, %v3021
    %v3086 = vmax.f32 %v2830, %v3022
    %v3087 = vmax.f32 %v2831, %v3023
    %v3088 = vmax.f32 %v2832, %v3024
    %v3089 = vmax.f32 %v2833, %v3025
    %v3090 = vmax.f32 %v2834, %v3026
    %v3091 = vmax.f32 %v2835, %v3027
    %v3092 = vrot.slane %v2772, 6
    %v3093 = vrot.slane %v2773, 6
    %v3094 = vrot.slane %v2774, 6
    %v3095 = vrot.slane %v2775, 6
    %v3096 = vrot.slane %v2776, 6
    %v3097 = vrot.slane %v2777, 6
    %v3098 = vrot.slane %v2778, 6
    %v3099 = vrot.slane %v2779, 6
    %v3100 = vrot.slane %v2780, 6
    %v3101 = vrot.slane %v2781, 6
    %v3102 = vrot.slane %v2782, 6
    %v3103 = vrot.slane %v2783, 6
    %v3104 = vrot.slane %v2784, 6
    %v3105 = vrot.slane %v2785, 6
    %v3106 = vrot.slane %v2786, 6
    %v3107 = vrot.slane %v2787, 6
    %v3108 = vrot.slane %v2788, 6
    %v3109 = vrot.slane %v2789, 6
    %v3110 = vrot.slane %v2790, 6
    %v3111 = vrot.slane %v2791, 6
    %v3112 = vrot.slane %v2792, 6
    %v3113 = vrot.slane %v2793, 6
    %v3114 = vrot.slane %v2794, 6
    %v3115 = vrot.slane %v2795, 6
    %v3116 = vrot.slane %v2796, 6
    %v3117 = vrot.slane %v2797, 6
    %v3118 = vrot.slane %v2798, 6
    %v3119 = vrot.slane %v2799, 6
    %v3120 = vrot.slane %v2800, 6
    %v3121 = vrot.slane %v2801, 6
    %v3122 = vrot.slane %v2802, 6
    %v3123 = vrot.slane %v2803, 6
    %v3124 = vrot.slane %v2804, 6
    %v3125 = vrot.slane %v2805, 6
    %v3126 = vrot.slane %v2806, 6
    %v3127 = vrot.slane %v2807, 6
    %v3128 = vrot.slane %v2808, 6
    %v3129 = vrot.slane %v2809, 6
    %v3130 = vrot.slane %v2810, 6
    %v3131 = vrot.slane %v2811, 6
    %v3132 = vrot.slane %v2812, 6
    %v3133 = vrot.slane %v2813, 6
    %v3134 = vrot.slane %v2814, 6
    %v3135 = vrot.slane %v2815, 6
    %v3136 = vrot.slane %v2816, 6
    %v3137 = vrot.slane %v2817, 6
    %v3138 = vrot.slane %v2818, 6
    %v3139 = vrot.slane %v2819, 6
    %v3140 = vrot.slane %v2820, 6
    %v3141 = vrot.slane %v2821, 6
    %v3142 = vrot.slane %v2822, 6
    %v3143 = vrot.slane %v2823, 6
    %v3144 = vrot.slane %v2824, 6
    %v3145 = vrot.slane %v2825, 6
    %v3146 = vrot.slane %v2826, 6
    %v3147 = vrot.slane %v2827, 6
    %v3148 = vrot.slane %v2828, 6
    %v3149 = vrot.slane %v2829, 6
    %v3150 = vrot.slane %v2830, 6
    %v3151 = vrot.slane %v2831, 6
    %v3152 = vrot.slane %v2832, 6
    %v3153 = vrot.slane %v2833, 6
    %v3154 = vrot.slane %v2834, 6
    %v3155 = vrot.slane %v2835, 6
    %v3156 = vsel %vm640, %v3154, %v3155
    %v3157 = vsel %vm640, %v3153, %v3154
    %v3158 = vsel %vm640, %v3152, %v3153
    %v3159 = vsel %vm640, %v3151, %v3152
    %v3160 = vsel %vm640, %v3150, %v3151
    %v3161 = vsel %vm640, %v3149, %v3150
    %v3162 = vsel %vm640, %v3148, %v3149
    %v3163 = vsel %vm640, %v3147, %v3148
    %v3164 = vsel %vm640, %v3146, %v3147
    %v3165 = vsel %vm640, %v3145, %v3146
    %v3166 = vsel %vm640, %v3144, %v3145
    %v3167 = vsel %vm640, %v3143, %v3144
    %v3168 = vsel %vm640, %v3142, %v3143
    %v3169 = vsel %vm640, %v3141, %v3142
    %v3170 = vsel %vm640, %v3140, %v3141
    %v3171 = vsel %vm640, %v3139, %v3140
    %v3172 = vsel %vm640, %v3138, %v3139
    %v3173 = vsel %vm640, %v3137, %v3138
    %v3174 = vsel %vm640, %v3136, %v3137
    %v3175 = vsel %vm640, %v3135, %v3136
    %v3176 = vsel %vm640, %v3134, %v3135
    %v3177 = vsel %vm640, %v3133, %v3134
    %v3178 = vsel %vm640, %v3132, %v3133
    %v3179 = vsel %vm640, %v3131, %v3132
    %v3180 = vsel %vm640, %v3130, %v3131
    %v3181 = vsel %vm640, %v3129, %v3130
    %v3182 = vsel %vm640, %v3128, %v3129
    %v3183 = vsel %vm640, %v3127, %v3128
    %v3184 = vsel %vm640, %v3126, %v3127
    %v3185 = vsel %vm640, %v3125, %v3126
    %v3186 = vsel %vm640, %v3124, %v3125
    %v3187 = vsel %vm640, %v3123, %v3124
    %v3188 = vsel %vm640, %v3122, %v3123
    %v3189 = vsel %vm640, %v3121, %v3122
    %v3190 = vsel %vm640, %v3120, %v3121
    %v3191 = vsel %vm640, %v3119, %v3120
    %v3192 = vsel %vm640, %v3118, %v3119
    %v3193 = vsel %vm640, %v3117, %v3118
    %v3194 = vsel %vm640, %v3116, %v3117
    %v3195 = vsel %vm640, %v3115, %v3116
    %v3196 = vsel %vm640, %v3114, %v3115
    %v3197 = vsel %vm640, %v3113, %v3114
    %v3198 = vsel %vm640, %v3112, %v3113
    %v3199 = vsel %vm640, %v3111, %v3112
    %v3200 = vsel %vm640, %v3110, %v3111
    %v3201 = vsel %vm640, %v3109, %v3110
    %v3202 = vsel %vm640, %v3108, %v3109
    %v3203 = vsel %vm640, %v3107, %v3108
    %v3204 = vsel %vm640, %v3106, %v3107
    %v3205 = vsel %vm640, %v3105, %v3106
    %v3206 = vsel %vm640, %v3104, %v3105
    %v3207 = vsel %vm640, %v3103, %v3104
    %v3208 = vsel %vm640, %v3102, %v3103
    %v3209 = vsel %vm640, %v3101, %v3102
    %v3210 = vsel %vm640, %v3100, %v3101
    %v3211 = vsel %vm640, %v3099, %v3100
    %v3212 = vsel %vm640, %v3098, %v3099
    %v3213 = vsel %vm640, %v3097, %v3098
    %v3214 = vsel %vm640, %v3096, %v3097
    %v3215 = vsel %vm640, %v3095, %v3096
    %v3216 = vsel %vm640, %v3094, %v3095
    %v3217 = vsel %vm640, %v3093, %v3094
    %v3218 = vsel %vm640, %v3092, %v3093
    %v3219 = vsel %vm640, %v3155, %v3092
    %v3220 = vsel %vm897, %v3219, -1e+30
    %v3221 = vsel %vm898, %v3218, -1e+30
    %v3222 = vsel %vm899, %v3217, -1e+30
    %v3223 = vsel %vm900, %v3216, -1e+30
    %v3224 = vsel %vm901, %v3215, -1e+30
    %v3225 = vsel %vm902, %v3214, -1e+30
    %v3226 = vsel %vm903, %v3213, -1e+30
    %v3227 = vsel %vm904, %v3212, -1e+30
    %v3228 = vsel %vm905, %v3211, -1e+30
    %v3229 = vsel %vm906, %v3210, -1e+30
    %v3230 = vsel %vm907, %v3209, -1e+30
    %v3231 = vsel %vm908, %v3208, -1e+30
    %v3232 = vsel %vm909, %v3207, -1e+30
    %v3233 = vsel %vm910, %v3206, -1e+30
    %v3234 = vsel %vm911, %v3205, -1e+30
    %v3235 = vsel %vm912, %v3204, -1e+30
    %v3236 = vsel %vm913, %v3203, -1e+30
    %v3237 = vsel %vm914, %v3202, -1e+30
    %v3238 = vsel %vm915, %v3201, -1e+30
    %v3239 = vsel %vm916, %v3200, -1e+30
    %v3240 = vsel %vm917, %v3199, -1e+30
    %v3241 = vsel %vm918, %v3198, -1e+30
    %v3242 = vsel %vm919, %v3197, -1e+30
    %v3243 = vsel %vm920, %v3196, -1e+30
    %v3244 = vsel %vm921, %v3195, -1e+30
    %v3245 = vsel %vm922, %v3194, -1e+30
    %v3246 = vsel %vm923, %v3193, -1e+30
    %v3247 = vsel %vm924, %v3192, -1e+30
    %v3248 = vsel %vm925, %v3191, -1e+30
    %v3249 = vsel %vm926, %v3190, -1e+30
    %v3250 = vsel %vm927, %v3189, -1e+30
    %v3251 = vsel %vm928, %v3188, -1e+30
    %v3252 = vsel %vm929, %v3187, -1e+30
    %v3253 = vsel %vm930, %v3186, -1e+30
    %v3254 = vsel %vm931, %v3185, -1e+30
    %v3255 = vsel %vm932, %v3184, -1e+30
    %v3256 = vsel %vm933, %v3183, -1e+30
    %v3257 = vsel %vm934, %v3182, -1e+30
    %v3258 = vsel %vm935, %v3181, -1e+30
    %v3259 = vsel %vm936, %v3180, -1e+30
    %v3260 = vsel %vm937, %v3179, -1e+30
    %v3261 = vsel %vm938, %v3178, -1e+30
    %v3262 = vsel %vm939, %v3177, -1e+30
    %v3263 = vsel %vm940, %v3176, -1e+30
    %v3264 = vsel %vm941, %v3175, -1e+30
    %v3265 = vsel %vm942, %v3174, -1e+30
    %v3266 = vsel %vm943, %v3173, -1e+30
    %v3267 = vsel %vm944, %v3172, -1e+30
    %v3268 = vsel %vm945, %v3171, -1e+30
    %v3269 = vsel %vm946, %v3170, -1e+30
    %v3270 = vsel %vm947, %v3169, -1e+30
    %v3271 = vsel %vm948, %v3168, -1e+30
    %v3272 = vsel %vm949, %v3167, -1e+30
    %v3273 = vsel %vm950, %v3166, -1e+30
    %v3274 = vsel %vm951, %v3165, -1e+30
    %v3275 = vsel %vm952, %v3164, -1e+30
    %v3276 = vsel %vm953, %v3163, -1e+30
    %v3277 = vsel %vm954, %v3162, -1e+30
    %v3278 = vsel %vm955, %v3161, -1e+30
    %v3279 = vsel %vm956, %v3160, -1e+30
    %v3280 = vsel %vm957, %v3159, -1e+30
    %v3281 = vsel %vm958, %v3158, -1e+30
    %v3282 = vsel %vm959, %v3157, -1e+30
    %v3283 = vsel %vm960, %v3156, -1e+30
    %v3284 = vmax.f32 %v3028, %v3220
    %v3285 = vmax.f32 %v3029, %v3221
    %v3286 = vmax.f32 %v3030, %v3222
    %v3287 = vmax.f32 %v3031, %v3223
    %v3288 = vmax.f32 %v3032, %v3224
    %v3289 = vmax.f32 %v3033, %v3225
    %v3290 = vmax.f32 %v3034, %v3226
    %v3291 = vmax.f32 %v3035, %v3227
    %v3292 = vmax.f32 %v3036, %v3228
    %v3293 = vmax.f32 %v3037, %v3229
    %v3294 = vmax.f32 %v3038, %v3230
    %v3295 = vmax.f32 %v3039, %v3231
    %v3296 = vmax.f32 %v3040, %v3232
    %v3297 = vmax.f32 %v3041, %v3233
    %v3298 = vmax.f32 %v3042, %v3234
    %v3299 = vmax.f32 %v3043, %v3235
    %v3300 = vmax.f32 %v3044, %v3236
    %v3301 = vmax.f32 %v3045, %v3237
    %v3302 = vmax.f32 %v3046, %v3238
    %v3303 = vmax.f32 %v3047, %v3239
    %v3304 = vmax.f32 %v3048, %v3240
    %v3305 = vmax.f32 %v3049, %v3241
    %v3306 = vmax.f32 %v3050, %v3242
    %v3307 = vmax.f32 %v3051, %v3243
    %v3308 = vmax.f32 %v3052, %v3244
    %v3309 = vmax.f32 %v3053, %v3245
    %v3310 = vmax.f32 %v3054, %v3246
    %v3311 = vmax.f32 %v3055, %v3247
    %v3312 = vmax.f32 %v3056, %v3248
    %v3313 = vmax.f32 %v3057, %v3249
    %v3314 = vmax.f32 %v3058, %v3250
    %v3315 = vmax.f32 %v3059, %v3251
    %v3316 = vmax.f32 %v3060, %v3252
    %v3317 = vmax.f32 %v3061, %v3253
    %v3318 = vmax.f32 %v3062, %v3254
    %v3319 = vmax.f32 %v3063, %v3255
    %v3320 = vmax.f32 %v3064, %v3256
    %v3321 = vmax.f32 %v3065, %v3257
    %v3322 = vmax.f32 %v3066, %v3258
    %v3323 = vmax.f32 %v3067, %v3259
    %v3324 = vmax.f32 %v3068, %v3260
    %v3325 = vmax.f32 %v3069, %v3261
    %v3326 = vmax.f32 %v3070, %v3262
    %v3327 = vmax.f32 %v3071, %v3263
    %v3328 = vmax.f32 %v3072, %v3264
    %v3329 = vmax.f32 %v3073, %v3265
    %v3330 = vmax.f32 %v3074, %v3266
    %v3331 = vmax.f32 %v3075, %v3267
    %v3332 = vmax.f32 %v3076, %v3268
    %v3333 = vmax.f32 %v3077, %v3269
    %v3334 = vmax.f32 %v3078, %v3270
    %v3335 = vmax.f32 %v3079, %v3271
    %v3336 = vmax.f32 %v3080, %v3272
    %v3337 = vmax.f32 %v3081, %v3273
    %v3338 = vmax.f32 %v3082, %v3274
    %v3339 = vmax.f32 %v3083, %v3275
    %v3340 = vmax.f32 %v3084, %v3276
    %v3341 = vmax.f32 %v3085, %v3277
    %v3342 = vmax.f32 %v3086, %v3278
    %v3343 = vmax.f32 %v3087, %v3279
    %v3344 = vmax.f32 %v3088, %v3280
    %v3345 = vmax.f32 %v3089, %v3281
    %v3346 = vmax.f32 %v3090, %v3282
    %v3347 = vmax.f32 %v3091, %v3283
    %v3348 = vrot.slane %v2772, 1
    %v3349 = vrot.slane %v2773, 1
    %v3350 = vrot.slane %v2774, 1
    %v3351 = vrot.slane %v2775, 1
    %v3352 = vrot.slane %v2776, 1
    %v3353 = vrot.slane %v2777, 1
    %v3354 = vrot.slane %v2778, 1
    %v3355 = vrot.slane %v2779, 1
    %v3356 = vrot.slane %v2780, 1
    %v3357 = vrot.slane %v2781, 1
    %v3358 = vrot.slane %v2782, 1
    %v3359 = vrot.slane %v2783, 1
    %v3360 = vrot.slane %v2784, 1
    %v3361 = vrot.slane %v2785, 1
    %v3362 = vrot.slane %v2786, 1
    %v3363 = vrot.slane %v2787, 1
    %v3364 = vrot.slane %v2788, 1
    %v3365 = vrot.slane %v2789, 1
    %v3366 = vrot.slane %v2790, 1
    %v3367 = vrot.slane %v2791, 1
    %v3368 = vrot.slane %v2792, 1
    %v3369 = vrot.slane %v2793, 1
    %v3370 = vrot.slane %v2794, 1
    %v3371 = vrot.slane %v2795, 1
    %v3372 = vrot.slane %v2796, 1
    %v3373 = vrot.slane %v2797, 1
    %v3374 = vrot.slane %v2798, 1
    %v3375 = vrot.slane %v2799, 1
    %v3376 = vrot.slane %v2800, 1
    %v3377 = vrot.slane %v2801, 1
    %v3378 = vrot.slane %v2802, 1
    %v3379 = vrot.slane %v2803, 1
    %v3380 = vrot.slane %v2804, 1
    %v3381 = vrot.slane %v2805, 1
    %v3382 = vrot.slane %v2806, 1
    %v3383 = vrot.slane %v2807, 1
    %v3384 = vrot.slane %v2808, 1
    %v3385 = vrot.slane %v2809, 1
    %v3386 = vrot.slane %v2810, 1
    %v3387 = vrot.slane %v2811, 1
    %v3388 = vrot.slane %v2812, 1
    %v3389 = vrot.slane %v2813, 1
    %v3390 = vrot.slane %v2814, 1
    %v3391 = vrot.slane %v2815, 1
    %v3392 = vrot.slane %v2816, 1
    %v3393 = vrot.slane %v2817, 1
    %v3394 = vrot.slane %v2818, 1
    %v3395 = vrot.slane %v2819, 1
    %v3396 = vrot.slane %v2820, 1
    %v3397 = vrot.slane %v2821, 1
    %v3398 = vrot.slane %v2822, 1
    %v3399 = vrot.slane %v2823, 1
    %v3400 = vrot.slane %v2824, 1
    %v3401 = vrot.slane %v2825, 1
    %v3402 = vrot.slane %v2826, 1
    %v3403 = vrot.slane %v2827, 1
    %v3404 = vrot.slane %v2828, 1
    %v3405 = vrot.slane %v2829, 1
    %v3406 = vrot.slane %v2830, 1
    %v3407 = vrot.slane %v2831, 1
    %v3408 = vrot.slane %v2832, 1
    %v3409 = vrot.slane %v2833, 1
    %v3410 = vrot.slane %v2834, 1
    %v3411 = vrot.slane %v2835, 1
    %v3412 = vsel %vm1025, %v3410, %v3411
    %v3413 = vsel %vm1025, %v3409, %v3410
    %v3414 = vsel %vm1025, %v3408, %v3409
    %v3415 = vsel %vm1025, %v3407, %v3408
    %v3416 = vsel %vm1025, %v3406, %v3407
    %v3417 = vsel %vm1025, %v3405, %v3406
    %v3418 = vsel %vm1025, %v3404, %v3405
    %v3419 = vsel %vm1025, %v3403, %v3404
    %v3420 = vsel %vm1025, %v3402, %v3403
    %v3421 = vsel %vm1025, %v3401, %v3402
    %v3422 = vsel %vm1025, %v3400, %v3401
    %v3423 = vsel %vm1025, %v3399, %v3400
    %v3424 = vsel %vm1025, %v3398, %v3399
    %v3425 = vsel %vm1025, %v3397, %v3398
    %v3426 = vsel %vm1025, %v3396, %v3397
    %v3427 = vsel %vm1025, %v3395, %v3396
    %v3428 = vsel %vm1025, %v3394, %v3395
    %v3429 = vsel %vm1025, %v3393, %v3394
    %v3430 = vsel %vm1025, %v3392, %v3393
    %v3431 = vsel %vm1025, %v3391, %v3392
    %v3432 = vsel %vm1025, %v3390, %v3391
    %v3433 = vsel %vm1025, %v3389, %v3390
    %v3434 = vsel %vm1025, %v3388, %v3389
    %v3435 = vsel %vm1025, %v3387, %v3388
    %v3436 = vsel %vm1025, %v3386, %v3387
    %v3437 = vsel %vm1025, %v3385, %v3386
    %v3438 = vsel %vm1025, %v3384, %v3385
    %v3439 = vsel %vm1025, %v3383, %v3384
    %v3440 = vsel %vm1025, %v3382, %v3383
    %v3441 = vsel %vm1025, %v3381, %v3382
    %v3442 = vsel %vm1025, %v3380, %v3381
    %v3443 = vsel %vm1025, %v3379, %v3380
    %v3444 = vsel %vm1025, %v3378, %v3379
    %v3445 = vsel %vm1025, %v3377, %v3378
    %v3446 = vsel %vm1025, %v3376, %v3377
    %v3447 = vsel %vm1025, %v3375, %v3376
    %v3448 = vsel %vm1025, %v3374, %v3375
    %v3449 = vsel %vm1025, %v3373, %v3374
    %v3450 = vsel %vm1025, %v3372, %v3373
    %v3451 = vsel %vm1025, %v3371, %v3372
    %v3452 = vsel %vm1025, %v3370, %v3371
    %v3453 = vsel %vm1025, %v3369, %v3370
    %v3454 = vsel %vm1025, %v3368, %v3369
    %v3455 = vsel %vm1025, %v3367, %v3368
    %v3456 = vsel %vm1025, %v3366, %v3367
    %v3457 = vsel %vm1025, %v3365, %v3366
    %v3458 = vsel %vm1025, %v3364, %v3365
    %v3459 = vsel %vm1025, %v3363, %v3364
    %v3460 = vsel %vm1025, %v3362, %v3363
    %v3461 = vsel %vm1025, %v3361, %v3362
    %v3462 = vsel %vm1025, %v3360, %v3361
    %v3463 = vsel %vm1025, %v3359, %v3360
    %v3464 = vsel %vm1025, %v3358, %v3359
    %v3465 = vsel %vm1025, %v3357, %v3358
    %v3466 = vsel %vm1025, %v3356, %v3357
    %v3467 = vsel %vm1025, %v3355, %v3356
    %v3468 = vsel %vm1025, %v3354, %v3355
    %v3469 = vsel %vm1025, %v3353, %v3354
    %v3470 = vsel %vm1025, %v3352, %v3353
    %v3471 = vsel %vm1025, %v3351, %v3352
    %v3472 = vsel %vm1025, %v3350, %v3351
    %v3473 = vsel %vm1025, %v3349, %v3350
    %v3474 = vsel %vm1025, %v3348, %v3349
    %v3475 = vsel %vm1025, %v3411, %v3348
    %v3476 = vsel %vm1282, %v3474, -1e+30
    %v3477 = vsel %vm1283, %v3473, -1e+30
    %v3478 = vsel %vm1284, %v3472, -1e+30
    %v3479 = vsel %vm1285, %v3471, -1e+30
    %v3480 = vsel %vm1286, %v3470, -1e+30
    %v3481 = vsel %vm1287, %v3469, -1e+30
    %v3482 = vsel %vm1288, %v3468, -1e+30
    %v3483 = vsel %vm1289, %v3467, -1e+30
    %v3484 = vsel %vm1290, %v3466, -1e+30
    %v3485 = vsel %vm1291, %v3465, -1e+30
    %v3486 = vsel %vm1292, %v3464, -1e+30
    %v3487 = vsel %vm1293, %v3463, -1e+30
    %v3488 = vsel %vm1294, %v3462, -1e+30
    %v3489 = vsel %vm1295, %v3461, -1e+30
    %v3490 = vsel %vm1296, %v3460, -1e+30
    %v3491 = vsel %vm1297, %v3459, -1e+30
    %v3492 = vsel %vm1298, %v3458, -1e+30
    %v3493 = vsel %vm1299, %v3457, -1e+30
    %v3494 = vsel %vm1300, %v3456, -1e+30
    %v3495 = vsel %vm1301, %v3455, -1e+30
    %v3496 = vsel %vm1302, %v3454, -1e+30
    %v3497 = vsel %vm1303, %v3453, -1e+30
    %v3498 = vsel %vm1304, %v3452, -1e+30
    %v3499 = vsel %vm1305, %v3451, -1e+30
    %v3500 = vsel %vm1306, %v3450, -1e+30
    %v3501 = vsel %vm1307, %v3449, -1e+30
    %v3502 = vsel %vm1308, %v3448, -1e+30
    %v3503 = vsel %vm1309, %v3447, -1e+30
    %v3504 = vsel %vm1310, %v3446, -1e+30
    %v3505 = vsel %vm1311, %v3445, -1e+30
    %v3506 = vsel %vm1312, %v3444, -1e+30
    %v3507 = vsel %vm1313, %v3443, -1e+30
    %v3508 = vsel %vm1314, %v3442, -1e+30
    %v3509 = vsel %vm1315, %v3441, -1e+30
    %v3510 = vsel %vm1316, %v3440, -1e+30
    %v3511 = vsel %vm1317, %v3439, -1e+30
    %v3512 = vsel %vm1318, %v3438, -1e+30
    %v3513 = vsel %vm1319, %v3437, -1e+30
    %v3514 = vsel %vm1320, %v3436, -1e+30
    %v3515 = vsel %vm1321, %v3435, -1e+30
    %v3516 = vsel %vm1322, %v3434, -1e+30
    %v3517 = vsel %vm1323, %v3433, -1e+30
    %v3518 = vsel %vm1324, %v3432, -1e+30
    %v3519 = vsel %vm1325, %v3431, -1e+30
    %v3520 = vsel %vm1326, %v3430, -1e+30
    %v3521 = vsel %vm1327, %v3429, -1e+30
    %v3522 = vsel %vm1328, %v3428, -1e+30
    %v3523 = vsel %vm1329, %v3427, -1e+30
    %v3524 = vsel %vm1330, %v3426, -1e+30
    %v3525 = vsel %vm1331, %v3425, -1e+30
    %v3526 = vsel %vm1332, %v3424, -1e+30
    %v3527 = vsel %vm1333, %v3423, -1e+30
    %v3528 = vsel %vm1334, %v3422, -1e+30
    %v3529 = vsel %vm1335, %v3421, -1e+30
    %v3530 = vsel %vm1336, %v3420, -1e+30
    %v3531 = vsel %vm1337, %v3419, -1e+30
    %v3532 = vsel %vm1338, %v3418, -1e+30
    %v3533 = vsel %vm1339, %v3417, -1e+30
    %v3534 = vsel %vm1340, %v3416, -1e+30
    %v3535 = vsel %vm1341, %v3415, -1e+30
    %v3536 = vsel %vm1342, %v3414, -1e+30
    %v3537 = vsel %vm1343, %v3413, -1e+30
    %v3538 = vsel %vm1344, %v3412, -1e+30
    %v3539 = vsel %vm1345, %v3475, -1e+30
    %v3540 = vmax.f32 %v3284, %v3476
    %v3541 = vmax.f32 %v3285, %v3477
    %v3542 = vmax.f32 %v3286, %v3478
    %v3543 = vmax.f32 %v3287, %v3479
    %v3544 = vmax.f32 %v3288, %v3480
    %v3545 = vmax.f32 %v3289, %v3481
    %v3546 = vmax.f32 %v3290, %v3482
    %v3547 = vmax.f32 %v3291, %v3483
    %v3548 = vmax.f32 %v3292, %v3484
    %v3549 = vmax.f32 %v3293, %v3485
    %v3550 = vmax.f32 %v3294, %v3486
    %v3551 = vmax.f32 %v3295, %v3487
    %v3552 = vmax.f32 %v3296, %v3488
    %v3553 = vmax.f32 %v3297, %v3489
    %v3554 = vmax.f32 %v3298, %v3490
    %v3555 = vmax.f32 %v3299, %v3491
    %v3556 = vmax.f32 %v3300, %v3492
    %v3557 = vmax.f32 %v3301, %v3493
    %v3558 = vmax.f32 %v3302, %v3494
    %v3559 = vmax.f32 %v3303, %v3495
    %v3560 = vmax.f32 %v3304, %v3496
    %v3561 = vmax.f32 %v3305, %v3497
    %v3562 = vmax.f32 %v3306, %v3498
    %v3563 = vmax.f32 %v3307, %v3499
    %v3564 = vmax.f32 %v3308, %v3500
    %v3565 = vmax.f32 %v3309, %v3501
    %v3566 = vmax.f32 %v3310, %v3502
    %v3567 = vmax.f32 %v3311, %v3503
    %v3568 = vmax.f32 %v3312, %v3504
    %v3569 = vmax.f32 %v3313, %v3505
    %v3570 = vmax.f32 %v3314, %v3506
    %v3571 = vmax.f32 %v3315, %v3507
    %v3572 = vmax.f32 %v3316, %v3508
    %v3573 = vmax.f32 %v3317, %v3509
    %v3574 = vmax.f32 %v3318, %v3510
    %v3575 = vmax.f32 %v3319, %v3511
    %v3576 = vmax.f32 %v3320, %v3512
    %v3577 = vmax.f32 %v3321, %v3513
    %v3578 = vmax.f32 %v3322, %v3514
    %v3579 = vmax.f32 %v3323, %v3515
    %v3580 = vmax.f32 %v3324, %v3516
    %v3581 = vmax.f32 %v3325, %v3517
    %v3582 = vmax.f32 %v3326, %v3518
    %v3583 = vmax.f32 %v3327, %v3519
    %v3584 = vmax.f32 %v3328, %v3520
    %v3585 = vmax.f32 %v3329, %v3521
    %v3586 = vmax.f32 %v3330, %v3522
    %v3587 = vmax.f32 %v3331, %v3523
    %v3588 = vmax.f32 %v3332, %v3524
    %v3589 = vmax.f32 %v3333, %v3525
    %v3590 = vmax.f32 %v3334, %v3526
    %v3591 = vmax.f32 %v3335, %v3527
    %v3592 = vmax.f32 %v3336, %v3528
    %v3593 = vmax.f32 %v3337, %v3529
    %v3594 = vmax.f32 %v3338, %v3530
    %v3595 = vmax.f32 %v3339, %v3531
    %v3596 = vmax.f32 %v3340, %v3532
    %v3597 = vmax.f32 %v3341, %v3533
    %v3598 = vmax.f32 %v3342, %v3534
    %v3599 = vmax.f32 %v3343, %v3535
    %v3600 = vmax.f32 %v3344, %v3536
    %v3601 = vmax.f32 %v3345, %v3537
    %v3602 = vmax.f32 %v3346, %v3538
    %v3603 = vmax.f32 %v3347, %v3539
    %v3604 = vrot.slane %v2772, 2
    %v3605 = vrot.slane %v2773, 2
    %v3606 = vrot.slane %v2774, 2
    %v3607 = vrot.slane %v2775, 2
    %v3608 = vrot.slane %v2776, 2
    %v3609 = vrot.slane %v2777, 2
    %v3610 = vrot.slane %v2778, 2
    %v3611 = vrot.slane %v2779, 2
    %v3612 = vrot.slane %v2780, 2
    %v3613 = vrot.slane %v2781, 2
    %v3614 = vrot.slane %v2782, 2
    %v3615 = vrot.slane %v2783, 2
    %v3616 = vrot.slane %v2784, 2
    %v3617 = vrot.slane %v2785, 2
    %v3618 = vrot.slane %v2786, 2
    %v3619 = vrot.slane %v2787, 2
    %v3620 = vrot.slane %v2788, 2
    %v3621 = vrot.slane %v2789, 2
    %v3622 = vrot.slane %v2790, 2
    %v3623 = vrot.slane %v2791, 2
    %v3624 = vrot.slane %v2792, 2
    %v3625 = vrot.slane %v2793, 2
    %v3626 = vrot.slane %v2794, 2
    %v3627 = vrot.slane %v2795, 2
    %v3628 = vrot.slane %v2796, 2
    %v3629 = vrot.slane %v2797, 2
    %v3630 = vrot.slane %v2798, 2
    %v3631 = vrot.slane %v2799, 2
    %v3632 = vrot.slane %v2800, 2
    %v3633 = vrot.slane %v2801, 2
    %v3634 = vrot.slane %v2802, 2
    %v3635 = vrot.slane %v2803, 2
    %v3636 = vrot.slane %v2804, 2
    %v3637 = vrot.slane %v2805, 2
    %v3638 = vrot.slane %v2806, 2
    %v3639 = vrot.slane %v2807, 2
    %v3640 = vrot.slane %v2808, 2
    %v3641 = vrot.slane %v2809, 2
    %v3642 = vrot.slane %v2810, 2
    %v3643 = vrot.slane %v2811, 2
    %v3644 = vrot.slane %v2812, 2
    %v3645 = vrot.slane %v2813, 2
    %v3646 = vrot.slane %v2814, 2
    %v3647 = vrot.slane %v2815, 2
    %v3648 = vrot.slane %v2816, 2
    %v3649 = vrot.slane %v2817, 2
    %v3650 = vrot.slane %v2818, 2
    %v3651 = vrot.slane %v2819, 2
    %v3652 = vrot.slane %v2820, 2
    %v3653 = vrot.slane %v2821, 2
    %v3654 = vrot.slane %v2822, 2
    %v3655 = vrot.slane %v2823, 2
    %v3656 = vrot.slane %v2824, 2
    %v3657 = vrot.slane %v2825, 2
    %v3658 = vrot.slane %v2826, 2
    %v3659 = vrot.slane %v2827, 2
    %v3660 = vrot.slane %v2828, 2
    %v3661 = vrot.slane %v2829, 2
    %v3662 = vrot.slane %v2830, 2
    %v3663 = vrot.slane %v2831, 2
    %v3664 = vrot.slane %v2832, 2
    %v3665 = vrot.slane %v2833, 2
    %v3666 = vrot.slane %v2834, 2
    %v3667 = vrot.slane %v2835, 2
    %v3668 = vsel %vm1410, %v3666, %v3667
    %v3669 = vsel %vm1410, %v3665, %v3666
    %v3670 = vsel %vm1410, %v3664, %v3665
    %v3671 = vsel %vm1410, %v3663, %v3664
    %v3672 = vsel %vm1410, %v3662, %v3663
    %v3673 = vsel %vm1410, %v3661, %v3662
    %v3674 = vsel %vm1410, %v3660, %v3661
    %v3675 = vsel %vm1410, %v3659, %v3660
    %v3676 = vsel %vm1410, %v3658, %v3659
    %v3677 = vsel %vm1410, %v3657, %v3658
    %v3678 = vsel %vm1410, %v3656, %v3657
    %v3679 = vsel %vm1410, %v3655, %v3656
    %v3680 = vsel %vm1410, %v3654, %v3655
    %v3681 = vsel %vm1410, %v3653, %v3654
    %v3682 = vsel %vm1410, %v3652, %v3653
    %v3683 = vsel %vm1410, %v3651, %v3652
    %v3684 = vsel %vm1410, %v3650, %v3651
    %v3685 = vsel %vm1410, %v3649, %v3650
    %v3686 = vsel %vm1410, %v3648, %v3649
    %v3687 = vsel %vm1410, %v3647, %v3648
    %v3688 = vsel %vm1410, %v3646, %v3647
    %v3689 = vsel %vm1410, %v3645, %v3646
    %v3690 = vsel %vm1410, %v3644, %v3645
    %v3691 = vsel %vm1410, %v3643, %v3644
    %v3692 = vsel %vm1410, %v3642, %v3643
    %v3693 = vsel %vm1410, %v3641, %v3642
    %v3694 = vsel %vm1410, %v3640, %v3641
    %v3695 = vsel %vm1410, %v3639, %v3640
    %v3696 = vsel %vm1410, %v3638, %v3639
    %v3697 = vsel %vm1410, %v3637, %v3638
    %v3698 = vsel %vm1410, %v3636, %v3637
    %v3699 = vsel %vm1410, %v3635, %v3636
    %v3700 = vsel %vm1410, %v3634, %v3635
    %v3701 = vsel %vm1410, %v3633, %v3634
    %v3702 = vsel %vm1410, %v3632, %v3633
    %v3703 = vsel %vm1410, %v3631, %v3632
    %v3704 = vsel %vm1410, %v3630, %v3631
    %v3705 = vsel %vm1410, %v3629, %v3630
    %v3706 = vsel %vm1410, %v3628, %v3629
    %v3707 = vsel %vm1410, %v3627, %v3628
    %v3708 = vsel %vm1410, %v3626, %v3627
    %v3709 = vsel %vm1410, %v3625, %v3626
    %v3710 = vsel %vm1410, %v3624, %v3625
    %v3711 = vsel %vm1410, %v3623, %v3624
    %v3712 = vsel %vm1410, %v3622, %v3623
    %v3713 = vsel %vm1410, %v3621, %v3622
    %v3714 = vsel %vm1410, %v3620, %v3621
    %v3715 = vsel %vm1410, %v3619, %v3620
    %v3716 = vsel %vm1410, %v3618, %v3619
    %v3717 = vsel %vm1410, %v3617, %v3618
    %v3718 = vsel %vm1410, %v3616, %v3617
    %v3719 = vsel %vm1410, %v3615, %v3616
    %v3720 = vsel %vm1410, %v3614, %v3615
    %v3721 = vsel %vm1410, %v3613, %v3614
    %v3722 = vsel %vm1410, %v3612, %v3613
    %v3723 = vsel %vm1410, %v3611, %v3612
    %v3724 = vsel %vm1410, %v3610, %v3611
    %v3725 = vsel %vm1410, %v3609, %v3610
    %v3726 = vsel %vm1410, %v3608, %v3609
    %v3727 = vsel %vm1410, %v3607, %v3608
    %v3728 = vsel %vm1410, %v3606, %v3607
    %v3729 = vsel %vm1410, %v3605, %v3606
    %v3730 = vsel %vm1410, %v3604, %v3605
    %v3731 = vsel %vm1410, %v3667, %v3604
    %v3732 = vsel %vm1667, %v3730, -1e+30
    %v3733 = vsel %vm1668, %v3729, -1e+30
    %v3734 = vsel %vm1669, %v3728, -1e+30
    %v3735 = vsel %vm1670, %v3727, -1e+30
    %v3736 = vsel %vm1671, %v3726, -1e+30
    %v3737 = vsel %vm1672, %v3725, -1e+30
    %v3738 = vsel %vm1673, %v3724, -1e+30
    %v3739 = vsel %vm1674, %v3723, -1e+30
    %v3740 = vsel %vm1675, %v3722, -1e+30
    %v3741 = vsel %vm1676, %v3721, -1e+30
    %v3742 = vsel %vm1677, %v3720, -1e+30
    %v3743 = vsel %vm1678, %v3719, -1e+30
    %v3744 = vsel %vm1679, %v3718, -1e+30
    %v3745 = vsel %vm1680, %v3717, -1e+30
    %v3746 = vsel %vm1681, %v3716, -1e+30
    %v3747 = vsel %vm1682, %v3715, -1e+30
    %v3748 = vsel %vm1683, %v3714, -1e+30
    %v3749 = vsel %vm1684, %v3713, -1e+30
    %v3750 = vsel %vm1685, %v3712, -1e+30
    %v3751 = vsel %vm1686, %v3711, -1e+30
    %v3752 = vsel %vm1687, %v3710, -1e+30
    %v3753 = vsel %vm1688, %v3709, -1e+30
    %v3754 = vsel %vm1689, %v3708, -1e+30
    %v3755 = vsel %vm1690, %v3707, -1e+30
    %v3756 = vsel %vm1691, %v3706, -1e+30
    %v3757 = vsel %vm1692, %v3705, -1e+30
    %v3758 = vsel %vm1693, %v3704, -1e+30
    %v3759 = vsel %vm1694, %v3703, -1e+30
    %v3760 = vsel %vm1695, %v3702, -1e+30
    %v3761 = vsel %vm1696, %v3701, -1e+30
    %v3762 = vsel %vm1697, %v3700, -1e+30
    %v3763 = vsel %vm1698, %v3699, -1e+30
    %v3764 = vsel %vm1699, %v3698, -1e+30
    %v3765 = vsel %vm1700, %v3697, -1e+30
    %v3766 = vsel %vm1701, %v3696, -1e+30
    %v3767 = vsel %vm1702, %v3695, -1e+30
    %v3768 = vsel %vm1703, %v3694, -1e+30
    %v3769 = vsel %vm1704, %v3693, -1e+30
    %v3770 = vsel %vm1705, %v3692, -1e+30
    %v3771 = vsel %vm1706, %v3691, -1e+30
    %v3772 = vsel %vm1707, %v3690, -1e+30
    %v3773 = vsel %vm1708, %v3689, -1e+30
    %v3774 = vsel %vm1709, %v3688, -1e+30
    %v3775 = vsel %vm1710, %v3687, -1e+30
    %v3776 = vsel %vm1711, %v3686, -1e+30
    %v3777 = vsel %vm1712, %v3685, -1e+30
    %v3778 = vsel %vm1713, %v3684, -1e+30
    %v3779 = vsel %vm1714, %v3683, -1e+30
    %v3780 = vsel %vm1715, %v3682, -1e+30
    %v3781 = vsel %vm1716, %v3681, -1e+30
    %v3782 = vsel %vm1717, %v3680, -1e+30
    %v3783 = vsel %vm1718, %v3679, -1e+30
    %v3784 = vsel %vm1719, %v3678, -1e+30
    %v3785 = vsel %vm1720, %v3677, -1e+30
    %v3786 = vsel %vm1721, %v3676, -1e+30
    %v3787 = vsel %vm1722, %v3675, -1e+30
    %v3788 = vsel %vm1723, %v3674, -1e+30
    %v3789 = vsel %vm1724, %v3673, -1e+30
    %v3790 = vsel %vm1725, %v3672, -1e+30
    %v3791 = vsel %vm1726, %v3671, -1e+30
    %v3792 = vsel %vm1727, %v3670, -1e+30
    %v3793 = vsel %vm1728, %v3669, -1e+30
    %v3794 = vsel %vm1729, %v3668, -1e+30
    %v3795 = vsel %vm1730, %v3731, -1e+30
    %v3796 = vmax.f32 %v3540, %v3732
    %v3797 = vmax.f32 %v3541, %v3733
    %v3798 = vmax.f32 %v3542, %v3734
    %v3799 = vmax.f32 %v3543, %v3735
    %v3800 = vmax.f32 %v3544, %v3736
    %v3801 = vmax.f32 %v3545, %v3737
    %v3802 = vmax.f32 %v3546, %v3738
    %v3803 = vmax.f32 %v3547, %v3739
    %v3804 = vmax.f32 %v3548, %v3740
    %v3805 = vmax.f32 %v3549, %v3741
    %v3806 = vmax.f32 %v3550, %v3742
    %v3807 = vmax.f32 %v3551, %v3743
    %v3808 = vmax.f32 %v3552, %v3744
    %v3809 = vmax.f32 %v3553, %v3745
    %v3810 = vmax.f32 %v3554, %v3746
    %v3811 = vmax.f32 %v3555, %v3747
    %v3812 = vmax.f32 %v3556, %v3748
    %v3813 = vmax.f32 %v3557, %v3749
    %v3814 = vmax.f32 %v3558, %v3750
    %v3815 = vmax.f32 %v3559, %v3751
    %v3816 = vmax.f32 %v3560, %v3752
    %v3817 = vmax.f32 %v3561, %v3753
    %v3818 = vmax.f32 %v3562, %v3754
    %v3819 = vmax.f32 %v3563, %v3755
    %v3820 = vmax.f32 %v3564, %v3756
    %v3821 = vmax.f32 %v3565, %v3757
    %v3822 = vmax.f32 %v3566, %v3758
    %v3823 = vmax.f32 %v3567, %v3759
    %v3824 = vmax.f32 %v3568, %v3760
    %v3825 = vmax.f32 %v3569, %v3761
    %v3826 = vmax.f32 %v3570, %v3762
    %v3827 = vmax.f32 %v3571, %v3763
    %v3828 = vmax.f32 %v3572, %v3764
    %v3829 = vmax.f32 %v3573, %v3765
    %v3830 = vmax.f32 %v3574, %v3766
    %v3831 = vmax.f32 %v3575, %v3767
    %v3832 = vmax.f32 %v3576, %v3768
    %v3833 = vmax.f32 %v3577, %v3769
    %v3834 = vmax.f32 %v3578, %v3770
    %v3835 = vmax.f32 %v3579, %v3771
    %v3836 = vmax.f32 %v3580, %v3772
    %v3837 = vmax.f32 %v3581, %v3773
    %v3838 = vmax.f32 %v3582, %v3774
    %v3839 = vmax.f32 %v3583, %v3775
    %v3840 = vmax.f32 %v3584, %v3776
    %v3841 = vmax.f32 %v3585, %v3777
    %v3842 = vmax.f32 %v3586, %v3778
    %v3843 = vmax.f32 %v3587, %v3779
    %v3844 = vmax.f32 %v3588, %v3780
    %v3845 = vmax.f32 %v3589, %v3781
    %v3846 = vmax.f32 %v3590, %v3782
    %v3847 = vmax.f32 %v3591, %v3783
    %v3848 = vmax.f32 %v3592, %v3784
    %v3849 = vmax.f32 %v3593, %v3785
    %v3850 = vmax.f32 %v3594, %v3786
    %v3851 = vmax.f32 %v3595, %v3787
    %v3852 = vmax.f32 %v3596, %v3788
    %v3853 = vmax.f32 %v3597, %v3789
    %v3854 = vmax.f32 %v3598, %v3790
    %v3855 = vmax.f32 %v3599, %v3791
    %v3856 = vmax.f32 %v3600, %v3792
    %v3857 = vmax.f32 %v3601, %v3793
    %v3858 = vmax.f32 %v3602, %v3794
    %v3859 = vmax.f32 %v3603, %v3795
    %v3860 = vmax.f32 %v3796, -1e+30
    %v3861 = vmax.f32 %v3797, -1e+30
    %v3862 = vmax.f32 %v3796, %v3798
    %v3863 = vmax.f32 %v3797, %v3799
    %v3864 = vmax.f32 %v3798, %v3800
    %v3865 = vmax.f32 %v3799, %v3801
    %v3866 = vmax.f32 %v3800, %v3802
    %v3867 = vmax.f32 %v3801, %v3803
    %v3868 = vmax.f32 %v3802, %v3804
    %v3869 = vmax.f32 %v3803, %v3805
    %v3870 = vmax.f32 %v3804, %v3806
    %v3871 = vmax.f32 %v3805, %v3807
    %v3872 = vmax.f32 %v3806, %v3808
    %v3873 = vmax.f32 %v3807, %v3809
    %v3874 = vmax.f32 %v3808, %v3810
    %v3875 = vmax.f32 %v3809, %v3811
    %v3876 = vmax.f32 %v3810, %v3812
    %v3877 = vmax.f32 %v3811, %v3813
    %v3878 = vmax.f32 %v3812, %v3814
    %v3879 = vmax.f32 %v3813, %v3815
    %v3880 = vmax.f32 %v3814, %v3816
    %v3881 = vmax.f32 %v3815, %v3817
    %v3882 = vmax.f32 %v3816, %v3818
    %v3883 = vmax.f32 %v3817, %v3819
    %v3884 = vmax.f32 %v3818, %v3820
    %v3885 = vmax.f32 %v3819, %v3821
    %v3886 = vmax.f32 %v3820, %v3822
    %v3887 = vmax.f32 %v3821, %v3823
    %v3888 = vmax.f32 %v3822, %v3824
    %v3889 = vmax.f32 %v3823, %v3825
    %v3890 = vmax.f32 %v3824, %v3826
    %v3891 = vmax.f32 %v3825, %v3827
    %v3892 = vmax.f32 %v3826, -1e+30
    %v3893 = vmax.f32 %v3827, -1e+30
    %v3894 = vmax.f32 %v3828, -1e+30
    %v3895 = vmax.f32 %v3829, -1e+30
    %v3896 = vmax.f32 %v3828, %v3830
    %v3897 = vmax.f32 %v3829, %v3831
    %v3898 = vmax.f32 %v3830, %v3832
    %v3899 = vmax.f32 %v3831, %v3833
    %v3900 = vmax.f32 %v3832, %v3834
    %v3901 = vmax.f32 %v3833, %v3835
    %v3902 = vmax.f32 %v3834, %v3836
    %v3903 = vmax.f32 %v3835, %v3837
    %v3904 = vmax.f32 %v3836, %v3838
    %v3905 = vmax.f32 %v3837, %v3839
    %v3906 = vmax.f32 %v3838, %v3840
    %v3907 = vmax.f32 %v3839, %v3841
    %v3908 = vmax.f32 %v3840, %v3842
    %v3909 = vmax.f32 %v3841, %v3843
    %v3910 = vmax.f32 %v3842, %v3844
    %v3911 = vmax.f32 %v3843, %v3845
    %v3912 = vmax.f32 %v3844, %v3846
    %v3913 = vmax.f32 %v3845, %v3847
    %v3914 = vmax.f32 %v3846, %v3848
    %v3915 = vmax.f32 %v3847, %v3849
    %v3916 = vmax.f32 %v3848, %v3850
    %v3917 = vmax.f32 %v3849, %v3851
    %v3918 = vmax.f32 %v3850, %v3852
    %v3919 = vmax.f32 %v3851, %v3853
    %v3920 = vmax.f32 %v3852, %v3854
    %v3921 = vmax.f32 %v3853, %v3855
    %v3922 = vmax.f32 %v3854, %v3856
    %v3923 = vmax.f32 %v3855, %v3857
    %v3924 = vmax.f32 %v3856, %v3858
    %v3925 = vmax.f32 %v3857, %v3859
    %v3926 = vmax.f32 %v3858, -1e+30
    %v3927 = vmax.f32 %v3859, -1e+30
    %v3928 = vmax.f32 %v3862, -1e+30
    %v3929 = vmax.f32 %v3863, -1e+30
    %v3930 = vmax.f32 %v3860, %v3864
    %v3931 = vmax.f32 %v3861, %v3865
    %v3932 = vmax.f32 %v3862, %v3866
    %v3933 = vmax.f32 %v3863, %v3867
    %v3934 = vmax.f32 %v3864, %v3868
    %v3935 = vmax.f32 %v3865, %v3869
    %v3936 = vmax.f32 %v3866, %v3870
    %v3937 = vmax.f32 %v3867, %v3871
    %v3938 = vmax.f32 %v3868, %v3872
    %v3939 = vmax.f32 %v3869, %v3873
    %v3940 = vmax.f32 %v3870, %v3874
    %v3941 = vmax.f32 %v3871, %v3875
    %v3942 = vmax.f32 %v3872, %v3876
    %v3943 = vmax.f32 %v3873, %v3877
    %v3944 = vmax.f32 %v3874, %v3878
    %v3945 = vmax.f32 %v3875, %v3879
    %v3946 = vmax.f32 %v3876, %v3880
    %v3947 = vmax.f32 %v3877, %v3881
    %v3948 = vmax.f32 %v3878, %v3882
    %v3949 = vmax.f32 %v3879, %v3883
    %v3950 = vmax.f32 %v3880, %v3884
    %v3951 = vmax.f32 %v3881, %v3885
    %v3952 = vmax.f32 %v3882, %v3886
    %v3953 = vmax.f32 %v3883, %v3887
    %v3954 = vmax.f32 %v3884, %v3888
    %v3955 = vmax.f32 %v3885, %v3889
    %v3956 = vmax.f32 %v3886, %v3890
    %v3957 = vmax.f32 %v3887, %v3891
    %v3958 = vmax.f32 %v3888, %v3892
    %v3959 = vmax.f32 %v3889, %v3893
    %v3960 = vmax.f32 %v3896, -1e+30
    %v3961 = vmax.f32 %v3897, -1e+30
    %v3962 = vmax.f32 %v3894, %v3898
    %v3963 = vmax.f32 %v3895, %v3899
    %v3964 = vmax.f32 %v3896, %v3900
    %v3965 = vmax.f32 %v3897, %v3901
    %v3966 = vmax.f32 %v3898, %v3902
    %v3967 = vmax.f32 %v3899, %v3903
    %v3968 = vmax.f32 %v3900, %v3904
    %v3969 = vmax.f32 %v3901, %v3905
    %v3970 = vmax.f32 %v3902, %v3906
    %v3971 = vmax.f32 %v3903, %v3907
    %v3972 = vmax.f32 %v3904, %v3908
    %v3973 = vmax.f32 %v3905, %v3909
    %v3974 = vmax.f32 %v3906, %v3910
    %v3975 = vmax.f32 %v3907, %v3911
    %v3976 = vmax.f32 %v3908, %v3912
    %v3977 = vmax.f32 %v3909, %v3913
    %v3978 = vmax.f32 %v3910, %v3914
    %v3979 = vmax.f32 %v3911, %v3915
    %v3980 = vmax.f32 %v3912, %v3916
    %v3981 = vmax.f32 %v3913, %v3917
    %v3982 = vmax.f32 %v3914, %v3918
    %v3983 = vmax.f32 %v3915, %v3919
    %v3984 = vmax.f32 %v3916, %v3920
    %v3985 = vmax.f32 %v3917, %v3921
    %v3986 = vmax.f32 %v3918, %v3922
    %v3987 = vmax.f32 %v3919, %v3923
    %v3988 = vmax.f32 %v3920, %v3924
    %v3989 = vmax.f32 %v3921, %v3925
    %v3990 = vmax.f32 %v3922, %v3926
    %v3991 = vmax.f32 %v3923, %v3927
    %v3992 = vmax.f32 %v3928, %v3800
    %v3993 = vmax.f32 %v3929, %v3801
    %v3994 = vmax.f32 %v3930, %v3802
    %v3995 = vmax.f32 %v3931, %v3803
    %v3996 = vmax.f32 %v3932, %v3804
    %v3997 = vmax.f32 %v3933, %v3805
    %v3998 = vmax.f32 %v3934, %v3806
    %v3999 = vmax.f32 %v3935, %v3807
    %v4000 = vmax.f32 %v3936, %v3808
    %v4001 = vmax.f32 %v3937, %v3809
    %v4002 = vmax.f32 %v3938, %v3810
    %v4003 = vmax.f32 %v3939, %v3811
    %v4004 = vmax.f32 %v3940, %v3812
    %v4005 = vmax.f32 %v3941, %v3813
    %v4006 = vmax.f32 %v3942, %v3814
    %v4007 = vmax.f32 %v3943, %v3815
    %v4008 = vmax.f32 %v3944, %v3816
    %v4009 = vmax.f32 %v3945, %v3817
    %v4010 = vmax.f32 %v3946, %v3818
    %v4011 = vmax.f32 %v3947, %v3819
    %v4012 = vmax.f32 %v3948, %v3820
    %v4013 = vmax.f32 %v3949, %v3821
    %v4014 = vmax.f32 %v3950, %v3822
    %v4015 = vmax.f32 %v3951, %v3823
    %v4016 = vmax.f32 %v3952, %v3824
    %v4017 = vmax.f32 %v3953, %v3825
    %v4018 = vmax.f32 %v3954, %v3826
    %v4019 = vmax.f32 %v3955, %v3827
    %v4020 = vmax.f32 %v3956, -1e+30
    %v4021 = vmax.f32 %v3957, -1e+30
    %v4022 = vmax.f32 %v3958, -1e+30
    %v4023 = vmax.f32 %v3959, -1e+30
    %v4024 = vmax.f32 %v3960, %v3832
    %v4025 = vmax.f32 %v3961, %v3833
    %v4026 = vmax.f32 %v3962, %v3834
    %v4027 = vmax.f32 %v3963, %v3835
    %v4028 = vmax.f32 %v3964, %v3836
    %v4029 = vmax.f32 %v3965, %v3837
    %v4030 = vmax.f32 %v3966, %v3838
    %v4031 = vmax.f32 %v3967, %v3839
    %v4032 = vmax.f32 %v3968, %v3840
    %v4033 = vmax.f32 %v3969, %v3841
    %v4034 = vmax.f32 %v3970, %v3842
    %v4035 = vmax.f32 %v3971, %v3843
    %v4036 = vmax.f32 %v3972, %v3844
    %v4037 = vmax.f32 %v3973, %v3845
    %v4038 = vmax.f32 %v3974, %v3846
    %v4039 = vmax.f32 %v3975, %v3847
    %v4040 = vmax.f32 %v3976, %v3848
    %v4041 = vmax.f32 %v3977, %v3849
    %v4042 = vmax.f32 %v3978, %v3850
    %v4043 = vmax.f32 %v3979, %v3851
    %v4044 = vmax.f32 %v3980, %v3852
    %v4045 = vmax.f32 %v3981, %v3853
    %v4046 = vmax.f32 %v3982, %v3854
    %v4047 = vmax.f32 %v3983, %v3855
    %v4048 = vmax.f32 %v3984, %v3856
    %v4049 = vmax.f32 %v3985, %v3857
    %v4050 = vmax.f32 %v3986, %v3858
    %v4051 = vmax.f32 %v3987, %v3859
    %v4052 = vmax.f32 %v3988, -1e+30
    %v4053 = vmax.f32 %v3989, -1e+30
    %v4054 = vmax.f32 %v3990, -1e+30
    %v4055 = vmax.f32 %v3991, -1e+30
    %4120 = vrot.lane.b32.xlu0 %v3992, 64
    %v4121 = vpop.permute.xlu0 %4120
    %4122 = vrot.lane.b32.xlu0 %v3993, 64
    %v4123 = vpop.permute.xlu0 %4122
    %4124 = vrot.lane.b32.xlu0 %v3994, 64
    %v4125 = vpop.permute.xlu0 %4124
    %4126 = vrot.lane.b32.xlu0 %v3995, 64
    %v4127 = vpop.permute.xlu0 %4126
    %4128 = vrot.lane.b32.xlu0 %v3996, 64
    %v4129 = vpop.permute.xlu0 %4128
    %4130 = vrot.lane.b32.xlu0 %v3997, 64
    %v4131 = vpop.permute.xlu0 %4130
    %4132 = vrot.lane.b32.xlu0 %v3998, 64
    %v4133 = vpop.permute.xlu0 %4132
    %4134 = vrot.lane.b32.xlu0 %v3999, 64
    %v4135 = vpop.permute.xlu0 %4134
    %4136 = vrot.lane.b32.xlu0 %v4000, 64
    %v4137 = vpop.permute.xlu0 %4136
    %4138 = vrot.lane.b32.xlu0 %v4001, 64
    %v4139 = vpop.permute.xlu0 %4138
    %4140 = vrot.lane.b32.xlu0 %v4002, 64
    %v4141 = vpop.permute.xlu0 %4140
    %4142 = vrot.lane.b32.xlu0 %v4003, 64
    %v4143 = vpop.permute.xlu0 %4142
    %4144 = vrot.lane.b32.xlu0 %v4004, 64
    %v4145 = vpop.permute.xlu0 %4144
    %4146 = vrot.lane.b32.xlu0 %v4005, 64
    %v4147 = vpop.permute.xlu0 %4146
    %4148 = vrot.lane.b32.xlu0 %v4006, 64
    %v4149 = vpop.permute.xlu0 %4148
    %4150 = vrot.lane.b32.xlu0 %v4007, 64
    %v4151 = vpop.permute.xlu0 %4150
    %4152 = vrot.lane.b32.xlu0 %v4008, 64
    %v4153 = vpop.permute.xlu0 %4152
    %4154 = vrot.lane.b32.xlu0 %v4009, 64
    %v4155 = vpop.permute.xlu0 %4154
    %4156 = vrot.lane.b32.xlu0 %v4010, 64
    %v4157 = vpop.permute.xlu0 %4156
    %4158 = vrot.lane.b32.xlu0 %v4011, 64
    %v4159 = vpop.permute.xlu0 %4158
    %4160 = vrot.lane.b32.xlu0 %v4012, 64
    %v4161 = vpop.permute.xlu0 %4160
    %4162 = vrot.lane.b32.xlu0 %v4013, 64
    %v4163 = vpop.permute.xlu0 %4162
    %4164 = vrot.lane.b32.xlu0 %v4014, 64
    %v4165 = vpop.permute.xlu0 %4164
    %4166 = vrot.lane.b32.xlu0 %v4015, 64
    %v4167 = vpop.permute.xlu0 %4166
    %4168 = vrot.lane.b32.xlu0 %v4016, 64
    %v4169 = vpop.permute.xlu0 %4168
    %4170 = vrot.lane.b32.xlu0 %v4017, 64
    %v4171 = vpop.permute.xlu0 %4170
    %4172 = vrot.lane.b32.xlu0 %v4018, 64
    %v4173 = vpop.permute.xlu0 %4172
    %4174 = vrot.lane.b32.xlu0 %v4019, 64
    %v4175 = vpop.permute.xlu0 %4174
    %4176 = vrot.lane.b32.xlu0 %v4020, 64
    %v4177 = vpop.permute.xlu0 %4176
    %4178 = vrot.lane.b32.xlu0 %v4021, 64
    %v4179 = vpop.permute.xlu0 %4178
    %4180 = vrot.lane.b32.xlu0 %v4022, 64
    %v4181 = vpop.permute.xlu0 %4180
    %4182 = vrot.lane.b32.xlu0 %v4023, 64
    %v4183 = vpop.permute.xlu0 %4182
    %4184 = vrot.lane.b32.xlu0 %v4024, 64
    %v4185 = vpop.permute.xlu0 %4184
    %4186 = vrot.lane.b32.xlu0 %v4025, 64
    %v4187 = vpop.permute.xlu0 %4186
    %4188 = vrot.lane.b32.xlu0 %v4026, 64
    %v4189 = vpop.permute.xlu0 %4188
    %4190 = vrot.lane.b32.xlu0 %v4027, 64
    %v4191 = vpop.permute.xlu0 %4190
    %4192 = vrot.lane.b32.xlu0 %v4028, 64
    %v4193 = vpop.permute.xlu0 %4192
    %4194 = vrot.lane.b32.xlu0 %v4029, 64
    %v4195 = vpop.permute.xlu0 %4194
    %4196 = vrot.lane.b32.xlu0 %v4030, 64
    %v4197 = vpop.permute.xlu0 %4196
    %4198 = vrot.lane.b32.xlu0 %v4031, 64
    %v4199 = vpop.permute.xlu0 %4198
    %4200 = vrot.lane.b32.xlu0 %v4032, 64
    %v4201 = vpop.permute.xlu0 %4200
    %4202 = vrot.lane.b32.xlu0 %v4033, 64
    %v4203 = vpop.permute.xlu0 %4202
    %4204 = vrot.lane.b32.xlu0 %v4034, 64
    %v4205 = vpop.permute.xlu0 %4204
    %4206 = vrot.lane.b32.xlu0 %v4035, 64
    %v4207 = vpop.permute.xlu0 %4206
    %4208 = vrot.lane.b32.xlu0 %v4036, 64
    %v4209 = vpop.permute.xlu0 %4208
    %4210 = vrot.lane.b32.xlu0 %v4037, 64
    %v4211 = vpop.permute.xlu0 %4210
    %4212 = vrot.lane.b32.xlu0 %v4038, 64
    %v4213 = vpop.permute.xlu0 %4212
    %4214 = vrot.lane.b32.xlu0 %v4039, 64
    %v4215 = vpop.permute.xlu0 %4214
    %4216 = vrot.lane.b32.xlu0 %v4040, 64
    %v4217 = vpop.permute.xlu0 %4216
    %4218 = vrot.lane.b32.xlu0 %v4041, 64
    %v4219 = vpop.permute.xlu0 %4218
    %4220 = vrot.lane.b32.xlu0 %v4042, 64
    %v4221 = vpop.permute.xlu0 %4220
    %4222 = vrot.lane.b32.xlu0 %v4043, 64
    %v4223 = vpop.permute.xlu0 %4222
    %4224 = vrot.lane.b32.xlu0 %v4044, 64
    %v4225 = vpop.permute.xlu0 %4224
    %4226 = vrot.lane.b32.xlu0 %v4045, 64
    %v4227 = vpop.permute.xlu0 %4226
    %4228 = vrot.lane.b32.xlu0 %v4046, 64
    %v4229 = vpop.permute.xlu0 %4228
    %4230 = vrot.lane.b32.xlu0 %v4047, 64
    %v4231 = vpop.permute.xlu0 %4230
    %4232 = vrot.lane.b32.xlu0 %v4048, 64
    %v4233 = vpop.permute.xlu0 %4232
    %4234 = vrot.lane.b32.xlu0 %v4049, 64
    %v4235 = vpop.permute.xlu0 %4234
    %4236 = vrot.lane.b32.xlu0 %v4050, 64
    %v4237 = vpop.permute.xlu0 %4236
    %4238 = vrot.lane.b32.xlu0 %v4051, 64
    %v4239 = vpop.permute.xlu0 %4238
    %4240 = vrot.lane.b32.xlu0 %v4052, 64
    %v4241 = vpop.permute.xlu0 %4240
    %4242 = vrot.lane.b32.xlu0 %v4053, 64
    %v4243 = vpop.permute.xlu0 %4242
    %4244 = vrot.lane.b32.xlu0 %v4054, 64
    %v4245 = vpop.permute.xlu0 %4244
    %4246 = vrot.lane.b32.xlu0 %v4055, 64
    %v4247 = vpop.permute.xlu0 %4246
    %v4312 = vsel %vm1810, %v2772, %v4121
    %v4313 = vsel %vm1810, %v2773, %v4123
    %v4314 = vsel %vm1810, %v2774, %v4125
    %v4315 = vsel %vm1810, %v2775, %v4127
    %v4316 = vsel %vm1810, %v2776, %v4129
    %v4317 = vsel %vm1810, %v2777, %v4131
    %v4318 = vsel %vm1810, %v2778, %v4133
    %v4319 = vsel %vm1810, %v2779, %v4135
    %v4320 = vsel %vm1810, %v2780, %v4137
    %v4321 = vsel %vm1810, %v2781, %v4139
    %v4322 = vsel %vm1810, %v2782, %v4141
    %v4323 = vsel %vm1810, %v2783, %v4143
    %v4324 = vsel %vm1810, %v2784, %v4145
    %v4325 = vsel %vm1810, %v2785, %v4147
    %v4326 = vsel %vm1810, %v2786, %v4149
    %v4327 = vsel %vm1810, %v2787, %v4151
    %v4328 = vsel %vm1810, %v2788, %v4153
    %v4329 = vsel %vm1810, %v2789, %v4155
    %v4330 = vsel %vm1810, %v2790, %v4157
    %v4331 = vsel %vm1810, %v2791, %v4159
    %v4332 = vsel %vm1810, %v2792, %v4161
    %v4333 = vsel %vm1810, %v2793, %v4163
    %v4334 = vsel %vm1810, %v2794, %v4165
    %v4335 = vsel %vm1810, %v2795, %v4167
    %v4336 = vsel %vm1810, %v2796, %v4169
    %v4337 = vsel %vm1810, %v2797, %v4171
    %v4338 = vsel %vm1810, %v2798, %v4173
    %v4339 = vsel %vm1810, %v2799, %v4175
    %v4340 = vsel %vm1810, %v2800, %v4177
    %v4341 = vsel %vm1810, %v2801, %v4179
    %v4342 = vsel %vm1810, %v2802, %v4181
    %v4343 = vsel %vm1810, %v2803, %v4183
    %v4344 = vsel %vm1810, %v2804, %v4185
    %v4345 = vsel %vm1810, %v2805, %v4187
    %v4346 = vsel %vm1810, %v2806, %v4189
    %v4347 = vsel %vm1810, %v2807, %v4191
    %v4348 = vsel %vm1810, %v2808, %v4193
    %v4349 = vsel %vm1810, %v2809, %v4195
    %v4350 = vsel %vm1810, %v2810, %v4197
    %v4351 = vsel %vm1810, %v2811, %v4199
    %v4352 = vsel %vm1810, %v2812, %v4201
    %v4353 = vsel %vm1810, %v2813, %v4203
    %v4354 = vsel %vm1810, %v2814, %v4205
    %v4355 = vsel %vm1810, %v2815, %v4207
    %v4356 = vsel %vm1810, %v2816, %v4209
    %v4357 = vsel %vm1810, %v2817, %v4211
    %v4358 = vsel %vm1810, %v2818, %v4213
    %v4359 = vsel %vm1810, %v2819, %v4215
    %v4360 = vsel %vm1810, %v2820, %v4217
    %v4361 = vsel %vm1810, %v2821, %v4219
    %v4362 = vsel %vm1810, %v2822, %v4221
    %v4363 = vsel %vm1810, %v2823, %v4223
    %v4364 = vsel %vm1810, %v2824, %v4225
    %v4365 = vsel %vm1810, %v2825, %v4227
    %v4366 = vsel %vm1810, %v2826, %v4229
    %v4367 = vsel %vm1810, %v2827, %v4231
    %v4368 = vsel %vm1810, %v2828, %v4233
    %v4369 = vsel %vm1810, %v2829, %v4235
    %v4370 = vsel %vm1810, %v2830, %v4237
    %v4371 = vsel %vm1810, %v2831, %v4239
    %v4372 = vsel %vm1810, %v2832, %v4241
    %v4373 = vsel %vm1810, %v2833, %v4243
    %v4374 = vsel %vm1810, %v2834, %v4245
    %v4375 = vsel %vm1810, %v2835, %v4247
    %v4376 = vld [vmem:[#allocation7] sm:$0xff]
    %v4377 = vld [vmem:[#allocation7 + $0x8] sm:$0xff]
    %v4378 = vld [vmem:[#allocation7 + $0x10] sm:$0xff]
    %v4379 = vld [vmem:[#allocation7 + $0x18] sm:$0xff]
    %v4380 = vld [vmem:[#allocation7 + $0x20] sm:$0xff]
    %v4381 = vld [vmem:[#allocation7 + $0x28] sm:$0xff]
    %v4382 = vld [vmem:[#allocation7 + $0x30] sm:$0xff]
    %v4383 = vld [vmem:[#allocation7 + $0x38] sm:$0xff]
    %v4384 = vld [vmem:[#allocation7 + $0x40] sm:$0xff]
    %v4385 = vld [vmem:[#allocation7 + $0x48] sm:$0xff]
    %v4386 = vld [vmem:[#allocation7 + $0x50] sm:$0xff]
    %v4387 = vld [vmem:[#allocation7 + $0x58] sm:$0xff]
    %v4388 = vld [vmem:[#allocation7 + $0x60] sm:$0xff]
    %v4389 = vld [vmem:[#allocation7 + $0x68] sm:$0xff]
    %v4390 = vld [vmem:[#allocation7 + $0x70] sm:$0xff]
    %v4391 = vld [vmem:[#allocation7 + $0x78] sm:$0xff]
    %v4392 = vrot.slane %v3992, 7
    %v4393 = vrot.slane %v3993, 7
    %v4394 = vrot.slane %v3994, 7
    %v4395 = vrot.slane %v3995, 7
    %v4396 = vrot.slane %v3996, 7
    %v4397 = vrot.slane %v3997, 7
    %v4398 = vrot.slane %v3998, 7
    %v4399 = vrot.slane %v3999, 7
    %v4400 = vrot.slane %v4000, 7
    %v4401 = vrot.slane %v4001, 7
    %v4402 = vrot.slane %v4002, 7
    %v4403 = vrot.slane %v4003, 7
    %v4404 = vrot.slane %v4004, 7
    %v4405 = vrot.slane %v4005, 7
    %v4406 = vrot.slane %v4006, 7
    %v4407 = vrot.slane %v4007, 7
    %v4408 = vrot.slane %v4008, 7
    %v4409 = vrot.slane %v4009, 7
    %v4410 = vrot.slane %v4010, 7
    %v4411 = vrot.slane %v4011, 7
    %v4412 = vrot.slane %v4012, 7
    %v4413 = vrot.slane %v4013, 7
    %v4414 = vrot.slane %v4014, 7
    %v4415 = vrot.slane %v4015, 7
    %v4416 = vrot.slane %v4016, 7
    %v4417 = vrot.slane %v4017, 7
    %v4418 = vrot.slane %v4018, 7
    %v4419 = vrot.slane %v4019, 7
    %v4420 = vrot.slane %v4020, 7
    %v4421 = vrot.slane %v4021, 7
    %v4422 = vrot.slane %v4022, 7
    %v4423 = vrot.slane %v4023, 7
    %v4424 = vrot.slane %v4024, 7
    %v4425 = vrot.slane %v4025, 7
    %v4426 = vrot.slane %v4026, 7
    %v4427 = vrot.slane %v4027, 7
    %v4428 = vrot.slane %v4028, 7
    %v4429 = vrot.slane %v4029, 7
    %v4430 = vrot.slane %v4030, 7
    %v4431 = vrot.slane %v4031, 7
    %v4432 = vrot.slane %v4032, 7
    %v4433 = vrot.slane %v4033, 7
    %v4434 = vrot.slane %v4034, 7
    %v4435 = vrot.slane %v4035, 7
    %v4436 = vrot.slane %v4036, 7
    %v4437 = vrot.slane %v4037, 7
    %v4438 = vrot.slane %v4038, 7
    %v4439 = vrot.slane %v4039, 7
    %v4440 = vrot.slane %v4040, 7
    %v4441 = vrot.slane %v4041, 7
    %v4442 = vrot.slane %v4042, 7
    %v4443 = vrot.slane %v4043, 7
    %v4444 = vrot.slane %v4044, 7
    %v4445 = vrot.slane %v4045, 7
    %v4446 = vrot.slane %v4046, 7
    %v4447 = vrot.slane %v4047, 7
    %v4448 = vrot.slane %v4048, 7
    %v4449 = vrot.slane %v4049, 7
    %v4450 = vrot.slane %v4050, 7
    %v4451 = vrot.slane %v4051, 7
    %v4452 = vrot.slane %v4052, 7
    %v4453 = vrot.slane %v4053, 7
    %v4454 = vrot.slane %v4054, 7
    %v4455 = vrot.slane %v4055, 7
    %v4456 = vsel %vm255, %v4454, %v4455
    %v4457 = vsel %vm255, %v4453, %v4454
    %v4458 = vsel %vm255, %v4452, %v4453
    %v4459 = vsel %vm255, %v4451, %v4452
    %v4460 = vsel %vm255, %v4450, %v4451
    %v4461 = vsel %vm255, %v4449, %v4450
    %v4462 = vsel %vm255, %v4448, %v4449
    %v4463 = vsel %vm255, %v4447, %v4448
    %v4464 = vsel %vm255, %v4446, %v4447
    %v4465 = vsel %vm255, %v4445, %v4446
    %v4466 = vsel %vm255, %v4444, %v4445
    %v4467 = vsel %vm255, %v4443, %v4444
    %v4468 = vsel %vm255, %v4442, %v4443
    %v4469 = vsel %vm255, %v4441, %v4442
    %v4470 = vsel %vm255, %v4440, %v4441
    %v4471 = vsel %vm255, %v4439, %v4440
    %v4472 = vsel %vm255, %v4438, %v4439
    %v4473 = vsel %vm255, %v4437, %v4438
    %v4474 = vsel %vm255, %v4436, %v4437
    %v4475 = vsel %vm255, %v4435, %v4436
    %v4476 = vsel %vm255, %v4434, %v4435
    %v4477 = vsel %vm255, %v4433, %v4434
    %v4478 = vsel %vm255, %v4432, %v4433
    %v4479 = vsel %vm255, %v4431, %v4432
    %v4480 = vsel %vm255, %v4430, %v4431
    %v4481 = vsel %vm255, %v4429, %v4430
    %v4482 = vsel %vm255, %v4428, %v4429
    %v4483 = vsel %vm255, %v4427, %v4428
    %v4484 = vsel %vm255, %v4426, %v4427
    %v4485 = vsel %vm255, %v4425, %v4426
    %v4486 = vsel %vm255, %v4424, %v4425
    %v4487 = vsel %vm255, %v4423, %v4424
    %v4488 = vsel %vm255, %v4422, %v4423
    %v4489 = vsel %vm255, %v4421, %v4422
    %v4490 = vsel %vm255, %v4420, %v4421
    %v4491 = vsel %vm255, %v4419, %v4420
    %v4492 = vsel %vm255, %v4418, %v4419
    %v4493 = vsel %vm255, %v4417, %v4418
    %v4494 = vsel %vm255, %v4416, %v4417
    %v4495 = vsel %vm255, %v4415, %v4416
    %v4496 = vsel %vm255, %v4414, %v4415
    %v4497 = vsel %vm255, %v4413, %v4414
    %v4498 = vsel %vm255, %v4412, %v4413
    %v4499 = vsel %vm255, %v4411, %v4412
    %v4500 = vsel %vm255, %v4410, %v4411
    %v4501 = vsel %vm255, %v4409, %v4410
    %v4502 = vsel %vm255, %v4408, %v4409
    %v4503 = vsel %vm255, %v4407, %v4408
    %v4504 = vsel %vm255, %v4406, %v4407
    %v4505 = vsel %vm255, %v4405, %v4406
    %v4506 = vsel %vm255, %v4404, %v4405
    %v4507 = vsel %vm255, %v4403, %v4404
    %v4508 = vsel %vm255, %v4402, %v4403
    %v4509 = vsel %vm255, %v4401, %v4402
    %v4510 = vsel %vm255, %v4400, %v4401
    %v4511 = vsel %vm255, %v4399, %v4400
    %v4512 = vsel %vm255, %v4398, %v4399
    %v4513 = vsel %vm255, %v4397, %v4398
    %v4514 = vsel %vm255, %v4396, %v4397
    %v4515 = vsel %vm255, %v4395, %v4396
    %v4516 = vsel %vm255, %v4394, %v4395
    %v4517 = vsel %vm255, %v4393, %v4394
    %v4518 = vsel %vm255, %v4392, %v4393
    %v4519 = vsel %vm255, %v4455, %v4392
    %v4520 = vsel %vm512, %v4519, -1e+30
    %v4521 = vsel %vm513, %v4518, -1e+30
    %v4522 = vsel %vm514, %v4517, -1e+30
    %v4523 = vsel %vm515, %v4516, -1e+30
    %v4524 = vsel %vm516, %v4515, -1e+30
    %v4525 = vsel %vm517, %v4514, -1e+30
    %v4526 = vsel %vm518, %v4513, -1e+30
    %v4527 = vsel %vm519, %v4512, -1e+30
    %v4528 = vsel %vm520, %v4511, -1e+30
    %v4529 = vsel %vm521, %v4510, -1e+30
    %v4530 = vsel %vm522, %v4509, -1e+30
    %v4531 = vsel %vm523, %v4508, -1e+30
    %v4532 = vsel %vm524, %v4507, -1e+30
    %v4533 = vsel %vm525, %v4506, -1e+30
    %v4534 = vsel %vm526, %v4505, -1e+30
    %v4535 = vsel %vm527, %v4504, -1e+30
    %v4536 = vsel %vm528, %v4503, -1e+30
    %v4537 = vsel %vm529, %v4502, -1e+30
    %v4538 = vsel %vm530, %v4501, -1e+30
    %v4539 = vsel %vm531, %v4500, -1e+30
    %v4540 = vsel %vm532, %v4499, -1e+30
    %v4541 = vsel %vm533, %v4498, -1e+30
    %v4542 = vsel %vm534, %v4497, -1e+30
    %v4543 = vsel %vm535, %v4496, -1e+30
    %v4544 = vsel %vm536, %v4495, -1e+30
    %v4545 = vsel %vm537, %v4494, -1e+30
    %v4546 = vsel %vm538, %v4493, -1e+30
    %v4547 = vsel %vm539, %v4492, -1e+30
    %v4548 = vsel %vm540, %v4491, -1e+30
    %v4549 = vsel %vm541, %v4490, -1e+30
    %v4550 = vsel %vm542, %v4489, -1e+30
    %v4551 = vsel %vm543, %v4488, -1e+30
    %v4552 = vsel %vm544, %v4487, -1e+30
    %v4553 = vsel %vm545, %v4486, -1e+30
    %v4554 = vsel %vm546, %v4485, -1e+30
    %v4555 = vsel %vm547, %v4484, -1e+30
    %v4556 = vsel %vm548, %v4483, -1e+30
    %v4557 = vsel %vm549, %v4482, -1e+30
    %v4558 = vsel %vm550, %v4481, -1e+30
    %v4559 = vsel %vm551, %v4480, -1e+30
    %v4560 = vsel %vm552, %v4479, -1e+30
    %v4561 = vsel %vm553, %v4478, -1e+30
    %v4562 = vsel %vm554, %v4477, -1e+30
    %v4563 = vsel %vm555, %v4476, -1e+30
    %v4564 = vsel %vm556, %v4475, -1e+30
    %v4565 = vsel %vm557, %v4474, -1e+30
    %v4566 = vsel %vm558, %v4473, -1e+30
    %v4567 = vsel %vm559, %v4472, -1e+30
    %v4568 = vsel %vm560, %v4471, -1e+30
    %v4569 = vsel %vm561, %v4470, -1e+30
    %v4570 = vsel %vm562, %v4469, -1e+30
    %v4571 = vsel %vm563, %v4468, -1e+30
    %v4572 = vsel %vm564, %v4467, -1e+30
    %v4573 = vsel %vm565, %v4466, -1e+30
    %v4574 = vsel %vm566, %v4465, -1e+30
    %v4575 = vsel %vm567, %v4464, -1e+30
    %v4576 = vsel %vm568, %v4463, -1e+30
    %v4577 = vsel %vm569, %v4462, -1e+30
    %v4578 = vsel %vm570, %v4461, -1e+30
    %v4579 = vsel %vm571, %v4460, -1e+30
    %v4580 = vsel %vm572, %v4459, -1e+30
    %v4581 = vsel %vm573, %v4458, -1e+30
    %v4582 = vsel %vm574, %v4457, -1e+30
    %v4583 = vsel %vm575, %v4456, -1e+30
    %v4584 = vmax.f32 %v3992, %v4520
    %v4585 = vmax.f32 %v3993, %v4521
    %v4586 = vmax.f32 %v3994, %v4522
    %v4587 = vmax.f32 %v3995, %v4523
    %v4588 = vmax.f32 %v3996, %v4524
    %v4589 = vmax.f32 %v3997, %v4525
    %v4590 = vmax.f32 %v3998, %v4526
    %v4591 = vmax.f32 %v3999, %v4527
    %v4592 = vmax.f32 %v4000, %v4528
    %v4593 = vmax.f32 %v4001, %v4529
    %v4594 = vmax.f32 %v4002, %v4530
    %v4595 = vmax.f32 %v4003, %v4531
    %v4596 = vmax.f32 %v4004, %v4532
    %v4597 = vmax.f32 %v4005, %v4533
    %v4598 = vmax.f32 %v4006, %v4534
    %v4599 = vmax.f32 %v4007, %v4535
    %v4600 = vmax.f32 %v4008, %v4536
    %v4601 = vmax.f32 %v4009, %v4537
    %v4602 = vmax.f32 %v4010, %v4538
    %v4603 = vmax.f32 %v4011, %v4539
    %v4604 = vmax.f32 %v4012, %v4540
    %v4605 = vmax.f32 %v4013, %v4541
    %v4606 = vmax.f32 %v4014, %v4542
    %v4607 = vmax.f32 %v4015, %v4543
    %v4608 = vmax.f32 %v4016, %v4544
    %v4609 = vmax.f32 %v4017, %v4545
    %v4610 = vmax.f32 %v4018, %v4546
    %v4611 = vmax.f32 %v4019, %v4547
    %v4612 = vmax.f32 %v4020, %v4548
    %v4613 = vmax.f32 %v4021, %v4549
    %v4614 = vmax.f32 %v4022, %v4550
    %v4615 = vmax.f32 %v4023, %v4551
    %v4616 = vmax.f32 %v4024, %v4552
    %v4617 = vmax.f32 %v4025, %v4553
    %v4618 = vmax.f32 %v4026, %v4554
    %v4619 = vmax.f32 %v4027, %v4555
    %v4620 = vmax.f32 %v4028, %v4556
    %v4621 = vmax.f32 %v4029, %v4557
    %v4622 = vmax.f32 %v4030, %v4558
    %v4623 = vmax.f32 %v4031, %v4559
    %v4624 = vmax.f32 %v4032, %v4560
    %v4625 = vmax.f32 %v4033, %v4561
    %v4626 = vmax.f32 %v4034, %v4562
    %v4627 = vmax.f32 %v4035, %v4563
    %v4628 = vmax.f32 %v4036, %v4564
    %v4629 = vmax.f32 %v4037, %v4565
    %v4630 = vmax.f32 %v4038, %v4566
    %v4631 = vmax.f32 %v4039, %v4567
    %v4632 = vmax.f32 %v4040, %v4568
    %v4633 = vmax.f32 %v4041, %v4569
    %v4634 = vmax.f32 %v4042, %v4570
    %v4635 = vmax.f32 %v4043, %v4571
    %v4636 = vmax.f32 %v4044, %v4572
    %v4637 = vmax.f32 %v4045, %v4573
    %v4638 = vmax.f32 %v4046, %v4574
    %v4639 = vmax.f32 %v4047, %v4575
    %v4640 = vmax.f32 %v4048, %v4576
    %v4641 = vmax.f32 %v4049, %v4577
    %v4642 = vmax.f32 %v4050, %v4578
    %v4643 = vmax.f32 %v4051, %v4579
    %v4644 = vmax.f32 %v4052, %v4580
    %v4645 = vmax.f32 %v4053, %v4581
    %v4646 = vmax.f32 %v4054, %v4582
    %v4647 = vmax.f32 %v4055, %v4583
    %v4648 = vrot.slane %v3992, 6
    %v4649 = vrot.slane %v3993, 6
    %v4650 = vrot.slane %v3994, 6
    %v4651 = vrot.slane %v3995, 6
    %v4652 = vrot.slane %v3996, 6
    %v4653 = vrot.slane %v3997, 6
    %v4654 = vrot.slane %v3998, 6
    %v4655 = vrot.slane %v3999, 6
    %v4656 = vrot.slane %v4000, 6
    %v4657 = vrot.slane %v4001, 6
    %v4658 = vrot.slane %v4002, 6
    %v4659 = vrot.slane %v4003, 6
    %v4660 = vrot.slane %v4004, 6
    %v4661 = vrot.slane %v4005, 6
    %v4662 = vrot.slane %v4006, 6
    %v4663 = vrot.slane %v4007, 6
    %v4664 = vrot.slane %v4008, 6
    %v4665 = vrot.slane %v4009, 6
    %v4666 = vrot.slane %v4010, 6
    %v4667 = vrot.slane %v4011, 6
    %v4668 = vrot.slane %v4012, 6
    %v4669 = vrot.slane %v4013, 6
    %v4670 = vrot.slane %v4014, 6
    %v4671 = vrot.slane %v4015, 6
    %v4672 = vrot.slane %v4016, 6
    %v4673 = vrot.slane %v4017, 6
    %v4674 = vrot.slane %v4018, 6
    %v4675 = vrot.slane %v4019, 6
    %v4676 = vrot.slane %v4020, 6
    %v4677 = vrot.slane %v4021, 6
    %v4678 = vrot.slane %v4022, 6
    %v4679 = vrot.slane %v4023, 6
    %v4680 = vrot.slane %v4024, 6
    %v4681 = vrot.slane %v4025, 6
    %v4682 = vrot.slane %v4026, 6
    %v4683 = vrot.slane %v4027, 6
    %v4684 = vrot.slane %v4028, 6
    %v4685 = vrot.slane %v4029, 6
    %v4686 = vrot.slane %v4030, 6
    %v4687 = vrot.slane %v4031, 6
    %v4688 = vrot.slane %v4032, 6
    %v4689 = vrot.slane %v4033, 6
    %v4690 = vrot.slane %v4034, 6
    %v4691 = vrot.slane %v4035, 6
    %v4692 = vrot.slane %v4036, 6
    %v4693 = vrot.slane %v4037, 6
    %v4694 = vrot.slane %v4038, 6
    %v4695 = vrot.slane %v4039, 6
    %v4696 = vrot.slane %v4040, 6
    %v4697 = vrot.slane %v4041, 6
    %v4698 = vrot.slane %v4042, 6
    %v4699 = vrot.slane %v4043, 6
    %v4700 = vrot.slane %v4044, 6
    %v4701 = vrot.slane %v4045, 6
    %v4702 = vrot.slane %v4046, 6
    %v4703 = vrot.slane %v4047, 6
    %v4704 = vrot.slane %v4048, 6
    %v4705 = vrot.slane %v4049, 6
    %v4706 = vrot.slane %v4050, 6
    %v4707 = vrot.slane %v4051, 6
    %v4708 = vrot.slane %v4052, 6
    %v4709 = vrot.slane %v4053, 6
    %v4710 = vrot.slane %v4054, 6
    %v4711 = vrot.slane %v4055, 6
    %v4712 = vsel %vm640, %v4710, %v4711
    %v4713 = vsel %vm640, %v4709, %v4710
    %v4714 = vsel %vm640, %v4708, %v4709
    %v4715 = vsel %vm640, %v4707, %v4708
    %v4716 = vsel %vm640, %v4706, %v4707
    %v4717 = vsel %vm640, %v4705, %v4706
    %v4718 = vsel %vm640, %v4704, %v4705
    %v4719 = vsel %vm640, %v4703, %v4704
    %v4720 = vsel %vm640, %v4702, %v4703
    %v4721 = vsel %vm640, %v4701, %v4702
    %v4722 = vsel %vm640, %v4700, %v4701
    %v4723 = vsel %vm640, %v4699, %v4700
    %v4724 = vsel %vm640, %v4698, %v4699
    %v4725 = vsel %vm640, %v4697, %v4698
    %v4726 = vsel %vm640, %v4696, %v4697
    %v4727 = vsel %vm640, %v4695, %v4696
    %v4728 = vsel %vm640, %v4694, %v4695
    %v4729 = vsel %vm640, %v4693, %v4694
    %v4730 = vsel %vm640, %v4692, %v4693
    %v4731 = vsel %vm640, %v4691, %v4692
    %v4732 = vsel %vm640, %v4690, %v4691
    %v4733 = vsel %vm640, %v4689, %v4690
    %v4734 = vsel %vm640, %v4688, %v4689
    %v4735 = vsel %vm640, %v4687, %v4688
    %v4736 = vsel %vm640, %v4686, %v4687
    %v4737 = vsel %vm640, %v4685, %v4686
    %v4738 = vsel %vm640, %v4684, %v4685
    %v4739 = vsel %vm640, %v4683, %v4684
    %v4740 = vsel %vm640, %v4682, %v4683
    %v4741 = vsel %vm640, %v4681, %v4682
    %v4742 = vsel %vm640, %v4680, %v4681
    %v4743 = vsel %vm640, %v4679, %v4680
    %v4744 = vsel %vm640, %v4678, %v4679
    %v4745 = vsel %vm640, %v4677, %v4678
    %v4746 = vsel %vm640, %v4676, %v4677
    %v4747 = vsel %vm640, %v4675, %v4676
    %v4748 = vsel %vm640, %v4674, %v4675
    %v4749 = vsel %vm640, %v4673, %v4674
    %v4750 = vsel %vm640, %v4672, %v4673
    %v4751 = vsel %vm640, %v4671, %v4672
    %v4752 = vsel %vm640, %v4670, %v4671
    %v4753 = vsel %vm640, %v4669, %v4670
    %v4754 = vsel %vm640, %v4668, %v4669
    %v4755 = vsel %vm640, %v4667, %v4668
    %v4756 = vsel %vm640, %v4666, %v4667
    %v4757 = vsel %vm640, %v4665, %v4666
    %v4758 = vsel %vm640, %v4664, %v4665
    %v4759 = vsel %vm640, %v4663, %v4664
    %v4760 = vsel %vm640, %v4662, %v4663
    %v4761 = vsel %vm640, %v4661, %v4662
    %v4762 = vsel %vm640, %v4660, %v4661
    %v4763 = vsel %vm640, %v4659, %v4660
    %v4764 = vsel %vm640, %v4658, %v4659
    %v4765 = vsel %vm640, %v4657, %v4658
    %v4766 = vsel %vm640, %v4656, %v4657
    %v4767 = vsel %vm640, %v4655, %v4656
    %v4768 = vsel %vm640, %v4654, %v4655
    %v4769 = vsel %vm640, %v4653, %v4654
    %v4770 = vsel %vm640, %v4652, %v4653
    %v4771 = vsel %vm640, %v4651, %v4652
    %v4772 = vsel %vm640, %v4650, %v4651
    %v4773 = vsel %vm640, %v4649, %v4650
    %v4774 = vsel %vm640, %v4648, %v4649
    %v4775 = vsel %vm640, %v4711, %v4648
    %v4776 = vsel %vm897, %v4775, -1e+30
    %v4777 = vsel %vm898, %v4774, -1e+30
    %v4778 = vsel %vm899, %v4773, -1e+30
    %v4779 = vsel %vm900, %v4772, -1e+30
    %v4780 = vsel %vm901, %v4771, -1e+30
    %v4781 = vsel %vm902, %v4770, -1e+30
    %v4782 = vsel %vm903, %v4769, -1e+30
    %v4783 = vsel %vm904, %v4768, -1e+30
    %v4784 = vsel %vm905, %v4767, -1e+30
    %v4785 = vsel %vm906, %v4766, -1e+30
    %v4786 = vsel %vm907, %v4765, -1e+30
    %v4787 = vsel %vm908, %v4764, -1e+30
    %v4788 = vsel %vm909, %v4763, -1e+30
    %v4789 = vsel %vm910, %v4762, -1e+30
    %v4790 = vsel %vm911, %v4761, -1e+30
    %v4791 = vsel %vm912, %v4760, -1e+30
    %v4792 = vsel %vm913, %v4759, -1e+30
    %v4793 = vsel %vm914, %v4758, -1e+30
    %v4794 = vsel %vm915, %v4757, -1e+30
    %v4795 = vsel %vm916, %v4756, -1e+30
    %v4796 = vsel %vm917, %v4755, -1e+30
    %v4797 = vsel %vm918, %v4754, -1e+30
    %v4798 = vsel %vm919, %v4753, -1e+30
    %v4799 = vsel %vm920, %v4752, -1e+30
    %v4800 = vsel %vm921, %v4751, -1e+30
    %v4801 = vsel %vm922, %v4750, -1e+30
    %v4802 = vsel %vm923, %v4749, -1e+30
    %v4803 = vsel %vm924, %v4748, -1e+30
    %v4804 = vsel %vm925, %v4747, -1e+30
    %v4805 = vsel %vm926, %v4746, -1e+30
    %v4806 = vsel %vm927, %v4745, -1e+30
    %v4807 = vsel %vm928, %v4744, -1e+30
    %v4808 = vsel %vm929, %v4743, -1e+30
    %v4809 = vsel %vm930, %v4742, -1e+30
    %v4810 = vsel %vm931, %v4741, -1e+30
    %v4811 = vsel %vm932, %v4740, -1e+30
    %v4812 = vsel %vm933, %v4739, -1e+30
    %v4813 = vsel %vm934, %v4738, -1e+30
    %v4814 = vsel %vm935, %v4737, -1e+30
    %v4815 = vsel %vm936, %v4736, -1e+30
    %v4816 = vsel %vm937, %v4735, -1e+30
    %v4817 = vsel %vm938, %v4734, -1e+30
    %v4818 = vsel %vm939, %v4733, -1e+30
    %v4819 = vsel %vm940, %v4732, -1e+30
    %v4820 = vsel %vm941, %v4731, -1e+30
    %v4821 = vsel %vm942, %v4730, -1e+30
    %v4822 = vsel %vm943, %v4729, -1e+30
    %v4823 = vsel %vm944, %v4728, -1e+30
    %v4824 = vsel %vm945, %v4727, -1e+30
    %v4825 = vsel %vm946, %v4726, -1e+30
    %v4826 = vsel %vm947, %v4725, -1e+30
    %v4827 = vsel %vm948, %v4724, -1e+30
    %v4828 = vsel %vm949, %v4723, -1e+30
    %v4829 = vsel %vm950, %v4722, -1e+30
    %v4830 = vsel %vm951, %v4721, -1e+30
    %v4831 = vsel %vm952, %v4720, -1e+30
    %v4832 = vsel %vm953, %v4719, -1e+30
    %v4833 = vsel %vm954, %v4718, -1e+30
    %v4834 = vsel %vm955, %v4717, -1e+30
    %v4835 = vsel %vm956, %v4716, -1e+30
    %v4836 = vsel %vm957, %v4715, -1e+30
    %v4837 = vsel %vm958, %v4714, -1e+30
    %v4838 = vsel %vm959, %v4713, -1e+30
    %v4839 = vsel %vm960, %v4712, -1e+30
    %v4840 = vmax.f32 %v4584, %v4776
    %v4841 = vmax.f32 %v4585, %v4777
    %v4842 = vmax.f32 %v4586, %v4778
    %v4843 = vmax.f32 %v4587, %v4779
    %v4844 = vmax.f32 %v4588, %v4780
    %v4845 = vmax.f32 %v4589, %v4781
    %v4846 = vmax.f32 %v4590, %v4782
    %v4847 = vmax.f32 %v4591, %v4783
    %v4848 = vmax.f32 %v4592, %v4784
    %v4849 = vmax.f32 %v4593, %v4785
    %v4850 = vmax.f32 %v4594, %v4786
    %v4851 = vmax.f32 %v4595, %v4787
    %v4852 = vmax.f32 %v4596, %v4788
    %v4853 = vmax.f32 %v4597, %v4789
    %v4854 = vmax.f32 %v4598, %v4790
    %v4855 = vmax.f32 %v4599, %v4791
    %v4856 = vmax.f32 %v4600, %v4792
    %v4857 = vmax.f32 %v4601, %v4793
    %v4858 = vmax.f32 %v4602, %v4794
    %v4859 = vmax.f32 %v4603, %v4795
    %v4860 = vmax.f32 %v4604, %v4796
    %v4861 = vmax.f32 %v4605, %v4797
    %v4862 = vmax.f32 %v4606, %v4798
    %v4863 = vmax.f32 %v4607, %v4799
    %v4864 = vmax.f32 %v4608, %v4800
    %v4865 = vmax.f32 %v4609, %v4801
    %v4866 = vmax.f32 %v4610, %v4802
    %v4867 = vmax.f32 %v4611, %v4803
    %v4868 = vmax.f32 %v4612, %v4804
    %v4869 = vmax.f32 %v4613, %v4805
    %v4870 = vmax.f32 %v4614, %v4806
    %v4871 = vmax.f32 %v4615, %v4807
    %v4872 = vmax.f32 %v4616, %v4808
    %v4873 = vmax.f32 %v4617, %v4809
    %v4874 = vmax.f32 %v4618, %v4810
    %v4875 = vmax.f32 %v4619, %v4811
    %v4876 = vmax.f32 %v4620, %v4812
    %v4877 = vmax.f32 %v4621, %v4813
    %v4878 = vmax.f32 %v4622, %v4814
    %v4879 = vmax.f32 %v4623, %v4815
    %v4880 = vmax.f32 %v4624, %v4816
    %v4881 = vmax.f32 %v4625, %v4817
    %v4882 = vmax.f32 %v4626, %v4818
    %v4883 = vmax.f32 %v4627, %v4819
    %v4884 = vmax.f32 %v4628, %v4820
    %v4885 = vmax.f32 %v4629, %v4821
    %v4886 = vmax.f32 %v4630, %v4822
    %v4887 = vmax.f32 %v4631, %v4823
    %v4888 = vmax.f32 %v4632, %v4824
    %v4889 = vmax.f32 %v4633, %v4825
    %v4890 = vmax.f32 %v4634, %v4826
    %v4891 = vmax.f32 %v4635, %v4827
    %v4892 = vmax.f32 %v4636, %v4828
    %v4893 = vmax.f32 %v4637, %v4829
    %v4894 = vmax.f32 %v4638, %v4830
    %v4895 = vmax.f32 %v4639, %v4831
    %v4896 = vmax.f32 %v4640, %v4832
    %v4897 = vmax.f32 %v4641, %v4833
    %v4898 = vmax.f32 %v4642, %v4834
    %v4899 = vmax.f32 %v4643, %v4835
    %v4900 = vmax.f32 %v4644, %v4836
    %v4901 = vmax.f32 %v4645, %v4837
    %v4902 = vmax.f32 %v4646, %v4838
    %v4903 = vmax.f32 %v4647, %v4839
    %v4904 = vrot.slane %v3992, 1
    %v4905 = vrot.slane %v3993, 1
    %v4906 = vrot.slane %v3994, 1
    %v4907 = vrot.slane %v3995, 1
    %v4908 = vrot.slane %v3996, 1
    %v4909 = vrot.slane %v3997, 1
    %v4910 = vrot.slane %v3998, 1
    %v4911 = vrot.slane %v3999, 1
    %v4912 = vrot.slane %v4000, 1
    %v4913 = vrot.slane %v4001, 1
    %v4914 = vrot.slane %v4002, 1
    %v4915 = vrot.slane %v4003, 1
    %v4916 = vrot.slane %v4004, 1
    %v4917 = vrot.slane %v4005, 1
    %v4918 = vrot.slane %v4006, 1
    %v4919 = vrot.slane %v4007, 1
    %v4920 = vrot.slane %v4008, 1
    %v4921 = vrot.slane %v4009, 1
    %v4922 = vrot.slane %v4010, 1
    %v4923 = vrot.slane %v4011, 1
    %v4924 = vrot.slane %v4012, 1
    %v4925 = vrot.slane %v4013, 1
    %v4926 = vrot.slane %v4014, 1
    %v4927 = vrot.slane %v4015, 1
    %v4928 = vrot.slane %v4016, 1
    %v4929 = vrot.slane %v4017, 1
    %v4930 = vrot.slane %v4018, 1
    %v4931 = vrot.slane %v4019, 1
    %v4932 = vrot.slane %v4020, 1
    %v4933 = vrot.slane %v4021, 1
    %v4934 = vrot.slane %v4022, 1
    %v4935 = vrot.slane %v4023, 1
    %v4936 = vrot.slane %v4024, 1
    %v4937 = vrot.slane %v4025, 1
    %v4938 = vrot.slane %v4026, 1
    %v4939 = vrot.slane %v4027, 1
    %v4940 = vrot.slane %v4028, 1
    %v4941 = vrot.slane %v4029, 1
    %v4942 = vrot.slane %v4030, 1
    %v4943 = vrot.slane %v4031, 1
    %v4944 = vrot.slane %v4032, 1
    %v4945 = vrot.slane %v4033, 1
    %v4946 = vrot.slane %v4034, 1
    %v4947 = vrot.slane %v4035, 1
    %v4948 = vrot.slane %v4036, 1
    %v4949 = vrot.slane %v4037, 1
    %v4950 = vrot.slane %v4038, 1
    %v4951 = vrot.slane %v4039, 1
    %v4952 = vrot.slane %v4040, 1
    %v4953 = vrot.slane %v4041, 1
    %v4954 = vrot.slane %v4042, 1
    %v4955 = vrot.slane %v4043, 1
    %v4956 = vrot.slane %v4044, 1
    %v4957 = vrot.slane %v4045, 1
    %v4958 = vrot.slane %v4046, 1
    %v4959 = vrot.slane %v4047, 1
    %v4960 = vrot.slane %v4048, 1
    %v4961 = vrot.slane %v4049, 1
    %v4962 = vrot.slane %v4050, 1
    %v4963 = vrot.slane %v4051, 1
    %v4964 = vrot.slane %v4052, 1
    %v4965 = vrot.slane %v4053, 1
    %v4966 = vrot.slane %v4054, 1
    %v4967 = vrot.slane %v4055, 1
    %v4968 = vsel %vm1025, %v4966, %v4967
    %v4969 = vsel %vm1025, %v4965, %v4966
    %v4970 = vsel %vm1025, %v4964, %v4965
    %v4971 = vsel %vm1025, %v4963, %v4964
    %v4972 = vsel %vm1025, %v4962, %v4963
    %v4973 = vsel %vm1025, %v4961, %v4962
    %v4974 = vsel %vm1025, %v4960, %v4961
    %v4975 = vsel %vm1025, %v4959, %v4960
    %v4976 = vsel %vm1025, %v4958, %v4959
    %v4977 = vsel %vm1025, %v4957, %v4958
    %v4978 = vsel %vm1025, %v4956, %v4957
    %v4979 = vsel %vm1025, %v4955, %v4956
    %v4980 = vsel %vm1025, %v4954, %v4955
    %v4981 = vsel %vm1025, %v4953, %v4954
    %v4982 = vsel %vm1025, %v4952, %v4953
    %v4983 = vsel %vm1025, %v4951, %v4952
    %v4984 = vsel %vm1025, %v4950, %v4951
    %v4985 = vsel %vm1025, %v4949, %v4950
    %v4986 = vsel %vm1025, %v4948, %v4949
    %v4987 = vsel %vm1025, %v4947, %v4948
    %v4988 = vsel %vm1025, %v4946, %v4947
    %v4989 = vsel %vm1025, %v4945, %v4946
    %v4990 = vsel %vm1025, %v4944, %v4945
    %v4991 = vsel %vm1025, %v4943, %v4944
    %v4992 = vsel %vm1025, %v4942, %v4943
    %v4993 = vsel %vm1025, %v4941, %v4942
    %v4994 = vsel %vm1025, %v4940, %v4941
    %v4995 = vsel %vm1025, %v4939, %v4940
    %v4996 = vsel %vm1025, %v4938, %v4939
    %v4997 = vsel %vm1025, %v4937, %v4938
    %v4998 = vsel %vm1025, %v4936, %v4937
    %v4999 = vsel %vm1025, %v4935, %v4936
    %v5000 = vsel %vm1025, %v4934, %v4935
    %v5001 = vsel %vm1025, %v4933, %v4934
    %v5002 = vsel %vm1025, %v4932, %v4933
    %v5003 = vsel %vm1025, %v4931, %v4932
    %v5004 = vsel %vm1025, %v4930, %v4931
    %v5005 = vsel %vm1025, %v4929, %v4930
    %v5006 = vsel %vm1025, %v4928, %v4929
    %v5007 = vsel %vm1025, %v4927, %v4928
    %v5008 = vsel %vm1025, %v4926, %v4927
    %v5009 = vsel %vm1025, %v4925, %v4926
    %v5010 = vsel %vm1025, %v4924, %v4925
    %v5011 = vsel %vm1025, %v4923, %v4924
    %v5012 = vsel %vm1025, %v4922, %v4923
    %v5013 = vsel %vm1025, %v4921, %v4922
    %v5014 = vsel %vm1025, %v4920, %v4921
    %v5015 = vsel %vm1025, %v4919, %v4920
    %v5016 = vsel %vm1025, %v4918, %v4919
    %v5017 = vsel %vm1025, %v4917, %v4918
    %v5018 = vsel %vm1025, %v4916, %v4917
    %v5019 = vsel %vm1025, %v4915, %v4916
    %v5020 = vsel %vm1025, %v4914, %v4915
    %v5021 = vsel %vm1025, %v4913, %v4914
    %v5022 = vsel %vm1025, %v4912, %v4913
    %v5023 = vsel %vm1025, %v4911, %v4912
    %v5024 = vsel %vm1025, %v4910, %v4911
    %v5025 = vsel %vm1025, %v4909, %v4910
    %v5026 = vsel %vm1025, %v4908, %v4909
    %v5027 = vsel %vm1025, %v4907, %v4908
    %v5028 = vsel %vm1025, %v4906, %v4907
    %v5029 = vsel %vm1025, %v4905, %v4906
    %v5030 = vsel %vm1025, %v4904, %v4905
    %v5031 = vsel %vm1025, %v4967, %v4904
    %v5032 = vsel %vm1282, %v5030, -1e+30
    %v5033 = vsel %vm1283, %v5029, -1e+30
    %v5034 = vsel %vm1284, %v5028, -1e+30
    %v5035 = vsel %vm1285, %v5027, -1e+30
    %v5036 = vsel %vm1286, %v5026, -1e+30
    %v5037 = vsel %vm1287, %v5025, -1e+30
    %v5038 = vsel %vm1288, %v5024, -1e+30
    %v5039 = vsel %vm1289, %v5023, -1e+30
    %v5040 = vsel %vm1290, %v5022, -1e+30
    %v5041 = vsel %vm1291, %v5021, -1e+30
    %v5042 = vsel %vm1292, %v5020, -1e+30
    %v5043 = vsel %vm1293, %v5019, -1e+30
    %v5044 = vsel %vm1294, %v5018, -1e+30
    %v5045 = vsel %vm1295, %v5017, -1e+30
    %v5046 = vsel %vm1296, %v5016, -1e+30
    %v5047 = vsel %vm1297, %v5015, -1e+30
    %v5048 = vsel %vm1298, %v5014, -1e+30
    %v5049 = vsel %vm1299, %v5013, -1e+30
    %v5050 = vsel %vm1300, %v5012, -1e+30
    %v5051 = vsel %vm1301, %v5011, -1e+30
    %v5052 = vsel %vm1302, %v5010, -1e+30
    %v5053 = vsel %vm1303, %v5009, -1e+30
    %v5054 = vsel %vm1304, %v5008, -1e+30
    %v5055 = vsel %vm1305, %v5007, -1e+30
    %v5056 = vsel %vm1306, %v5006, -1e+30
    %v5057 = vsel %vm1307, %v5005, -1e+30
    %v5058 = vsel %vm1308, %v5004, -1e+30
    %v5059 = vsel %vm1309, %v5003, -1e+30
    %v5060 = vsel %vm1310, %v5002, -1e+30
    %v5061 = vsel %vm1311, %v5001, -1e+30
    %v5062 = vsel %vm1312, %v5000, -1e+30
    %v5063 = vsel %vm1313, %v4999, -1e+30
    %v5064 = vsel %vm1314, %v4998, -1e+30
    %v5065 = vsel %vm1315, %v4997, -1e+30
    %v5066 = vsel %vm1316, %v4996, -1e+30
    %v5067 = vsel %vm1317, %v4995, -1e+30
    %v5068 = vsel %vm1318, %v4994, -1e+30
    %v5069 = vsel %vm1319, %v4993, -1e+30
    %v5070 = vsel %vm1320, %v4992, -1e+30
    %v5071 = vsel %vm1321, %v4991, -1e+30
    %v5072 = vsel %vm1322, %v4990, -1e+30
    %v5073 = vsel %vm1323, %v4989, -1e+30
    %v5074 = vsel %vm1324, %v4988, -1e+30
    %v5075 = vsel %vm1325, %v4987, -1e+30
    %v5076 = vsel %vm1326, %v4986, -1e+30
    %v5077 = vsel %vm1327, %v4985, -1e+30
    %v5078 = vsel %vm1328, %v4984, -1e+30
    %v5079 = vsel %vm1329, %v4983, -1e+30
    %v5080 = vsel %vm1330, %v4982, -1e+30
    %v5081 = vsel %vm1331, %v4981, -1e+30
    %v5082 = vsel %vm1332, %v4980, -1e+30
    %v5083 = vsel %vm1333, %v4979, -1e+30
    %v5084 = vsel %vm1334, %v4978, -1e+30
    %v5085 = vsel %vm1335, %v4977, -1e+30
    %v5086 = vsel %vm1336, %v4976, -1e+30
    %v5087 = vsel %vm1337, %v4975, -1e+30
    %v5088 = vsel %vm1338, %v4974, -1e+30
    %v5089 = vsel %vm1339, %v4973, -1e+30
    %v5090 = vsel %vm1340, %v4972, -1e+30
    %v5091 = vsel %vm1341, %v4971, -1e+30
    %v5092 = vsel %vm1342, %v4970, -1e+30
    %v5093 = vsel %vm1343, %v4969, -1e+30
    %v5094 = vsel %vm1344, %v4968, -1e+30
    %v5095 = vsel %vm1345, %v5031, -1e+30
    %v5096 = vmax.f32 %v4840, %v5032
    %v5097 = vmax.f32 %v4841, %v5033
    %v5098 = vmax.f32 %v4842, %v5034
    %v5099 = vmax.f32 %v4843, %v5035
    %v5100 = vmax.f32 %v4844, %v5036
    %v5101 = vmax.f32 %v4845, %v5037
    %v5102 = vmax.f32 %v4846, %v5038
    %v5103 = vmax.f32 %v4847, %v5039
    %v5104 = vmax.f32 %v4848, %v5040
    %v5105 = vmax.f32 %v4849, %v5041
    %v5106 = vmax.f32 %v4850, %v5042
    %v5107 = vmax.f32 %v4851, %v5043
    %v5108 = vmax.f32 %v4852, %v5044
    %v5109 = vmax.f32 %v4853, %v5045
    %v5110 = vmax.f32 %v4854, %v5046
    %v5111 = vmax.f32 %v4855, %v5047
    %v5112 = vmax.f32 %v4856, %v5048
    %v5113 = vmax.f32 %v4857, %v5049
    %v5114 = vmax.f32 %v4858, %v5050
    %v5115 = vmax.f32 %v4859, %v5051
    %v5116 = vmax.f32 %v4860, %v5052
    %v5117 = vmax.f32 %v4861, %v5053
    %v5118 = vmax.f32 %v4862, %v5054
    %v5119 = vmax.f32 %v4863, %v5055
    %v5120 = vmax.f32 %v4864, %v5056
    %v5121 = vmax.f32 %v4865, %v5057
    %v5122 = vmax.f32 %v4866, %v5058
    %v5123 = vmax.f32 %v4867, %v5059
    %v5124 = vmax.f32 %v4868, %v5060
    %v5125 = vmax.f32 %v4869, %v5061
    %v5126 = vmax.f32 %v4870, %v5062
    %v5127 = vmax.f32 %v4871, %v5063
    %v5128 = vmax.f32 %v4872, %v5064
    %v5129 = vmax.f32 %v4873, %v5065
    %v5130 = vmax.f32 %v4874, %v5066
    %v5131 = vmax.f32 %v4875, %v5067
    %v5132 = vmax.f32 %v4876, %v5068
    %v5133 = vmax.f32 %v4877, %v5069
    %v5134 = vmax.f32 %v4878, %v5070
    %v5135 = vmax.f32 %v4879, %v5071
    %v5136 = vmax.f32 %v4880, %v5072
    %v5137 = vmax.f32 %v4881, %v5073
    %v5138 = vmax.f32 %v4882, %v5074
    %v5139 = vmax.f32 %v4883, %v5075
    %v5140 = vmax.f32 %v4884, %v5076
    %v5141 = vmax.f32 %v4885, %v5077
    %v5142 = vmax.f32 %v4886, %v5078
    %v5143 = vmax.f32 %v4887, %v5079
    %v5144 = vmax.f32 %v4888, %v5080
    %v5145 = vmax.f32 %v4889, %v5081
    %v5146 = vmax.f32 %v4890, %v5082
    %v5147 = vmax.f32 %v4891, %v5083
    %v5148 = vmax.f32 %v4892, %v5084
    %v5149 = vmax.f32 %v4893, %v5085
    %v5150 = vmax.f32 %v4894, %v5086
    %v5151 = vmax.f32 %v4895, %v5087
    %v5152 = vmax.f32 %v4896, %v5088
    %v5153 = vmax.f32 %v4897, %v5089
    %v5154 = vmax.f32 %v4898, %v5090
    %v5155 = vmax.f32 %v4899, %v5091
    %v5156 = vmax.f32 %v4900, %v5092
    %v5157 = vmax.f32 %v4901, %v5093
    %v5158 = vmax.f32 %v4902, %v5094
    %v5159 = vmax.f32 %v4903, %v5095
    %v5160 = vrot.slane %v3992, 2
    %v5161 = vrot.slane %v3993, 2
    %v5162 = vrot.slane %v3994, 2
    %v5163 = vrot.slane %v3995, 2
    %v5164 = vrot.slane %v3996, 2
    %v5165 = vrot.slane %v3997, 2
    %v5166 = vrot.slane %v3998, 2
    %v5167 = vrot.slane %v3999, 2
    %v5168 = vrot.slane %v4000, 2
    %v5169 = vrot.slane %v4001, 2
    %v5170 = vrot.slane %v4002, 2
    %v5171 = vrot.slane %v4003, 2
    %v5172 = vrot.slane %v4004, 2
    %v5173 = vrot.slane %v4005, 2
    %v5174 = vrot.slane %v4006, 2
    %v5175 = vrot.slane %v4007, 2
    %v5176 = vrot.slane %v4008, 2
    %v5177 = vrot.slane %v4009, 2
    %v5178 = vrot.slane %v4010, 2
    %v5179 = vrot.slane %v4011, 2
    %v5180 = vrot.slane %v4012, 2
    %v5181 = vrot.slane %v4013, 2
    %v5182 = vrot.slane %v4014, 2
    %v5183 = vrot.slane %v4015, 2
    %v5184 = vrot.slane %v4016, 2
    %v5185 = vrot.slane %v4017, 2
    %v5186 = vrot.slane %v4018, 2
    %v5187 = vrot.slane %v4019, 2
    %v5188 = vrot.slane %v4020, 2
    %v5189 = vrot.slane %v4021, 2
    %v5190 = vrot.slane %v4022, 2
    %v5191 = vrot.slane %v4023, 2
    %v5192 = vrot.slane %v4024, 2
    %v5193 = vrot.slane %v4025, 2
    %v5194 = vrot.slane %v4026, 2
    %v5195 = vrot.slane %v4027, 2
    %v5196 = vrot.slane %v4028, 2
    %v5197 = vrot.slane %v4029, 2
    %v5198 = vrot.slane %v4030, 2
    %v5199 = vrot.slane %v4031, 2
    %v5200 = vrot.slane %v4032, 2
    %v5201 = vrot.slane %v4033, 2
    %v5202 = vrot.slane %v4034, 2
    %v5203 = vrot.slane %v4035, 2
    %v5204 = vrot.slane %v4036, 2
    %v5205 = vrot.slane %v4037, 2
    %v5206 = vrot.slane %v4038, 2
    %v5207 = vrot.slane %v4039, 2
    %v5208 = vrot.slane %v4040, 2
    %v5209 = vrot.slane %v4041, 2
    %v5210 = vrot.slane %v4042, 2
    %v5211 = vrot.slane %v4043, 2
    %v5212 = vrot.slane %v4044, 2
    %v5213 = vrot.slane %v4045, 2
    %v5214 = vrot.slane %v4046, 2
    %v5215 = vrot.slane %v4047, 2
    %v5216 = vrot.slane %v4048, 2
    %v5217 = vrot.slane %v4049, 2
    %v5218 = vrot.slane %v4050, 2
    %v5219 = vrot.slane %v4051, 2
    %v5220 = vrot.slane %v4052, 2
    %v5221 = vrot.slane %v4053, 2
    %v5222 = vrot.slane %v4054, 2
    %v5223 = vrot.slane %v4055, 2
    %v5224 = vsel %vm1410, %v5222, %v5223
    %v5225 = vsel %vm1410, %v5221, %v5222
    %v5226 = vsel %vm1410, %v5220, %v5221
    %v5227 = vsel %vm1410, %v5219, %v5220
    %v5228 = vsel %vm1410, %v5218, %v5219
    %v5229 = vsel %vm1410, %v5217, %v5218
    %v5230 = vsel %vm1410, %v5216, %v5217
    %v5231 = vsel %vm1410, %v5215, %v5216
    %v5232 = vsel %vm1410, %v5214, %v5215
    %v5233 = vsel %vm1410, %v5213, %v5214
    %v5234 = vsel %vm1410, %v5212, %v5213
    %v5235 = vsel %vm1410, %v5211, %v5212
    %v5236 = vsel %vm1410, %v5210, %v5211
    %v5237 = vsel %vm1410, %v5209, %v5210
    %v5238 = vsel %vm1410, %v5208, %v5209
    %v5239 = vsel %vm1410, %v5207, %v5208
    %v5240 = vsel %vm1410, %v5206, %v5207
    %v5241 = vsel %vm1410, %v5205, %v5206
    %v5242 = vsel %vm1410, %v5204, %v5205
    %v5243 = vsel %vm1410, %v5203, %v5204
    %v5244 = vsel %vm1410, %v5202, %v5203
    %v5245 = vsel %vm1410, %v5201, %v5202
    %v5246 = vsel %vm1410, %v5200, %v5201
    %v5247 = vsel %vm1410, %v5199, %v5200
    %v5248 = vsel %vm1410, %v5198, %v5199
    %v5249 = vsel %vm1410, %v5197, %v5198
    %v5250 = vsel %vm1410, %v5196, %v5197
    %v5251 = vsel %vm1410, %v5195, %v5196
    %v5252 = vsel %vm1410, %v5194, %v5195
    %v5253 = vsel %vm1410, %v5193, %v5194
    %v5254 = vsel %vm1410, %v5192, %v5193
    %v5255 = vsel %vm1410, %v5191, %v5192
    %v5256 = vsel %vm1410, %v5190, %v5191
    %v5257 = vsel %vm1410, %v5189, %v5190
    %v5258 = vsel %vm1410, %v5188, %v5189
    %v5259 = vsel %vm1410, %v5187, %v5188
    %v5260 = vsel %vm1410, %v5186, %v5187
    %v5261 = vsel %vm1410, %v5185, %v5186
    %v5262 = vsel %vm1410, %v5184, %v5185
    %v5263 = vsel %vm1410, %v5183, %v5184
    %v5264 = vsel %vm1410, %v5182, %v5183
    %v5265 = vsel %vm1410, %v5181, %v5182
    %v5266 = vsel %vm1410, %v5180, %v5181
    %v5267 = vsel %vm1410, %v5179, %v5180
    %v5268 = vsel %vm1410, %v5178, %v5179
    %v5269 = vsel %vm1410, %v5177, %v5178
    %v5270 = vsel %vm1410, %v5176, %v5177
    %v5271 = vsel %vm1410, %v5175, %v5176
    %v5272 = vsel %vm1410, %v5174, %v5175
    %v5273 = vsel %vm1410, %v5173, %v5174
    %v5274 = vsel %vm1410, %v5172, %v5173
    %v5275 = vsel %vm1410, %v5171, %v5172
    %v5276 = vsel %vm1410, %v5170, %v5171
    %v5277 = vsel %vm1410, %v5169, %v5170
    %v5278 = vsel %vm1410, %v5168, %v5169
    %v5279 = vsel %vm1410, %v5167, %v5168
    %v5280 = vsel %vm1410, %v5166, %v5167
    %v5281 = vsel %vm1410, %v5165, %v5166
    %v5282 = vsel %vm1410, %v5164, %v5165
    %v5283 = vsel %vm1410, %v5163, %v5164
    %v5284 = vsel %vm1410, %v5162, %v5163
    %v5285 = vsel %vm1410, %v5161, %v5162
    %v5286 = vsel %vm1410, %v5160, %v5161
    %v5287 = vsel %vm1410, %v5223, %v5160
    %v5288 = vsel %vm1667, %v5286, -1e+30
    %v5289 = vsel %vm1668, %v5285, -1e+30
    %v5290 = vsel %vm1669, %v5284, -1e+30
    %v5291 = vsel %vm1670, %v5283, -1e+30
    %v5292 = vsel %vm1671, %v5282, -1e+30
    %v5293 = vsel %vm1672, %v5281, -1e+30
    %v5294 = vsel %vm1673, %v5280, -1e+30
    %v5295 = vsel %vm1674, %v5279, -1e+30
    %v5296 = vsel %vm1675, %v5278, -1e+30
    %v5297 = vsel %vm1676, %v5277, -1e+30
    %v5298 = vsel %vm1677, %v5276, -1e+30
    %v5299 = vsel %vm1678, %v5275, -1e+30
    %v5300 = vsel %vm1679, %v5274, -1e+30
    %v5301 = vsel %vm1680, %v5273, -1e+30
    %v5302 = vsel %vm1681, %v5272, -1e+30
    %v5303 = vsel %vm1682, %v5271, -1e+30
    %v5304 = vsel %vm1683, %v5270, -1e+30
    %v5305 = vsel %vm1684, %v5269, -1e+30
    %v5306 = vsel %vm1685, %v5268, -1e+30
    %v5307 = vsel %vm1686, %v5267, -1e+30
    %v5308 = vsel %vm1687, %v5266, -1e+30
    %v5309 = vsel %vm1688, %v5265, -1e+30
    %v5310 = vsel %vm1689, %v5264, -1e+30
    %v5311 = vsel %vm1690, %v5263, -1e+30
    %v5312 = vsel %vm1691, %v5262, -1e+30
    %v5313 = vsel %vm1692, %v5261, -1e+30
    %v5314 = vsel %vm1693, %v5260, -1e+30
    %v5315 = vsel %vm1694, %v5259, -1e+30
    %v5316 = vsel %vm1695, %v5258, -1e+30
    %v5317 = vsel %vm1696, %v5257, -1e+30
    %v5318 = vsel %vm1697, %v5256, -1e+30
    %v5319 = vsel %vm1698, %v5255, -1e+30
    %v5320 = vsel %vm1699, %v5254, -1e+30
    %v5321 = vsel %vm1700, %v5253, -1e+30
    %v5322 = vsel %vm1701, %v5252, -1e+30
    %v5323 = vsel %vm1702, %v5251, -1e+30
    %v5324 = vsel %vm1703, %v5250, -1e+30
    %v5325 = vsel %vm1704, %v5249, -1e+30
    %v5326 = vsel %vm1705, %v5248, -1e+30
    %v5327 = vsel %vm1706, %v5247, -1e+30
    %v5328 = vsel %vm1707, %v5246, -1e+30
    %v5329 = vsel %vm1708, %v5245, -1e+30
    %v5330 = vsel %vm1709, %v5244, -1e+30
    %v5331 = vsel %vm1710, %v5243, -1e+30
    %v5332 = vsel %vm1711, %v5242, -1e+30
    %v5333 = vsel %vm1712, %v5241, -1e+30
    %v5334 = vsel %vm1713, %v5240, -1e+30
    %v5335 = vsel %vm1714, %v5239, -1e+30
    %v5336 = vsel %vm1715, %v5238, -1e+30
    %v5337 = vsel %vm1716, %v5237, -1e+30
    %v5338 = vsel %vm1717, %v5236, -1e+30
    %v5339 = vsel %vm1718, %v5235, -1e+30
    %v5340 = vsel %vm1719, %v5234, -1e+30
    %v5341 = vsel %vm1720, %v5233, -1e+30
    %v5342 = vsel %vm1721, %v5232, -1e+30
    %v5343 = vsel %vm1722, %v5231, -1e+30
    %v5344 = vsel %vm1723, %v5230, -1e+30
    %v5345 = vsel %vm1724, %v5229, -1e+30
    %v5346 = vsel %vm1725, %v5228, -1e+30
    %v5347 = vsel %vm1726, %v5227, -1e+30
    %v5348 = vsel %vm1727, %v5226, -1e+30
    %v5349 = vsel %vm1728, %v5225, -1e+30
    %v5350 = vsel %vm1729, %v5224, -1e+30
    %v5351 = vsel %vm1730, %v5287, -1e+30
    %v5352 = vmax.f32 %v5096, %v5288
    %v5353 = vmax.f32 %v5097, %v5289
    %v5354 = vmax.f32 %v5098, %v5290
    %v5355 = vmax.f32 %v5099, %v5291
    %v5356 = vmax.f32 %v5100, %v5292
    %v5357 = vmax.f32 %v5101, %v5293
    %v5358 = vmax.f32 %v5102, %v5294
    %v5359 = vmax.f32 %v5103, %v5295
    %v5360 = vmax.f32 %v5104, %v5296
    %v5361 = vmax.f32 %v5105, %v5297
    %v5362 = vmax.f32 %v5106, %v5298
    %v5363 = vmax.f32 %v5107, %v5299
    %v5364 = vmax.f32 %v5108, %v5300
    %v5365 = vmax.f32 %v5109, %v5301
    %v5366 = vmax.f32 %v5110, %v5302
    %v5367 = vmax.f32 %v5111, %v5303
    %v5368 = vmax.f32 %v5112, %v5304
    %v5369 = vmax.f32 %v5113, %v5305
    %v5370 = vmax.f32 %v5114, %v5306
    %v5371 = vmax.f32 %v5115, %v5307
    %v5372 = vmax.f32 %v5116, %v5308
    %v5373 = vmax.f32 %v5117, %v5309
    %v5374 = vmax.f32 %v5118, %v5310
    %v5375 = vmax.f32 %v5119, %v5311
    %v5376 = vmax.f32 %v5120, %v5312
    %v5377 = vmax.f32 %v5121, %v5313
    %v5378 = vmax.f32 %v5122, %v5314
    %v5379 = vmax.f32 %v5123, %v5315
    %v5380 = vmax.f32 %v5124, %v5316
    %v5381 = vmax.f32 %v5125, %v5317
    %v5382 = vmax.f32 %v5126, %v5318
    %v5383 = vmax.f32 %v5127, %v5319
    %v5384 = vmax.f32 %v5128, %v5320
    %v5385 = vmax.f32 %v5129, %v5321
    %v5386 = vmax.f32 %v5130, %v5322
    %v5387 = vmax.f32 %v5131, %v5323
    %v5388 = vmax.f32 %v5132, %v5324
    %v5389 = vmax.f32 %v5133, %v5325
    %v5390 = vmax.f32 %v5134, %v5326
    %v5391 = vmax.f32 %v5135, %v5327
    %v5392 = vmax.f32 %v5136, %v5328
    %v5393 = vmax.f32 %v5137, %v5329
    %v5394 = vmax.f32 %v5138, %v5330
    %v5395 = vmax.f32 %v5139, %v5331
    %v5396 = vmax.f32 %v5140, %v5332
    %v5397 = vmax.f32 %v5141, %v5333
    %v5398 = vmax.f32 %v5142, %v5334
    %v5399 = vmax.f32 %v5143, %v5335
    %v5400 = vmax.f32 %v5144, %v5336
    %v5401 = vmax.f32 %v5145, %v5337
    %v5402 = vmax.f32 %v5146, %v5338
    %v5403 = vmax.f32 %v5147, %v5339
    %v5404 = vmax.f32 %v5148, %v5340
    %v5405 = vmax.f32 %v5149, %v5341
    %v5406 = vmax.f32 %v5150, %v5342
    %v5407 = vmax.f32 %v5151, %v5343
    %v5408 = vmax.f32 %v5152, %v5344
    %v5409 = vmax.f32 %v5153, %v5345
    %v5410 = vmax.f32 %v5154, %v5346
    %v5411 = vmax.f32 %v5155, %v5347
    %v5412 = vmax.f32 %v5156, %v5348
    %v5413 = vmax.f32 %v5157, %v5349
    %v5414 = vmax.f32 %v5158, %v5350
    %v5415 = vmax.f32 %v5159, %v5351
    %v5416 = vmax.f32 %v5352, -1e+30
    %v5417 = vmax.f32 %v5353, -1e+30
    %v5418 = vmax.f32 %v5352, %v5354
    %v5419 = vmax.f32 %v5353, %v5355
    %v5420 = vmax.f32 %v5354, %v5356
    %v5421 = vmax.f32 %v5355, %v5357
    %v5422 = vmax.f32 %v5356, %v5358
    %v5423 = vmax.f32 %v5357, %v5359
    %v5424 = vmax.f32 %v5358, %v5360
    %v5425 = vmax.f32 %v5359, %v5361
    %v5426 = vmax.f32 %v5360, %v5362
    %v5427 = vmax.f32 %v5361, %v5363
    %v5428 = vmax.f32 %v5362, %v5364
    %v5429 = vmax.f32 %v5363, %v5365
    %v5430 = vmax.f32 %v5364, %v5366
    %v5431 = vmax.f32 %v5365, %v5367
    %v5432 = vmax.f32 %v5366, %v5368
    %v5433 = vmax.f32 %v5367, %v5369
    %v5434 = vmax.f32 %v5368, %v5370
    %v5435 = vmax.f32 %v5369, %v5371
    %v5436 = vmax.f32 %v5370, %v5372
    %v5437 = vmax.f32 %v5371, %v5373
    %v5438 = vmax.f32 %v5372, %v5374
    %v5439 = vmax.f32 %v5373, %v5375
    %v5440 = vmax.f32 %v5374, %v5376
    %v5441 = vmax.f32 %v5375, %v5377
    %v5442 = vmax.f32 %v5376, %v5378
    %v5443 = vmax.f32 %v5377, %v5379
    %v5444 = vmax.f32 %v5378, %v5380
    %v5445 = vmax.f32 %v5379, %v5381
    %v5446 = vmax.f32 %v5380, %v5382
    %v5447 = vmax.f32 %v5381, %v5383
    %v5448 = vmax.f32 %v5382, -1e+30
    %v5449 = vmax.f32 %v5383, -1e+30
    %v5450 = vmax.f32 %v5384, -1e+30
    %v5451 = vmax.f32 %v5385, -1e+30
    %v5452 = vmax.f32 %v5384, %v5386
    %v5453 = vmax.f32 %v5385, %v5387
    %v5454 = vmax.f32 %v5386, %v5388
    %v5455 = vmax.f32 %v5387, %v5389
    %v5456 = vmax.f32 %v5388, %v5390
    %v5457 = vmax.f32 %v5389, %v5391
    %v5458 = vmax.f32 %v5390, %v5392
    %v5459 = vmax.f32 %v5391, %v5393
    %v5460 = vmax.f32 %v5392, %v5394
    %v5461 = vmax.f32 %v5393, %v5395
    %v5462 = vmax.f32 %v5394, %v5396
    %v5463 = vmax.f32 %v5395, %v5397
    %v5464 = vmax.f32 %v5396, %v5398
    %v5465 = vmax.f32 %v5397, %v5399
    %v5466 = vmax.f32 %v5398, %v5400
    %v5467 = vmax.f32 %v5399, %v5401
    %v5468 = vmax.f32 %v5400, %v5402
    %v5469 = vmax.f32 %v5401, %v5403
    %v5470 = vmax.f32 %v5402, %v5404
    %v5471 = vmax.f32 %v5403, %v5405
    %v5472 = vmax.f32 %v5404, %v5406
    %v5473 = vmax.f32 %v5405, %v5407
    %v5474 = vmax.f32 %v5406, %v5408
    %v5475 = vmax.f32 %v5407, %v5409
    %v5476 = vmax.f32 %v5408, %v5410
    %v5477 = vmax.f32 %v5409, %v5411
    %v5478 = vmax.f32 %v5410, %v5412
    %v5479 = vmax.f32 %v5411, %v5413
    %v5480 = vmax.f32 %v5412, %v5414
    %v5481 = vmax.f32 %v5413, %v5415
    %v5482 = vmax.f32 %v5414, -1e+30
    %v5483 = vmax.f32 %v5415, -1e+30
    %v5484 = vmax.f32 %v5418, -1e+30
    %v5485 = vmax.f32 %v5419, -1e+30
    %v5486 = vmax.f32 %v5416, %v5420
    %v5487 = vmax.f32 %v5417, %v5421
    %v5488 = vmax.f32 %v5418, %v5422
    %v5489 = vmax.f32 %v5419, %v5423
    %v5490 = vmax.f32 %v5420, %v5424
    %v5491 = vmax.f32 %v5421, %v5425
    %v5492 = vmax.f32 %v5422, %v5426
    %v5493 = vmax.f32 %v5423, %v5427
    %v5494 = vmax.f32 %v5424, %v5428
    %v5495 = vmax.f32 %v5425, %v5429
    %v5496 = vmax.f32 %v5426, %v5430
    %v5497 = vmax.f32 %v5427, %v5431
    %v5498 = vmax.f32 %v5428, %v5432
    %v5499 = vmax.f32 %v5429, %v5433
    %v5500 = vmax.f32 %v5430, %v5434
    %v5501 = vmax.f32 %v5431, %v5435
    %v5502 = vmax.f32 %v5432, %v5436
    %v5503 = vmax.f32 %v5433, %v5437
    %v5504 = vmax.f32 %v5434, %v5438
    %v5505 = vmax.f32 %v5435, %v5439
    %v5506 = vmax.f32 %v5436, %v5440
    %v5507 = vmax.f32 %v5437, %v5441
    %v5508 = vmax.f32 %v5438, %v5442
    %v5509 = vmax.f32 %v5439, %v5443
    %v5510 = vmax.f32 %v5440, %v5444
    %v5511 = vmax.f32 %v5441, %v5445
    %v5512 = vmax.f32 %v5442, %v5446
    %v5513 = vmax.f32 %v5443, %v5447
    %v5514 = vmax.f32 %v5444, %v5448
    %v5515 = vmax.f32 %v5445, %v5449
    %v5516 = vmax.f32 %v5452, -1e+30
    %v5517 = vmax.f32 %v5453, -1e+30
    %v5518 = vmax.f32 %v5450, %v5454
    %v5519 = vmax.f32 %v5451, %v5455
    %v5520 = vmax.f32 %v5452, %v5456
    %v5521 = vmax.f32 %v5453, %v5457
    %v5522 = vmax.f32 %v5454, %v5458
    %v5523 = vmax.f32 %v5455, %v5459
    %v5524 = vmax.f32 %v5456, %v5460
    %v5525 = vmax.f32 %v5457, %v5461
    %v5526 = vmax.f32 %v5458, %v5462
    %v5527 = vmax.f32 %v5459, %v5463
    %v5528 = vmax.f32 %v5460, %v5464
    %v5529 = vmax.f32 %v5461, %v5465
    %v5530 = vmax.f32 %v5462, %v5466
    %v5531 = vmax.f32 %v5463, %v5467
    %v5532 = vmax.f32 %v5464, %v5468
    %v5533 = vmax.f32 %v5465, %v5469
    %v5534 = vmax.f32 %v5466, %v5470
    %v5535 = vmax.f32 %v5467, %v5471
    %v5536 = vmax.f32 %v5468, %v5472
    %v5537 = vmax.f32 %v5469, %v5473
    %v5538 = vmax.f32 %v5470, %v5474
    %v5539 = vmax.f32 %v5471, %v5475
    %v5540 = vmax.f32 %v5472, %v5476
    %v5541 = vmax.f32 %v5473, %v5477
    %v5542 = vmax.f32 %v5474, %v5478
    %v5543 = vmax.f32 %v5475, %v5479
    %v5544 = vmax.f32 %v5476, %v5480
    %v5545 = vmax.f32 %v5477, %v5481
    %v5546 = vmax.f32 %v5478, %v5482
    %v5547 = vmax.f32 %v5479, %v5483
    %v5548 = vmax.f32 %v5484, %v5356
    %v5549 = vmax.f32 %v5485, %v5357
    %v5550 = vmax.f32 %v5486, %v5358
    %v5551 = vmax.f32 %v5487, %v5359
    %v5552 = vmax.f32 %v5488, %v5360
    %v5553 = vmax.f32 %v5489, %v5361
    %v5554 = vmax.f32 %v5490, %v5362
    %v5555 = vmax.f32 %v5491, %v5363
    %v5556 = vmax.f32 %v5492, %v5364
    %v5557 = vmax.f32 %v5493, %v5365
    %v5558 = vmax.f32 %v5494, %v5366
    %v5559 = vmax.f32 %v5495, %v5367
    %v5560 = vmax.f32 %v5496, %v5368
    %v5561 = vmax.f32 %v5497, %v5369
    %v5562 = vmax.f32 %v5498, %v5370
    %v5563 = vmax.f32 %v5499, %v5371
    %v5564 = vmax.f32 %v5500, %v5372
    %v5565 = vmax.f32 %v5501, %v5373
    %v5566 = vmax.f32 %v5502, %v5374
    %v5567 = vmax.f32 %v5503, %v5375
    %v5568 = vmax.f32 %v5504, %v5376
    %v5569 = vmax.f32 %v5505, %v5377
    %v5570 = vmax.f32 %v5506, %v5378
    %v5571 = vmax.f32 %v5507, %v5379
    %v5572 = vmax.f32 %v5508, %v5380
    %v5573 = vmax.f32 %v5509, %v5381
    %v5574 = vmax.f32 %v5510, %v5382
    %v5575 = vmax.f32 %v5511, %v5383
    %v5576 = vmax.f32 %v5512, -1e+30
    %v5577 = vmax.f32 %v5513, -1e+30
    %v5578 = vmax.f32 %v5514, -1e+30
    %v5579 = vmax.f32 %v5515, -1e+30
    %v5580 = vmax.f32 %v5516, %v5388
    %v5581 = vmax.f32 %v5517, %v5389
    %v5582 = vmax.f32 %v5518, %v5390
    %v5583 = vmax.f32 %v5519, %v5391
    %v5584 = vmax.f32 %v5520, %v5392
    %v5585 = vmax.f32 %v5521, %v5393
    %v5586 = vmax.f32 %v5522, %v5394
    %v5587 = vmax.f32 %v5523, %v5395
    %v5588 = vmax.f32 %v5524, %v5396
    %v5589 = vmax.f32 %v5525, %v5397
    %v5590 = vmax.f32 %v5526, %v5398
    %v5591 = vmax.f32 %v5527, %v5399
    %v5592 = vmax.f32 %v5528, %v5400
    %v5593 = vmax.f32 %v5529, %v5401
    %v5594 = vmax.f32 %v5530, %v5402
    %v5595 = vmax.f32 %v5531, %v5403
    %v5596 = vmax.f32 %v5532, %v5404
    %v5597 = vmax.f32 %v5533, %v5405
    %v5598 = vmax.f32 %v5534, %v5406
    %v5599 = vmax.f32 %v5535, %v5407
    %v5600 = vmax.f32 %v5536, %v5408
    %v5601 = vmax.f32 %v5537, %v5409
    %v5602 = vmax.f32 %v5538, %v5410
    %v5603 = vmax.f32 %v5539, %v5411
    %v5604 = vmax.f32 %v5540, %v5412
    %v5605 = vmax.f32 %v5541, %v5413
    %v5606 = vmax.f32 %v5542, %v5414
    %v5607 = vmax.f32 %v5543, %v5415
    %v5608 = vmax.f32 %v5544, -1e+30
    %v5609 = vmax.f32 %v5545, -1e+30
    %v5610 = vmax.f32 %v5546, -1e+30
    %v5611 = vmax.f32 %v5547, -1e+30
    %v5612 = vrot.slane %v5548, 7
    %v5613 = vrot.slane %v5549, 7
    %v5614 = vrot.slane %v5550, 7
    %v5615 = vrot.slane %v5551, 7
    %v5616 = vrot.slane %v5552, 7
    %v5617 = vrot.slane %v5553, 7
    %v5618 = vrot.slane %v5554, 7
    %v5619 = vrot.slane %v5555, 7
    %v5620 = vrot.slane %v5556, 7
    %v5621 = vrot.slane %v5557, 7
    %v5622 = vrot.slane %v5558, 7
    %v5623 = vrot.slane %v5559, 7
    %v5624 = vrot.slane %v5560, 7
    %v5625 = vrot.slane %v5561, 7
    %v5626 = vrot.slane %v5562, 7
    %v5627 = vrot.slane %v5563, 7
    %v5628 = vrot.slane %v5564, 7
    %v5629 = vrot.slane %v5565, 7
    %v5630 = vrot.slane %v5566, 7
    %v5631 = vrot.slane %v5567, 7
    %v5632 = vrot.slane %v5568, 7
    %v5633 = vrot.slane %v5569, 7
    %v5634 = vrot.slane %v5570, 7
    %v5635 = vrot.slane %v5571, 7
    %v5636 = vrot.slane %v5572, 7
    %v5637 = vrot.slane %v5573, 7
    %v5638 = vrot.slane %v5574, 7
    %v5639 = vrot.slane %v5575, 7
    %v5640 = vrot.slane %v5576, 7
    %v5641 = vrot.slane %v5577, 7
    %v5642 = vrot.slane %v5578, 7
    %v5643 = vrot.slane %v5579, 7
    %v5644 = vrot.slane %v5580, 7
    %v5645 = vrot.slane %v5581, 7
    %v5646 = vrot.slane %v5582, 7
    %v5647 = vrot.slane %v5583, 7
    %v5648 = vrot.slane %v5584, 7
    %v5649 = vrot.slane %v5585, 7
    %v5650 = vrot.slane %v5586, 7
    %v5651 = vrot.slane %v5587, 7
    %v5652 = vrot.slane %v5588, 7
    %v5653 = vrot.slane %v5589, 7
    %v5654 = vrot.slane %v5590, 7
    %v5655 = vrot.slane %v5591, 7
    %v5656 = vrot.slane %v5592, 7
    %v5657 = vrot.slane %v5593, 7
    %v5658 = vrot.slane %v5594, 7
    %v5659 = vrot.slane %v5595, 7
    %v5660 = vrot.slane %v5596, 7
    %v5661 = vrot.slane %v5597, 7
    %v5662 = vrot.slane %v5598, 7
    %v5663 = vrot.slane %v5599, 7
    %v5664 = vrot.slane %v5600, 7
    %v5665 = vrot.slane %v5601, 7
    %v5666 = vrot.slane %v5602, 7
    %v5667 = vrot.slane %v5603, 7
    %v5668 = vrot.slane %v5604, 7
    %v5669 = vrot.slane %v5605, 7
    %v5670 = vrot.slane %v5606, 7
    %v5671 = vrot.slane %v5607, 7
    %v5672 = vrot.slane %v5608, 7
    %v5673 = vrot.slane %v5609, 7
    %v5674 = vrot.slane %v5610, 7
    %v5675 = vrot.slane %v5611, 7
    %v5676 = vsel %vm255, %v5674, %v5675
    %v5677 = vsel %vm255, %v5673, %v5674
    %v5678 = vsel %vm255, %v5672, %v5673
    %v5679 = vsel %vm255, %v5671, %v5672
    %v5680 = vsel %vm255, %v5670, %v5671
    %v5681 = vsel %vm255, %v5669, %v5670
    %v5682 = vsel %vm255, %v5668, %v5669
    %v5683 = vsel %vm255, %v5667, %v5668
    %v5684 = vsel %vm255, %v5666, %v5667
    %v5685 = vsel %vm255, %v5665, %v5666
    %v5686 = vsel %vm255, %v5664, %v5665
    %v5687 = vsel %vm255, %v5663, %v5664
    %v5688 = vsel %vm255, %v5662, %v5663
    %v5689 = vsel %vm255, %v5661, %v5662
    %v5690 = vsel %vm255, %v5660, %v5661
    %v5691 = vsel %vm255, %v5659, %v5660
    %v5692 = vsel %vm255, %v5658, %v5659
    %v5693 = vsel %vm255, %v5657, %v5658
    %v5694 = vsel %vm255, %v5656, %v5657
    %v5695 = vsel %vm255, %v5655, %v5656
    %v5696 = vsel %vm255, %v5654, %v5655
    %v5697 = vsel %vm255, %v5653, %v5654
    %v5698 = vsel %vm255, %v5652, %v5653
    %v5699 = vsel %vm255, %v5651, %v5652
    %v5700 = vsel %vm255, %v5650, %v5651
    %v5701 = vsel %vm255, %v5649, %v5650
    %v5702 = vsel %vm255, %v5648, %v5649
    %v5703 = vsel %vm255, %v5647, %v5648
    %v5704 = vsel %vm255, %v5646, %v5647
    %v5705 = vsel %vm255, %v5645, %v5646
    %v5706 = vsel %vm255, %v5644, %v5645
    %v5707 = vsel %vm255, %v5643, %v5644
    %v5708 = vsel %vm255, %v5642, %v5643
    %v5709 = vsel %vm255, %v5641, %v5642
    %v5710 = vsel %vm255, %v5640, %v5641
    %v5711 = vsel %vm255, %v5639, %v5640
    %v5712 = vsel %vm255, %v5638, %v5639
    %v5713 = vsel %vm255, %v5637, %v5638
    %v5714 = vsel %vm255, %v5636, %v5637
    %v5715 = vsel %vm255, %v5635, %v5636
    %v5716 = vsel %vm255, %v5634, %v5635
    %v5717 = vsel %vm255, %v5633, %v5634
    %v5718 = vsel %vm255, %v5632, %v5633
    %v5719 = vsel %vm255, %v5631, %v5632
    %v5720 = vsel %vm255, %v5630, %v5631
    %v5721 = vsel %vm255, %v5629, %v5630
    %v5722 = vsel %vm255, %v5628, %v5629
    %v5723 = vsel %vm255, %v5627, %v5628
    %v5724 = vsel %vm255, %v5626, %v5627
    %v5725 = vsel %vm255, %v5625, %v5626
    %v5726 = vsel %vm255, %v5624, %v5625
    %v5727 = vsel %vm255, %v5623, %v5624
    %v5728 = vsel %vm255, %v5622, %v5623
    %v5729 = vsel %vm255, %v5621, %v5622
    %v5730 = vsel %vm255, %v5620, %v5621
    %v5731 = vsel %vm255, %v5619, %v5620
    %v5732 = vsel %vm255, %v5618, %v5619
    %v5733 = vsel %vm255, %v5617, %v5618
    %v5734 = vsel %vm255, %v5616, %v5617
    %v5735 = vsel %vm255, %v5615, %v5616
    %v5736 = vsel %vm255, %v5614, %v5615
    %v5737 = vsel %vm255, %v5613, %v5614
    %v5738 = vsel %vm255, %v5612, %v5613
    %v5739 = vsel %vm255, %v5675, %v5612
    %v5740 = vsel %vm512, %v5739, -1e+30
    %v5741 = vsel %vm513, %v5738, -1e+30
    %v5742 = vsel %vm514, %v5737, -1e+30
    %v5743 = vsel %vm515, %v5736, -1e+30
    %v5744 = vsel %vm516, %v5735, -1e+30
    %v5745 = vsel %vm517, %v5734, -1e+30
    %v5746 = vsel %vm518, %v5733, -1e+30
    %v5747 = vsel %vm519, %v5732, -1e+30
    %v5748 = vsel %vm520, %v5731, -1e+30
    %v5749 = vsel %vm521, %v5730, -1e+30
    %v5750 = vsel %vm522, %v5729, -1e+30
    %v5751 = vsel %vm523, %v5728, -1e+30
    %v5752 = vsel %vm524, %v5727, -1e+30
    %v5753 = vsel %vm525, %v5726, -1e+30
    %v5754 = vsel %vm526, %v5725, -1e+30
    %v5755 = vsel %vm527, %v5724, -1e+30
    %v5756 = vsel %vm528, %v5723, -1e+30
    %v5757 = vsel %vm529, %v5722, -1e+30
    %v5758 = vsel %vm530, %v5721, -1e+30
    %v5759 = vsel %vm531, %v5720, -1e+30
    %v5760 = vsel %vm532, %v5719, -1e+30
    %v5761 = vsel %vm533, %v5718, -1e+30
    %v5762 = vsel %vm534, %v5717, -1e+30
    %v5763 = vsel %vm535, %v5716, -1e+30
    %v5764 = vsel %vm536, %v5715, -1e+30
    %v5765 = vsel %vm537, %v5714, -1e+30
    %v5766 = vsel %vm538, %v5713, -1e+30
    %v5767 = vsel %vm539, %v5712, -1e+30
    %v5768 = vsel %vm540, %v5711, -1e+30
    %v5769 = vsel %vm541, %v5710, -1e+30
    %v5770 = vsel %vm542, %v5709, -1e+30
    %v5771 = vsel %vm543, %v5708, -1e+30
    %v5772 = vsel %vm544, %v5707, -1e+30
    %v5773 = vsel %vm545, %v5706, -1e+30
    %v5774 = vsel %vm546, %v5705, -1e+30
    %v5775 = vsel %vm547, %v5704, -1e+30
    %v5776 = vsel %vm548, %v5703, -1e+30
    %v5777 = vsel %vm549, %v5702, -1e+30
    %v5778 = vsel %vm550, %v5701, -1e+30
    %v5779 = vsel %vm551, %v5700, -1e+30
    %v5780 = vsel %vm552, %v5699, -1e+30
    %v5781 = vsel %vm553, %v5698, -1e+30
    %v5782 = vsel %vm554, %v5697, -1e+30
    %v5783 = vsel %vm555, %v5696, -1e+30
    %v5784 = vsel %vm556, %v5695, -1e+30
    %v5785 = vsel %vm557, %v5694, -1e+30
    %v5786 = vsel %vm558, %v5693, -1e+30
    %v5787 = vsel %vm559, %v5692, -1e+30
    %v5788 = vsel %vm560, %v5691, -1e+30
    %v5789 = vsel %vm561, %v5690, -1e+30
    %v5790 = vsel %vm562, %v5689, -1e+30
    %v5791 = vsel %vm563, %v5688, -1e+30
    %v5792 = vsel %vm564, %v5687, -1e+30
    %v5793 = vsel %vm565, %v5686, -1e+30
    %v5794 = vsel %vm566, %v5685, -1e+30
    %v5795 = vsel %vm567, %v5684, -1e+30
    %v5796 = vsel %vm568, %v5683, -1e+30
    %v5797 = vsel %vm569, %v5682, -1e+30
    %v5798 = vsel %vm570, %v5681, -1e+30
    %v5799 = vsel %vm571, %v5680, -1e+30
    %v5800 = vsel %vm572, %v5679, -1e+30
    %v5801 = vsel %vm573, %v5678, -1e+30
    %v5802 = vsel %vm574, %v5677, -1e+30
    %v5803 = vsel %vm575, %v5676, -1e+30
    %v5804 = vmax.f32 %v5548, %v5740
    %v5805 = vmax.f32 %v5549, %v5741
    %v5806 = vmax.f32 %v5550, %v5742
    %v5807 = vmax.f32 %v5551, %v5743
    %v5808 = vmax.f32 %v5552, %v5744
    %v5809 = vmax.f32 %v5553, %v5745
    %v5810 = vmax.f32 %v5554, %v5746
    %v5811 = vmax.f32 %v5555, %v5747
    %v5812 = vmax.f32 %v5556, %v5748
    %v5813 = vmax.f32 %v5557, %v5749
    %v5814 = vmax.f32 %v5558, %v5750
    %v5815 = vmax.f32 %v5559, %v5751
    %v5816 = vmax.f32 %v5560, %v5752
    %v5817 = vmax.f32 %v5561, %v5753
    %v5818 = vmax.f32 %v5562, %v5754
    %v5819 = vmax.f32 %v5563, %v5755
    %v5820 = vmax.f32 %v5564, %v5756
    %v5821 = vmax.f32 %v5565, %v5757
    %v5822 = vmax.f32 %v5566, %v5758
    %v5823 = vmax.f32 %v5567, %v5759
    %v5824 = vmax.f32 %v5568, %v5760
    %v5825 = vmax.f32 %v5569, %v5761
    %v5826 = vmax.f32 %v5570, %v5762
    %v5827 = vmax.f32 %v5571, %v5763
    %v5828 = vmax.f32 %v5572, %v5764
    %v5829 = vmax.f32 %v5573, %v5765
    %v5830 = vmax.f32 %v5574, %v5766
    %v5831 = vmax.f32 %v5575, %v5767
    %v5832 = vmax.f32 %v5576, %v5768
    %v5833 = vmax.f32 %v5577, %v5769
    %v5834 = vmax.f32 %v5578, %v5770
    %v5835 = vmax.f32 %v5579, %v5771
    %v5836 = vmax.f32 %v5580, %v5772
    %v5837 = vmax.f32 %v5581, %v5773
    %v5838 = vmax.f32 %v5582, %v5774
    %v5839 = vmax.f32 %v5583, %v5775
    %v5840 = vmax.f32 %v5584, %v5776
    %v5841 = vmax.f32 %v5585, %v5777
    %v5842 = vmax.f32 %v5586, %v5778
    %v5843 = vmax.f32 %v5587, %v5779
    %v5844 = vmax.f32 %v5588, %v5780
    %v5845 = vmax.f32 %v5589, %v5781
    %v5846 = vmax.f32 %v5590, %v5782
    %v5847 = vmax.f32 %v5591, %v5783
    %v5848 = vmax.f32 %v5592, %v5784
    %v5849 = vmax.f32 %v5593, %v5785
    %v5850 = vmax.f32 %v5594, %v5786
    %v5851 = vmax.f32 %v5595, %v5787
    %v5852 = vmax.f32 %v5596, %v5788
    %v5853 = vmax.f32 %v5597, %v5789
    %v5854 = vmax.f32 %v5598, %v5790
    %v5855 = vmax.f32 %v5599, %v5791
    %v5856 = vmax.f32 %v5600, %v5792
    %v5857 = vmax.f32 %v5601, %v5793
    %v5858 = vmax.f32 %v5602, %v5794
    %v5859 = vmax.f32 %v5603, %v5795
    %v5860 = vmax.f32 %v5604, %v5796
    %v5861 = vmax.f32 %v5605, %v5797
    %v5862 = vmax.f32 %v5606, %v5798
    %v5863 = vmax.f32 %v5607, %v5799
    %v5864 = vmax.f32 %v5608, %v5800
    %v5865 = vmax.f32 %v5609, %v5801
    %v5866 = vmax.f32 %v5610, %v5802
    %v5867 = vmax.f32 %v5611, %v5803
    %v5868 = vrot.slane %v5548, 6
    %v5869 = vrot.slane %v5549, 6
    %v5870 = vrot.slane %v5550, 6
    %v5871 = vrot.slane %v5551, 6
    %v5872 = vrot.slane %v5552, 6
    %v5873 = vrot.slane %v5553, 6
    %v5874 = vrot.slane %v5554, 6
    %v5875 = vrot.slane %v5555, 6
    %v5876 = vrot.slane %v5556, 6
    %v5877 = vrot.slane %v5557, 6
    %v5878 = vrot.slane %v5558, 6
    %v5879 = vrot.slane %v5559, 6
    %v5880 = vrot.slane %v5560, 6
    %v5881 = vrot.slane %v5561, 6
    %v5882 = vrot.slane %v5562, 6
    %v5883 = vrot.slane %v5563, 6
    %v5884 = vrot.slane %v5564, 6
    %v5885 = vrot.slane %v5565, 6
    %v5886 = vrot.slane %v5566, 6
    %v5887 = vrot.slane %v5567, 6
    %v5888 = vrot.slane %v5568, 6
    %v5889 = vrot.slane %v5569, 6
    %v5890 = vrot.slane %v5570, 6
    %v5891 = vrot.slane %v5571, 6
    %v5892 = vrot.slane %v5572, 6
    %v5893 = vrot.slane %v5573, 6
    %v5894 = vrot.slane %v5574, 6
    %v5895 = vrot.slane %v5575, 6
    %v5896 = vrot.slane %v5576, 6
    %v5897 = vrot.slane %v5577, 6
    %v5898 = vrot.slane %v5578, 6
    %v5899 = vrot.slane %v5579, 6
    %v5900 = vrot.slane %v5580, 6
    %v5901 = vrot.slane %v5581, 6
    %v5902 = vrot.slane %v5582, 6
    %v5903 = vrot.slane %v5583, 6
    %v5904 = vrot.slane %v5584, 6
    %v5905 = vrot.slane %v5585, 6
    %v5906 = vrot.slane %v5586, 6
    %v5907 = vrot.slane %v5587, 6
    %v5908 = vrot.slane %v5588, 6
    %v5909 = vrot.slane %v5589, 6
    %v5910 = vrot.slane %v5590, 6
    %v5911 = vrot.slane %v5591, 6
    %v5912 = vrot.slane %v5592, 6
    %v5913 = vrot.slane %v5593, 6
    %v5914 = vrot.slane %v5594, 6
    %v5915 = vrot.slane %v5595, 6
    %v5916 = vrot.slane %v5596, 6
    %v5917 = vrot.slane %v5597, 6
    %v5918 = vrot.slane %v5598, 6
    %v5919 = vrot.slane %v5599, 6
    %v5920 = vrot.slane %v5600, 6
    %v5921 = vrot.slane %v5601, 6
    %v5922 = vrot.slane %v5602, 6
    %v5923 = vrot.slane %v5603, 6
    %v5924 = vrot.slane %v5604, 6
    %v5925 = vrot.slane %v5605, 6
    %v5926 = vrot.slane %v5606, 6
    %v5927 = vrot.slane %v5607, 6
    %v5928 = vrot.slane %v5608, 6
    %v5929 = vrot.slane %v5609, 6
    %v5930 = vrot.slane %v5610, 6
    %v5931 = vrot.slane %v5611, 6
    %v5932 = vsel %vm640, %v5930, %v5931
    %v5933 = vsel %vm640, %v5929, %v5930
    %v5934 = vsel %vm640, %v5928, %v5929
    %v5935 = vsel %vm640, %v5927, %v5928
    %v5936 = vsel %vm640, %v5926, %v5927
    %v5937 = vsel %vm640, %v5925, %v5926
    %v5938 = vsel %vm640, %v5924, %v5925
    %v5939 = vsel %vm640, %v5923, %v5924
    %v5940 = vsel %vm640, %v5922, %v5923
    %v5941 = vsel %vm640, %v5921, %v5922
    %v5942 = vsel %vm640, %v5920, %v5921
    %v5943 = vsel %vm640, %v5919, %v5920
    %v5944 = vsel %vm640, %v5918, %v5919
    %v5945 = vsel %vm640, %v5917, %v5918
    %v5946 = vsel %vm640, %v5916, %v5917
    %v5947 = vsel %vm640, %v5915, %v5916
    %v5948 = vsel %vm640, %v5914, %v5915
    %v5949 = vsel %vm640, %v5913, %v5914
    %v5950 = vsel %vm640, %v5912, %v5913
    %v5951 = vsel %vm640, %v5911, %v5912
    %v5952 = vsel %vm640, %v5910, %v5911
    %v5953 = vsel %vm640, %v5909, %v5910
    %v5954 = vsel %vm640, %v5908, %v5909
    %v5955 = vsel %vm640, %v5907, %v5908
    %v5956 = vsel %vm640, %v5906, %v5907
    %v5957 = vsel %vm640, %v5905, %v5906
    %v5958 = vsel %vm640, %v5904, %v5905
    %v5959 = vsel %vm640, %v5903, %v5904
    %v5960 = vsel %vm640, %v5902, %v5903
    %v5961 = vsel %vm640, %v5901, %v5902
    %v5962 = vsel %vm640, %v5900, %v5901
    %v5963 = vsel %vm640, %v5899, %v5900
    %v5964 = vsel %vm640, %v5898, %v5899
    %v5965 = vsel %vm640, %v5897, %v5898
    %v5966 = vsel %vm640, %v5896, %v5897
    %v5967 = vsel %vm640, %v5895, %v5896
    %v5968 = vsel %vm640, %v5894, %v5895
    %v5969 = vsel %vm640, %v5893, %v5894
    %v5970 = vsel %vm640, %v5892, %v5893
    %v5971 = vsel %vm640, %v5891, %v5892
    %v5972 = vsel %vm640, %v5890, %v5891
    %v5973 = vsel %vm640, %v5889, %v5890
    %v5974 = vsel %vm640, %v5888, %v5889
    %v5975 = vsel %vm640, %v5887, %v5888
    %v5976 = vsel %vm640, %v5886, %v5887
    %v5977 = vsel %vm640, %v5885, %v5886
    %v5978 = vsel %vm640, %v5884, %v5885
    %v5979 = vsel %vm640, %v5883, %v5884
    %v5980 = vsel %vm640, %v5882, %v5883
    %v5981 = vsel %vm640, %v5881, %v5882
    %v5982 = vsel %vm640, %v5880, %v5881
    %v5983 = vsel %vm640, %v5879, %v5880
    %v5984 = vsel %vm640, %v5878, %v5879
    %v5985 = vsel %vm640, %v5877, %v5878
    %v5986 = vsel %vm640, %v5876, %v5877
    %v5987 = vsel %vm640, %v5875, %v5876
    %v5988 = vsel %vm640, %v5874, %v5875
    %v5989 = vsel %vm640, %v5873, %v5874
    %v5990 = vsel %vm640, %v5872, %v5873
    %v5991 = vsel %vm640, %v5871, %v5872
    %v5992 = vsel %vm640, %v5870, %v5871
    %v5993 = vsel %vm640, %v5869, %v5870
    %v5994 = vsel %vm640, %v5868, %v5869
    %v5995 = vsel %vm640, %v5931, %v5868
    %v5996 = vsel %vm897, %v5995, -1e+30
    %v5997 = vsel %vm898, %v5994, -1e+30
    %v5998 = vsel %vm899, %v5993, -1e+30
    %v5999 = vsel %vm900, %v5992, -1e+30
    %v6000 = vsel %vm901, %v5991, -1e+30
    %v6001 = vsel %vm902, %v5990, -1e+30
    %v6002 = vsel %vm903, %v5989, -1e+30
    %v6003 = vsel %vm904, %v5988, -1e+30
    %v6004 = vsel %vm905, %v5987, -1e+30
    %v6005 = vsel %vm906, %v5986, -1e+30
    %v6006 = vsel %vm907, %v5985, -1e+30
    %v6007 = vsel %vm908, %v5984, -1e+30
    %v6008 = vsel %vm909, %v5983, -1e+30
    %v6009 = vsel %vm910, %v5982, -1e+30
    %v6010 = vsel %vm911, %v5981, -1e+30
    %v6011 = vsel %vm912, %v5980, -1e+30
    %v6012 = vsel %vm913, %v5979, -1e+30
    %v6013 = vsel %vm914, %v5978, -1e+30
    %v6014 = vsel %vm915, %v5977, -1e+30
    %v6015 = vsel %vm916, %v5976, -1e+30
    %v6016 = vsel %vm917, %v5975, -1e+30
    %v6017 = vsel %vm918, %v5974, -1e+30
    %v6018 = vsel %vm919, %v5973, -1e+30
    %v6019 = vsel %vm920, %v5972, -1e+30
    %v6020 = vsel %vm921, %v5971, -1e+30
    %v6021 = vsel %vm922, %v5970, -1e+30
    %v6022 = vsel %vm923, %v5969, -1e+30
    %v6023 = vsel %vm924, %v5968, -1e+30
    %v6024 = vsel %vm925, %v5967, -1e+30
    %v6025 = vsel %vm926, %v5966, -1e+30
    %v6026 = vsel %vm927, %v5965, -1e+30
    %v6027 = vsel %vm928, %v5964, -1e+30
    %v6028 = vsel %vm929, %v5963, -1e+30
    %v6029 = vsel %vm930, %v5962, -1e+30
    %v6030 = vsel %vm931, %v5961, -1e+30
    %v6031 = vsel %vm932, %v5960, -1e+30
    %v6032 = vsel %vm933, %v5959, -1e+30
    %v6033 = vsel %vm934, %v5958, -1e+30
    %v6034 = vsel %vm935, %v5957, -1e+30
    %v6035 = vsel %vm936, %v5956, -1e+30
    %v6036 = vsel %vm937, %v5955, -1e+30
    %v6037 = vsel %vm938, %v5954, -1e+30
    %v6038 = vsel %vm939, %v5953, -1e+30
    %v6039 = vsel %vm940, %v5952, -1e+30
    %v6040 = vsel %vm941, %v5951, -1e+30
    %v6041 = vsel %vm942, %v5950, -1e+30
    %v6042 = vsel %vm943, %v5949, -1e+30
    %v6043 = vsel %vm944, %v5948, -1e+30
    %v6044 = vsel %vm945, %v5947, -1e+30
    %v6045 = vsel %vm946, %v5946, -1e+30
    %v6046 = vsel %vm947, %v5945, -1e+30
    %v6047 = vsel %vm948, %v5944, -1e+30
    %v6048 = vsel %vm949, %v5943, -1e+30
    %v6049 = vsel %vm950, %v5942, -1e+30
    %v6050 = vsel %vm951, %v5941, -1e+30
    %v6051 = vsel %vm952, %v5940, -1e+30
    %v6052 = vsel %vm953, %v5939, -1e+30
    %v6053 = vsel %vm954, %v5938, -1e+30
    %v6054 = vsel %vm955, %v5937, -1e+30
    %v6055 = vsel %vm956, %v5936, -1e+30
    %v6056 = vsel %vm957, %v5935, -1e+30
    %v6057 = vsel %vm958, %v5934, -1e+30
    %v6058 = vsel %vm959, %v5933, -1e+30
    %v6059 = vsel %vm960, %v5932, -1e+30
    %v6060 = vmax.f32 %v5804, %v5996
    %v6061 = vmax.f32 %v5805, %v5997
    %v6062 = vmax.f32 %v5806, %v5998
    %v6063 = vmax.f32 %v5807, %v5999
    %v6064 = vmax.f32 %v5808, %v6000
    %v6065 = vmax.f32 %v5809, %v6001
    %v6066 = vmax.f32 %v5810, %v6002
    %v6067 = vmax.f32 %v5811, %v6003
    %v6068 = vmax.f32 %v5812, %v6004
    %v6069 = vmax.f32 %v5813, %v6005
    %v6070 = vmax.f32 %v5814, %v6006
    %v6071 = vmax.f32 %v5815, %v6007
    %v6072 = vmax.f32 %v5816, %v6008
    %v6073 = vmax.f32 %v5817, %v6009
    %v6074 = vmax.f32 %v5818, %v6010
    %v6075 = vmax.f32 %v5819, %v6011
    %v6076 = vmax.f32 %v5820, %v6012
    %v6077 = vmax.f32 %v5821, %v6013
    %v6078 = vmax.f32 %v5822, %v6014
    %v6079 = vmax.f32 %v5823, %v6015
    %v6080 = vmax.f32 %v5824, %v6016
    %v6081 = vmax.f32 %v5825, %v6017
    %v6082 = vmax.f32 %v5826, %v6018
    %v6083 = vmax.f32 %v5827, %v6019
    %v6084 = vmax.f32 %v5828, %v6020
    %v6085 = vmax.f32 %v5829, %v6021
    %v6086 = vmax.f32 %v5830, %v6022
    %v6087 = vmax.f32 %v5831, %v6023
    %v6088 = vmax.f32 %v5832, %v6024
    %v6089 = vmax.f32 %v5833, %v6025
    %v6090 = vmax.f32 %v5834, %v6026
    %v6091 = vmax.f32 %v5835, %v6027
    %v6092 = vmax.f32 %v5836, %v6028
    %v6093 = vmax.f32 %v5837, %v6029
    %v6094 = vmax.f32 %v5838, %v6030
    %v6095 = vmax.f32 %v5839, %v6031
    %v6096 = vmax.f32 %v5840, %v6032
    %v6097 = vmax.f32 %v5841, %v6033
    %v6098 = vmax.f32 %v5842, %v6034
    %v6099 = vmax.f32 %v5843, %v6035
    %v6100 = vmax.f32 %v5844, %v6036
    %v6101 = vmax.f32 %v5845, %v6037
    %v6102 = vmax.f32 %v5846, %v6038
    %v6103 = vmax.f32 %v5847, %v6039
    %v6104 = vmax.f32 %v5848, %v6040
    %v6105 = vmax.f32 %v5849, %v6041
    %v6106 = vmax.f32 %v5850, %v6042
    %v6107 = vmax.f32 %v5851, %v6043
    %v6108 = vmax.f32 %v5852, %v6044
    %v6109 = vmax.f32 %v5853, %v6045
    %v6110 = vmax.f32 %v5854, %v6046
    %v6111 = vmax.f32 %v5855, %v6047
    %v6112 = vmax.f32 %v5856, %v6048
    %v6113 = vmax.f32 %v5857, %v6049
    %v6114 = vmax.f32 %v5858, %v6050
    %v6115 = vmax.f32 %v5859, %v6051
    %v6116 = vmax.f32 %v5860, %v6052
    %v6117 = vmax.f32 %v5861, %v6053
    %v6118 = vmax.f32 %v5862, %v6054
    %v6119 = vmax.f32 %v5863, %v6055
    %v6120 = vmax.f32 %v5864, %v6056
    %v6121 = vmax.f32 %v5865, %v6057
    %v6122 = vmax.f32 %v5866, %v6058
    %v6123 = vmax.f32 %v5867, %v6059
    %v6124 = vrot.slane %v5548, 1
    %v6125 = vrot.slane %v5549, 1
    %v6126 = vrot.slane %v5550, 1
    %v6127 = vrot.slane %v5551, 1
    %v6128 = vrot.slane %v5552, 1
    %v6129 = vrot.slane %v5553, 1
    %v6130 = vrot.slane %v5554, 1
    %v6131 = vrot.slane %v5555, 1
    %v6132 = vrot.slane %v5556, 1
    %v6133 = vrot.slane %v5557, 1
    %v6134 = vrot.slane %v5558, 1
    %v6135 = vrot.slane %v5559, 1
    %v6136 = vrot.slane %v5560, 1
    %v6137 = vrot.slane %v5561, 1
    %v6138 = vrot.slane %v5562, 1
    %v6139 = vrot.slane %v5563, 1
    %v6140 = vrot.slane %v5564, 1
    %v6141 = vrot.slane %v5565, 1
    %v6142 = vrot.slane %v5566, 1
    %v6143 = vrot.slane %v5567, 1
    %v6144 = vrot.slane %v5568, 1
    %v6145 = vrot.slane %v5569, 1
    %v6146 = vrot.slane %v5570, 1
    %v6147 = vrot.slane %v5571, 1
    %v6148 = vrot.slane %v5572, 1
    %v6149 = vrot.slane %v5573, 1
    %v6150 = vrot.slane %v5574, 1
    %v6151 = vrot.slane %v5575, 1
    %v6152 = vrot.slane %v5576, 1
    %v6153 = vrot.slane %v5577, 1
    %v6154 = vrot.slane %v5578, 1
    %v6155 = vrot.slane %v5579, 1
    %v6156 = vrot.slane %v5580, 1
    %v6157 = vrot.slane %v5581, 1
    %v6158 = vrot.slane %v5582, 1
    %v6159 = vrot.slane %v5583, 1
    %v6160 = vrot.slane %v5584, 1
    %v6161 = vrot.slane %v5585, 1
    %v6162 = vrot.slane %v5586, 1
    %v6163 = vrot.slane %v5587, 1
    %v6164 = vrot.slane %v5588, 1
    %v6165 = vrot.slane %v5589, 1
    %v6166 = vrot.slane %v5590, 1
    %v6167 = vrot.slane %v5591, 1
    %v6168 = vrot.slane %v5592, 1
    %v6169 = vrot.slane %v5593, 1
    %v6170 = vrot.slane %v5594, 1
    %v6171 = vrot.slane %v5595, 1
    %v6172 = vrot.slane %v5596, 1
    %v6173 = vrot.slane %v5597, 1
    %v6174 = vrot.slane %v5598, 1
    %v6175 = vrot.slane %v5599, 1
    %v6176 = vrot.slane %v5600, 1
    %v6177 = vrot.slane %v5601, 1
    %v6178 = vrot.slane %v5602, 1
    %v6179 = vrot.slane %v5603, 1
    %v6180 = vrot.slane %v5604, 1
    %v6181 = vrot.slane %v5605, 1
    %v6182 = vrot.slane %v5606, 1
    %v6183 = vrot.slane %v5607, 1
    %v6184 = vrot.slane %v5608, 1
    %v6185 = vrot.slane %v5609, 1
    %v6186 = vrot.slane %v5610, 1
    %v6187 = vrot.slane %v5611, 1
    %v6188 = vsel %vm1025, %v6186, %v6187
    %v6189 = vsel %vm1025, %v6185, %v6186
    %v6190 = vsel %vm1025, %v6184, %v6185
    %v6191 = vsel %vm1025, %v6183, %v6184
    %v6192 = vsel %vm1025, %v6182, %v6183
    %v6193 = vsel %vm1025, %v6181, %v6182
    %v6194 = vsel %vm1025, %v6180, %v6181
    %v6195 = vsel %vm1025, %v6179, %v6180
    %v6196 = vsel %vm1025, %v6178, %v6179
    %v6197 = vsel %vm1025, %v6177, %v6178
    %v6198 = vsel %vm1025, %v6176, %v6177
    %v6199 = vsel %vm1025, %v6175, %v6176
    %v6200 = vsel %vm1025, %v6174, %v6175
    %v6201 = vsel %vm1025, %v6173, %v6174
    %v6202 = vsel %vm1025, %v6172, %v6173
    %v6203 = vsel %vm1025, %v6171, %v6172
    %v6204 = vsel %vm1025, %v6170, %v6171
    %v6205 = vsel %vm1025, %v6169, %v6170
    %v6206 = vsel %vm1025, %v6168, %v6169
    %v6207 = vsel %vm1025, %v6167, %v6168
    %v6208 = vsel %vm1025, %v6166, %v6167
    %v6209 = vsel %vm1025, %v6165, %v6166
    %v6210 = vsel %vm1025, %v6164, %v6165
    %v6211 = vsel %vm1025, %v6163, %v6164
    %v6212 = vsel %vm1025, %v6162, %v6163
    %v6213 = vsel %vm1025, %v6161, %v6162
    %v6214 = vsel %vm1025, %v6160, %v6161
    %v6215 = vsel %vm1025, %v6159, %v6160
    %v6216 = vsel %vm1025, %v6158, %v6159
    %v6217 = vsel %vm1025, %v6157, %v6158
    %v6218 = vsel %vm1025, %v6156, %v6157
    %v6219 = vsel %vm1025, %v6155, %v6156
    %v6220 = vsel %vm1025, %v6154, %v6155
    %v6221 = vsel %vm1025, %v6153, %v6154
    %v6222 = vsel %vm1025, %v6152, %v6153
    %v6223 = vsel %vm1025, %v6151, %v6152
    %v6224 = vsel %vm1025, %v6150, %v6151
    %v6225 = vsel %vm1025, %v6149, %v6150
    %v6226 = vsel %vm1025, %v6148, %v6149
    %v6227 = vsel %vm1025, %v6147, %v6148
    %v6228 = vsel %vm1025, %v6146, %v6147
    %v6229 = vsel %vm1025, %v6145, %v6146
    %v6230 = vsel %vm1025, %v6144, %v6145
    %v6231 = vsel %vm1025, %v6143, %v6144
    %v6232 = vsel %vm1025, %v6142, %v6143
    %v6233 = vsel %vm1025, %v6141, %v6142
    %v6234 = vsel %vm1025, %v6140, %v6141
    %v6235 = vsel %vm1025, %v6139, %v6140
    %v6236 = vsel %vm1025, %v6138, %v6139
    %v6237 = vsel %vm1025, %v6137, %v6138
    %v6238 = vsel %vm1025, %v6136, %v6137
    %v6239 = vsel %vm1025, %v6135, %v6136
    %v6240 = vsel %vm1025, %v6134, %v6135
    %v6241 = vsel %vm1025, %v6133, %v6134
    %v6242 = vsel %vm1025, %v6132, %v6133
    %v6243 = vsel %vm1025, %v6131, %v6132
    %v6244 = vsel %vm1025, %v6130, %v6131
    %v6245 = vsel %vm1025, %v6129, %v6130
    %v6246 = vsel %vm1025, %v6128, %v6129
    %v6247 = vsel %vm1025, %v6127, %v6128
    %v6248 = vsel %vm1025, %v6126, %v6127
    %v6249 = vsel %vm1025, %v6125, %v6126
    %v6250 = vsel %vm1025, %v6124, %v6125
    %v6251 = vsel %vm1025, %v6187, %v6124
    %v6252 = vsel %vm1282, %v6250, -1e+30
    %v6253 = vsel %vm1283, %v6249, -1e+30
    %v6254 = vsel %vm1284, %v6248, -1e+30
    %v6255 = vsel %vm1285, %v6247, -1e+30
    %v6256 = vsel %vm1286, %v6246, -1e+30
    %v6257 = vsel %vm1287, %v6245, -1e+30
    %v6258 = vsel %vm1288, %v6244, -1e+30
    %v6259 = vsel %vm1289, %v6243, -1e+30
    %v6260 = vsel %vm1290, %v6242, -1e+30
    %v6261 = vsel %vm1291, %v6241, -1e+30
    %v6262 = vsel %vm1292, %v6240, -1e+30
    %v6263 = vsel %vm1293, %v6239, -1e+30
    %v6264 = vsel %vm1294, %v6238, -1e+30
    %v6265 = vsel %vm1295, %v6237, -1e+30
    %v6266 = vsel %vm1296, %v6236, -1e+30
    %v6267 = vsel %vm1297, %v6235, -1e+30
    %v6268 = vsel %vm1298, %v6234, -1e+30
    %v6269 = vsel %vm1299, %v6233, -1e+30
    %v6270 = vsel %vm1300, %v6232, -1e+30
    %v6271 = vsel %vm1301, %v6231, -1e+30
    %v6272 = vsel %vm1302, %v6230, -1e+30
    %v6273 = vsel %vm1303, %v6229, -1e+30
    %v6274 = vsel %vm1304, %v6228, -1e+30
    %v6275 = vsel %vm1305, %v6227, -1e+30
    %v6276 = vsel %vm1306, %v6226, -1e+30
    %v6277 = vsel %vm1307, %v6225, -1e+30
    %v6278 = vsel %vm1308, %v6224, -1e+30
    %v6279 = vsel %vm1309, %v6223, -1e+30
    %v6280 = vsel %vm1310, %v6222, -1e+30
    %v6281 = vsel %vm1311, %v6221, -1e+30
    %v6282 = vsel %vm1312, %v6220, -1e+30
    %v6283 = vsel %vm1313, %v6219, -1e+30
    %v6284 = vsel %vm1314, %v6218, -1e+30
    %v6285 = vsel %vm1315, %v6217, -1e+30
    %v6286 = vsel %vm1316, %v6216, -1e+30
    %v6287 = vsel %vm1317, %v6215, -1e+30
    %v6288 = vsel %vm1318, %v6214, -1e+30
    %v6289 = vsel %vm1319, %v6213, -1e+30
    %v6290 = vsel %vm1320, %v6212, -1e+30
    %v6291 = vsel %vm1321, %v6211, -1e+30
    %v6292 = vsel %vm1322, %v6210, -1e+30
    %v6293 = vsel %vm1323, %v6209, -1e+30
    %v6294 = vsel %vm1324, %v6208, -1e+30
    %v6295 = vsel %vm1325, %v6207, -1e+30
    %v6296 = vsel %vm1326, %v6206, -1e+30
    %v6297 = vsel %vm1327, %v6205, -1e+30
    %v6298 = vsel %vm1328, %v6204, -1e+30
    %v6299 = vsel %vm1329, %v6203, -1e+30
    %v6300 = vsel %vm1330, %v6202, -1e+30
    %v6301 = vsel %vm1331, %v6201, -1e+30
    %v6302 = vsel %vm1332, %v6200, -1e+30
    %v6303 = vsel %vm1333, %v6199, -1e+30
    %v6304 = vsel %vm1334, %v6198, -1e+30
    %v6305 = vsel %vm1335, %v6197, -1e+30
    %v6306 = vsel %vm1336, %v6196, -1e+30
    %v6307 = vsel %vm1337, %v6195, -1e+30
    %v6308 = vsel %vm1338, %v6194, -1e+30
    %v6309 = vsel %vm1339, %v6193, -1e+30
    %v6310 = vsel %vm1340, %v6192, -1e+30
    %v6311 = vsel %vm1341, %v6191, -1e+30
    %v6312 = vsel %vm1342, %v6190, -1e+30
    %v6313 = vsel %vm1343, %v6189, -1e+30
    %v6314 = vsel %vm1344, %v6188, -1e+30
    %v6315 = vsel %vm1345, %v6251, -1e+30
    %v6316 = vmax.f32 %v6060, %v6252
    %v6317 = vmax.f32 %v6061, %v6253
    %v6318 = vmax.f32 %v6062, %v6254
    %v6319 = vmax.f32 %v6063, %v6255
    %v6320 = vmax.f32 %v6064, %v6256
    %v6321 = vmax.f32 %v6065, %v6257
    %v6322 = vmax.f32 %v6066, %v6258
    %v6323 = vmax.f32 %v6067, %v6259
    %v6324 = vmax.f32 %v6068, %v6260
    %v6325 = vmax.f32 %v6069, %v6261
    %v6326 = vmax.f32 %v6070, %v6262
    %v6327 = vmax.f32 %v6071, %v6263
    %v6328 = vmax.f32 %v6072, %v6264
    %v6329 = vmax.f32 %v6073, %v6265
    %v6330 = vmax.f32 %v6074, %v6266
    %v6331 = vmax.f32 %v6075, %v6267
    %v6332 = vmax.f32 %v6076, %v6268
    %v6333 = vmax.f32 %v6077, %v6269
    %v6334 = vmax.f32 %v6078, %v6270
    %v6335 = vmax.f32 %v6079, %v6271
    %v6336 = vmax.f32 %v6080, %v6272
    %v6337 = vmax.f32 %v6081, %v6273
    %v6338 = vmax.f32 %v6082, %v6274
    %v6339 = vmax.f32 %v6083, %v6275
    %v6340 = vmax.f32 %v6084, %v6276
    %v6341 = vmax.f32 %v6085, %v6277
    %v6342 = vmax.f32 %v6086, %v6278
    %v6343 = vmax.f32 %v6087, %v6279
    %v6344 = vmax.f32 %v6088, %v6280
    %v6345 = vmax.f32 %v6089, %v6281
    %v6346 = vmax.f32 %v6090, %v6282
    %v6347 = vmax.f32 %v6091, %v6283
    %v6348 = vmax.f32 %v6092, %v6284
    %v6349 = vmax.f32 %v6093, %v6285
    %v6350 = vmax.f32 %v6094, %v6286
    %v6351 = vmax.f32 %v6095, %v6287
    %v6352 = vmax.f32 %v6096, %v6288
    %v6353 = vmax.f32 %v6097, %v6289
    %v6354 = vmax.f32 %v6098, %v6290
    %v6355 = vmax.f32 %v6099, %v6291
    %v6356 = vmax.f32 %v6100, %v6292
    %v6357 = vmax.f32 %v6101, %v6293
    %v6358 = vmax.f32 %v6102, %v6294
    %v6359 = vmax.f32 %v6103, %v6295
    %v6360 = vmax.f32 %v6104, %v6296
    %v6361 = vmax.f32 %v6105, %v6297
    %v6362 = vmax.f32 %v6106, %v6298
    %v6363 = vmax.f32 %v6107, %v6299
    %v6364 = vmax.f32 %v6108, %v6300
    %v6365 = vmax.f32 %v6109, %v6301
    %v6366 = vmax.f32 %v6110, %v6302
    %v6367 = vmax.f32 %v6111, %v6303
    %v6368 = vmax.f32 %v6112, %v6304
    %v6369 = vmax.f32 %v6113, %v6305
    %v6370 = vmax.f32 %v6114, %v6306
    %v6371 = vmax.f32 %v6115, %v6307
    %v6372 = vmax.f32 %v6116, %v6308
    %v6373 = vmax.f32 %v6117, %v6309
    %v6374 = vmax.f32 %v6118, %v6310
    %v6375 = vmax.f32 %v6119, %v6311
    %v6376 = vmax.f32 %v6120, %v6312
    %v6377 = vmax.f32 %v6121, %v6313
    %v6378 = vmax.f32 %v6122, %v6314
    %v6379 = vmax.f32 %v6123, %v6315
    %v6380 = vrot.slane %v5548, 2
    %v6381 = vrot.slane %v5549, 2
    %v6382 = vrot.slane %v5550, 2
    %v6383 = vrot.slane %v5551, 2
    %v6384 = vrot.slane %v5552, 2
    %v6385 = vrot.slane %v5553, 2
    %v6386 = vrot.slane %v5554, 2
    %v6387 = vrot.slane %v5555, 2
    %v6388 = vrot.slane %v5556, 2
    %v6389 = vrot.slane %v5557, 2
    %v6390 = vrot.slane %v5558, 2
    %v6391 = vrot.slane %v5559, 2
    %v6392 = vrot.slane %v5560, 2
    %v6393 = vrot.slane %v5561, 2
    %v6394 = vrot.slane %v5562, 2
    %v6395 = vrot.slane %v5563, 2
    %v6396 = vrot.slane %v5564, 2
    %v6397 = vrot.slane %v5565, 2
    %v6398 = vrot.slane %v5566, 2
    %v6399 = vrot.slane %v5567, 2
    %v6400 = vrot.slane %v5568, 2
    %v6401 = vrot.slane %v5569, 2
    %v6402 = vrot.slane %v5570, 2
    %v6403 = vrot.slane %v5571, 2
    %v6404 = vrot.slane %v5572, 2
    %v6405 = vrot.slane %v5573, 2
    %v6406 = vrot.slane %v5574, 2
    %v6407 = vrot.slane %v5575, 2
    %v6408 = vrot.slane %v5576, 2
    %v6409 = vrot.slane %v5577, 2
    %v6410 = vrot.slane %v5578, 2
    %v6411 = vrot.slane %v5579, 2
    %v6412 = vrot.slane %v5580, 2
    %v6413 = vrot.slane %v5581, 2
    %v6414 = vrot.slane %v5582, 2
    %v6415 = vrot.slane %v5583, 2
    %v6416 = vrot.slane %v5584, 2
    %v6417 = vrot.slane %v5585, 2
    %v6418 = vrot.slane %v5586, 2
    %v6419 = vrot.slane %v5587, 2
    %v6420 = vrot.slane %v5588, 2
    %v6421 = vrot.slane %v5589, 2
    %v6422 = vrot.slane %v5590, 2
    %v6423 = vrot.slane %v5591, 2
    %v6424 = vrot.slane %v5592, 2
    %v6425 = vrot.slane %v5593, 2
    %v6426 = vrot.slane %v5594, 2
    %v6427 = vrot.slane %v5595, 2
    %v6428 = vrot.slane %v5596, 2
    %v6429 = vrot.slane %v5597, 2
    %v6430 = vrot.slane %v5598, 2
    %v6431 = vrot.slane %v5599, 2
    %v6432 = vrot.slane %v5600, 2
    %v6433 = vrot.slane %v5601, 2
    %v6434 = vrot.slane %v5602, 2
    %v6435 = vrot.slane %v5603, 2
    %v6436 = vrot.slane %v5604, 2
    %v6437 = vrot.slane %v5605, 2
    %v6438 = vrot.slane %v5606, 2
    %v6439 = vrot.slane %v5607, 2
    %v6440 = vrot.slane %v5608, 2
    %v6441 = vrot.slane %v5609, 2
    %v6442 = vrot.slane %v5610, 2
    %v6443 = vrot.slane %v5611, 2
    %v6444 = vsel %vm1410, %v6442, %v6443
    %v6445 = vsel %vm1410, %v6441, %v6442
    %v6446 = vsel %vm1410, %v6440, %v6441
    %v6447 = vsel %vm1410, %v6439, %v6440
    %v6448 = vsel %vm1410, %v6438, %v6439
    %v6449 = vsel %vm1410, %v6437, %v6438
    %v6450 = vsel %vm1410, %v6436, %v6437
    %v6451 = vsel %vm1410, %v6435, %v6436
    %v6452 = vsel %vm1410, %v6434, %v6435
    %v6453 = vsel %vm1410, %v6433, %v6434
    %v6454 = vsel %vm1410, %v6432, %v6433
    %v6455 = vsel %vm1410, %v6431, %v6432
    %v6456 = vsel %vm1410, %v6430, %v6431
    %v6457 = vsel %vm1410, %v6429, %v6430
    %v6458 = vsel %vm1410, %v6428, %v6429
    %v6459 = vsel %vm1410, %v6427, %v6428
    %v6460 = vsel %vm1410, %v6426, %v6427
    %v6461 = vsel %vm1410, %v6425, %v6426
    %v6462 = vsel %vm1410, %v6424, %v6425
    %v6463 = vsel %vm1410, %v6423, %v6424
    %v6464 = vsel %vm1410, %v6422, %v6423
    %v6465 = vsel %vm1410, %v6421, %v6422
    %v6466 = vsel %vm1410, %v6420, %v6421
    %v6467 = vsel %vm1410, %v6419, %v6420
    %v6468 = vsel %vm1410, %v6418, %v6419
    %v6469 = vsel %vm1410, %v6417, %v6418
    %v6470 = vsel %vm1410, %v6416, %v6417
    %v6471 = vsel %vm1410, %v6415, %v6416
    %v6472 = vsel %vm1410, %v6414, %v6415
    %v6473 = vsel %vm1410, %v6413, %v6414
    %v6474 = vsel %vm1410, %v6412, %v6413
    %v6475 = vsel %vm1410, %v6411, %v6412
    %v6476 = vsel %vm1410, %v6410, %v6411
    %v6477 = vsel %vm1410, %v6409, %v6410
    %v6478 = vsel %vm1410, %v6408, %v6409
    %v6479 = vsel %vm1410, %v6407, %v6408
    %v6480 = vsel %vm1410, %v6406, %v6407
    %v6481 = vsel %vm1410, %v6405, %v6406
    %v6482 = vsel %vm1410, %v6404, %v6405
    %v6483 = vsel %vm1410, %v6403, %v6404
    %v6484 = vsel %vm1410, %v6402, %v6403
    %v6485 = vsel %vm1410, %v6401, %v6402
    %v6486 = vsel %vm1410, %v6400, %v6401
    %v6487 = vsel %vm1410, %v6399, %v6400
    %v6488 = vsel %vm1410, %v6398, %v6399
    %v6489 = vsel %vm1410, %v6397, %v6398
    %v6490 = vsel %vm1410, %v6396, %v6397
    %v6491 = vsel %vm1410, %v6395, %v6396
    %v6492 = vsel %vm1410, %v6394, %v6395
    %v6493 = vsel %vm1410, %v6393, %v6394
    %v6494 = vsel %vm1410, %v6392, %v6393
    %v6495 = vsel %vm1410, %v6391, %v6392
    %v6496 = vsel %vm1410, %v6390, %v6391
    %v6497 = vsel %vm1410, %v6389, %v6390
    %v6498 = vsel %vm1410, %v6388, %v6389
    %v6499 = vsel %vm1410, %v6387, %v6388
    %v6500 = vsel %vm1410, %v6386, %v6387
    %v6501 = vsel %vm1410, %v6385, %v6386
    %v6502 = vsel %vm1410, %v6384, %v6385
    %v6503 = vsel %vm1410, %v6383, %v6384
    %v6504 = vsel %vm1410, %v6382, %v6383
    %v6505 = vsel %vm1410, %v6381, %v6382
    %v6506 = vsel %vm1410, %v6380, %v6381
    %v6507 = vsel %vm1410, %v6443, %v6380
    %v6508 = vsel %vm1667, %v6506, -1e+30
    %v6509 = vsel %vm1668, %v6505, -1e+30
    %v6510 = vsel %vm1669, %v6504, -1e+30
    %v6511 = vsel %vm1670, %v6503, -1e+30
    %v6512 = vsel %vm1671, %v6502, -1e+30
    %v6513 = vsel %vm1672, %v6501, -1e+30
    %v6514 = vsel %vm1673, %v6500, -1e+30
    %v6515 = vsel %vm1674, %v6499, -1e+30
    %v6516 = vsel %vm1675, %v6498, -1e+30
    %v6517 = vsel %vm1676, %v6497, -1e+30
    %v6518 = vsel %vm1677, %v6496, -1e+30
    %v6519 = vsel %vm1678, %v6495, -1e+30
    %v6520 = vsel %vm1679, %v6494, -1e+30
    %v6521 = vsel %vm1680, %v6493, -1e+30
    %v6522 = vsel %vm1681, %v6492, -1e+30
    %v6523 = vsel %vm1682, %v6491, -1e+30
    %v6524 = vsel %vm1683, %v6490, -1e+30
    %v6525 = vsel %vm1684, %v6489, -1e+30
    %v6526 = vsel %vm1685, %v6488, -1e+30
    %v6527 = vsel %vm1686, %v6487, -1e+30
    %v6528 = vsel %vm1687, %v6486, -1e+30
    %v6529 = vsel %vm1688, %v6485, -1e+30
    %v6530 = vsel %vm1689, %v6484, -1e+30
    %v6531 = vsel %vm1690, %v6483, -1e+30
    %v6532 = vsel %vm1691, %v6482, -1e+30
    %v6533 = vsel %vm1692, %v6481, -1e+30
    %v6534 = vsel %vm1693, %v6480, -1e+30
    %v6535 = vsel %vm1694, %v6479, -1e+30
    %v6536 = vsel %vm1695, %v6478, -1e+30
    %v6537 = vsel %vm1696, %v6477, -1e+30
    %v6538 = vsel %vm1697, %v6476, -1e+30
    %v6539 = vsel %vm1698, %v6475, -1e+30
    %v6540 = vsel %vm1699, %v6474, -1e+30
    %v6541 = vsel %vm1700, %v6473, -1e+30
    %v6542 = vsel %vm1701, %v6472, -1e+30
    %v6543 = vsel %vm1702, %v6471, -1e+30
    %v6544 = vsel %vm1703, %v6470, -1e+30
    %v6545 = vsel %vm1704, %v6469, -1e+30
    %v6546 = vsel %vm1705, %v6468, -1e+30
    %v6547 = vsel %vm1706, %v6467, -1e+30
    %v6548 = vsel %vm1707, %v6466, -1e+30
    %v6549 = vsel %vm1708, %v6465, -1e+30
    %v6550 = vsel %vm1709, %v6464, -1e+30
    %v6551 = vsel %vm1710, %v6463, -1e+30
    %v6552 = vsel %vm1711, %v6462, -1e+30
    %v6553 = vsel %vm1712, %v6461, -1e+30
    %v6554 = vsel %vm1713, %v6460, -1e+30
    %v6555 = vsel %vm1714, %v6459, -1e+30
    %v6556 = vsel %vm1715, %v6458, -1e+30
    %v6557 = vsel %vm1716, %v6457, -1e+30
    %v6558 = vsel %vm1717, %v6456, -1e+30
    %v6559 = vsel %vm1718, %v6455, -1e+30
    %v6560 = vsel %vm1719, %v6454, -1e+30
    %v6561 = vsel %vm1720, %v6453, -1e+30
    %v6562 = vsel %vm1721, %v6452, -1e+30
    %v6563 = vsel %vm1722, %v6451, -1e+30
    %v6564 = vsel %vm1723, %v6450, -1e+30
    %v6565 = vsel %vm1724, %v6449, -1e+30
    %v6566 = vsel %vm1725, %v6448, -1e+30
    %v6567 = vsel %vm1726, %v6447, -1e+30
    %v6568 = vsel %vm1727, %v6446, -1e+30
    %v6569 = vsel %vm1728, %v6445, -1e+30
    %v6570 = vsel %vm1729, %v6444, -1e+30
    %v6571 = vsel %vm1730, %v6507, -1e+30
    %v6572 = vmax.f32 %v6316, %v6508
    %v6573 = vmax.f32 %v6317, %v6509
    %v6574 = vmax.f32 %v6318, %v6510
    %v6575 = vmax.f32 %v6319, %v6511
    %v6576 = vmax.f32 %v6320, %v6512
    %v6577 = vmax.f32 %v6321, %v6513
    %v6578 = vmax.f32 %v6322, %v6514
    %v6579 = vmax.f32 %v6323, %v6515
    %v6580 = vmax.f32 %v6324, %v6516
    %v6581 = vmax.f32 %v6325, %v6517
    %v6582 = vmax.f32 %v6326, %v6518
    %v6583 = vmax.f32 %v6327, %v6519
    %v6584 = vmax.f32 %v6328, %v6520
    %v6585 = vmax.f32 %v6329, %v6521
    %v6586 = vmax.f32 %v6330, %v6522
    %v6587 = vmax.f32 %v6331, %v6523
    %v6588 = vmax.f32 %v6332, %v6524
    %v6589 = vmax.f32 %v6333, %v6525
    %v6590 = vmax.f32 %v6334, %v6526
    %v6591 = vmax.f32 %v6335, %v6527
    %v6592 = vmax.f32 %v6336, %v6528
    %v6593 = vmax.f32 %v6337, %v6529
    %v6594 = vmax.f32 %v6338, %v6530
    %v6595 = vmax.f32 %v6339, %v6531
    %v6596 = vmax.f32 %v6340, %v6532
    %v6597 = vmax.f32 %v6341, %v6533
    %v6598 = vmax.f32 %v6342, %v6534
    %v6599 = vmax.f32 %v6343, %v6535
    %v6600 = vmax.f32 %v6344, %v6536
    %v6601 = vmax.f32 %v6345, %v6537
    %v6602 = vmax.f32 %v6346, %v6538
    %v6603 = vmax.f32 %v6347, %v6539
    %v6604 = vmax.f32 %v6348, %v6540
    %v6605 = vmax.f32 %v6349, %v6541
    %v6606 = vmax.f32 %v6350, %v6542
    %v6607 = vmax.f32 %v6351, %v6543
    %v6608 = vmax.f32 %v6352, %v6544
    %v6609 = vmax.f32 %v6353, %v6545
    %v6610 = vmax.f32 %v6354, %v6546
    %v6611 = vmax.f32 %v6355, %v6547
    %v6612 = vmax.f32 %v6356, %v6548
    %v6613 = vmax.f32 %v6357, %v6549
    %v6614 = vmax.f32 %v6358, %v6550
    %v6615 = vmax.f32 %v6359, %v6551
    %v6616 = vmax.f32 %v6360, %v6552
    %v6617 = vmax.f32 %v6361, %v6553
    %v6618 = vmax.f32 %v6362, %v6554
    %v6619 = vmax.f32 %v6363, %v6555
    %v6620 = vmax.f32 %v6364, %v6556
    %v6621 = vmax.f32 %v6365, %v6557
    %v6622 = vmax.f32 %v6366, %v6558
    %v6623 = vmax.f32 %v6367, %v6559
    %v6624 = vmax.f32 %v6368, %v6560
    %v6625 = vmax.f32 %v6369, %v6561
    %v6626 = vmax.f32 %v6370, %v6562
    %v6627 = vmax.f32 %v6371, %v6563
    %v6628 = vmax.f32 %v6372, %v6564
    %v6629 = vmax.f32 %v6373, %v6565
    %v6630 = vmax.f32 %v6374, %v6566
    %v6631 = vmax.f32 %v6375, %v6567
    %v6632 = vmax.f32 %v6376, %v6568
    %v6633 = vmax.f32 %v6377, %v6569
    %v6634 = vmax.f32 %v6378, %v6570
    %v6635 = vmax.f32 %v6379, %v6571
    %v6636 = vmax.f32 %v6572, -1e+30
    %v6637 = vmax.f32 %v6573, -1e+30
    %v6638 = vmax.f32 %v6572, %v6574
    %v6639 = vmax.f32 %v6573, %v6575
    %v6640 = vmax.f32 %v6574, %v6576
    %v6641 = vmax.f32 %v6575, %v6577
    %v6642 = vmax.f32 %v6576, %v6578
    %v6643 = vmax.f32 %v6577, %v6579
    %v6644 = vmax.f32 %v6578, %v6580
    %v6645 = vmax.f32 %v6579, %v6581
    %v6646 = vmax.f32 %v6580, %v6582
    %v6647 = vmax.f32 %v6581, %v6583
    %v6648 = vmax.f32 %v6582, %v6584
    %v6649 = vmax.f32 %v6583, %v6585
    %v6650 = vmax.f32 %v6584, %v6586
    %v6651 = vmax.f32 %v6585, %v6587
    %v6652 = vmax.f32 %v6586, %v6588
    %v6653 = vmax.f32 %v6587, %v6589
    %v6654 = vmax.f32 %v6588, %v6590
    %v6655 = vmax.f32 %v6589, %v6591
    %v6656 = vmax.f32 %v6590, %v6592
    %v6657 = vmax.f32 %v6591, %v6593
    %v6658 = vmax.f32 %v6592, %v6594
    %v6659 = vmax.f32 %v6593, %v6595
    %v6660 = vmax.f32 %v6594, %v6596
    %v6661 = vmax.f32 %v6595, %v6597
    %v6662 = vmax.f32 %v6596, %v6598
    %v6663 = vmax.f32 %v6597, %v6599
    %v6664 = vmax.f32 %v6598, %v6600
    %v6665 = vmax.f32 %v6599, %v6601
    %v6666 = vmax.f32 %v6600, %v6602
    %v6667 = vmax.f32 %v6601, %v6603
    %v6668 = vmax.f32 %v6602, -1e+30
    %v6669 = vmax.f32 %v6603, -1e+30
    %v6670 = vmax.f32 %v6604, -1e+30
    %v6671 = vmax.f32 %v6605, -1e+30
    %v6672 = vmax.f32 %v6604, %v6606
    %v6673 = vmax.f32 %v6605, %v6607
    %v6674 = vmax.f32 %v6606, %v6608
    %v6675 = vmax.f32 %v6607, %v6609
    %v6676 = vmax.f32 %v6608, %v6610
    %v6677 = vmax.f32 %v6609, %v6611
    %v6678 = vmax.f32 %v6610, %v6612
    %v6679 = vmax.f32 %v6611, %v6613
    %v6680 = vmax.f32 %v6612, %v6614
    %v6681 = vmax.f32 %v6613, %v6615
    %v6682 = vmax.f32 %v6614, %v6616
    %v6683 = vmax.f32 %v6615, %v6617
    %v6684 = vmax.f32 %v6616, %v6618
    %v6685 = vmax.f32 %v6617, %v6619
    %v6686 = vmax.f32 %v6618, %v6620
    %v6687 = vmax.f32 %v6619, %v6621
    %v6688 = vmax.f32 %v6620, %v6622
    %v6689 = vmax.f32 %v6621, %v6623
    %v6690 = vmax.f32 %v6622, %v6624
    %v6691 = vmax.f32 %v6623, %v6625
    %v6692 = vmax.f32 %v6624, %v6626
    %v6693 = vmax.f32 %v6625, %v6627
    %v6694 = vmax.f32 %v6626, %v6628
    %v6695 = vmax.f32 %v6627, %v6629
    %v6696 = vmax.f32 %v6628, %v6630
    %v6697 = vmax.f32 %v6629, %v6631
    %v6698 = vmax.f32 %v6630, %v6632
    %v6699 = vmax.f32 %v6631, %v6633
    %v6700 = vmax.f32 %v6632, %v6634
    %v6701 = vmax.f32 %v6633, %v6635
    %v6702 = vmax.f32 %v6634, -1e+30
    %v6703 = vmax.f32 %v6635, -1e+30
    %v6704 = vmax.f32 %v6638, -1e+30
    %v6705 = vmax.f32 %v6639, -1e+30
    %v6706 = vmax.f32 %v6636, %v6640
    %v6707 = vmax.f32 %v6637, %v6641
    %v6708 = vmax.f32 %v6638, %v6642
    %v6709 = vmax.f32 %v6639, %v6643
    %v6710 = vmax.f32 %v6640, %v6644
    %v6711 = vmax.f32 %v6641, %v6645
    %v6712 = vmax.f32 %v6642, %v6646
    %v6713 = vmax.f32 %v6643, %v6647
    %v6714 = vmax.f32 %v6644, %v6648
    %v6715 = vmax.f32 %v6645, %v6649
    %v6716 = vmax.f32 %v6646, %v6650
    %v6717 = vmax.f32 %v6647, %v6651
    %v6718 = vmax.f32 %v6648, %v6652
    %v6719 = vmax.f32 %v6649, %v6653
    %v6720 = vmax.f32 %v6650, %v6654
    %v6721 = vmax.f32 %v6651, %v6655
    %v6722 = vmax.f32 %v6652, %v6656
    %v6723 = vmax.f32 %v6653, %v6657
    %v6724 = vmax.f32 %v6654, %v6658
    %v6725 = vmax.f32 %v6655, %v6659
    %v6726 = vmax.f32 %v6656, %v6660
    %v6727 = vmax.f32 %v6657, %v6661
    %v6728 = vmax.f32 %v6658, %v6662
    %v6729 = vmax.f32 %v6659, %v6663
    %v6730 = vmax.f32 %v6660, %v6664
    %v6731 = vmax.f32 %v6661, %v6665
    %v6732 = vmax.f32 %v6662, %v6666
    %v6733 = vmax.f32 %v6663, %v6667
    %v6734 = vmax.f32 %v6664, %v6668
    %v6735 = vmax.f32 %v6665, %v6669
    %v6736 = vmax.f32 %v6672, -1e+30
    %v6737 = vmax.f32 %v6673, -1e+30
    %v6738 = vmax.f32 %v6670, %v6674
    %v6739 = vmax.f32 %v6671, %v6675
    %v6740 = vmax.f32 %v6672, %v6676
    %v6741 = vmax.f32 %v6673, %v6677
    %v6742 = vmax.f32 %v6674, %v6678
    %v6743 = vmax.f32 %v6675, %v6679
    %v6744 = vmax.f32 %v6676, %v6680
    %v6745 = vmax.f32 %v6677, %v6681
    %v6746 = vmax.f32 %v6678, %v6682
    %v6747 = vmax.f32 %v6679, %v6683
    %v6748 = vmax.f32 %v6680, %v6684
    %v6749 = vmax.f32 %v6681, %v6685
    %v6750 = vmax.f32 %v6682, %v6686
    %v6751 = vmax.f32 %v6683, %v6687
    %v6752 = vmax.f32 %v6684, %v6688
    %v6753 = vmax.f32 %v6685, %v6689
    %v6754 = vmax.f32 %v6686, %v6690
    %v6755 = vmax.f32 %v6687, %v6691
    %v6756 = vmax.f32 %v6688, %v6692
    %v6757 = vmax.f32 %v6689, %v6693
    %v6758 = vmax.f32 %v6690, %v6694
    %v6759 = vmax.f32 %v6691, %v6695
    %v6760 = vmax.f32 %v6692, %v6696
    %v6761 = vmax.f32 %v6693, %v6697
    %v6762 = vmax.f32 %v6694, %v6698
    %v6763 = vmax.f32 %v6695, %v6699
    %v6764 = vmax.f32 %v6696, %v6700
    %v6765 = vmax.f32 %v6697, %v6701
    %v6766 = vmax.f32 %v6698, %v6702
    %v6767 = vmax.f32 %v6699, %v6703
    %v6768 = vmax.f32 %v6704, %v6576
    %v6769 = vmax.f32 %v6705, %v6577
    %v6770 = vmax.f32 %v6706, %v6578
    %v6771 = vmax.f32 %v6707, %v6579
    %v6772 = vmax.f32 %v6708, %v6580
    %v6773 = vmax.f32 %v6709, %v6581
    %v6774 = vmax.f32 %v6710, %v6582
    %v6775 = vmax.f32 %v6711, %v6583
    %v6776 = vmax.f32 %v6712, %v6584
    %v6777 = vmax.f32 %v6713, %v6585
    %v6778 = vmax.f32 %v6714, %v6586
    %v6779 = vmax.f32 %v6715, %v6587
    %v6780 = vmax.f32 %v6716, %v6588
    %v6781 = vmax.f32 %v6717, %v6589
    %v6782 = vmax.f32 %v6718, %v6590
    %v6783 = vmax.f32 %v6719, %v6591
    %v6784 = vmax.f32 %v6720, %v6592
    %v6785 = vmax.f32 %v6721, %v6593
    %v6786 = vmax.f32 %v6722, %v6594
    %v6787 = vmax.f32 %v6723, %v6595
    %v6788 = vmax.f32 %v6724, %v6596
    %v6789 = vmax.f32 %v6725, %v6597
    %v6790 = vmax.f32 %v6726, %v6598
    %v6791 = vmax.f32 %v6727, %v6599
    %v6792 = vmax.f32 %v6728, %v6600
    %v6793 = vmax.f32 %v6729, %v6601
    %v6794 = vmax.f32 %v6730, %v6602
    %v6795 = vmax.f32 %v6731, %v6603
    %v6796 = vmax.f32 %v6732, -1e+30
    %v6797 = vmax.f32 %v6733, -1e+30
    %v6798 = vmax.f32 %v6734, -1e+30
    %v6799 = vmax.f32 %v6735, -1e+30
    %v6800 = vmax.f32 %v6736, %v6608
    %v6801 = vmax.f32 %v6737, %v6609
    %v6802 = vmax.f32 %v6738, %v6610
    %v6803 = vmax.f32 %v6739, %v6611
    %v6804 = vmax.f32 %v6740, %v6612
    %v6805 = vmax.f32 %v6741, %v6613
    %v6806 = vmax.f32 %v6742, %v6614
    %v6807 = vmax.f32 %v6743, %v6615
    %v6808 = vmax.f32 %v6744, %v6616
    %v6809 = vmax.f32 %v6745, %v6617
    %v6810 = vmax.f32 %v6746, %v6618
    %v6811 = vmax.f32 %v6747, %v6619
    %v6812 = vmax.f32 %v6748, %v6620
    %v6813 = vmax.f32 %v6749, %v6621
    %v6814 = vmax.f32 %v6750, %v6622
    %v6815 = vmax.f32 %v6751, %v6623
    %v6816 = vmax.f32 %v6752, %v6624
    %v6817 = vmax.f32 %v6753, %v6625
    %v6818 = vmax.f32 %v6754, %v6626
    %v6819 = vmax.f32 %v6755, %v6627
    %v6820 = vmax.f32 %v6756, %v6628
    %v6821 = vmax.f32 %v6757, %v6629
    %v6822 = vmax.f32 %v6758, %v6630
    %v6823 = vmax.f32 %v6759, %v6631
    %v6824 = vmax.f32 %v6760, %v6632
    %v6825 = vmax.f32 %v6761, %v6633
    %v6826 = vmax.f32 %v6762, %v6634
    %v6827 = vmax.f32 %v6763, %v6635
    %v6828 = vmax.f32 %v6764, -1e+30
    %v6829 = vmax.f32 %v6765, -1e+30
    %v6830 = vmax.f32 %v6766, -1e+30
    %v6831 = vmax.f32 %v6767, -1e+30
    %6896 = vrot.lane.b32.xlu0 %v6768, 64
    %v6897 = vpop.permute.xlu0 %6896
    %6898 = vrot.lane.b32.xlu0 %v6769, 64
    %v6899 = vpop.permute.xlu0 %6898
    %6900 = vrot.lane.b32.xlu0 %v6770, 64
    %v6901 = vpop.permute.xlu0 %6900
    %6902 = vrot.lane.b32.xlu0 %v6771, 64
    %v6903 = vpop.permute.xlu0 %6902
    %6904 = vrot.lane.b32.xlu0 %v6772, 64
    %v6905 = vpop.permute.xlu0 %6904
    %6906 = vrot.lane.b32.xlu0 %v6773, 64
    %v6907 = vpop.permute.xlu0 %6906
    %6908 = vrot.lane.b32.xlu0 %v6774, 64
    %v6909 = vpop.permute.xlu0 %6908
    %6910 = vrot.lane.b32.xlu0 %v6775, 64
    %v6911 = vpop.permute.xlu0 %6910
    %6912 = vrot.lane.b32.xlu0 %v6776, 64
    %v6913 = vpop.permute.xlu0 %6912
    %6914 = vrot.lane.b32.xlu0 %v6777, 64
    %v6915 = vpop.permute.xlu0 %6914
    %6916 = vrot.lane.b32.xlu0 %v6778, 64
    %v6917 = vpop.permute.xlu0 %6916
    %6918 = vrot.lane.b32.xlu0 %v6779, 64
    %v6919 = vpop.permute.xlu0 %6918
    %6920 = vrot.lane.b32.xlu0 %v6780, 64
    %v6921 = vpop.permute.xlu0 %6920
    %6922 = vrot.lane.b32.xlu0 %v6781, 64
    %v6923 = vpop.permute.xlu0 %6922
    %6924 = vrot.lane.b32.xlu0 %v6782, 64
    %v6925 = vpop.permute.xlu0 %6924
    %6926 = vrot.lane.b32.xlu0 %v6783, 64
    %v6927 = vpop.permute.xlu0 %6926
    %6928 = vrot.lane.b32.xlu0 %v6784, 64
    %v6929 = vpop.permute.xlu0 %6928
    %6930 = vrot.lane.b32.xlu0 %v6785, 64
    %v6931 = vpop.permute.xlu0 %6930
    %6932 = vrot.lane.b32.xlu0 %v6786, 64
    %v6933 = vpop.permute.xlu0 %6932
    %6934 = vrot.lane.b32.xlu0 %v6787, 64
    %v6935 = vpop.permute.xlu0 %6934
    %6936 = vrot.lane.b32.xlu0 %v6788, 64
    %v6937 = vpop.permute.xlu0 %6936
    %6938 = vrot.lane.b32.xlu0 %v6789, 64
    %v6939 = vpop.permute.xlu0 %6938
    %6940 = vrot.lane.b32.xlu0 %v6790, 64
    %v6941 = vpop.permute.xlu0 %6940
    %6942 = vrot.lane.b32.xlu0 %v6791, 64
    %v6943 = vpop.permute.xlu0 %6942
    %6944 = vrot.lane.b32.xlu0 %v6792, 64
    %v6945 = vpop.permute.xlu0 %6944
    %6946 = vrot.lane.b32.xlu0 %v6793, 64
    %v6947 = vpop.permute.xlu0 %6946
    %6948 = vrot.lane.b32.xlu0 %v6794, 64
    %v6949 = vpop.permute.xlu0 %6948
    %6950 = vrot.lane.b32.xlu0 %v6795, 64
    %v6951 = vpop.permute.xlu0 %6950
    %6952 = vrot.lane.b32.xlu0 %v6796, 64
    %v6953 = vpop.permute.xlu0 %6952
    %6954 = vrot.lane.b32.xlu0 %v6797, 64
    %v6955 = vpop.permute.xlu0 %6954
    %6956 = vrot.lane.b32.xlu0 %v6798, 64
    %v6957 = vpop.permute.xlu0 %6956
    %6958 = vrot.lane.b32.xlu0 %v6799, 64
    %v6959 = vpop.permute.xlu0 %6958
    %6960 = vrot.lane.b32.xlu0 %v6800, 64
    %v6961 = vpop.permute.xlu0 %6960
    %6962 = vrot.lane.b32.xlu0 %v6801, 64
    %v6963 = vpop.permute.xlu0 %6962
    %6964 = vrot.lane.b32.xlu0 %v6802, 64
    %v6965 = vpop.permute.xlu0 %6964
    %6966 = vrot.lane.b32.xlu0 %v6803, 64
    %v6967 = vpop.permute.xlu0 %6966
    %6968 = vrot.lane.b32.xlu0 %v6804, 64
    %v6969 = vpop.permute.xlu0 %6968
    %6970 = vrot.lane.b32.xlu0 %v6805, 64
    %v6971 = vpop.permute.xlu0 %6970
    %6972 = vrot.lane.b32.xlu0 %v6806, 64
    %v6973 = vpop.permute.xlu0 %6972
    %6974 = vrot.lane.b32.xlu0 %v6807, 64
    %v6975 = vpop.permute.xlu0 %6974
    %6976 = vrot.lane.b32.xlu0 %v6808, 64
    %v6977 = vpop.permute.xlu0 %6976
    %6978 = vrot.lane.b32.xlu0 %v6809, 64
    %v6979 = vpop.permute.xlu0 %6978
    %6980 = vrot.lane.b32.xlu0 %v6810, 64
    %v6981 = vpop.permute.xlu0 %6980
    %6982 = vrot.lane.b32.xlu0 %v6811, 64
    %v6983 = vpop.permute.xlu0 %6982
    %6984 = vrot.lane.b32.xlu0 %v6812, 64
    %v6985 = vpop.permute.xlu0 %6984
    %6986 = vrot.lane.b32.xlu0 %v6813, 64
    %v6987 = vpop.permute.xlu0 %6986
    %6988 = vrot.lane.b32.xlu0 %v6814, 64
    %v6989 = vpop.permute.xlu0 %6988
    %6990 = vrot.lane.b32.xlu0 %v6815, 64
    %v6991 = vpop.permute.xlu0 %6990
    %6992 = vrot.lane.b32.xlu0 %v6816, 64
    %v6993 = vpop.permute.xlu0 %6992
    %6994 = vrot.lane.b32.xlu0 %v6817, 64
    %v6995 = vpop.permute.xlu0 %6994
    %6996 = vrot.lane.b32.xlu0 %v6818, 64
    %v6997 = vpop.permute.xlu0 %6996
    %6998 = vrot.lane.b32.xlu0 %v6819, 64
    %v6999 = vpop.permute.xlu0 %6998
    %7000 = vrot.lane.b32.xlu0 %v6820, 64
    %v7001 = vpop.permute.xlu0 %7000
    %7002 = vrot.lane.b32.xlu0 %v6821, 64
    %v7003 = vpop.permute.xlu0 %7002
    %7004 = vrot.lane.b32.xlu0 %v6822, 64
    %v7005 = vpop.permute.xlu0 %7004
    %7006 = vrot.lane.b32.xlu0 %v6823, 64
    %v7007 = vpop.permute.xlu0 %7006
    %7008 = vrot.lane.b32.xlu0 %v6824, 64
    %v7009 = vpop.permute.xlu0 %7008
    %7010 = vrot.lane.b32.xlu0 %v6825, 64
    %v7011 = vpop.permute.xlu0 %7010
    %7012 = vrot.lane.b32.xlu0 %v6826, 64
    %v7013 = vpop.permute.xlu0 %7012
    %7014 = vrot.lane.b32.xlu0 %v6827, 64
    %v7015 = vpop.permute.xlu0 %7014
    %7016 = vrot.lane.b32.xlu0 %v6828, 64
    %v7017 = vpop.permute.xlu0 %7016
    %7018 = vrot.lane.b32.xlu0 %v6829, 64
    %v7019 = vpop.permute.xlu0 %7018
    %7020 = vrot.lane.b32.xlu0 %v6830, 64
    %v7021 = vpop.permute.xlu0 %7020
    %7022 = vrot.lane.b32.xlu0 %v6831, 64
    %v7023 = vpop.permute.xlu0 %7022
    %v7088 = vsel %vm1810, %v5548, %v6897
    %v7089 = vsel %vm1810, %v5549, %v6899
    %v7090 = vsel %vm1810, %v5550, %v6901
    %v7091 = vsel %vm1810, %v5551, %v6903
    %v7092 = vsel %vm1810, %v5552, %v6905
    %v7093 = vsel %vm1810, %v5553, %v6907
    %v7094 = vsel %vm1810, %v5554, %v6909
    %v7095 = vsel %vm1810, %v5555, %v6911
    %v7096 = vsel %vm1810, %v5556, %v6913
    %v7097 = vsel %vm1810, %v5557, %v6915
    %v7098 = vsel %vm1810, %v5558, %v6917
    %v7099 = vsel %vm1810, %v5559, %v6919
    %v7100 = vsel %vm1810, %v5560, %v6921
    %v7101 = vsel %vm1810, %v5561, %v6923
    %v7102 = vsel %vm1810, %v5562, %v6925
    %v7103 = vsel %vm1810, %v5563, %v6927
    %v7104 = vsel %vm1810, %v5564, %v6929
    %v7105 = vsel %vm1810, %v5565, %v6931
    %v7106 = vsel %vm1810, %v5566, %v6933
    %v7107 = vsel %vm1810, %v5567, %v6935
    %v7108 = vsel %vm1810, %v5568, %v6937
    %v7109 = vsel %vm1810, %v5569, %v6939
    %v7110 = vsel %vm1810, %v5570, %v6941
    %v7111 = vsel %vm1810, %v5571, %v6943
    %v7112 = vsel %vm1810, %v5572, %v6945
    %v7113 = vsel %vm1810, %v5573, %v6947
    %v7114 = vsel %vm1810, %v5574, %v6949
    %v7115 = vsel %vm1810, %v5575, %v6951
    %v7116 = vsel %vm1810, %v5576, %v6953
    %v7117 = vsel %vm1810, %v5577, %v6955
    %v7118 = vsel %vm1810, %v5578, %v6957
    %v7119 = vsel %vm1810, %v5579, %v6959
    %v7120 = vsel %vm1810, %v5580, %v6961
    %v7121 = vsel %vm1810, %v5581, %v6963
    %v7122 = vsel %vm1810, %v5582, %v6965
    %v7123 = vsel %vm1810, %v5583, %v6967
    %v7124 = vsel %vm1810, %v5584, %v6969
    %v7125 = vsel %vm1810, %v5585, %v6971
    %v7126 = vsel %vm1810, %v5586, %v6973
    %v7127 = vsel %vm1810, %v5587, %v6975
    %v7128 = vsel %vm1810, %v5588, %v6977
    %v7129 = vsel %vm1810, %v5589, %v6979
    %v7130 = vsel %vm1810, %v5590, %v6981
    %v7131 = vsel %vm1810, %v5591, %v6983
    %v7132 = vsel %vm1810, %v5592, %v6985
    %v7133 = vsel %vm1810, %v5593, %v6987
    %v7134 = vsel %vm1810, %v5594, %v6989
    %v7135 = vsel %vm1810, %v5595, %v6991
    %v7136 = vsel %vm1810, %v5596, %v6993
    %v7137 = vsel %vm1810, %v5597, %v6995
    %v7138 = vsel %vm1810, %v5598, %v6997
    %v7139 = vsel %vm1810, %v5599, %v6999
    %v7140 = vsel %vm1810, %v5600, %v7001
    %v7141 = vsel %vm1810, %v5601, %v7003
    %v7142 = vsel %vm1810, %v5602, %v7005
    %v7143 = vsel %vm1810, %v5603, %v7007
    %v7144 = vsel %vm1810, %v5604, %v7009
    %v7145 = vsel %vm1810, %v5605, %v7011
    %v7146 = vsel %vm1810, %v5606, %v7013
    %v7147 = vsel %vm1810, %v5607, %v7015
    %v7148 = vsel %vm1810, %v5608, %v7017
    %v7149 = vsel %vm1810, %v5609, %v7019
    %v7150 = vsel %vm1810, %v5610, %v7021
    %v7151 = vsel %vm1810, %v5611, %v7023
    %s7152 = scalar_lea.vmem [#allocation7], 128
    %v7153 = vld [vmem:[%s7152] sm:$0xff]
    %v7154 = vld [vmem:[%s7152 + $0x8] sm:$0xff]
    %v7155 = vld [vmem:[%s7152 + $0x10] sm:$0xff]
    %v7156 = vld [vmem:[%s7152 + $0x18] sm:$0xff]
    %v7157 = vld [vmem:[%s7152 + $0x20] sm:$0xff]
    %v7158 = vld [vmem:[%s7152 + $0x28] sm:$0xff]
    %v7159 = vld [vmem:[%s7152 + $0x30] sm:$0xff]
    %v7160 = vld [vmem:[%s7152 + $0x38] sm:$0xff]
    %v7161 = vld [vmem:[%s7152 + $0x40] sm:$0xff]
    %v7162 = vld [vmem:[%s7152 + $0x48] sm:$0xff]
    %v7163 = vld [vmem:[%s7152 + $0x50] sm:$0xff]
    %v7164 = vld [vmem:[%s7152 + $0x58] sm:$0xff]
    %v7165 = vld [vmem:[%s7152 + $0x60] sm:$0xff]
    %v7166 = vld [vmem:[%s7152 + $0x68] sm:$0xff]
    %v7167 = vld [vmem:[%s7152 + $0x70] sm:$0xff]
    %v7168 = vld [vmem:[%s7152 + $0x78] sm:$0xff]
    %7169 = vmatprep.subr.mxu0 0.0
    %7170 = vmatpush1.msra.mxu0 %v7153
    %7171 = vmatprep.subr.mxu0 0.0
    %7172 = vmatpush1.msra.mxu0 %v7154
    %7173 = vmatprep.subr.mxu0 0.0
    %7174 = vmatpush1.msra.mxu0 %v7155
    %7175 = vmatprep.subr.mxu0 0.0
    %7176 = vmatpush1.msra.mxu0 %v7156
    %7177 = vmatprep.subr.mxu0 0.0
    %7178 = vmatpush1.msra.mxu0 %v7157
    %7179 = vmatprep.subr.mxu0 0.0
    %7180 = vmatpush1.msra.mxu0 %v7158
    %7181 = vmatprep.subr.mxu0 0.0
    %7182 = vmatpush1.msra.mxu0 %v7159
    %7183 = vmatprep.subr.mxu0 0.0
    %7184 = vmatpush1.msra.mxu0 %v7160
    %7185 = vmatprep.subr.mxu0 0.0
    %7186 = vmatpush1.msra.mxu0 %v7161
    %7187 = vmatprep.subr.mxu0 0.0
    %7188 = vmatpush1.msra.mxu0 %v7162
    %7189 = vmatprep.subr.mxu0 0.0
    %7190 = vmatpush1.msra.mxu0 %v7163
    %7191 = vmatprep.subr.mxu0 0.0
    %7192 = vmatpush1.msra.mxu0 %v7164
    %7193 = vmatprep.subr.mxu0 0.0
    %7194 = vmatpush1.msra.mxu0 %v7165
    %7195 = vmatprep.subr.mxu0 0.0
    %7196 = vmatpush1.msra.mxu0 %v7166
    %7197 = vmatprep.subr.mxu0 0.0
    %7198 = vmatpush1.msra.mxu0 %v7167
    %7199 = vmatprep.subr.mxu0 0.0
    %7200 = vmatpush1.msra.mxu0 %v7168
    %7201 = vmatprep.subr.mxu0 0.0
    %7202 = vmatpush1.msra.mxu0 0.0
    %7203 = vmatprep.subr.mxu0 0.0
    %7204 = vmatpush1.msra.mxu0 0.0
    %7205 = vmatprep.subr.mxu0 0.0
    %7206 = vmatpush1.msra.mxu0 0.0
    %7207 = vmatprep.subr.mxu0 0.0
    %7208 = vmatpush1.msra.mxu0 0.0
    %7209 = vmatprep.subr.mxu0 0.0
    %7210 = vmatpush1.msra.mxu0 0.0
    %7211 = vmatprep.subr.mxu0 0.0
    %7212 = vmatpush1.msra.mxu0 0.0
    %7213 = vmatprep.subr.mxu0 0.0
    %7214 = vmatpush1.msra.mxu0 0.0
    %7215 = vmatprep.subr.mxu0 0.0
    %7216 = vmatpush1.msra.mxu0 0.0
    %7217 = vmatprep.subr.mxu0 0.0
    %7218 = vmatpush1.msra.mxu0 0.0
    %7219 = vmatprep.subr.mxu0 0.0
    %7220 = vmatpush1.msra.mxu0 0.0
    %7221 = vmatprep.subr.mxu0 0.0
    %7222 = vmatpush1.msra.mxu0 0.0
    %7223 = vmatprep.subr.mxu0 0.0
    %7224 = vmatpush1.msra.mxu0 0.0
    %7225 = vmatprep.subr.mxu0 0.0
    %7226 = vmatpush1.msra.mxu0 0.0
    %7227 = vmatprep.subr.mxu0 0.0
    %7228 = vmatpush1.msra.mxu0 0.0
    %7229 = vmatprep.subr.mxu0 0.0
    %7230 = vmatpush1.msra.mxu0 0.0
    %7231 = vmatprep.subr.mxu0 0.0
    %7232 = vmatpush1.msra.mxu0 0.0
    %7233 = vmatprep.mubr.f32.mxu0 0.0
    %7234 = vmatmul.mubr.f32.gmra.mrb[0].mxu0 %v7088
    %v7235 = vpop.f32.mrb[0].mxu0
    %v7236 = vadd.f32 0.0, %v7235
    %v7237 = vpop.f32.mrb[0].mxu0
    %7238 = vmatprep.mubr.f32.mxu0 0.0
    %7239 = vmatmul.mubr.f32.gmra.mrb[0].mxu0 %v7089
    %v7240 = vpop.f32.mrb[0].mxu0
    %v7241 = vadd.f32 0.0, %v7240
    %v7242 = vpop.f32.mrb[0].mxu0
    %7243 = vmatprep.mubr.f32.mxu0 0.0
    %7244 = vmatmul.mubr.f32.gmra.mrb[0].mxu0 %v7090
    %v7245 = vpop.f32.mrb[0].mxu0
    %v7246 = vadd.f32 0.0, %v7245
    %v7247 = vpop.f32.mrb[0].mxu0
    %7248 = vmatprep.mubr.f32.mxu0 0.0
    %7249 = vmatmul.mubr.f32.gmra.mrb[0].mxu0 %v7091
    %v7250 = vpop.f32.mrb[0].mxu0
    %v7251 = vadd.f32 0.0, %v7250
    %v7252 = vpop.f32.mrb[0].mxu0
    %7253 = vmatprep.mubr.f32.mxu0 0.0
    %7254 = vmatmul.mubr.f32.gmra.mrb[0].mxu0 %v7092
    %v7255 = vpop.f32.mrb[0].mxu0
    %v7256 = vadd.f32 0.0, %v7255
    %v7257 = vpop.f32.mrb[0].mxu0
    %7258 = vmatprep.mubr.f32.mxu0 0.0
    %7259 = vmatmul.mubr.f32.gmra.mrb[0].mxu0 %v7093
    %v7260 = vpop.f32.mrb[0].mxu0
    %v7261 = vadd.f32 0.0, %v7260
    %v7262 = vpop.f32.mrb[0].mxu0
    %7263 = vmatprep.mubr.f32.mxu0 0.0
    %7264 = vmatmul.mubr.f32.gmra.mrb[0].mxu0 %v7094
    %v7265 = vpop.f32.mrb[0].mxu0
    %v7266 = vadd.f32 0.0, %v7265
    %v7267 = vpop.f32.mrb[0].mxu0
    %7268 = vmatprep.mubr.f32.mxu0 0.0
    %7269 = vmatmul.mubr.f32.gmra.mrb[0].mxu0 %v7095
    %v7270 = vpop.f32.mrb[0].mxu0
    %v7271 = vadd.f32 0.0, %v7270
    %v7272 = vpop.f32.mrb[0].mxu0
    %7273 = vmatprep.mubr.f32.mxu0 0.0
    %7274 = vmatmul.mubr.f32.gmra.mrb[0].mxu0 %v7096
    %v7275 = vpop.f32.mrb[0].mxu0
    %v7276 = vadd.f32 0.0, %v7275
    %v7277 = vpop.f32.mrb[0].mxu0
    %7278 = vmatprep.mubr.f32.mxu0 0.0
    %7279 = vmatmul.mubr.f32.gmra.mrb[0].mxu0 %v7097
    %v7280 = vpop.f32.mrb[0].mxu0
    %v7281 = vadd.f32 0.0, %v7280
    %v7282 = vpop.f32.mrb[0].mxu0
    %7283 = vmatprep.mubr.f32.mxu0 0.0
    %7284 = vmatmul.mubr.f32.gmra.mrb[0].mxu0 %v7098
    %v7285 = vpop.f32.mrb[0].mxu0
    %v7286 = vadd.f32 0.0, %v7285
    %v7287 = vpop.f32.mrb[0].mxu0
    %7288 = vmatprep.mubr.f32.mxu0 0.0
    %7289 = vmatmul.mubr.f32.gmra.mrb[0].mxu0 %v7099
    %v7290 = vpop.f32.mrb[0].mxu0
    %v7291 = vadd.f32 0.0, %v7290
    %v7292 = vpop.f32.mrb[0].mxu0
    %7293 = vmatprep.mubr.f32.mxu0 0.0
    %7294 = vmatmul.mubr.f32.gmra.mrb[0].mxu0 %v7100
    %v7295 = vpop.f32.mrb[0].mxu0
    %v7296 = vadd.f32 0.0, %v7295
    %v7297 = vpop.f32.mrb[0].mxu0
    %7298 = vmatprep.mubr.f32.mxu0 0.0
    %7299 = vmatmul.mubr.f32.gmra.mrb[0].mxu0 %v7101
    %v7300 = vpop.f32.mrb[0].mxu0
    %v7301 = vadd.f32 0.0, %v7300
    %v7302 = vpop.f32.mrb[0].mxu0
    %7303 = vmatprep.mubr.f32.mxu0 0.0
    %7304 = vmatmul.mubr.f32.gmra.mrb[0].mxu0 %v7102
    %v7305 = vpop.f32.mrb[0].mxu0
    %v7306 = vadd.f32 0.0, %v7305
    %v7307 = vpop.f32.mrb[0].mxu0
    %7308 = vmatprep.mubr.f32.mxu0 0.0
    %7309 = vmatmul.mubr.f32.gmra.mrb[0].mxu0 %v7103
    %v7310 = vpop.f32.mrb[0].mxu0
    %v7311 = vadd.f32 0.0, %v7310
    %v7312 = vpop.f32.mrb[0].mxu0
    %7313 = vmatprep.mubr.f32.mxu0 0.0
    %7314 = vmatmul.mubr.f32.gmra.mrb[0].mxu0 %v7104
    %v7315 = vpop.f32.mrb[0].mxu0
    %v7316 = vadd.f32 0.0, %v7315
    %v7317 = vpop.f32.mrb[0].mxu0
    %7318 = vmatprep.mubr.f32.mxu0 0.0
    %7319 = vmatmul.mubr.f32.gmra.mrb[0].mxu0 %v7105
    %v7320 = vpop.f32.mrb[0].mxu0
    %v7321 = vadd.f32 0.0, %v7320
    %v7322 = vpop.f32.mrb[0].mxu0
    %7323 = vmatprep.mubr.f32.mxu0 0.0
    %7324 = vmatmul.mubr.f32.gmra.mrb[0].mxu0 %v7106
    %v7325 = vpop.f32.mrb[0].mxu0
    %v7326 = vadd.f32 0.0, %v7325
    %v7327 = vpop.f32.mrb[0].mxu0
    %7328 = vmatprep.mubr.f32.mxu0 0.0
    %7329 = vmatmul.mubr.f32.gmra.mrb[0].mxu0 %v7107
    %v7330 = vpop.f32.mrb[0].mxu0
    %v7331 = vadd.f32 0.0, %v7330
    %v7332 = vpop.f32.mrb[0].mxu0
    %7333 = vmatprep.mubr.f32.mxu0 0.0
    %7334 = vmatmul.mubr.f32.gmra.mrb[0].mxu0 %v7108
    %v7335 = vpop.f32.mrb[0].mxu0
    %v7336 = vadd.f32 0.0, %v7335
    %v7337 = vpop.f32.mrb[0].mxu0
    %7338 = vmatprep.mubr.f32.mxu0 0.0
    %7339 = vmatmul.mubr.f32.gmra.mrb[0].mxu0 %v7109
    %v7340 = vpop.f32.mrb[0].mxu0
    %v7341 = vadd.f32 0.0, %v7340
    %v7342 = vpop.f32.mrb[0].mxu0
    %7343 = vmatprep.mubr.f32.mxu0 0.0
    %7344 = vmatmul.mubr.f32.gmra.mrb[0].mxu0 %v7110
    %v7345 = vpop.f32.mrb[0].mxu0
    %v7346 = vadd.f32 0.0, %v7345
    %v7347 = vpop.f32.mrb[0].mxu0
    %7348 = vmatprep.mubr.f32.mxu0 0.0
    %7349 = vmatmul.mubr.f32.gmra.mrb[0].mxu0 %v7111
    %v7350 = vpop.f32.mrb[0].mxu0
    %v7351 = vadd.f32 0.0, %v7350
    %v7352 = vpop.f32.mrb[0].mxu0
    %7353 = vmatprep.mubr.f32.mxu0 0.0
    %7354 = vmatmul.mubr.f32.gmra.mrb[0].mxu0 %v7112
    %v7355 = vpop.f32.mrb[0].mxu0
    %v7356 = vadd.f32 0.0, %v7355
    %v7357 = vpop.f32.mrb[0].mxu0
    %7358 = vmatprep.mubr.f32.mxu0 0.0
    %7359 = vmatmul.mubr.f32.gmra.mrb[0].mxu0 %v7113
    %v7360 = vpop.f32.mrb[0].mxu0
    %v7361 = vadd.f32 0.0, %v7360
    %v7362 = vpop.f32.mrb[0].mxu0
    %7363 = vmatprep.mubr.f32.mxu0 0.0
    %7364 = vmatmul.mubr.f32.gmra.mrb[0].mxu0 %v7114
    %v7365 = vpop.f32.mrb[0].mxu0
    %v7366 = vadd.f32 0.0, %v7365
    %v7367 = vpop.f32.mrb[0].mxu0
    %7368 = vmatprep.mubr.f32.mxu0 0.0
    %7369 = vmatmul.mubr.f32.gmra.mrb[0].mxu0 %v7115
    %v7370 = vpop.f32.mrb[0].mxu0
    %v7371 = vadd.f32 0.0, %v7370
    %v7372 = vpop.f32.mrb[0].mxu0
    %7373 = vmatprep.mubr.f32.mxu0 0.0
    %7374 = vmatmul.mubr.f32.gmra.mrb[0].mxu0 %v7116
    %v7375 = vpop.f32.mrb[0].mxu0
    %v7376 = vadd.f32 0.0, %v7375
    %v7377 = vpop.f32.mrb[0].mxu0
    %7378 = vmatprep.mubr.f32.mxu0 0.0
    %7379 = vmatmul.mubr.f32.gmra.mrb[0].mxu0 %v7117
    %v7380 = vpop.f32.mrb[0].mxu0
    %v7381 = vadd.f32 0.0, %v7380
    %v7382 = vpop.f32.mrb[0].mxu0
    %7383 = vmatprep.mubr.f32.mxu0 0.0
    %7384 = vmatmul.mubr.f32.gmra.mrb[0].mxu0 %v7118
    %v7385 = vpop.f32.mrb[0].mxu0
    %v7386 = vadd.f32 0.0, %v7385
    %v7387 = vpop.f32.mrb[0].mxu0
    %7388 = vmatprep.mubr.f32.mxu0 0.0
    %7389 = vmatmul.mubr.f32.gmra.mrb[0].mxu0 %v7119
    %v7390 = vpop.f32.mrb[0].mxu0
    %v7391 = vadd.f32 0.0, %v7390
    %v7392 = vpop.f32.mrb[0].mxu0
    %7393 = vmatprep.mubr.f32.mxu0 0.0
    %7394 = vmatmul.mubr.f32.gmra.mrb[0].mxu0 %v7120
    %v7395 = vpop.f32.mrb[0].mxu0
    %v7396 = vadd.f32 0.0, %v7395
    %v7397 = vpop.f32.mrb[0].mxu0
    %7398 = vmatprep.mubr.f32.mxu0 0.0
    %7399 = vmatmul.mubr.f32.gmra.mrb[0].mxu0 %v7121
    %v7400 = vpop.f32.mrb[0].mxu0
    %v7401 = vadd.f32 0.0, %v7400
    %v7402 = vpop.f32.mrb[0].mxu0
    %7403 = vmatprep.mubr.f32.mxu0 0.0
    %7404 = vmatmul.mubr.f32.gmra.mrb[0].mxu0 %v7122
    %v7405 = vpop.f32.mrb[0].mxu0
    %v7406 = vadd.f32 0.0, %v7405
    %v7407 = vpop.f32.mrb[0].mxu0
    %7408 = vmatprep.mubr.f32.mxu0 0.0
    %7409 = vmatmul.mubr.f32.gmra.mrb[0].mxu0 %v7123
    %v7410 = vpop.f32.mrb[0].mxu0
    %v7411 = vadd.f32 0.0, %v7410
    %v7412 = vpop.f32.mrb[0].mxu0
    %7413 = vmatprep.mubr.f32.mxu0 0.0
    %7414 = vmatmul.mubr.f32.gmra.mrb[0].mxu0 %v7124
    %v7415 = vpop.f32.mrb[0].mxu0
    %v7416 = vadd.f32 0.0, %v7415
    %v7417 = vpop.f32.mrb[0].mxu0
    %7418 = vmatprep.mubr.f32.mxu0 0.0
    %7419 = vmatmul.mubr.f32.gmra.mrb[0].mxu0 %v7125
    %v7420 = vpop.f32.mrb[0].mxu0
    %v7421 = vadd.f32 0.0, %v7420
    %v7422 = vpop.f32.mrb[0].mxu0
    %7423 = vmatprep.mubr.f32.mxu0 0.0
    %7424 = vmatmul.mubr.f32.gmra.mrb[0].mxu0 %v7126
    %v7425 = vpop.f32.mrb[0].mxu0
    %v7426 = vadd.f32 0.0, %v7425
    %v7427 = vpop.f32.mrb[0].mxu0
    %7428 = vmatprep.mubr.f32.mxu0 0.0
    %7429 = vmatmul.mubr.f32.gmra.mrb[0].mxu0 %v7127
    %v7430 = vpop.f32.mrb[0].mxu0
    %v7431 = vadd.f32 0.0, %v7430
    %v7432 = vpop.f32.mrb[0].mxu0
    %7433 = vmatprep.mubr.f32.mxu0 0.0
    %7434 = vmatmul.mubr.f32.gmra.mrb[0].mxu0 %v7128
    %v7435 = vpop.f32.mrb[0].mxu0
    %v7436 = vadd.f32 0.0, %v7435
    %v7437 = vpop.f32.mrb[0].mxu0
    %7438 = vmatprep.mubr.f32.mxu0 0.0
    %7439 = vmatmul.mubr.f32.gmra.mrb[0].mxu0 %v7129
    %v7440 = vpop.f32.mrb[0].mxu0
    %v7441 = vadd.f32 0.0, %v7440
    %v7442 = vpop.f32.mrb[0].mxu0
    %7443 = vmatprep.mubr.f32.mxu0 0.0
    %7444 = vmatmul.mubr.f32.gmra.mrb[0].mxu0 %v7130
    %v7445 = vpop.f32.mrb[0].mxu0
    %v7446 = vadd.f32 0.0, %v7445
    %v7447 = vpop.f32.mrb[0].mxu0
    %7448 = vmatprep.mubr.f32.mxu0 0.0
    %7449 = vmatmul.mubr.f32.gmra.mrb[0].mxu0 %v7131
    %v7450 = vpop.f32.mrb[0].mxu0
    %v7451 = vadd.f32 0.0, %v7450
    %v7452 = vpop.f32.mrb[0].mxu0
    %7453 = vmatprep.mubr.f32.mxu0 0.0
    %7454 = vmatmul.mubr.f32.gmra.mrb[0].mxu0 %v7132
    %v7455 = vpop.f32.mrb[0].mxu0
    %v7456 = vadd.f32 0.0, %v7455
    %v7457 = vpop.f32.mrb[0].mxu0
    %7458 = vmatprep.mubr.f32.mxu0 0.0
    %7459 = vmatmul.mubr.f32.gmra.mrb[0].mxu0 %v7133
    %v7460 = vpop.f32.mrb[0].mxu0
    %v7461 = vadd.f32 0.0, %v7460
    %v7462 = vpop.f32.mrb[0].mxu0
    %7463 = vmatprep.mubr.f32.mxu0 0.0
    %7464 = vmatmul.mubr.f32.gmra.mrb[0].mxu0 %v7134
    %v7465 = vpop.f32.mrb[0].mxu0
    %v7466 = vadd.f32 0.0, %v7465
    %v7467 = vpop.f32.mrb[0].mxu0
    %7468 = vmatprep.mubr.f32.mxu0 0.0
    %7469 = vmatmul.mubr.f32.gmra.mrb[0].mxu0 %v7135
    %v7470 = vpop.f32.mrb[0].mxu0
    %v7471 = vadd.f32 0.0, %v7470
    %v7472 = vpop.f32.mrb[0].mxu0
    %7473 = vmatprep.mubr.f32.mxu0 0.0
    %7474 = vmatmul.mubr.f32.gmra.mrb[0].mxu0 %v7136
    %v7475 = vpop.f32.mrb[0].mxu0
    %v7476 = vadd.f32 0.0, %v7475
    %v7477 = vpop.f32.mrb[0].mxu0
    %7478 = vmatprep.mubr.f32.mxu0 0.0
    %7479 = vmatmul.mubr.f32.gmra.mrb[0].mxu0 %v7137
    %v7480 = vpop.f32.mrb[0].mxu0
    %v7481 = vadd.f32 0.0, %v7480
    %v7482 = vpop.f32.mrb[0].mxu0
    %7483 = vmatprep.mubr.f32.mxu0 0.0
    %7484 = vmatmul.mubr.f32.gmra.mrb[0].mxu0 %v7138
    %v7485 = vpop.f32.mrb[0].mxu0
    %v7486 = vadd.f32 0.0, %v7485
    %v7487 = vpop.f32.mrb[0].mxu0
    %7488 = vmatprep.mubr.f32.mxu0 0.0
    %7489 = vmatmul.mubr.f32.gmra.mrb[0].mxu0 %v7139
    %v7490 = vpop.f32.mrb[0].mxu0
    %v7491 = vadd.f32 0.0, %v7490
    %v7492 = vpop.f32.mrb[0].mxu0
    %7493 = vmatprep.mubr.f32.mxu0 0.0
    %7494 = vmatmul.mubr.f32.gmra.mrb[0].mxu0 %v7140
    %v7495 = vpop.f32.mrb[0].mxu0
    %v7496 = vadd.f32 0.0, %v7495
    %v7497 = vpop.f32.mrb[0].mxu0
    %7498 = vmatprep.mubr.f32.mxu0 0.0
    %7499 = vmatmul.mubr.f32.gmra.mrb[0].mxu0 %v7141
    %v7500 = vpop.f32.mrb[0].mxu0
    %v7501 = vadd.f32 0.0, %v7500
    %v7502 = vpop.f32.mrb[0].mxu0
    %7503 = vmatprep.mubr.f32.mxu0 0.0
    %7504 = vmatmul.mubr.f32.gmra.mrb[0].mxu0 %v7142
    %v7505 = vpop.f32.mrb[0].mxu0
    %v7506 = vadd.f32 0.0, %v7505
    %v7507 = vpop.f32.mrb[0].mxu0
    %7508 = vmatprep.mubr.f32.mxu0 0.0
    %7509 = vmatmul.mubr.f32.gmra.mrb[0].mxu0 %v7143
    %v7510 = vpop.f32.mrb[0].mxu0
    %v7511 = vadd.f32 0.0, %v7510
    %v7512 = vpop.f32.mrb[0].mxu0
    %7513 = vmatprep.mubr.f32.mxu0 0.0
    %7514 = vmatmul.mubr.f32.gmra.mrb[0].mxu0 %v7144
    %v7515 = vpop.f32.mrb[0].mxu0
    %v7516 = vadd.f32 0.0, %v7515
    %v7517 = vpop.f32.mrb[0].mxu0
    %7518 = vmatprep.mubr.f32.mxu0 0.0
    %7519 = vmatmul.mubr.f32.gmra.mrb[0].mxu0 %v7145
    %v7520 = vpop.f32.mrb[0].mxu0
    %v7521 = vadd.f32 0.0, %v7520
    %v7522 = vpop.f32.mrb[0].mxu0
    %7523 = vmatprep.mubr.f32.mxu0 0.0
    %7524 = vmatmul.mubr.f32.gmra.mrb[0].mxu0 %v7146
    %v7525 = vpop.f32.mrb[0].mxu0
    %v7526 = vadd.f32 0.0, %v7525
    %v7527 = vpop.f32.mrb[0].mxu0
    %7528 = vmatprep.mubr.f32.mxu0 0.0
    %7529 = vmatmul.mubr.f32.gmra.mrb[0].mxu0 %v7147
    %v7530 = vpop.f32.mrb[0].mxu0
    %v7531 = vadd.f32 0.0, %v7530
    %v7532 = vpop.f32.mrb[0].mxu0
    %7533 = vmatprep.mubr.f32.mxu0 0.0
    %7534 = vmatmul.mubr.f32.gmra.mrb[0].mxu0 %v7148
    %v7535 = vpop.f32.mrb[0].mxu0
    %v7536 = vadd.f32 0.0, %v7535
    %v7537 = vpop.f32.mrb[0].mxu0
    %7538 = vmatprep.mubr.f32.mxu0 0.0
    %7539 = vmatmul.mubr.f32.gmra.mrb[0].mxu0 %v7149
    %v7540 = vpop.f32.mrb[0].mxu0
    %v7541 = vadd.f32 0.0, %v7540
    %v7542 = vpop.f32.mrb[0].mxu0
    %7543 = vmatprep.mubr.f32.mxu0 0.0
    %7544 = vmatmul.mubr.f32.gmra.mrb[0].mxu0 %v7150
    %v7545 = vpop.f32.mrb[0].mxu0
    %v7546 = vadd.f32 0.0, %v7545
    %v7547 = vpop.f32.mrb[0].mxu0
    %7548 = vmatprep.mubr.f32.mxu0 0.0
    %7549 = vmatmul.mubr.f32.gmra.mrb[0].mxu0 %v7151
    %v7550 = vpop.f32.mrb[0].mxu0
    %v7551 = vadd.f32 0.0, %v7550
    %v7552 = vpop.f32.mrb[0].mxu0
    %7553 = vdwg.mxu0
    %7554 = vmatprep.subr.mxu0 0.0
    %7555 = vmatpush1.msra.mxu0 %v4376
    %7556 = vmatprep.subr.mxu0 0.0
    %7557 = vmatpush1.msra.mxu0 %v4377
    %7558 = vmatprep.subr.mxu0 0.0
    %7559 = vmatpush1.msra.mxu0 %v4378
    %7560 = vmatprep.subr.mxu0 0.0
    %7561 = vmatpush1.msra.mxu0 %v4379
    %7562 = vmatprep.subr.mxu0 0.0
    %7563 = vmatpush1.msra.mxu0 %v4380
    %7564 = vmatprep.subr.mxu0 0.0
    %7565 = vmatpush1.msra.mxu0 %v4381
    %7566 = vmatprep.subr.mxu0 0.0
    %7567 = vmatpush1.msra.mxu0 %v4382
    %7568 = vmatprep.subr.mxu0 0.0
    %7569 = vmatpush1.msra.mxu0 %v4383
    %7570 = vmatprep.subr.mxu0 0.0
    %7571 = vmatpush1.msra.mxu0 %v4384
    %7572 = vmatprep.subr.mxu0 0.0
    %7573 = vmatpush1.msra.mxu0 %v4385
    %7574 = vmatprep.subr.mxu0 0.0
    %7575 = vmatpush1.msra.mxu0 %v4386
    %7576 = vmatprep.subr.mxu0 0.0
    %7577 = vmatpush1.msra.mxu0 %v4387
    %7578 = vmatprep.subr.mxu0 0.0
    %7579 = vmatpush1.msra.mxu0 %v4388
    %7580 = vmatprep.subr.mxu0 0.0
    %7581 = vmatpush1.msra.mxu0 %v4389
    %7582 = vmatprep.subr.mxu0 0.0
    %7583 = vmatpush1.msra.mxu0 %v4390
    %7584 = vmatprep.subr.mxu0 0.0
    %7585 = vmatpush1.msra.mxu0 %v4391
    %7586 = vmatprep.subr.mxu0 0.0
    %7587 = vmatpush1.msra.mxu0 0.0
    %7588 = vmatprep.subr.mxu0 0.0
    %7589 = vmatpush1.msra.mxu0 0.0
    %7590 = vmatprep.subr.mxu0 0.0
    %7591 = vmatpush1.msra.mxu0 0.0
    %7592 = vmatprep.subr.mxu0 0.0
    %7593 = vmatpush1.msra.mxu0 0.0
    %7594 = vmatprep.subr.mxu0 0.0
    %7595 = vmatpush1.msra.mxu0 0.0
    %7596 = vmatprep.subr.mxu0 0.0
    %7597 = vmatpush1.msra.mxu0 0.0
    %7598 = vmatprep.subr.mxu0 0.0
    %7599 = vmatpush1.msra.mxu0 0.0
    %7600 = vmatprep.subr.mxu0 0.0
    %7601 = vmatpush1.msra.mxu0 0.0
    %7602 = vmatprep.subr.mxu0 0.0
    %7603 = vmatpush1.msra.mxu0 0.0
    %7604 = vmatprep.subr.mxu0 0.0
    %7605 = vmatpush1.msra.mxu0 0.0
    %7606 = vmatprep.subr.mxu0 0.0
    %7607 = vmatpush1.msra.mxu0 0.0
    %7608 = vmatprep.subr.mxu0 0.0
    %7609 = vmatpush1.msra.mxu0 0.0
    %7610 = vmatprep.subr.mxu0 0.0
    %7611 = vmatpush1.msra.mxu0 0.0
    %7612 = vmatprep.subr.mxu0 0.0
    %7613 = vmatpush1.msra.mxu0 0.0
    %7614 = vmatprep.subr.mxu0 0.0
    %7615 = vmatpush1.msra.mxu0 0.0
    %7616 = vmatprep.subr.mxu0 0.0
    %7617 = vmatpush1.msra.mxu0 0.0
    %7618 = vmatprep.mubr.f32.mxu0 0.0
    %7619 = vmatmul.mubr.f32.gmra.mrb[0].mxu0 %v4312
    %v7620 = vpop.f32.mrb[0].mxu0
    %v7621 = vadd.f32 %v7236, %v7620
    %v7622 = vpop.f32.mrb[0].mxu0
    %7623 = vmatprep.mubr.f32.mxu0 0.0
    %7624 = vmatmul.mubr.f32.gmra.mrb[0].mxu0 %v4313
    %v7625 = vpop.f32.mrb[0].mxu0
    %v7626 = vadd.f32 %v7241, %v7625
    %v7627 = vpop.f32.mrb[0].mxu0
    %7628 = vmatprep.mubr.f32.mxu0 0.0
    %7629 = vmatmul.mubr.f32.gmra.mrb[0].mxu0 %v4314
    %v7630 = vpop.f32.mrb[0].mxu0
    %v7631 = vadd.f32 %v7246, %v7630
    %v7632 = vpop.f32.mrb[0].mxu0
    %7633 = vmatprep.mubr.f32.mxu0 0.0
    %7634 = vmatmul.mubr.f32.gmra.mrb[0].mxu0 %v4315
    %v7635 = vpop.f32.mrb[0].mxu0
    %v7636 = vadd.f32 %v7251, %v7635
    %v7637 = vpop.f32.mrb[0].mxu0
    %7638 = vmatprep.mubr.f32.mxu0 0.0
    %7639 = vmatmul.mubr.f32.gmra.mrb[0].mxu0 %v4316
    %v7640 = vpop.f32.mrb[0].mxu0
    %v7641 = vadd.f32 %v7256, %v7640
    %v7642 = vpop.f32.mrb[0].mxu0
    %7643 = vmatprep.mubr.f32.mxu0 0.0
    %7644 = vmatmul.mubr.f32.gmra.mrb[0].mxu0 %v4317
    %v7645 = vpop.f32.mrb[0].mxu0
    %v7646 = vadd.f32 %v7261, %v7645
    %v7647 = vpop.f32.mrb[0].mxu0
    %7648 = vmatprep.mubr.f32.mxu0 0.0
    %7649 = vmatmul.mubr.f32.gmra.mrb[0].mxu0 %v4318
    %v7650 = vpop.f32.mrb[0].mxu0
    %v7651 = vadd.f32 %v7266, %v7650
    %v7652 = vpop.f32.mrb[0].mxu0
    %7653 = vmatprep.mubr.f32.mxu0 0.0
    %7654 = vmatmul.mubr.f32.gmra.mrb[0].mxu0 %v4319
    %v7655 = vpop.f32.mrb[0].mxu0
    %v7656 = vadd.f32 %v7271, %v7655
    %v7657 = vpop.f32.mrb[0].mxu0
    %7658 = vmatprep.mubr.f32.mxu0 0.0
    %7659 = vmatmul.mubr.f32.gmra.mrb[0].mxu0 %v4320
    %v7660 = vpop.f32.mrb[0].mxu0
    %v7661 = vadd.f32 %v7276, %v7660
    %v7662 = vpop.f32.mrb[0].mxu0
    %7663 = vmatprep.mubr.f32.mxu0 0.0
    %7664 = vmatmul.mubr.f32.gmra.mrb[0].mxu0 %v4321
    %v7665 = vpop.f32.mrb[0].mxu0
    %v7666 = vadd.f32 %v7281, %v7665
    %v7667 = vpop.f32.mrb[0].mxu0
    %7668 = vmatprep.mubr.f32.mxu0 0.0
    %7669 = vmatmul.mubr.f32.gmra.mrb[0].mxu0 %v4322
    %v7670 = vpop.f32.mrb[0].mxu0
    %v7671 = vadd.f32 %v7286, %v7670
    %v7672 = vpop.f32.mrb[0].mxu0
    %7673 = vmatprep.mubr.f32.mxu0 0.0
    %7674 = vmatmul.mubr.f32.gmra.mrb[0].mxu0 %v4323
    %v7675 = vpop.f32.mrb[0].mxu0
    %v7676 = vadd.f32 %v7291, %v7675
    %v7677 = vpop.f32.mrb[0].mxu0
    %7678 = vmatprep.mubr.f32.mxu0 0.0
    %7679 = vmatmul.mubr.f32.gmra.mrb[0].mxu0 %v4324
    %v7680 = vpop.f32.mrb[0].mxu0
    %v7681 = vadd.f32 %v7296, %v7680
    %v7682 = vpop.f32.mrb[0].mxu0
    %7683 = vmatprep.mubr.f32.mxu0 0.0
    %7684 = vmatmul.mubr.f32.gmra.mrb[0].mxu0 %v4325
    %v7685 = vpop.f32.mrb[0].mxu0
    %v7686 = vadd.f32 %v7301, %v7685
    %v7687 = vpop.f32.mrb[0].mxu0
    %7688 = vmatprep.mubr.f32.mxu0 0.0
    %7689 = vmatmul.mubr.f32.gmra.mrb[0].mxu0 %v4326
    %v7690 = vpop.f32.mrb[0].mxu0
    %v7691 = vadd.f32 %v7306, %v7690
    %v7692 = vpop.f32.mrb[0].mxu0
    %7693 = vmatprep.mubr.f32.mxu0 0.0
    %7694 = vmatmul.mubr.f32.gmra.mrb[0].mxu0 %v4327
    %v7695 = vpop.f32.mrb[0].mxu0
    %v7696 = vadd.f32 %v7311, %v7695
    %v7697 = vpop.f32.mrb[0].mxu0
    %7698 = vmatprep.mubr.f32.mxu0 0.0
    %7699 = vmatmul.mubr.f32.gmra.mrb[0].mxu0 %v4328
    %v7700 = vpop.f32.mrb[0].mxu0
    %v7701 = vadd.f32 %v7316, %v7700
    %v7702 = vpop.f32.mrb[0].mxu0
    %7703 = vmatprep.mubr.f32.mxu0 0.0
    %7704 = vmatmul.mubr.f32.gmra.mrb[0].mxu0 %v4329
    %v7705 = vpop.f32.mrb[0].mxu0
    %v7706 = vadd.f32 %v7321, %v7705
    %v7707 = vpop.f32.mrb[0].mxu0
    %7708 = vmatprep.mubr.f32.mxu0 0.0
    %7709 = vmatmul.mubr.f32.gmra.mrb[0].mxu0 %v4330
    %v7710 = vpop.f32.mrb[0].mxu0
    %v7711 = vadd.f32 %v7326, %v7710
    %v7712 = vpop.f32.mrb[0].mxu0
    %7713 = vmatprep.mubr.f32.mxu0 0.0
    %7714 = vmatmul.mubr.f32.gmra.mrb[0].mxu0 %v4331
    %v7715 = vpop.f32.mrb[0].mxu0
    %v7716 = vadd.f32 %v7331, %v7715
    %v7717 = vpop.f32.mrb[0].mxu0
    %7718 = vmatprep.mubr.f32.mxu0 0.0
    %7719 = vmatmul.mubr.f32.gmra.mrb[0].mxu0 %v4332
    %v7720 = vpop.f32.mrb[0].mxu0
    %v7721 = vadd.f32 %v7336, %v7720
    %v7722 = vpop.f32.mrb[0].mxu0
    %7723 = vmatprep.mubr.f32.mxu0 0.0
    %7724 = vmatmul.mubr.f32.gmra.mrb[0].mxu0 %v4333
    %v7725 = vpop.f32.mrb[0].mxu0
    %v7726 = vadd.f32 %v7341, %v7725
    %v7727 = vpop.f32.mrb[0].mxu0
    %7728 = vmatprep.mubr.f32.mxu0 0.0
    %7729 = vmatmul.mubr.f32.gmra.mrb[0].mxu0 %v4334
    %v7730 = vpop.f32.mrb[0].mxu0
    %v7731 = vadd.f32 %v7346, %v7730
    %v7732 = vpop.f32.mrb[0].mxu0
    %7733 = vmatprep.mubr.f32.mxu0 0.0
    %7734 = vmatmul.mubr.f32.gmra.mrb[0].mxu0 %v4335
    %v7735 = vpop.f32.mrb[0].mxu0
    %v7736 = vadd.f32 %v7351, %v7735
    %v7737 = vpop.f32.mrb[0].mxu0
    %7738 = vmatprep.mubr.f32.mxu0 0.0
    %7739 = vmatmul.mubr.f32.gmra.mrb[0].mxu0 %v4336
    %v7740 = vpop.f32.mrb[0].mxu0
    %v7741 = vadd.f32 %v7356, %v7740
    %v7742 = vpop.f32.mrb[0].mxu0
    %7743 = vmatprep.mubr.f32.mxu0 0.0
    %7744 = vmatmul.mubr.f32.gmra.mrb[0].mxu0 %v4337
    %v7745 = vpop.f32.mrb[0].mxu0
    %v7746 = vadd.f32 %v7361, %v7745
    %v7747 = vpop.f32.mrb[0].mxu0
    %7748 = vmatprep.mubr.f32.mxu0 0.0
    %7749 = vmatmul.mubr.f32.gmra.mrb[0].mxu0 %v4338
    %v7750 = vpop.f32.mrb[0].mxu0
    %v7751 = vadd.f32 %v7366, %v7750
    %v7752 = vpop.f32.mrb[0].mxu0
    %7753 = vmatprep.mubr.f32.mxu0 0.0
    %7754 = vmatmul.mubr.f32.gmra.mrb[0].mxu0 %v4339
    %v7755 = vpop.f32.mrb[0].mxu0
    %v7756 = vadd.f32 %v7371, %v7755
    %v7757 = vpop.f32.mrb[0].mxu0
    %7758 = vmatprep.mubr.f32.mxu0 0.0
    %7759 = vmatmul.mubr.f32.gmra.mrb[0].mxu0 %v4340
    %v7760 = vpop.f32.mrb[0].mxu0
    %v7761 = vadd.f32 %v7376, %v7760
    %v7762 = vpop.f32.mrb[0].mxu0
    %7763 = vmatprep.mubr.f32.mxu0 0.0
    %7764 = vmatmul.mubr.f32.gmra.mrb[0].mxu0 %v4341
    %v7765 = vpop.f32.mrb[0].mxu0
    %v7766 = vadd.f32 %v7381, %v7765
    %v7767 = vpop.f32.mrb[0].mxu0
    %7768 = vmatprep.mubr.f32.mxu0 0.0
    %7769 = vmatmul.mubr.f32.gmra.mrb[0].mxu0 %v4342
    %v7770 = vpop.f32.mrb[0].mxu0
    %v7771 = vadd.f32 %v7386, %v7770
    %v7772 = vpop.f32.mrb[0].mxu0
    %7773 = vmatprep.mubr.f32.mxu0 0.0
    %7774 = vmatmul.mubr.f32.gmra.mrb[0].mxu0 %v4343
    %v7775 = vpop.f32.mrb[0].mxu0
    %v7776 = vadd.f32 %v7391, %v7775
    %v7777 = vpop.f32.mrb[0].mxu0
    %7778 = vmatprep.mubr.f32.mxu0 0.0
    %7779 = vmatmul.mubr.f32.gmra.mrb[0].mxu0 %v4344
    %v7780 = vpop.f32.mrb[0].mxu0
    %v7781 = vadd.f32 %v7396, %v7780
    %v7782 = vpop.f32.mrb[0].mxu0
    %7783 = vmatprep.mubr.f32.mxu0 0.0
    %7784 = vmatmul.mubr.f32.gmra.mrb[0].mxu0 %v4345
    %v7785 = vpop.f32.mrb[0].mxu0
    %v7786 = vadd.f32 %v7401, %v7785
    %v7787 = vpop.f32.mrb[0].mxu0
    %7788 = vmatprep.mubr.f32.mxu0 0.0
    %7789 = vmatmul.mubr.f32.gmra.mrb[0].mxu0 %v4346
    %v7790 = vpop.f32.mrb[0].mxu0
    %v7791 = vadd.f32 %v7406, %v7790
    %v7792 = vpop.f32.mrb[0].mxu0
    %7793 = vmatprep.mubr.f32.mxu0 0.0
    %7794 = vmatmul.mubr.f32.gmra.mrb[0].mxu0 %v4347
    %v7795 = vpop.f32.mrb[0].mxu0
    %v7796 = vadd.f32 %v7411, %v7795
    %v7797 = vpop.f32.mrb[0].mxu0
    %7798 = vmatprep.mubr.f32.mxu0 0.0
    %7799 = vmatmul.mubr.f32.gmra.mrb[0].mxu0 %v4348
    %v7800 = vpop.f32.mrb[0].mxu0
    %v7801 = vadd.f32 %v7416, %v7800
    %v7802 = vpop.f32.mrb[0].mxu0
    %7803 = vmatprep.mubr.f32.mxu0 0.0
    %7804 = vmatmul.mubr.f32.gmra.mrb[0].mxu0 %v4349
    %v7805 = vpop.f32.mrb[0].mxu0
    %v7806 = vadd.f32 %v7421, %v7805
    %v7807 = vpop.f32.mrb[0].mxu0
    %7808 = vmatprep.mubr.f32.mxu0 0.0
    %7809 = vmatmul.mubr.f32.gmra.mrb[0].mxu0 %v4350
    %v7810 = vpop.f32.mrb[0].mxu0
    %v7811 = vadd.f32 %v7426, %v7810
    %v7812 = vpop.f32.mrb[0].mxu0
    %7813 = vmatprep.mubr.f32.mxu0 0.0
    %7814 = vmatmul.mubr.f32.gmra.mrb[0].mxu0 %v4351
    %v7815 = vpop.f32.mrb[0].mxu0
    %v7816 = vadd.f32 %v7431, %v7815
    %v7817 = vpop.f32.mrb[0].mxu0
    %7818 = vmatprep.mubr.f32.mxu0 0.0
    %7819 = vmatmul.mubr.f32.gmra.mrb[0].mxu0 %v4352
    %v7820 = vpop.f32.mrb[0].mxu0
    %v7821 = vadd.f32 %v7436, %v7820
    %v7822 = vpop.f32.mrb[0].mxu0
    %7823 = vmatprep.mubr.f32.mxu0 0.0
    %7824 = vmatmul.mubr.f32.gmra.mrb[0].mxu0 %v4353
    %v7825 = vpop.f32.mrb[0].mxu0
    %v7826 = vadd.f32 %v7441, %v7825
    %v7827 = vpop.f32.mrb[0].mxu0
    %7828 = vmatprep.mubr.f32.mxu0 0.0
    %7829 = vmatmul.mubr.f32.gmra.mrb[0].mxu0 %v4354
    %v7830 = vpop.f32.mrb[0].mxu0
    %v7831 = vadd.f32 %v7446, %v7830
    %v7832 = vpop.f32.mrb[0].mxu0
    %7833 = vmatprep.mubr.f32.mxu0 0.0
    %7834 = vmatmul.mubr.f32.gmra.mrb[0].mxu0 %v4355
    %v7835 = vpop.f32.mrb[0].mxu0
    %v7836 = vadd.f32 %v7451, %v7835
    %v7837 = vpop.f32.mrb[0].mxu0
    %7838 = vmatprep.mubr.f32.mxu0 0.0
    %7839 = vmatmul.mubr.f32.gmra.mrb[0].mxu0 %v4356
    %v7840 = vpop.f32.mrb[0].mxu0
    %v7841 = vadd.f32 %v7456, %v7840
    %v7842 = vpop.f32.mrb[0].mxu0
    %7843 = vmatprep.mubr.f32.mxu0 0.0
    %7844 = vmatmul.mubr.f32.gmra.mrb[0].mxu0 %v4357
    %v7845 = vpop.f32.mrb[0].mxu0
    %v7846 = vadd.f32 %v7461, %v7845
    %v7847 = vpop.f32.mrb[0].mxu0
    %7848 = vmatprep.mubr.f32.mxu0 0.0
    %7849 = vmatmul.mubr.f32.gmra.mrb[0].mxu0 %v4358
    %v7850 = vpop.f32.mrb[0].mxu0
    %v7851 = vadd.f32 %v7466, %v7850
    %v7852 = vpop.f32.mrb[0].mxu0
    %7853 = vmatprep.mubr.f32.mxu0 0.0
    %7854 = vmatmul.mubr.f32.gmra.mrb[0].mxu0 %v4359
    %v7855 = vpop.f32.mrb[0].mxu0
    %v7856 = vadd.f32 %v7471, %v7855
    %v7857 = vpop.f32.mrb[0].mxu0
    %7858 = vmatprep.mubr.f32.mxu0 0.0
    %7859 = vmatmul.mubr.f32.gmra.mrb[0].mxu0 %v4360
    %v7860 = vpop.f32.mrb[0].mxu0
    %v7861 = vadd.f32 %v7476, %v7860
    %v7862 = vpop.f32.mrb[0].mxu0
    %7863 = vmatprep.mubr.f32.mxu0 0.0
    %7864 = vmatmul.mubr.f32.gmra.mrb[0].mxu0 %v4361
    %v7865 = vpop.f32.mrb[0].mxu0
    %v7866 = vadd.f32 %v7481, %v7865
    %v7867 = vpop.f32.mrb[0].mxu0
    %7868 = vmatprep.mubr.f32.mxu0 0.0
    %7869 = vmatmul.mubr.f32.gmra.mrb[0].mxu0 %v4362
    %v7870 = vpop.f32.mrb[0].mxu0
    %v7871 = vadd.f32 %v7486, %v7870
    %v7872 = vpop.f32.mrb[0].mxu0
    %7873 = vmatprep.mubr.f32.mxu0 0.0
    %7874 = vmatmul.mubr.f32.gmra.mrb[0].mxu0 %v4363
    %v7875 = vpop.f32.mrb[0].mxu0
    %v7876 = vadd.f32 %v7491, %v7875
    %v7877 = vpop.f32.mrb[0].mxu0
    %7878 = vmatprep.mubr.f32.mxu0 0.0
    %7879 = vmatmul.mubr.f32.gmra.mrb[0].mxu0 %v4364
    %v7880 = vpop.f32.mrb[0].mxu0
    %v7881 = vadd.f32 %v7496, %v7880
    %v7882 = vpop.f32.mrb[0].mxu0
    %7883 = vmatprep.mubr.f32.mxu0 0.0
    %7884 = vmatmul.mubr.f32.gmra.mrb[0].mxu0 %v4365
    %v7885 = vpop.f32.mrb[0].mxu0
    %v7886 = vadd.f32 %v7501, %v7885
    %v7887 = vpop.f32.mrb[0].mxu0
    %7888 = vmatprep.mubr.f32.mxu0 0.0
    %7889 = vmatmul.mubr.f32.gmra.mrb[0].mxu0 %v4366
    %v7890 = vpop.f32.mrb[0].mxu0
    %v7891 = vadd.f32 %v7506, %v7890
    %v7892 = vpop.f32.mrb[0].mxu0
    %7893 = vmatprep.mubr.f32.mxu0 0.0
    %7894 = vmatmul.mubr.f32.gmra.mrb[0].mxu0 %v4367
    %v7895 = vpop.f32.mrb[0].mxu0
    %v7896 = vadd.f32 %v7511, %v7895
    %v7897 = vpop.f32.mrb[0].mxu0
    %7898 = vmatprep.mubr.f32.mxu0 0.0
    %7899 = vmatmul.mubr.f32.gmra.mrb[0].mxu0 %v4368
    %v7900 = vpop.f32.mrb[0].mxu0
    %v7901 = vadd.f32 %v7516, %v7900
    %v7902 = vpop.f32.mrb[0].mxu0
    %7903 = vmatprep.mubr.f32.mxu0 0.0
    %7904 = vmatmul.mubr.f32.gmra.mrb[0].mxu0 %v4369
    %v7905 = vpop.f32.mrb[0].mxu0
    %v7906 = vadd.f32 %v7521, %v7905
    %v7907 = vpop.f32.mrb[0].mxu0
    %7908 = vmatprep.mubr.f32.mxu0 0.0
    %7909 = vmatmul.mubr.f32.gmra.mrb[0].mxu0 %v4370
    %v7910 = vpop.f32.mrb[0].mxu0
    %v7911 = vadd.f32 %v7526, %v7910
    %v7912 = vpop.f32.mrb[0].mxu0
    %7913 = vmatprep.mubr.f32.mxu0 0.0
    %7914 = vmatmul.mubr.f32.gmra.mrb[0].mxu0 %v4371
    %v7915 = vpop.f32.mrb[0].mxu0
    %v7916 = vadd.f32 %v7531, %v7915
    %v7917 = vpop.f32.mrb[0].mxu0
    %7918 = vmatprep.mubr.f32.mxu0 0.0
    %7919 = vmatmul.mubr.f32.gmra.mrb[0].mxu0 %v4372
    %v7920 = vpop.f32.mrb[0].mxu0
    %v7921 = vadd.f32 %v7536, %v7920
    %v7922 = vpop.f32.mrb[0].mxu0
    %7923 = vmatprep.mubr.f32.mxu0 0.0
    %7924 = vmatmul.mubr.f32.gmra.mrb[0].mxu0 %v4373
    %v7925 = vpop.f32.mrb[0].mxu0
    %v7926 = vadd.f32 %v7541, %v7925
    %v7927 = vpop.f32.mrb[0].mxu0
    %7928 = vmatprep.mubr.f32.mxu0 0.0
    %7929 = vmatmul.mubr.f32.gmra.mrb[0].mxu0 %v4374
    %v7930 = vpop.f32.mrb[0].mxu0
    %v7931 = vadd.f32 %v7546, %v7930
    %v7932 = vpop.f32.mrb[0].mxu0
    %7933 = vmatprep.mubr.f32.mxu0 0.0
    %7934 = vmatmul.mubr.f32.gmra.mrb[0].mxu0 %v4375
    %v7935 = vpop.f32.mrb[0].mxu0
    %v7936 = vadd.f32 %v7551, %v7935
    %v7937 = vpop.f32.mrb[0].mxu0
    %7938 = vdwg.mxu0
    %v7939 = vld [vmem:[%s4] sm:$0x1]
    %v7941 = vlaneseq
    %v7942 = vshrl.u32 %v7941, 7
    %v7943 = vsub.s32 0, %v7942
    %v7944 = vrot.slane %v7939, %v7943
    %v7946 = vadd.f32 %v7621, %v7944
    %v7947 = vadd.f32 %v7626, %v7944
    %v7948 = vadd.f32 %v7631, %v7944
    %v7949 = vadd.f32 %v7636, %v7944
    %v7950 = vadd.f32 %v7641, %v7944
    %v7951 = vadd.f32 %v7646, %v7944
    %v7952 = vadd.f32 %v7651, %v7944
    %v7953 = vadd.f32 %v7656, %v7944
    %v7954 = vadd.f32 %v7661, %v7944
    %v7955 = vadd.f32 %v7666, %v7944
    %v7956 = vadd.f32 %v7671, %v7944
    %v7957 = vadd.f32 %v7676, %v7944
    %v7958 = vadd.f32 %v7681, %v7944
    %v7959 = vadd.f32 %v7686, %v7944
    %v7960 = vadd.f32 %v7691, %v7944
    %v7961 = vadd.f32 %v7696, %v7944
    %v7962 = vadd.f32 %v7701, %v7944
    %v7963 = vadd.f32 %v7706, %v7944
    %v7964 = vadd.f32 %v7711, %v7944
    %v7965 = vadd.f32 %v7716, %v7944
    %v7966 = vadd.f32 %v7721, %v7944
    %v7967 = vadd.f32 %v7726, %v7944
    %v7968 = vadd.f32 %v7731, %v7944
    %v7969 = vadd.f32 %v7736, %v7944
    %v7970 = vadd.f32 %v7741, %v7944
    %v7971 = vadd.f32 %v7746, %v7944
    %v7972 = vadd.f32 %v7751, %v7944
    %v7973 = vadd.f32 %v7756, %v7944
    %v7974 = vadd.f32 %v7761, %v7944
    %v7975 = vadd.f32 %v7766, %v7944
    %v7976 = vadd.f32 %v7771, %v7944
    %v7977 = vadd.f32 %v7776, %v7944
    %v7978 = vadd.f32 %v7781, %v7944
    %v7979 = vadd.f32 %v7786, %v7944
    %v7980 = vadd.f32 %v7791, %v7944
    %v7981 = vadd.f32 %v7796, %v7944
    %v7982 = vadd.f32 %v7801, %v7944
    %v7983 = vadd.f32 %v7806, %v7944
    %v7984 = vadd.f32 %v7811, %v7944
    %v7985 = vadd.f32 %v7816, %v7944
    %v7986 = vadd.f32 %v7821, %v7944
    %v7987 = vadd.f32 %v7826, %v7944
    %v7988 = vadd.f32 %v7831, %v7944
    %v7989 = vadd.f32 %v7836, %v7944
    %v7990 = vadd.f32 %v7841, %v7944
    %v7991 = vadd.f32 %v7846, %v7944
    %v7992 = vadd.f32 %v7851, %v7944
    %v7993 = vadd.f32 %v7856, %v7944
    %v7994 = vadd.f32 %v7861, %v7944
    %v7995 = vadd.f32 %v7866, %v7944
    %v7996 = vadd.f32 %v7871, %v7944
    %v7997 = vadd.f32 %v7876, %v7944
    %v7998 = vadd.f32 %v7881, %v7944
    %v7999 = vadd.f32 %v7886, %v7944
    %v8000 = vadd.f32 %v7891, %v7944
    %v8001 = vadd.f32 %v7896, %v7944
    %v8002 = vadd.f32 %v7901, %v7944
    %v8003 = vadd.f32 %v7906, %v7944
    %v8004 = vadd.f32 %v7911, %v7944
    %v8005 = vadd.f32 %v7916, %v7944
    %v8006 = vadd.f32 %v7921, %v7944
    %v8007 = vadd.f32 %v7926, %v7944
    %v8008 = vadd.f32 %v7931, %v7944
    %v8009 = vadd.f32 %v7936, %v7944
    %v8010 = vxor.u32 %v7946, 2147483648
    %v8011 = vxor.u32 %v7947, 2147483648
    %v8012 = vxor.u32 %v7948, 2147483648
    %v8013 = vxor.u32 %v7949, 2147483648
    %v8014 = vxor.u32 %v7950, 2147483648
    %v8015 = vxor.u32 %v7951, 2147483648
    %v8016 = vxor.u32 %v7952, 2147483648
    %v8017 = vxor.u32 %v7953, 2147483648
    %v8018 = vxor.u32 %v7954, 2147483648
    %v8019 = vxor.u32 %v7955, 2147483648
    %v8020 = vxor.u32 %v7956, 2147483648
    %v8021 = vxor.u32 %v7957, 2147483648
    %v8022 = vxor.u32 %v7958, 2147483648
    %v8023 = vxor.u32 %v7959, 2147483648
    %v8024 = vxor.u32 %v7960, 2147483648
    %v8025 = vxor.u32 %v7961, 2147483648
    %v8026 = vxor.u32 %v7962, 2147483648
    %v8027 = vxor.u32 %v7963, 2147483648
    %v8028 = vxor.u32 %v7964, 2147483648
    %v8029 = vxor.u32 %v7965, 2147483648
    %v8030 = vxor.u32 %v7966, 2147483648
    %v8031 = vxor.u32 %v7967, 2147483648
    %v8032 = vxor.u32 %v7968, 2147483648
    %v8033 = vxor.u32 %v7969, 2147483648
    %v8034 = vxor.u32 %v7970, 2147483648
    %v8035 = vxor.u32 %v7971, 2147483648
    %v8036 = vxor.u32 %v7972, 2147483648
    %v8037 = vxor.u32 %v7973, 2147483648
    %v8038 = vxor.u32 %v7974, 2147483648
    %v8039 = vxor.u32 %v7975, 2147483648
    %v8040 = vxor.u32 %v7976, 2147483648
    %v8041 = vxor.u32 %v7977, 2147483648
    %v8042 = vxor.u32 %v7978, 2147483648
    %v8043 = vxor.u32 %v7979, 2147483648
    %v8044 = vxor.u32 %v7980, 2147483648
    %v8045 = vxor.u32 %v7981, 2147483648
    %v8046 = vxor.u32 %v7982, 2147483648
    %v8047 = vxor.u32 %v7983, 2147483648
    %v8048 = vxor.u32 %v7984, 2147483648
    %v8049 = vxor.u32 %v7985, 2147483648
    %v8050 = vxor.u32 %v7986, 2147483648
    %v8051 = vxor.u32 %v7987, 2147483648
    %v8052 = vxor.u32 %v7988, 2147483648
    %v8053 = vxor.u32 %v7989, 2147483648
    %v8054 = vxor.u32 %v7990, 2147483648
    %v8055 = vxor.u32 %v7991, 2147483648
    %v8056 = vxor.u32 %v7992, 2147483648
    %v8057 = vxor.u32 %v7993, 2147483648
    %v8058 = vxor.u32 %v7994, 2147483648
    %v8059 = vxor.u32 %v7995, 2147483648
    %v8060 = vxor.u32 %v7996, 2147483648
    %v8061 = vxor.u32 %v7997, 2147483648
    %v8062 = vxor.u32 %v7998, 2147483648
    %v8063 = vxor.u32 %v7999, 2147483648
    %v8064 = vxor.u32 %v8000, 2147483648
    %v8065 = vxor.u32 %v8001, 2147483648
    %v8066 = vxor.u32 %v8002, 2147483648
    %v8067 = vxor.u32 %v8003, 2147483648
    %v8068 = vxor.u32 %v8004, 2147483648
    %v8069 = vxor.u32 %v8005, 2147483648
    %v8070 = vxor.u32 %v8006, 2147483648
    %v8071 = vxor.u32 %v8007, 2147483648
    %v8072 = vxor.u32 %v8008, 2147483648
    %v8073 = vxor.u32 %v8009, 2147483648
    %v8074 = vmul.f32 %v8010, 1.442695
    %v8075 = vpow.pop %v8074
    %v8076 = vmul.f32 %v8011, 1.442695
    %v8077 = vpow.pop %v8076
    %v8078 = vmul.f32 %v8012, 1.442695
    %v8079 = vpow.pop %v8078
    %v8080 = vmul.f32 %v8013, 1.442695
    %v8081 = vpow.pop %v8080
    %v8082 = vmul.f32 %v8014, 1.442695
    %v8083 = vpow.pop %v8082
    %v8084 = vmul.f32 %v8015, 1.442695
    %v8085 = vpow.pop %v8084
    %v8086 = vmul.f32 %v8016, 1.442695
    %v8087 = vpow.pop %v8086
    %v8088 = vmul.f32 %v8017, 1.442695
    %v8089 = vpow.pop %v8088
    %v8090 = vmul.f32 %v8018, 1.442695
    %v8091 = vpow.pop %v8090
    %v8092 = vmul.f32 %v8019, 1.442695
    %v8093 = vpow.pop %v8092
    %v8094 = vmul.f32 %v8020, 1.442695
    %v8095 = vpow.pop %v8094
    %v8096 = vmul.f32 %v8021, 1.442695
    %v8097 = vpow.pop %v8096
    %v8098 = vmul.f32 %v8022, 1.442695
    %v8099 = vpow.pop %v8098
    %v8100 = vmul.f32 %v8023, 1.442695
    %v8101 = vpow.pop %v8100
    %v8102 = vmul.f32 %v8024, 1.442695
    %v8103 = vpow.pop %v8102
    %v8104 = vmul.f32 %v8025, 1.442695
    %v8105 = vpow.pop %v8104
    %v8106 = vmul.f32 %v8026, 1.442695
    %v8107 = vpow.pop %v8106
    %v8108 = vmul.f32 %v8027, 1.442695
    %v8109 = vpow.pop %v8108
    %v8110 = vmul.f32 %v8028, 1.442695
    %v8111 = vpow.pop %v8110
    %v8112 = vmul.f32 %v8029, 1.442695
    %v8113 = vpow.pop %v8112
    %v8114 = vmul.f32 %v8030, 1.442695
    %v8115 = vpow.pop %v8114
    %v8116 = vmul.f32 %v8031, 1.442695
    %v8117 = vpow.pop %v8116
    %v8118 = vmul.f32 %v8032, 1.442695
    %v8119 = vpow.pop %v8118
    %v8120 = vmul.f32 %v8033, 1.442695
    %v8121 = vpow.pop %v8120
    %v8122 = vmul.f32 %v8034, 1.442695
    %v8123 = vpow.pop %v8122
    %v8124 = vmul.f32 %v8035, 1.442695
    %v8125 = vpow.pop %v8124
    %v8126 = vmul.f32 %v8036, 1.442695
    %v8127 = vpow.pop %v8126
    %v8128 = vmul.f32 %v8037, 1.442695
    %v8129 = vpow.pop %v8128
    %v8130 = vmul.f32 %v8038, 1.442695
    %v8131 = vpow.pop %v8130
    %v8132 = vmul.f32 %v8039, 1.442695
    %v8133 = vpow.pop %v8132
    %v8134 = vmul.f32 %v8040, 1.442695
    %v8135 = vpow.pop %v8134
    %v8136 = vmul.f32 %v8041, 1.442695
    %v8137 = vpow.pop %v8136
    %v8138 = vmul.f32 %v8042, 1.442695
    %v8139 = vpow.pop %v8138
    %v8140 = vmul.f32 %v8043, 1.442695
    %v8141 = vpow.pop %v8140
    %v8142 = vmul.f32 %v8044, 1.442695
    %v8143 = vpow.pop %v8142
    %v8144 = vmul.f32 %v8045, 1.442695
    %v8145 = vpow.pop %v8144
    %v8146 = vmul.f32 %v8046, 1.442695
    %v8147 = vpow.pop %v8146
    %v8148 = vmul.f32 %v8047, 1.442695
    %v8149 = vpow.pop %v8148
    %v8150 = vmul.f32 %v8048, 1.442695
    %v8151 = vpow.pop %v8150
    %v8152 = vmul.f32 %v8049, 1.442695
    %v8153 = vpow.pop %v8152
    %v8154 = vmul.f32 %v8050, 1.442695
    %v8155 = vpow.pop %v8154
    %v8156 = vmul.f32 %v8051, 1.442695
    %v8157 = vpow.pop %v8156
    %v8158 = vmul.f32 %v8052, 1.442695
    %v8159 = vpow.pop %v8158
    %v8160 = vmul.f32 %v8053, 1.442695
    %v8161 = vpow.pop %v8160
    %v8162 = vmul.f32 %v8054, 1.442695
    %v8163 = vpow.pop %v8162
    %v8164 = vmul.f32 %v8055, 1.442695
    %v8165 = vpow.pop %v8164
    %v8166 = vmul.f32 %v8056, 1.442695
    %v8167 = vpow.pop %v8166
    %v8168 = vmul.f32 %v8057, 1.442695
    %v8169 = vpow.pop %v8168
    %v8170 = vmul.f32 %v8058, 1.442695
    %v8171 = vpow.pop %v8170
    %v8172 = vmul.f32 %v8059, 1.442695
    %v8173 = vpow.pop %v8172
    %v8174 = vmul.f32 %v8060, 1.442695
    %v8175 = vpow.pop %v8174
    %v8176 = vmul.f32 %v8061, 1.442695
    %v8177 = vpow.pop %v8176
    %v8178 = vmul.f32 %v8062, 1.442695
    %v8179 = vpow.pop %v8178
    %v8180 = vmul.f32 %v8063, 1.442695
    %v8181 = vpow.pop %v8180
    %v8182 = vmul.f32 %v8064, 1.442695
    %v8183 = vpow.pop %v8182
    %v8184 = vmul.f32 %v8065, 1.442695
    %v8185 = vpow.pop %v8184
    %v8186 = vmul.f32 %v8066, 1.442695
    %v8187 = vpow.pop %v8186
    %v8188 = vmul.f32 %v8067, 1.442695
    %v8189 = vpow.pop %v8188
    %v8190 = vmul.f32 %v8068, 1.442695
    %v8191 = vpow.pop %v8190
    %v8192 = vmul.f32 %v8069, 1.442695
    %v8193 = vpow.pop %v8192
    %v8194 = vmul.f32 %v8070, 1.442695
    %v8195 = vpow.pop %v8194
    %v8196 = vmul.f32 %v8071, 1.442695
    %v8197 = vpow.pop %v8196
    %v8198 = vmul.f32 %v8072, 1.442695
    %v8199 = vpow.pop %v8198
    %v8200 = vmul.f32 %v8073, 1.442695
    %v8201 = vpow.pop %v8200
    %v8202 = vadd.f32 %v8075, 1.0
    %v8203 = vadd.f32 %v8077, 1.0
    %v8204 = vadd.f32 %v8079, 1.0
    %v8205 = vadd.f32 %v8081, 1.0
    %v8206 = vadd.f32 %v8083, 1.0
    %v8207 = vadd.f32 %v8085, 1.0
    %v8208 = vadd.f32 %v8087, 1.0
    %v8209 = vadd.f32 %v8089, 1.0
    %v8210 = vadd.f32 %v8091, 1.0
    %v8211 = vadd.f32 %v8093, 1.0
    %v8212 = vadd.f32 %v8095, 1.0
    %v8213 = vadd.f32 %v8097, 1.0
    %v8214 = vadd.f32 %v8099, 1.0
    %v8215 = vadd.f32 %v8101, 1.0
    %v8216 = vadd.f32 %v8103, 1.0
    %v8217 = vadd.f32 %v8105, 1.0
    %v8218 = vadd.f32 %v8107, 1.0
    %v8219 = vadd.f32 %v8109, 1.0
    %v8220 = vadd.f32 %v8111, 1.0
    %v8221 = vadd.f32 %v8113, 1.0
    %v8222 = vadd.f32 %v8115, 1.0
    %v8223 = vadd.f32 %v8117, 1.0
    %v8224 = vadd.f32 %v8119, 1.0
    %v8225 = vadd.f32 %v8121, 1.0
    %v8226 = vadd.f32 %v8123, 1.0
    %v8227 = vadd.f32 %v8125, 1.0
    %v8228 = vadd.f32 %v8127, 1.0
    %v8229 = vadd.f32 %v8129, 1.0
    %v8230 = vadd.f32 %v8131, 1.0
    %v8231 = vadd.f32 %v8133, 1.0
    %v8232 = vadd.f32 %v8135, 1.0
    %v8233 = vadd.f32 %v8137, 1.0
    %v8234 = vadd.f32 %v8139, 1.0
    %v8235 = vadd.f32 %v8141, 1.0
    %v8236 = vadd.f32 %v8143, 1.0
    %v8237 = vadd.f32 %v8145, 1.0
    %v8238 = vadd.f32 %v8147, 1.0
    %v8239 = vadd.f32 %v8149, 1.0
    %v8240 = vadd.f32 %v8151, 1.0
    %v8241 = vadd.f32 %v8153, 1.0
    %v8242 = vadd.f32 %v8155, 1.0
    %v8243 = vadd.f32 %v8157, 1.0
    %v8244 = vadd.f32 %v8159, 1.0
    %v8245 = vadd.f32 %v8161, 1.0
    %v8246 = vadd.f32 %v8163, 1.0
    %v8247 = vadd.f32 %v8165, 1.0
    %v8248 = vadd.f32 %v8167, 1.0
    %v8249 = vadd.f32 %v8169, 1.0
    %v8250 = vadd.f32 %v8171, 1.0
    %v8251 = vadd.f32 %v8173, 1.0
    %v8252 = vadd.f32 %v8175, 1.0
    %v8253 = vadd.f32 %v8177, 1.0
    %v8254 = vadd.f32 %v8179, 1.0
    %v8255 = vadd.f32 %v8181, 1.0
    %v8256 = vadd.f32 %v8183, 1.0
    %v8257 = vadd.f32 %v8185, 1.0
    %v8258 = vadd.f32 %v8187, 1.0
    %v8259 = vadd.f32 %v8189, 1.0
    %v8260 = vadd.f32 %v8191, 1.0
    %v8261 = vadd.f32 %v8193, 1.0
    %v8262 = vadd.f32 %v8195, 1.0
    %v8263 = vadd.f32 %v8197, 1.0
    %v8264 = vadd.f32 %v8199, 1.0
    %v8265 = vadd.f32 %v8201, 1.0
    %v8266 = vrcp.pop %v8202
    %v8267 = vmul.f32 1.0, %v8266
    %v8268 = vrcp.pop %v8203
    %v8269 = vmul.f32 1.0, %v8268
    %v8270 = vrcp.pop %v8204
    %v8271 = vmul.f32 1.0, %v8270
    %v8272 = vrcp.pop %v8205
    %v8273 = vmul.f32 1.0, %v8272
    %v8274 = vrcp.pop %v8206
    %v8275 = vmul.f32 1.0, %v8274
    %v8276 = vrcp.pop %v8207
    %v8277 = vmul.f32 1.0, %v8276
    %v8278 = vrcp.pop %v8208
    %v8279 = vmul.f32 1.0, %v8278
    %v8280 = vrcp.pop %v8209
    %v8281 = vmul.f32 1.0, %v8280
    %v8282 = vrcp.pop %v8210
    %v8283 = vmul.f32 1.0, %v8282
    %v8284 = vrcp.pop %v8211
    %v8285 = vmul.f32 1.0, %v8284
    %v8286 = vrcp.pop %v8212
    %v8287 = vmul.f32 1.0, %v8286
    %v8288 = vrcp.pop %v8213
    %v8289 = vmul.f32 1.0, %v8288
    %v8290 = vrcp.pop %v8214
    %v8291 = vmul.f32 1.0, %v8290
    %v8292 = vrcp.pop %v8215
    %v8293 = vmul.f32 1.0, %v8292
    %v8294 = vrcp.pop %v8216
    %v8295 = vmul.f32 1.0, %v8294
    %v8296 = vrcp.pop %v8217
    %v8297 = vmul.f32 1.0, %v8296
    %v8298 = vrcp.pop %v8218
    %v8299 = vmul.f32 1.0, %v8298
    %v8300 = vrcp.pop %v8219
    %v8301 = vmul.f32 1.0, %v8300
    %v8302 = vrcp.pop %v8220
    %v8303 = vmul.f32 1.0, %v8302
    %v8304 = vrcp.pop %v8221
    %v8305 = vmul.f32 1.0, %v8304
    %v8306 = vrcp.pop %v8222
    %v8307 = vmul.f32 1.0, %v8306
    %v8308 = vrcp.pop %v8223
    %v8309 = vmul.f32 1.0, %v8308
    %v8310 = vrcp.pop %v8224
    %v8311 = vmul.f32 1.0, %v8310
    %v8312 = vrcp.pop %v8225
    %v8313 = vmul.f32 1.0, %v8312
    %v8314 = vrcp.pop %v8226
    %v8315 = vmul.f32 1.0, %v8314
    %v8316 = vrcp.pop %v8227
    %v8317 = vmul.f32 1.0, %v8316
    %v8318 = vrcp.pop %v8228
    %v8319 = vmul.f32 1.0, %v8318
    %v8320 = vrcp.pop %v8229
    %v8321 = vmul.f32 1.0, %v8320
    %v8322 = vrcp.pop %v8230
    %v8323 = vmul.f32 1.0, %v8322
    %v8324 = vrcp.pop %v8231
    %v8325 = vmul.f32 1.0, %v8324
    %v8326 = vrcp.pop %v8232
    %v8327 = vmul.f32 1.0, %v8326
    %v8328 = vrcp.pop %v8233
    %v8329 = vmul.f32 1.0, %v8328
    %v8330 = vrcp.pop %v8234
    %v8331 = vmul.f32 1.0, %v8330
    %v8332 = vrcp.pop %v8235
    %v8333 = vmul.f32 1.0, %v8332
    %v8334 = vrcp.pop %v8236
    %v8335 = vmul.f32 1.0, %v8334
    %v8336 = vrcp.pop %v8237
    %v8337 = vmul.f32 1.0, %v8336
    %v8338 = vrcp.pop %v8238
    %v8339 = vmul.f32 1.0, %v8338
    %v8340 = vrcp.pop %v8239
    %v8341 = vmul.f32 1.0, %v8340
    %v8342 = vrcp.pop %v8240
    %v8343 = vmul.f32 1.0, %v8342
    %v8344 = vrcp.pop %v8241
    %v8345 = vmul.f32 1.0, %v8344
    %v8346 = vrcp.pop %v8242
    %v8347 = vmul.f32 1.0, %v8346
    %v8348 = vrcp.pop %v8243
    %v8349 = vmul.f32 1.0, %v8348
    %v8350 = vrcp.pop %v8244
    %v8351 = vmul.f32 1.0, %v8350
    %v8352 = vrcp.pop %v8245
    %v8353 = vmul.f32 1.0, %v8352
    %v8354 = vrcp.pop %v8246
    %v8355 = vmul.f32 1.0, %v8354
    %v8356 = vrcp.pop %v8247
    %v8357 = vmul.f32 1.0, %v8356
    %v8358 = vrcp.pop %v8248
    %v8359 = vmul.f32 1.0, %v8358
    %v8360 = vrcp.pop %v8249
    %v8361 = vmul.f32 1.0, %v8360
    %v8362 = vrcp.pop %v8250
    %v8363 = vmul.f32 1.0, %v8362
    %v8364 = vrcp.pop %v8251
    %v8365 = vmul.f32 1.0, %v8364
    %v8366 = vrcp.pop %v8252
    %v8367 = vmul.f32 1.0, %v8366
    %v8368 = vrcp.pop %v8253
    %v8369 = vmul.f32 1.0, %v8368
    %v8370 = vrcp.pop %v8254
    %v8371 = vmul.f32 1.0, %v8370
    %v8372 = vrcp.pop %v8255
    %v8373 = vmul.f32 1.0, %v8372
    %v8374 = vrcp.pop %v8256
    %v8375 = vmul.f32 1.0, %v8374
    %v8376 = vrcp.pop %v8257
    %v8377 = vmul.f32 1.0, %v8376
    %v8378 = vrcp.pop %v8258
    %v8379 = vmul.f32 1.0, %v8378
    %v8380 = vrcp.pop %v8259
    %v8381 = vmul.f32 1.0, %v8380
    %v8382 = vrcp.pop %v8260
    %v8383 = vmul.f32 1.0, %v8382
    %v8384 = vrcp.pop %v8261
    %v8385 = vmul.f32 1.0, %v8384
    %v8386 = vrcp.pop %v8262
    %v8387 = vmul.f32 1.0, %v8386
    %v8388 = vrcp.pop %v8263
    %v8389 = vmul.f32 1.0, %v8388
    %v8390 = vrcp.pop %v8264
    %v8391 = vmul.f32 1.0, %v8390
    %v8392 = vrcp.pop %v8265
    %v8393 = vmul.f32 1.0, %v8392
    %v8394 = vmul.f32 %v7946, %v8267
    %v8395 = vmul.f32 %v7947, %v8269
    %v8396 = vmul.f32 %v7948, %v8271
    %v8397 = vmul.f32 %v7949, %v8273
    %v8398 = vmul.f32 %v7950, %v8275
    %v8399 = vmul.f32 %v7951, %v8277
    %v8400 = vmul.f32 %v7952, %v8279
    %v8401 = vmul.f32 %v7953, %v8281
    %v8402 = vmul.f32 %v7954, %v8283
    %v8403 = vmul.f32 %v7955, %v8285
    %v8404 = vmul.f32 %v7956, %v8287
    %v8405 = vmul.f32 %v7957, %v8289
    %v8406 = vmul.f32 %v7958, %v8291
    %v8407 = vmul.f32 %v7959, %v8293
    %v8408 = vmul.f32 %v7960, %v8295
    %v8409 = vmul.f32 %v7961, %v8297
    %v8410 = vmul.f32 %v7962, %v8299
    %v8411 = vmul.f32 %v7963, %v8301
    %v8412 = vmul.f32 %v7964, %v8303
    %v8413 = vmul.f32 %v7965, %v8305
    %v8414 = vmul.f32 %v7966, %v8307
    %v8415 = vmul.f32 %v7967, %v8309
    %v8416 = vmul.f32 %v7968, %v8311
    %v8417 = vmul.f32 %v7969, %v8313
    %v8418 = vmul.f32 %v7970, %v8315
    %v8419 = vmul.f32 %v7971, %v8317
    %v8420 = vmul.f32 %v7972, %v8319
    %v8421 = vmul.f32 %v7973, %v8321
    %v8422 = vmul.f32 %v7974, %v8323
    %v8423 = vmul.f32 %v7975, %v8325
    %v8424 = vmul.f32 %v7976, %v8327
    %v8425 = vmul.f32 %v7977, %v8329
    %v8426 = vmul.f32 %v7978, %v8331
    %v8427 = vmul.f32 %v7979, %v8333
    %v8428 = vmul.f32 %v7980, %v8335
    %v8429 = vmul.f32 %v7981, %v8337
    %v8430 = vmul.f32 %v7982, %v8339
    %v8431 = vmul.f32 %v7983, %v8341
    %v8432 = vmul.f32 %v7984, %v8343
    %v8433 = vmul.f32 %v7985, %v8345
    %v8434 = vmul.f32 %v7986, %v8347
    %v8435 = vmul.f32 %v7987, %v8349
    %v8436 = vmul.f32 %v7988, %v8351
    %v8437 = vmul.f32 %v7989, %v8353
    %v8438 = vmul.f32 %v7990, %v8355
    %v8439 = vmul.f32 %v7991, %v8357
    %v8440 = vmul.f32 %v7992, %v8359
    %v8441 = vmul.f32 %v7993, %v8361
    %v8442 = vmul.f32 %v7994, %v8363
    %v8443 = vmul.f32 %v7995, %v8365
    %v8444 = vmul.f32 %v7996, %v8367
    %v8445 = vmul.f32 %v7997, %v8369
    %v8446 = vmul.f32 %v7998, %v8371
    %v8447 = vmul.f32 %v7999, %v8373
    %v8448 = vmul.f32 %v8000, %v8375
    %v8449 = vmul.f32 %v8001, %v8377
    %v8450 = vmul.f32 %v8002, %v8379
    %v8451 = vmul.f32 %v8003, %v8381
    %v8452 = vmul.f32 %v8004, %v8383
    %v8453 = vmul.f32 %v8005, %v8385
    %v8454 = vmul.f32 %v8006, %v8387
    %v8455 = vmul.f32 %v8007, %v8389
    %v8456 = vmul.f32 %v8008, %v8391
    %v8457 = vmul.f32 %v8009, %v8393
    %8458 = vst [vmem:[#allocation8] sm:$0xff] %v8394
    %8459 = vst [vmem:[#allocation8 + $0x8] sm:$0xff] %v8395
    %8460 = vst [vmem:[#allocation8 + $0x10] sm:$0xff] %v8396
    %8461 = vst [vmem:[#allocation8 + $0x18] sm:$0xff] %v8397
    %8462 = vst [vmem:[#allocation8 + $0x20] sm:$0xff] %v8398
    %8463 = vst [vmem:[#allocation8 + $0x28] sm:$0xff] %v8399
    %8464 = vst [vmem:[#allocation8 + $0x30] sm:$0xff] %v8400
    %8465 = vst [vmem:[#allocation8 + $0x38] sm:$0xff] %v8401
    %8466 = vst [vmem:[#allocation8 + $0x40] sm:$0xff] %v8402
    %8467 = vst [vmem:[#allocation8 + $0x48] sm:$0xff] %v8403
    %8468 = vst [vmem:[#allocation8 + $0x50] sm:$0xff] %v8404
    %8469 = vst [vmem:[#allocation8 + $0x58] sm:$0xff] %v8405
    %8470 = vst [vmem:[#allocation8 + $0x60] sm:$0xff] %v8406
    %8471 = vst [vmem:[#allocation8 + $0x68] sm:$0xff] %v8407
    %8472 = vst [vmem:[#allocation8 + $0x70] sm:$0xff] %v8408
    %8473 = vst [vmem:[#allocation8 + $0x78] sm:$0xff] %v8409
    %8474 = vst [vmem:[#allocation8 + $0x80] sm:$0xff] %v8410
    %8475 = vst [vmem:[#allocation8 + $0x88] sm:$0xff] %v8411
    %8476 = vst [vmem:[#allocation8 + $0x90] sm:$0xff] %v8412
    %8477 = vst [vmem:[#allocation8 + $0x98] sm:$0xff] %v8413
    %8478 = vst [vmem:[#allocation8 + $0xa0] sm:$0xff] %v8414
    %8479 = vst [vmem:[#allocation8 + $0xa8] sm:$0xff] %v8415
    %8480 = vst [vmem:[#allocation8 + $0xb0] sm:$0xff] %v8416
    %8481 = vst [vmem:[#allocation8 + $0xb8] sm:$0xff] %v8417
    %8482 = vst [vmem:[#allocation8 + $0xc0] sm:$0xff] %v8418
    %8483 = vst [vmem:[#allocation8 + $0xc8] sm:$0xff] %v8419
    %8484 = vst [vmem:[#allocation8 + $0xd0] sm:$0xff] %v8420
    %8485 = vst [vmem:[#allocation8 + $0xd8] sm:$0xff] %v8421
    %8486 = vst [vmem:[#allocation8 + $0xe0] sm:$0xff] %v8422
    %8487 = vst [vmem:[#allocation8 + $0xe8] sm:$0xff] %v8423
    %8488 = vst [vmem:[#allocation8 + $0xf0] sm:$0xff] %v8424
    %8489 = vst [vmem:[#allocation8 + $0xf8] sm:$0xff] %v8425
    %8490 = vst [vmem:[#allocation8 + $0x100] sm:$0xff] %v8426
    %8491 = vst [vmem:[#allocation8 + $0x108] sm:$0xff] %v8427
    %8492 = vst [vmem:[#allocation8 + $0x110] sm:$0xff] %v8428
    %8493 = vst [vmem:[#allocation8 + $0x118] sm:$0xff] %v8429
    %8494 = vst [vmem:[#allocation8 + $0x120] sm:$0xff] %v8430
    %8495 = vst [vmem:[#allocation8 + $0x128] sm:$0xff] %v8431
    %8496 = vst [vmem:[#allocation8 + $0x130] sm:$0xff] %v8432
    %8497 = vst [vmem:[#allocation8 + $0x138] sm:$0xff] %v8433
    %8498 = vst [vmem:[#allocation8 + $0x140] sm:$0xff] %v8434
    %8499 = vst [vmem:[#allocation8 + $0x148] sm:$0xff] %v8435
    %8500 = vst [vmem:[#allocation8 + $0x150] sm:$0xff] %v8436
    %8501 = vst [vmem:[#allocation8 + $0x158] sm:$0xff] %v8437
    %8502 = vst [vmem:[#allocation8 + $0x160] sm:$0xff] %v8438
    %8503 = vst [vmem:[#allocation8 + $0x168] sm:$0xff] %v8439
    %8504 = vst [vmem:[#allocation8 + $0x170] sm:$0xff] %v8440
    %8505 = vst [vmem:[#allocation8 + $0x178] sm:$0xff] %v8441
    %8506 = vst [vmem:[#allocation8 + $0x180] sm:$0xff] %v8442
    %8507 = vst [vmem:[#allocation8 + $0x188] sm:$0xff] %v8443
    %8508 = vst [vmem:[#allocation8 + $0x190] sm:$0xff] %v8444
    %8509 = vst [vmem:[#allocation8 + $0x198] sm:$0xff] %v8445
    %8510 = vst [vmem:[#allocation8 + $0x1a0] sm:$0xff] %v8446
    %8511 = vst [vmem:[#allocation8 + $0x1a8] sm:$0xff] %v8447
    %8512 = vst [vmem:[#allocation8 + $0x1b0] sm:$0xff] %v8448
    %8513 = vst [vmem:[#allocation8 + $0x1b8] sm:$0xff] %v8449
    %8514 = vst [vmem:[#allocation8 + $0x1c0] sm:$0xff] %v8450
    %8515 = vst [vmem:[#allocation8 + $0x1c8] sm:$0xff] %v8451
    %8516 = vst [vmem:[#allocation8 + $0x1d0] sm:$0xff] %v8452
    %8517 = vst [vmem:[#allocation8 + $0x1d8] sm:$0xff] %v8453
    %8518 = vst [vmem:[#allocation8 + $0x1e0] sm:$0xff] %v8454
    %8519 = vst [vmem:[#allocation8 + $0x1e8] sm:$0xff] %v8455
    %8520 = vst [vmem:[#allocation8 + $0x1f0] sm:$0xff] %v8456
    %8521 = vst [vmem:[#allocation8 + $0x1f8] sm:$0xff] %v8457
    // Predicated region
    $region34: #{sppelan_forward.1} parent=1 // pred_check
      _
    $region35: #{sppelan_forward.1} parent=1 // pred_check_branch
      %8523 = sbr.rel (0) target = $region37
    $region36: #{sppelan_forward.1} parent=1 // pred_region
      %s8525 = ssub.s32 8192, 8192
      %8526 = vsyncadd [#allocation4], %s8525
      %s8527 = sshll.u32 [#allocation8], 4
      %s8528 = int_to_ptr.vmem [resolvable:$true] %s8527
      %8533 = dma.vmem_to_hbm [thread:$0]  %s8528, 8192, %s5, [#allocation4], 128, 128, 8
    $region37: #{sppelan_forward.1} parent=1 // pred_fallthru
      _
    // Predicated region
    $region38: #{sppelan_forward.1} parent=1 // pred_check
      _
    $region39: #{sppelan_forward.1} parent=1 // pred_check_branch
      %8535 = sbr.rel (0) target = $region41
    $region40: #{sppelan_forward.1} parent=1 // pred_region
      %8536 = dma.done [#allocation4], 8192
    $region41: #{sppelan_forward.1} parent=1 // pred_fallthru
      _
    %8537 = vsyncpa [#allocation3], 1
    %8538 = vsyncpa [#allocation6], 1
    %8539 = vsyncpa [#allocation4], 1

</llo_original>
